<compile_context>
chip_gen: v7x
topology: tpu7x:2x2x1
jax: 0.10.0
libtpu: 0.0.40
codegen_flags: <defaults>
</compile_context>

<pallas_src>
import jax
import jax.numpy as jnp
from jax.experimental import pallas as pl
from jax.experimental.pallas import tpu as pltpu


# ----------------------------------------------------------------------------
# Fused Pallas kernel: all 4 branches, one H-tile of concatenated output
# per grid step.  No scratch, single store per tile.
# ----------------------------------------------------------------------------
def _make_fused_kernel(dilations, dmax, TH, W, Cin, Cout):
    nb = len(dilations)
    C4 = nb * Cout

    def kernel(x_ref, w_ref, bias_ref, out_ref):
        # x_ref    : (1, Hp, Wp, Cin)       bf16  (whole padded sample, resident)
        # w_ref    : (nb, 9*Cin, Cout)      bf16  (BN scale folded in)
        # bias_ref : (1, C4)                f32   (conv bias + BN shift folded)
        # out_ref  : (1, TH, W, C4)         f32
        h = pl.program_id(1)
        hstart = pl.multiple_of(h * TH, TH)

        branch_results = []
        for b, d in enumerate(dilations):
            # im2col: pack the 9 dilated shifted windows into one fat K=9*Cin
            # operand, then a single MXU matmul per branch.
            taps = []
            for ky in range(3):
                r = hstart + dmax + (ky - 1) * d          # dynamic row start
                for kx in range(3):
                    c = dmax + (kx - 1) * d               # static col start
                    taps.append(
                        x_ref[0, pl.ds(r, TH), c:c + W, :].reshape(TH * W, Cin))
            patch = jnp.concatenate(taps, axis=1)          # (TH*W, 9*Cin)
            branch_results.append(
                jnp.dot(patch, w_ref[b], preferred_element_type=jnp.float32))

        # Concatenate branches along channels -> one lane-dense store; fuse
        # bias + ReLU on the live value (no scratch round-trip).
        y = jnp.concatenate(branch_results, axis=1) + bias_ref[...]   # (TH*W, C4)
        out_ref[...] = jnp.maximum(y, 0.0).reshape(1, TH, W, C4).astype(out_ref.dtype)

    return kernel


# ----------------------------------------------------------------------------
# ASPP forward (matches the PyTorch module with BatchNorm in eval mode).
# ----------------------------------------------------------------------------
def aspp_forward(x_nchw, params, dilations):
    N, Cin, H, W = x_nchw.shape
    Cout = params[0]["conv_w"].shape[0]
    nb = len(dilations)
    C4 = nb * Cout
    dmax = max(dilations)
    eps = 1e-5

    # H tile: pad H to a multiple of 8 (no TH = H fallback); grow TH up to 64.
    Hpad = -(-H // 8) * 8
    TH = 8
    for cand in (64, 32, 16):
        if Hpad % cand == 0:
            TH = cand
            break

    # One layout transform + zero-pad + bf16 cast for all branches
    # (single fused XLA copy pass).
    x_nhwc = jnp.transpose(x_nchw, (0, 2, 3, 1)).astype(jnp.bfloat16)
    xpad = jnp.pad(x_nhwc,
                   ((0, 0), (dmax, dmax + (Hpad - H)), (dmax, dmax), (0, 0)))
    Hp, Wp = Hpad + 2 * dmax, W + 2 * dmax

    # Fold conv bias + eval-mode BN into per-channel scale (into weights) and
    # a per-channel shift; reshape weights for the fat K=9*Cin matmul.
    w_list, b_list = [], []
    for p in params:
        scale = p["gamma"] / jnp.sqrt(p["var"] + eps)                 # (Cout,)
        shift = p["beta"] + (p["conv_b"] - p["mean"]) * scale         # (Cout,)
        w_hwio = jnp.transpose(p["conv_w"], (2, 3, 1, 0))             # (ky,kx,Cin,Cout)
        w_list.append((w_hwio * scale[None, None, None, :]).reshape(9 * Cin, Cout))
        b_list.append(shift)
    w_all = jnp.stack(w_list, axis=0).astype(jnp.bfloat16)            # (nb, 9*Cin, Cout)
    bias_all = jnp.concatenate(b_list).reshape(1, C4).astype(jnp.float32)

    grid = (N, Hpad // TH)
    kernel = _make_fused_kernel(tuple(dilations), dmax, TH, W, Cin, Cout)

    # Derive a per-generation VMEM limit (128 MiB v5e/v6e, 64 MiB v7x).
    try:
        vmem_cap = int(pltpu.get_tpu_info().vmem_capacity_bytes)
    except Exception:
        vmem_cap = 64 * 1024 * 1024
    vmem_limit = max(32 * 1024 * 1024,
                     min(vmem_cap * 3 // 4, 100 * 1024 * 1024))

    out_nhwc = pl.pallas_call(
        kernel,
        out_shape=jax.ShapeDtypeStruct((N, Hpad, W, C4), jnp.float32),
        grid=grid,
        in_specs=[
            # Whole padded sample; block index constant across h, so it is
            # fetched once per batch element (not re-DMA'd per h-tile).
            pl.BlockSpec((1, Hp, Wp, Cin), lambda n, h: (n, 0, 0, 0)),
            pl.BlockSpec((nb, 9 * Cin, Cout), lambda n, h: (0, 0, 0)),
            pl.BlockSpec((1, C4), lambda n, h: (0, 0)),
        ],
        out_specs=pl.BlockSpec((1, TH, W, C4), lambda n, h: (n, h, 0, 0)),
        compiler_params=pltpu.CompilerParams(
            dimension_semantics=("parallel", "parallel"),
            vmem_limit_bytes=vmem_limit,
        ),
    )(xpad, w_all, bias_all)

    # Crop the H padding and return NCHW to match the PyTorch module's layout.
    out_nhwc = out_nhwc[:, :H]
    return jnp.transpose(out_nhwc, (0, 3, 1, 2))


# ----------------------------------------------------------------------------
# Pure-JAX reference (lax conv, f32) for correctness checking.
# ----------------------------------------------------------------------------
def aspp_reference(x_nchw, params, dilations):
    eps = 1e-5
    outs = []
    for b, d in enumerate(dilations):
        p = params[b]
        y = jax.lax.conv_general_dilated(
            x_nchw, p["conv_w"], window_strides=(1, 1),
            padding=((d, d), (d, d)), rhs_dilation=(d, d),
            dimension_numbers=("NCHW", "OIHW", "NCHW"),
        )
        y = y + p["conv_b"][None, :, None, None]
        y = (y - p["mean"][None, :, None, None]) / jnp.sqrt(
            p["var"][None, :, None, None] + eps)
        y = y * p["gamma"][None, :, None, None] + p["beta"][None, :, None, None]
        outs.append(jnp.maximum(y, 0.0))
    return jnp.concatenate(outs, axis=1)


def init_params(key, in_ch, out_ch, n_branches=4):
    params = []
    for b in range(n_branches):
        k = jax.random.fold_in(key, b)
        k1, k2, k3, k4, k5, k6 = jax.random.split(k, 6)
        params.append({
            "conv_w": 0.1 * jax.random.normal(k1, (out_ch, in_ch, 3, 3), jnp.float32),
            "conv_b": 0.1 * jax.random.normal(k2, (out_ch,), jnp.float32),
            "gamma": 1.0 + 0.1 * jax.random.normal(k3, (out_ch,), jnp.float32),
            "beta": 0.1 * jax.random.normal(k4, (out_ch,), jnp.float32),
            "mean": 0.1 * jax.random.normal(k5, (out_ch,), jnp.float32),
            "var": jax.random.uniform(k6, (out_ch,), jnp.float32, 0.5, 1.5),
        })
    return params


if __name__ == "__main__":
    # Small shapes consistent with the module: in_ch divisible by reduction=4.
    N, in_ch, H, W = 2, 8, 16, 16
    reduction = 4
    out_ch = in_ch // reduction
    dilations = (1, 2, 3, 4)  # d1..d4

    key = jax.random.PRNGKey(0)
    kx, kp = jax.random.split(key)
    x = jax.random.normal(kx, (N, in_ch, H, W), jnp.float32)
    params = init_params(kp, in_ch, out_ch)

    out = jax.block_until_ready(aspp_forward(x, params, dilations))
    ref = jax.block_until_ready(aspp_reference(x, params, dilations))

    assert out.shape == (N, 4 * out_ch, H, W), out.shape
    # bf16 matmul inputs (f32 accumulation) -> loosened tolerance vs f32 reference.
    max_err = float(jnp.max(jnp.abs(out - ref)))
    assert jnp.allclose(out, ref, rtol=5e-2, atol=5e-2), max_err

    print("KERNEL_OK")
</pallas_src>

<mosaic_0001>
module attributes {stable_mosaic.version = 11 : i64} {
  func.func @kernel(%arg0: i32, %arg1: i32, %arg2: memref<1x24x24x8xbf16, #tpu.memory_space<vmem>>, %arg3: memref<4x72x2xbf16, #tpu.memory_space<vmem>>, %arg4: memref<1x8xf32, #tpu.memory_space<vmem>>, %arg5: memref<1x16x16x8xf32, #tpu.memory_space<vmem>>) attributes {dimension_semantics = [#tpu.dimension_semantics<parallel>, #tpu.dimension_semantics<parallel>], iteration_bounds = array<i64: 2, 1>, scalar_prefetch = 0 : i64, scratch_operands = 0 : i64, tpu.core_type = #tpu.core_type<tc>, window_params = [{transform_indices = @transform_0, window_bounds = array<i64: 1, 24, 24, 8>}, {pipeline_mode = #tpu.pipeline_mode<synchronous>, transform_indices = @transform_1, window_bounds = array<i64: 4, 72, 2>}, {pipeline_mode = #tpu.pipeline_mode<synchronous>, transform_indices = @transform_2, window_bounds = array<i64: 1, 8>}, {transform_indices = @transform_3, window_bounds = array<i64: 1, 16, 16, 8>}]} {
    %c16_i32 = arith.constant 16 : i32
    %0 = arith.muli %arg1, %c16_i32 : i32
    %1 = tpu.assume_multiple %0, 16 : i32
    %c4_i32 = arith.constant 4 : i32
    %2 = arith.addi %1, %c4_i32 : i32
    %c-1_i32 = arith.constant -1 : i32
    %3 = arith.addi %2, %c-1_i32 : i32
    %c0 = arith.constant 0 : index
    %4 = arith.index_cast %3 : i32 to index
    %c3 = arith.constant 3 : index
    %c0_0 = arith.constant 0 : index
    %5 = vector.load %arg2[%c0, %4, %c3, %c0_0] : memref<1x24x24x8xbf16, #tpu.memory_space<vmem>>, vector<1x16x16x8xbf16>
    %6 = vector.shape_cast %5 : vector<1x16x16x8xbf16> to vector<16x16x8xbf16>
    %7 = vector.shape_cast %6 : vector<16x16x8xbf16> to vector<256x8xbf16>
    %c0_1 = arith.constant 0 : index
    %8 = arith.index_cast %3 : i32 to index
    %c4 = arith.constant 4 : index
    %c0_2 = arith.constant 0 : index
    %9 = vector.load %arg2[%c0_1, %8, %c4, %c0_2] : memref<1x24x24x8xbf16, #tpu.memory_space<vmem>>, vector<1x16x16x8xbf16>
    %10 = vector.shape_cast %9 : vector<1x16x16x8xbf16> to vector<16x16x8xbf16>
    %11 = vector.shape_cast %10 : vector<16x16x8xbf16> to vector<256x8xbf16>
    %c0_3 = arith.constant 0 : index
    %12 = arith.index_cast %3 : i32 to index
    %c5 = arith.constant 5 : index
    %c0_4 = arith.constant 0 : index
    %13 = vector.load %arg2[%c0_3, %12, %c5, %c0_4] : memref<1x24x24x8xbf16, #tpu.memory_space<vmem>>, vector<1x16x16x8xbf16>
    %14 = vector.shape_cast %13 : vector<1x16x16x8xbf16> to vector<16x16x8xbf16>
    %15 = vector.shape_cast %14 : vector<16x16x8xbf16> to vector<256x8xbf16>
    %c4_i32_5 = arith.constant 4 : i32
    %16 = arith.addi %1, %c4_i32_5 : i32
    %c0_i32 = arith.constant 0 : i32
    %17 = arith.addi %16, %c0_i32 : i32
    %c0_6 = arith.constant 0 : index
    %18 = arith.index_cast %17 : i32 to index
    %c3_7 = arith.constant 3 : index
    %c0_8 = arith.constant 0 : index
    %19 = vector.load %arg2[%c0_6, %18, %c3_7, %c0_8] : memref<1x24x24x8xbf16, #tpu.memory_space<vmem>>, vector<1x16x16x8xbf16>
    %20 = vector.shape_cast %19 : vector<1x16x16x8xbf16> to vector<16x16x8xbf16>
    %21 = vector.shape_cast %20 : vector<16x16x8xbf16> to vector<256x8xbf16>
    %c0_9 = arith.constant 0 : index
    %22 = arith.index_cast %17 : i32 to index
    %c4_10 = arith.constant 4 : index
    %c0_11 = arith.constant 0 : index
    %23 = vector.load %arg2[%c0_9, %22, %c4_10, %c0_11] : memref<1x24x24x8xbf16, #tpu.memory_space<vmem>>, vector<1x16x16x8xbf16>
    %24 = vector.shape_cast %23 : vector<1x16x16x8xbf16> to vector<16x16x8xbf16>
    %25 = vector.shape_cast %24 : vector<16x16x8xbf16> to vector<256x8xbf16>
    %c0_12 = arith.constant 0 : index
    %26 = arith.index_cast %17 : i32 to index
    %c5_13 = arith.constant 5 : index
    %c0_14 = arith.constant 0 : index
    %27 = vector.load %arg2[%c0_12, %26, %c5_13, %c0_14] : memref<1x24x24x8xbf16, #tpu.memory_space<vmem>>, vector<1x16x16x8xbf16>
    %28 = vector.shape_cast %27 : vector<1x16x16x8xbf16> to vector<16x16x8xbf16>
    %29 = vector.shape_cast %28 : vector<16x16x8xbf16> to vector<256x8xbf16>
    %c4_i32_15 = arith.constant 4 : i32
    %30 = arith.addi %1, %c4_i32_15 : i32
    %c1_i32 = arith.constant 1 : i32
    %31 = arith.addi %30, %c1_i32 : i32
    %c0_16 = arith.constant 0 : index
    %32 = arith.index_cast %31 : i32 to index
    %c3_17 = arith.constant 3 : index
    %c0_18 = arith.constant 0 : index
    %33 = vector.load %arg2[%c0_16, %32, %c3_17, %c0_18] : memref<1x24x24x8xbf16, #tpu.memory_space<vmem>>, vector<1x16x16x8xbf16>
    %34 = vector.shape_cast %33 : vector<1x16x16x8xbf16> to vector<16x16x8xbf16>
    %35 = vector.shape_cast %34 : vector<16x16x8xbf16> to vector<256x8xbf16>
    %c0_19 = arith.constant 0 : index
    %36 = arith.index_cast %31 : i32 to index
    %c4_20 = arith.constant 4 : index
    %c0_21 = arith.constant 0 : index
    %37 = vector.load %arg2[%c0_19, %36, %c4_20, %c0_21] : memref<1x24x24x8xbf16, #tpu.memory_space<vmem>>, vector<1x16x16x8xbf16>
    %38 = vector.shape_cast %37 : vector<1x16x16x8xbf16> to vector<16x16x8xbf16>
    %39 = vector.shape_cast %38 : vector<16x16x8xbf16> to vector<256x8xbf16>
    %c0_22 = arith.constant 0 : index
    %40 = arith.index_cast %31 : i32 to index
    %c5_23 = arith.constant 5 : index
    %c0_24 = arith.constant 0 : index
    %41 = vector.load %arg2[%c0_22, %40, %c5_23, %c0_24] : memref<1x24x24x8xbf16, #tpu.memory_space<vmem>>, vector<1x16x16x8xbf16>
    %42 = vector.shape_cast %41 : vector<1x16x16x8xbf16> to vector<16x16x8xbf16>
    %43 = vector.shape_cast %42 : vector<16x16x8xbf16> to vector<256x8xbf16>
    %44 = tpu.concatenate %7, %11, %15, %21, %25, %29, %35, %39, %43 in 1 : vector<256x8xbf16>, vector<256x8xbf16>, vector<256x8xbf16>, vector<256x8xbf16>, vector<256x8xbf16>, vector<256x8xbf16>, vector<256x8xbf16>, vector<256x8xbf16>, vector<256x8xbf16> -> vector<256x72xbf16>
    %c0_25 = arith.constant 0 : index
    %c0_26 = arith.constant 0 : index
    %c0_27 = arith.constant 0 : index
    %45 = vector.load %arg3[%c0_25, %c0_26, %c0_27] : memref<4x72x2xbf16, #tpu.memory_space<vmem>>, vector<1x72x2xbf16>
    %46 = vector.shape_cast %45 : vector<1x72x2xbf16> to vector<72x2xbf16>
    %cst = arith.constant dense<0.000000e+00> : vector<256x2xf32>
    %47 = tpu.matmul %44, %46, %cst {dimension_numbers = #tpu.dot_dimension_numbers<[1], [0], [0], [1], [0, 0, 1, 1], [], []>} : vector<256x72xbf16>, vector<72x2xbf16>, vector<256x2xf32> -> vector<256x2xf32>
    %c4_i32_28 = arith.constant 4 : i32
    %48 = arith.addi %1, %c4_i32_28 : i32
    %c-2_i32 = arith.constant -2 : i32
    %49 = arith.addi %48, %c-2_i32 : i32
    %c0_29 = arith.constant 0 : index
    %50 = arith.index_cast %49 : i32 to index
    %c2 = arith.constant 2 : index
    %c0_30 = arith.constant 0 : index
    %51 = vector.load %arg2[%c0_29, %50, %c2, %c0_30] : memref<1x24x24x8xbf16, #tpu.memory_space<vmem>>, vector<1x16x16x8xbf16>
    %52 = vector.shape_cast %51 : vector<1x16x16x8xbf16> to vector<16x16x8xbf16>
    %53 = vector.shape_cast %52 : vector<16x16x8xbf16> to vector<256x8xbf16>
    %c0_31 = arith.constant 0 : index
    %54 = arith.index_cast %49 : i32 to index
    %c4_32 = arith.constant 4 : index
    %c0_33 = arith.constant 0 : index
    %55 = vector.load %arg2[%c0_31, %54, %c4_32, %c0_33] : memref<1x24x24x8xbf16, #tpu.memory_space<vmem>>, vector<1x16x16x8xbf16>
    %56 = vector.shape_cast %55 : vector<1x16x16x8xbf16> to vector<16x16x8xbf16>
    %57 = vector.shape_cast %56 : vector<16x16x8xbf16> to vector<256x8xbf16>
    %c0_34 = arith.constant 0 : index
    %58 = arith.index_cast %49 : i32 to index
    %c6 = arith.constant 6 : index
    %c0_35 = arith.constant 0 : index
    %59 = vector.load %arg2[%c0_34, %58, %c6, %c0_35] : memref<1x24x24x8xbf16, #tpu.memory_space<vmem>>, vector<1x16x16x8xbf16>
    %60 = vector.shape_cast %59 : vector<1x16x16x8xbf16> to vector<16x16x8xbf16>
    %61 = vector.shape_cast %60 : vector<16x16x8xbf16> to vector<256x8xbf16>
    %c4_i32_36 = arith.constant 4 : i32
    %62 = arith.addi %1, %c4_i32_36 : i32
    %c0_i32_37 = arith.constant 0 : i32
    %63 = arith.addi %62, %c0_i32_37 : i32
    %c0_38 = arith.constant 0 : index
    %64 = arith.index_cast %63 : i32 to index
    %c2_39 = arith.constant 2 : index
    %c0_40 = arith.constant 0 : index
    %65 = vector.load %arg2[%c0_38, %64, %c2_39, %c0_40] : memref<1x24x24x8xbf16, #tpu.memory_space<vmem>>, vector<1x16x16x8xbf16>
    %66 = vector.shape_cast %65 : vector<1x16x16x8xbf16> to vector<16x16x8xbf16>
    %67 = vector.shape_cast %66 : vector<16x16x8xbf16> to vector<256x8xbf16>
    %c0_41 = arith.constant 0 : index
    %68 = arith.index_cast %63 : i32 to index
    %c4_42 = arith.constant 4 : index
    %c0_43 = arith.constant 0 : index
    %69 = vector.load %arg2[%c0_41, %68, %c4_42, %c0_43] : memref<1x24x24x8xbf16, #tpu.memory_space<vmem>>, vector<1x16x16x8xbf16>
    %70 = vector.shape_cast %69 : vector<1x16x16x8xbf16> to vector<16x16x8xbf16>
    %71 = vector.shape_cast %70 : vector<16x16x8xbf16> to vector<256x8xbf16>
    %c0_44 = arith.constant 0 : index
    %72 = arith.index_cast %63 : i32 to index
    %c6_45 = arith.constant 6 : index
    %c0_46 = arith.constant 0 : index
    %73 = vector.load %arg2[%c0_44, %72, %c6_45, %c0_46] : memref<1x24x24x8xbf16, #tpu.memory_space<vmem>>, vector<1x16x16x8xbf16>
    %74 = vector.shape_cast %73 : vector<1x16x16x8xbf16> to vector<16x16x8xbf16>
    %75 = vector.shape_cast %74 : vector<16x16x8xbf16> to vector<256x8xbf16>
    %c4_i32_47 = arith.constant 4 : i32
    %76 = arith.addi %1, %c4_i32_47 : i32
    %c2_i32 = arith.constant 2 : i32
    %77 = arith.addi %76, %c2_i32 : i32
    %c0_48 = arith.constant 0 : index
    %78 = arith.index_cast %77 : i32 to index
    %c2_49 = arith.constant 2 : index
    %c0_50 = arith.constant 0 : index
    %79 = vector.load %arg2[%c0_48, %78, %c2_49, %c0_50] : memref<1x24x24x8xbf16, #tpu.memory_space<vmem>>, vector<1x16x16x8xbf16>
    %80 = vector.shape_cast %79 : vector<1x16x16x8xbf16> to vector<16x16x8xbf16>
    %81 = vector.shape_cast %80 : vector<16x16x8xbf16> to vector<256x8xbf16>
    %c0_51 = arith.constant 0 : index
    %82 = arith.index_cast %77 : i32 to index
    %c4_52 = arith.constant 4 : index
    %c0_53 = arith.constant 0 : index
    %83 = vector.load %arg2[%c0_51, %82, %c4_52, %c0_53] : memref<1x24x24x8xbf16, #tpu.memory_space<vmem>>, vector<1x16x16x8xbf16>
    %84 = vector.shape_cast %83 : vector<1x16x16x8xbf16> to vector<16x16x8xbf16>
    %85 = vector.shape_cast %84 : vector<16x16x8xbf16> to vector<256x8xbf16>
    %c0_54 = arith.constant 0 : index
    %86 = arith.index_cast %77 : i32 to index
    %c6_55 = arith.constant 6 : index
    %c0_56 = arith.constant 0 : index
    %87 = vector.load %arg2[%c0_54, %86, %c6_55, %c0_56] : memref<1x24x24x8xbf16, #tpu.memory_space<vmem>>, vector<1x16x16x8xbf16>
    %88 = vector.shape_cast %87 : vector<1x16x16x8xbf16> to vector<16x16x8xbf16>
    %89 = vector.shape_cast %88 : vector<16x16x8xbf16> to vector<256x8xbf16>
    %90 = tpu.concatenate %53, %57, %61, %67, %71, %75, %81, %85, %89 in 1 : vector<256x8xbf16>, vector<256x8xbf16>, vector<256x8xbf16>, vector<256x8xbf16>, vector<256x8xbf16>, vector<256x8xbf16>, vector<256x8xbf16>, vector<256x8xbf16>, vector<256x8xbf16> -> vector<256x72xbf16>
    %c1 = arith.constant 1 : index
    %c0_57 = arith.constant 0 : index
    %c0_58 = arith.constant 0 : index
    %91 = vector.load %arg3[%c1, %c0_57, %c0_58] : memref<4x72x2xbf16, #tpu.memory_space<vmem>>, vector<1x72x2xbf16>
    %92 = vector.shape_cast %91 : vector<1x72x2xbf16> to vector<72x2xbf16>
    %cst_59 = arith.constant dense<0.000000e+00> : vector<256x2xf32>
    %93 = tpu.matmul %90, %92, %cst_59 {dimension_numbers = #tpu.dot_dimension_numbers<[1], [0], [0], [1], [0, 0, 1, 1], [], []>} : vector<256x72xbf16>, vector<72x2xbf16>, vector<256x2xf32> -> vector<256x2xf32>
    %c4_i32_60 = arith.constant 4 : i32
    %94 = arith.addi %1, %c4_i32_60 : i32
    %c-3_i32 = arith.constant -3 : i32
    %95 = arith.addi %94, %c-3_i32 : i32
    %c0_61 = arith.constant 0 : index
    %96 = arith.index_cast %95 : i32 to index
    %c1_62 = arith.constant 1 : index
    %c0_63 = arith.constant 0 : index
    %97 = vector.load %arg2[%c0_61, %96, %c1_62, %c0_63] : memref<1x24x24x8xbf16, #tpu.memory_space<vmem>>, vector<1x16x16x8xbf16>
    %98 = vector.shape_cast %97 : vector<1x16x16x8xbf16> to vector<16x16x8xbf16>
    %99 = vector.shape_cast %98 : vector<16x16x8xbf16> to vector<256x8xbf16>
    %c0_64 = arith.constant 0 : index
    %100 = arith.index_cast %95 : i32 to index
    %c4_65 = arith.constant 4 : index
    %c0_66 = arith.constant 0 : index
    %101 = vector.load %arg2[%c0_64, %100, %c4_65, %c0_66] : memref<1x24x24x8xbf16, #tpu.memory_space<vmem>>, vector<1x16x16x8xbf16>
    %102 = vector.shape_cast %101 : vector<1x16x16x8xbf16> to vector<16x16x8xbf16>
    %103 = vector.shape_cast %102 : vector<16x16x8xbf16> to vector<256x8xbf16>
    %c0_67 = arith.constant 0 : index
    %104 = arith.index_cast %95 : i32 to index
    %c7 = arith.constant 7 : index
    %c0_68 = arith.constant 0 : index
    %105 = vector.load %arg2[%c0_67, %104, %c7, %c0_68] : memref<1x24x24x8xbf16, #tpu.memory_space<vmem>>, vector<1x16x16x8xbf16>
    %106 = vector.shape_cast %105 : vector<1x16x16x8xbf16> to vector<16x16x8xbf16>
    %107 = vector.shape_cast %106 : vector<16x16x8xbf16> to vector<256x8xbf16>
    %c4_i32_69 = arith.constant 4 : i32
    %108 = arith.addi %1, %c4_i32_69 : i32
    %c0_i32_70 = arith.constant 0 : i32
    %109 = arith.addi %108, %c0_i32_70 : i32
    %c0_71 = arith.constant 0 : index
    %110 = arith.index_cast %109 : i32 to index
    %c1_72 = arith.constant 1 : index
    %c0_73 = arith.constant 0 : index
    %111 = vector.load %arg2[%c0_71, %110, %c1_72, %c0_73] : memref<1x24x24x8xbf16, #tpu.memory_space<vmem>>, vector<1x16x16x8xbf16>
    %112 = vector.shape_cast %111 : vector<1x16x16x8xbf16> to vector<16x16x8xbf16>
    %113 = vector.shape_cast %112 : vector<16x16x8xbf16> to vector<256x8xbf16>
    %c0_74 = arith.constant 0 : index
    %114 = arith.index_cast %109 : i32 to index
    %c4_75 = arith.constant 4 : index
    %c0_76 = arith.constant 0 : index
    %115 = vector.load %arg2[%c0_74, %114, %c4_75, %c0_76] : memref<1x24x24x8xbf16, #tpu.memory_space<vmem>>, vector<1x16x16x8xbf16>
    %116 = vector.shape_cast %115 : vector<1x16x16x8xbf16> to vector<16x16x8xbf16>
    %117 = vector.shape_cast %116 : vector<16x16x8xbf16> to vector<256x8xbf16>
    %c0_77 = arith.constant 0 : index
    %118 = arith.index_cast %109 : i32 to index
    %c7_78 = arith.constant 7 : index
    %c0_79 = arith.constant 0 : index
    %119 = vector.load %arg2[%c0_77, %118, %c7_78, %c0_79] : memref<1x24x24x8xbf16, #tpu.memory_space<vmem>>, vector<1x16x16x8xbf16>
    %120 = vector.shape_cast %119 : vector<1x16x16x8xbf16> to vector<16x16x8xbf16>
    %121 = vector.shape_cast %120 : vector<16x16x8xbf16> to vector<256x8xbf16>
    %c4_i32_80 = arith.constant 4 : i32
    %122 = arith.addi %1, %c4_i32_80 : i32
    %c3_i32 = arith.constant 3 : i32
    %123 = arith.addi %122, %c3_i32 : i32
    %c0_81 = arith.constant 0 : index
    %124 = arith.index_cast %123 : i32 to index
    %c1_82 = arith.constant 1 : index
    %c0_83 = arith.constant 0 : index
    %125 = vector.load %arg2[%c0_81, %124, %c1_82, %c0_83] : memref<1x24x24x8xbf16, #tpu.memory_space<vmem>>, vector<1x16x16x8xbf16>
    %126 = vector.shape_cast %125 : vector<1x16x16x8xbf16> to vector<16x16x8xbf16>
    %127 = vector.shape_cast %126 : vector<16x16x8xbf16> to vector<256x8xbf16>
    %c0_84 = arith.constant 0 : index
    %128 = arith.index_cast %123 : i32 to index
    %c4_85 = arith.constant 4 : index
    %c0_86 = arith.constant 0 : index
    %129 = vector.load %arg2[%c0_84, %128, %c4_85, %c0_86] : memref<1x24x24x8xbf16, #tpu.memory_space<vmem>>, vector<1x16x16x8xbf16>
    %130 = vector.shape_cast %129 : vector<1x16x16x8xbf16> to vector<16x16x8xbf16>
    %131 = vector.shape_cast %130 : vector<16x16x8xbf16> to vector<256x8xbf16>
    %c0_87 = arith.constant 0 : index
    %132 = arith.index_cast %123 : i32 to index
    %c7_88 = arith.constant 7 : index
    %c0_89 = arith.constant 0 : index
    %133 = vector.load %arg2[%c0_87, %132, %c7_88, %c0_89] : memref<1x24x24x8xbf16, #tpu.memory_space<vmem>>, vector<1x16x16x8xbf16>
    %134 = vector.shape_cast %133 : vector<1x16x16x8xbf16> to vector<16x16x8xbf16>
    %135 = vector.shape_cast %134 : vector<16x16x8xbf16> to vector<256x8xbf16>
    %136 = tpu.concatenate %99, %103, %107, %113, %117, %121, %127, %131, %135 in 1 : vector<256x8xbf16>, vector<256x8xbf16>, vector<256x8xbf16>, vector<256x8xbf16>, vector<256x8xbf16>, vector<256x8xbf16>, vector<256x8xbf16>, vector<256x8xbf16>, vector<256x8xbf16> -> vector<256x72xbf16>
    %c2_90 = arith.constant 2 : index
    %c0_91 = arith.constant 0 : index
    %c0_92 = arith.constant 0 : index
    %137 = vector.load %arg3[%c2_90, %c0_91, %c0_92] : memref<4x72x2xbf16, #tpu.memory_space<vmem>>, vector<1x72x2xbf16>
    %138 = vector.shape_cast %137 : vector<1x72x2xbf16> to vector<72x2xbf16>
    %cst_93 = arith.constant dense<0.000000e+00> : vector<256x2xf32>
    %139 = tpu.matmul %136, %138, %cst_93 {dimension_numbers = #tpu.dot_dimension_numbers<[1], [0], [0], [1], [0, 0, 1, 1], [], []>} : vector<256x72xbf16>, vector<72x2xbf16>, vector<256x2xf32> -> vector<256x2xf32>
    %c4_i32_94 = arith.constant 4 : i32
    %140 = arith.addi %1, %c4_i32_94 : i32
    %c-4_i32 = arith.constant -4 : i32
    %141 = arith.addi %140, %c-4_i32 : i32
    %c0_95 = arith.constant 0 : index
    %142 = arith.index_cast %141 : i32 to index
    %c0_96 = arith.constant 0 : index
    %c0_97 = arith.constant 0 : index
    %143 = vector.load %arg2[%c0_95, %142, %c0_96, %c0_97] : memref<1x24x24x8xbf16, #tpu.memory_space<vmem>>, vector<1x16x16x8xbf16>
    %144 = vector.shape_cast %143 : vector<1x16x16x8xbf16> to vector<16x16x8xbf16>
    %145 = vector.shape_cast %144 : vector<16x16x8xbf16> to vector<256x8xbf16>
    %c0_98 = arith.constant 0 : index
    %146 = arith.index_cast %141 : i32 to index
    %c4_99 = arith.constant 4 : index
    %c0_100 = arith.constant 0 : index
    %147 = vector.load %arg2[%c0_98, %146, %c4_99, %c0_100] : memref<1x24x24x8xbf16, #tpu.memory_space<vmem>>, vector<1x16x16x8xbf16>
    %148 = vector.shape_cast %147 : vector<1x16x16x8xbf16> to vector<16x16x8xbf16>
    %149 = vector.shape_cast %148 : vector<16x16x8xbf16> to vector<256x8xbf16>
    %c0_101 = arith.constant 0 : index
    %150 = arith.index_cast %141 : i32 to index
    %c8 = arith.constant 8 : index
    %c0_102 = arith.constant 0 : index
    %151 = vector.load %arg2[%c0_101, %150, %c8, %c0_102] : memref<1x24x24x8xbf16, #tpu.memory_space<vmem>>, vector<1x16x16x8xbf16>
    %152 = vector.shape_cast %151 : vector<1x16x16x8xbf16> to vector<16x16x8xbf16>
    %153 = vector.shape_cast %152 : vector<16x16x8xbf16> to vector<256x8xbf16>
    %c4_i32_103 = arith.constant 4 : i32
    %154 = arith.addi %1, %c4_i32_103 : i32
    %c0_i32_104 = arith.constant 0 : i32
    %155 = arith.addi %154, %c0_i32_104 : i32
    %c0_105 = arith.constant 0 : index
    %156 = arith.index_cast %155 : i32 to index
    %c0_106 = arith.constant 0 : index
    %c0_107 = arith.constant 0 : index
    %157 = vector.load %arg2[%c0_105, %156, %c0_106, %c0_107] : memref<1x24x24x8xbf16, #tpu.memory_space<vmem>>, vector<1x16x16x8xbf16>
    %158 = vector.shape_cast %157 : vector<1x16x16x8xbf16> to vector<16x16x8xbf16>
    %159 = vector.shape_cast %158 : vector<16x16x8xbf16> to vector<256x8xbf16>
    %c0_108 = arith.constant 0 : index
    %160 = arith.index_cast %155 : i32 to index
    %c4_109 = arith.constant 4 : index
    %c0_110 = arith.constant 0 : index
    %161 = vector.load %arg2[%c0_108, %160, %c4_109, %c0_110] : memref<1x24x24x8xbf16, #tpu.memory_space<vmem>>, vector<1x16x16x8xbf16>
    %162 = vector.shape_cast %161 : vector<1x16x16x8xbf16> to vector<16x16x8xbf16>
    %163 = vector.shape_cast %162 : vector<16x16x8xbf16> to vector<256x8xbf16>
    %c0_111 = arith.constant 0 : index
    %164 = arith.index_cast %155 : i32 to index
    %c8_112 = arith.constant 8 : index
    %c0_113 = arith.constant 0 : index
    %165 = vector.load %arg2[%c0_111, %164, %c8_112, %c0_113] : memref<1x24x24x8xbf16, #tpu.memory_space<vmem>>, vector<1x16x16x8xbf16>
    %166 = vector.shape_cast %165 : vector<1x16x16x8xbf16> to vector<16x16x8xbf16>
    %167 = vector.shape_cast %166 : vector<16x16x8xbf16> to vector<256x8xbf16>
    %c4_i32_114 = arith.constant 4 : i32
    %168 = arith.addi %1, %c4_i32_114 : i32
    %c4_i32_115 = arith.constant 4 : i32
    %169 = arith.addi %168, %c4_i32_115 : i32
    %c0_116 = arith.constant 0 : index
    %170 = arith.index_cast %169 : i32 to index
    %c0_117 = arith.constant 0 : index
    %c0_118 = arith.constant 0 : index
    %171 = vector.load %arg2[%c0_116, %170, %c0_117, %c0_118] : memref<1x24x24x8xbf16, #tpu.memory_space<vmem>>, vector<1x16x16x8xbf16>
    %172 = vector.shape_cast %171 : vector<1x16x16x8xbf16> to vector<16x16x8xbf16>
    %173 = vector.shape_cast %172 : vector<16x16x8xbf16> to vector<256x8xbf16>
    %c0_119 = arith.constant 0 : index
    %174 = arith.index_cast %169 : i32 to index
    %c4_120 = arith.constant 4 : index
    %c0_121 = arith.constant 0 : index
    %175 = vector.load %arg2[%c0_119, %174, %c4_120, %c0_121] : memref<1x24x24x8xbf16, #tpu.memory_space<vmem>>, vector<1x16x16x8xbf16>
    %176 = vector.shape_cast %175 : vector<1x16x16x8xbf16> to vector<16x16x8xbf16>
    %177 = vector.shape_cast %176 : vector<16x16x8xbf16> to vector<256x8xbf16>
    %c0_122 = arith.constant 0 : index
    %178 = arith.index_cast %169 : i32 to index
    %c8_123 = arith.constant 8 : index
    %c0_124 = arith.constant 0 : index
    %179 = vector.load %arg2[%c0_122, %178, %c8_123, %c0_124] : memref<1x24x24x8xbf16, #tpu.memory_space<vmem>>, vector<1x16x16x8xbf16>
    %180 = vector.shape_cast %179 : vector<1x16x16x8xbf16> to vector<16x16x8xbf16>
    %181 = vector.shape_cast %180 : vector<16x16x8xbf16> to vector<256x8xbf16>
    %182 = tpu.concatenate %145, %149, %153, %159, %163, %167, %173, %177, %181 in 1 : vector<256x8xbf16>, vector<256x8xbf16>, vector<256x8xbf16>, vector<256x8xbf16>, vector<256x8xbf16>, vector<256x8xbf16>, vector<256x8xbf16>, vector<256x8xbf16>, vector<256x8xbf16> -> vector<256x72xbf16>
    %c3_125 = arith.constant 3 : index
    %c0_126 = arith.constant 0 : index
    %c0_127 = arith.constant 0 : index
    %183 = vector.load %arg3[%c3_125, %c0_126, %c0_127] : memref<4x72x2xbf16, #tpu.memory_space<vmem>>, vector<1x72x2xbf16>
    %184 = vector.shape_cast %183 : vector<1x72x2xbf16> to vector<72x2xbf16>
    %cst_128 = arith.constant dense<0.000000e+00> : vector<256x2xf32>
    %185 = tpu.matmul %182, %184, %cst_128 {dimension_numbers = #tpu.dot_dimension_numbers<[1], [0], [0], [1], [0, 0, 1, 1], [], []>} : vector<256x72xbf16>, vector<72x2xbf16>, vector<256x2xf32> -> vector<256x2xf32>
    %186 = tpu.concatenate %47, %93, %139, %185 in 1 : vector<256x2xf32>, vector<256x2xf32>, vector<256x2xf32>, vector<256x2xf32> -> vector<256x8xf32>
    %c0_129 = arith.constant 0 : index
    %c0_130 = arith.constant 0 : index
    %187 = vector.load %arg4[%c0_129, %c0_130] : memref<1x8xf32, #tpu.memory_space<vmem>>, vector<1x8xf32>
    %188 = vector.broadcast %187 : vector<1x8xf32> to vector<256x8xf32>
    %189 = arith.addf %186, %188 : vector<256x8xf32>
    %cst_131 = arith.constant 0.000000e+00 : f32
    %190 = vector.broadcast %cst_131 : f32 to vector<256x8xf32>
    %191 = arith.maximumf %189, %190 : vector<256x8xf32>
    %192 = vector.shape_cast %191 : vector<256x8xf32> to vector<1x16x16x8xf32>
    %c0_132 = arith.constant 0 : index
    %c0_133 = arith.constant 0 : index
    %c0_134 = arith.constant 0 : index
    %c0_135 = arith.constant 0 : index
    %193 = vector.load %arg5[%c0_132, %c0_133, %c0_134, %c0_135] : memref<1x16x16x8xf32, #tpu.memory_space<vmem>>, vector<1x16x16x8xf32>
    tpu.vector_store %arg5[%c0_132, %c0_133, %c0_134, %c0_135], %192 {strides = array<i32>} : memref<1x16x16x8xf32, #tpu.memory_space<vmem>>, vector<1x16x16x8xf32>,
    return
  }
  func.func @transform_0(%arg0: i32, %arg1: i32) -> (i32, i32, i32, i32) {
    %c0_i32 = arith.constant 0 : i32
    %c0_i32_0 = arith.constant 0 : i32
    %c0_i32_1 = arith.constant 0 : i32
    %c0_i32_2 = arith.constant 0 : i32
    return %arg0, %c0_i32, %c0_i32_0, %c0_i32_1 : i32, i32, i32, i32
  }
  func.func @transform_1(%arg0: i32, %arg1: i32) -> (i32, i32, i32) {
    %c0_i32 = arith.constant 0 : i32
    %c0_i32_0 = arith.constant 0 : i32
    %c0_i32_1 = arith.constant 0 : i32
    %c0_i32_2 = arith.constant 0 : i32
    return %c0_i32, %c0_i32_0, %c0_i32_1 : i32, i32, i32
  }
  func.func @transform_2(%arg0: i32, %arg1: i32) -> (i32, i32) {
    %c0_i32 = arith.constant 0 : i32
    %c0_i32_0 = arith.constant 0 : i32
    %c0_i32_1 = arith.constant 0 : i32
    return %c0_i32, %c0_i32_0 : i32, i32
  }
  func.func @transform_3(%arg0: i32, %arg1: i32) -> (i32, i32, i32, i32) {
    %c0_i32 = arith.constant 0 : i32
    %c0_i32_0 = arith.constant 0 : i32
    %c0_i32_1 = arith.constant 0 : i32
    return %arg0, %arg1, %c0_i32, %c0_i32_0 : i32, i32, i32, i32
  }
}

</mosaic_0001>

<llo_original>
// kernel: tpu_custom_call.1
$region0: #{tpu_custom_call.1}
  #allocation0 [shape = 'u32[]', space=smem, size = 0x4, offset = 0x4, fixed_abs, tag = 'smem constant byte address 0x4 - core index']
  #allocation1 [shape = 'u32[144,128]{1,0:T(1,128)}', space=vmem, size = 0x12000, scoped, tag = 'internal scratch']
  %s0 = inlined_call_operand.vmem [shape: bf16[2,24,24,8], index: 0, kind: input, shape index: {}]
  %s1 = inlined_call_operand.vmem [shape: bf16[4,72,2], index: 1, kind: input, shape index: {}]
  %s2 = inlined_call_operand.vmem [shape: f32[1,8], index: 2, kind: input, shape index: {}]
  %s3 = inlined_call_operand.vmem [shape: f32[2,16,16,8], index: 3, kind: output, shape index: {}]
  %s4 = sld [smem:[#allocation0]]
  $region45: #{tpu_custom_call.1} parent=0
    _
  %s6 = ssub.s32 1, %s4
  %s7 = scalar_select 0, %s6, %s4
  loop: start=0, step=1, limit=4
  $region2: #{tpu_custom_call.1} parent=0 // loop_pre_header
    _
  $region3: #{tpu_custom_call.1} parent=0 // loop_header
    %s9 = sphi 0, %s13
    %p10 = scmp.ge.s32.totalorder %s9, 4
    %s16 = sphi 0, %s28
    %s17 = sphi 0, %s24
    %s18 = sphi 0, %s16
    %s19 = sphi 0, %s17
    %s20 = sphi 0, %s18
    %s21 = sphi 0, %s19
    %s31 = sphi 0, %s33
    %s34 = sphi 0, %s31
    %s35 = sphi 0, %s34
    %s51 = sphi 0, %s35
    %s55 = sphi 0, %s55
    %s57 = sphi 0, %s55
    %s58 = sphi 0, %s57
    %s72 = sphi 0, %s58
    %s76 = sphi 0, %s76
    %s78 = sphi 0, %s76
    %s79 = sphi 0, %s78
    %s93 = sphi 0, %s79
    %s101 = sphi 0, %s103
    %s104 = sphi 0, %s101
    %s105 = sphi 0, %s104
    %s121 = sphi 0, %s105
  $region4: #{tpu_custom_call.1} parent=0 // loop_header_branch
    %12 = sbr.rel (%p10) target = $region8
  $region5: #{tpu_custom_call.1} parent=0 // loop_body
    %s14 = ssub.s32 %s9, 1
    %s15 = ssub.s32 %s9, 2
    %s22 = sadd.s32 1, %s17
    %p23 = scmp.ge.s32.totalorder %s22, 1
    %s24 = scalar_select %p23, 0, %s22
    %s25 = sadd.s32 1, %s16
    %s26 = scalar_select %p23, %s25, %s16
    %p27 = scmp.ge.s32.totalorder %s26, 2
    %s28 = scalar_select %p27, 0, %s26
    %s29 = ssub.s32 %s16, %s28
    %p30 = scmp.eq.s32.totalorder %s29, 0
    %s32 = sadd.s32 %s31, 1
    %s33 = scalar_select %p30, %s31, %s32
    %p36 = pneg %p30
    %p37 = scmp.eq.s32.totalorder %s9, 1
    %p38 = por %p36, %p37
    %p39 = scmp.ne.s32.totalorder %s31, %s34
    %p40 = scmp.eq.s32.totalorder %s9, 0
    %p41 = por %p39, %p40
    %p42 = scmp.ne.s32.totalorder %s31, %s34
    %p43 = scmp.eq.s32.totalorder %s14, 1
    %p44 = por %p42, %p43
    %p45 = scmp.ne.s32.totalorder %s34, %s35
    %p46 = scmp.eq.s32.totalorder %s14, 0
    %p47 = por %p45, %p46
    %p48 = scmp.ne.s32.totalorder %s34, %s35
    %p49 = scmp.eq.s32.totalorder %s15, 1
    %p50 = por %p48, %p49
    %p52 = scmp.ne.s32.totalorder %s35, %s51
    %p53 = scmp.eq.s32.totalorder %s15, 0
    %p54 = por %p52, %p53
    %s56 = sadd.s32 %s55, 1
    %p59 = scmp.eq.s32.totalorder %s9, 1
    %p60 = scmp.ne.s32.totalorder %s55, %s57
    %p61 = scmp.eq.s32.totalorder %s9, 0
    %p62 = por %p60, %p61
    %p63 = scmp.ne.s32.totalorder %s55, %s57
    %p64 = scmp.eq.s32.totalorder %s14, 1
    %p65 = por %p63, %p64
    %p66 = scmp.ne.s32.totalorder %s57, %s58
    %p67 = scmp.eq.s32.totalorder %s14, 0
    %p68 = por %p66, %p67
    %p69 = scmp.ne.s32.totalorder %s57, %s58
    %p70 = scmp.eq.s32.totalorder %s15, 1
    %p71 = por %p69, %p70
    %p73 = scmp.ne.s32.totalorder %s58, %s72
    %p74 = scmp.eq.s32.totalorder %s15, 0
    %p75 = por %p73, %p74
    %s77 = sadd.s32 %s76, 1
    %p80 = scmp.eq.s32.totalorder %s9, 1
    %p81 = scmp.ne.s32.totalorder %s76, %s78
    %p82 = scmp.eq.s32.totalorder %s9, 0
    %p83 = por %p81, %p82
    %p84 = scmp.ne.s32.totalorder %s76, %s78
    %p85 = scmp.eq.s32.totalorder %s14, 1
    %p86 = por %p84, %p85
    %p87 = scmp.ne.s32.totalorder %s78, %s79
    %p88 = scmp.eq.s32.totalorder %s14, 0
    %p89 = por %p87, %p88
    %p90 = scmp.ne.s32.totalorder %s78, %s79
    %p91 = scmp.eq.s32.totalorder %s15, 1
    %p92 = por %p90, %p91
    %p94 = scmp.ne.s32.totalorder %s79, %s93
    %p95 = scmp.eq.s32.totalorder %s15, 0
    %p96 = por %p94, %p95
    %s97 = ssub.s32 %s16, %s28
    %s98 = ssub.s32 %s17, %s24
    %s99 = sor.u32 %s97, %s98
    %p100 = scmp.eq.s32.totalorder %s99, 0
    %s102 = sadd.s32 %s101, 1
    %s103 = scalar_select %p100, %s101, %s102
    %p106 = pneg %p100
    %p107 = scmp.eq.s32.totalorder %s9, 1
    %p108 = por %p106, %p107
    %p109 = scmp.ne.s32.totalorder %s101, %s104
    %p110 = scmp.eq.s32.totalorder %s9, 0
    %p111 = por %p109, %p110
    %p112 = scmp.ne.s32.totalorder %s101, %s104
    %p113 = scmp.eq.s32.totalorder %s14, 1
    %p114 = por %p112, %p113
    %p115 = scmp.ne.s32.totalorder %s104, %s105
    %p116 = scmp.eq.s32.totalorder %s14, 0
    %p117 = por %p115, %p116
    %p118 = scmp.ne.s32.totalorder %s104, %s105
    %p119 = scmp.eq.s32.totalorder %s15, 1
    %p120 = por %p118, %p119
    %p122 = scmp.ne.s32.totalorder %s105, %s121
    %p123 = scmp.eq.s32.totalorder %s15, 0
    %p124 = por %p122, %p123
    %p125 = scmp.le.s32.totalorder 1, %s9
    %p126 = scmp.lt.s32.totalorder %s9, 3
    %p127 = pnand %p125, %p126
    %p128 = pneg %p127
    // Predicated region
    $region9: #{tpu_custom_call.1} parent=5 // pred_check
      _
    $region10: #{tpu_custom_call.1} parent=5 // pred_check_branch
      %130 = sbr.rel (%p127) target = $region12
    $region11: #{tpu_custom_call.1} parent=5 // pred_region
      %s131 = ssub.s32 %s9, 1
      // Predicated region
      $region13: #{tpu_custom_call.1} parent=11 // pred_check
        %p132 = pneg %p68
      $region14: #{tpu_custom_call.1} parent=11 // pred_check_branch
        %134 = sbr.rel (%p132) target = $region16
      $region15: #{tpu_custom_call.1} parent=11 // pred_region
        _
      $region16: #{tpu_custom_call.1} parent=11 // pred_fallthru
        _
      // Predicated region
      $region17: #{tpu_custom_call.1} parent=11 // pred_check
        %p135 = pneg %p89
      $region18: #{tpu_custom_call.1} parent=11 // pred_check_branch
        %137 = sbr.rel (%p135) target = $region20
      $region19: #{tpu_custom_call.1} parent=11 // pred_region
        _
      $region20: #{tpu_custom_call.1} parent=11 // pred_fallthru
        _
    $region12: #{tpu_custom_call.1} parent=5 // pred_fallthru
      _
    %p138 = scmp.lt.s32.totalorder %s9, 2
    // Predicated region
    $region21: #{tpu_custom_call.1} parent=5 // pred_check
      %p139 = pneg %p138
    $region22: #{tpu_custom_call.1} parent=5 // pred_check_branch
      %141 = sbr.rel (%p139) target = $region24
    $region23: #{tpu_custom_call.1} parent=5 // pred_region
      // Predicated region
      $region25: #{tpu_custom_call.1} parent=23 // pred_check
        %p142 = pneg %p41
      $region26: #{tpu_custom_call.1} parent=23 // pred_check_branch
        %144 = sbr.rel (%p142) target = $region28
      $region27: #{tpu_custom_call.1} parent=23 // pred_region
        %p145 = scmp.lt.s32.totalorder %s16, 1
        %s146 = scalar_select %p145, %s16, 1
        %s147 = smul.addr %s146, 72
        %s148 = smul.addr %s147, 4
        %s149 = scalar_lea.vmem %s0, %s148
      $region28: #{tpu_custom_call.1} parent=23 // pred_fallthru
        _
    $region24: #{tpu_custom_call.1} parent=5 // pred_fallthru
      _
    %p150 = scmp.le.s32.totalorder 1, %s9
    %p151 = scmp.lt.s32.totalorder %s9, 3
    %p152 = pnand %p150, %p151
    %p153 = pneg %p152
    // Predicated region
    $region29: #{tpu_custom_call.1} parent=5 // pred_check
      _
    $region30: #{tpu_custom_call.1} parent=5 // pred_check_branch
      %155 = sbr.rel (%p152) target = $region32
    $region31: #{tpu_custom_call.1} parent=5 // pred_region
      %s156 = ssub.s32 %s9, 1
      %p157 = scmp.lt.s32.totalorder %s18, 1
      %s158 = scalar_select %p157, %s18, 1
      %s159 = smul.addr %s158, 72
      %s160 = smul.addr %s159, 4
      %s161 = scalar_lea.vmem %s0, %s160
      %p162 = pneg %p47
      %p163 = pneg %p44
      %p164 = pneg %p68
      %p165 = pneg %p65
      %p166 = pneg %p89
      %p167 = pneg %p86
      %p168 = pneg %p117
      %p169 = pneg %p114
      %s170 = smul.u32 16, %s19
      %p171 = scmp.lt.s32.totalorder %s18, 1
      %s172 = scalar_select %p171, %s18, 1
      %p173 = scmp.lt.s32.totalorder %s170, 15
      %s174 = scalar_select %p173, %s170, 15
      %s175 = smul.addr %s174, 2
      %s176 = smul.addr %s172, 32
      %s177 = sadd.s32 %s175, %s176
      %s178 = smul.addr %s177, 8
      %s179 = scalar_lea.vmem %s3, %s178
      %p180 = scmp.lt.s32.totalorder %s18, 1
      %s181 = scalar_select %p180, %s18, 1
      %s182 = smul.addr %s181, 72
      %s183 = smul.addr %s182, 4
      %s184 = scalar_lea.vmem %s0, %s183
      %s185 = smul.u32 16, %s19
      %p186 = scmp.lt.s32.totalorder %s18, 1
      %s187 = scalar_select %p186, %s18, 1
      %p188 = scmp.lt.s32.totalorder %s185, 15
      %s189 = scalar_select %p188, %s185, 15
      %s190 = smul.addr %s189, 2
      %s191 = smul.addr %s187, 32
      %s192 = sadd.s32 %s190, %s191
      %s193 = smul.addr %s192, 8
      %s194 = scalar_lea.vmem %s3, %s193
      %s195 = smul.u32 16, %s19
      %s197 = smul.u32 %s19, 16
      %s198 = sadd.s32 %s197, 3
      %s199 = smul.u32 %s198, 3
      %s200 = smul.addr %s199, 4
      %s201 = scalar_lea.vmem %s184, %s200
      %v202 = vld [vmem:[%s201] sm:$0xe]
      %v203 = vld [vmem:[%s201 + $0x4] sm:$0xf]
      %v204 = vld [vmem:[%s201 + $0x8] sm:$0x3]
      %v205 = vld [vmem:[%s201 + $0xc] sm:$0xe]
      %v206 = vld [vmem:[%s201 + $0x10] sm:$0xf]
      %v207 = vld [vmem:[%s201 + $0x14] sm:$0x3]
      %v208 = vld [vmem:[%s201 + $0x18] sm:$0xe]
      %v209 = vld [vmem:[%s201 + $0x1c] sm:$0xf]
      %v210 = vld [vmem:[%s201 + $0x20] sm:$0x3]
      %v211 = vld [vmem:[%s201 + $0x24] sm:$0xe]
      %v212 = vld [vmem:[%s201 + $0x28] sm:$0xf]
      %v213 = vld [vmem:[%s201 + $0x2c] sm:$0x3]
      %v214 = vld [vmem:[%s201 + $0x30] sm:$0xe]
      %v215 = vld [vmem:[%s201 + $0x34] sm:$0xf]
      %v216 = vld [vmem:[%s201 + $0x38] sm:$0x3]
      %v217 = vld [vmem:[%s201 + $0x3c] sm:$0xe]
      %v218 = vld [vmem:[%s201 + $0x40] sm:$0xf]
      %v219 = vld [vmem:[%s201 + $0x44] sm:$0x3]
      %v220 = vld [vmem:[%s201 + $0x48] sm:$0xe]
      %v221 = vld [vmem:[%s201 + $0x4c] sm:$0xf]
      %v222 = vld [vmem:[%s201 + $0x50] sm:$0x3]
      %v223 = vld [vmem:[%s201 + $0x54] sm:$0xe]
      %v224 = vld [vmem:[%s201 + $0x58] sm:$0xf]
      %v225 = vld [vmem:[%s201 + $0x5c] sm:$0x3]
      %v226 = vld [vmem:[%s201 + $0x60] sm:$0xe]
      %v227 = vld [vmem:[%s201 + $0x64] sm:$0xf]
      %v228 = vld [vmem:[%s201 + $0x68] sm:$0x3]
      %v229 = vld [vmem:[%s201 + $0x6c] sm:$0xe]
      %v230 = vld [vmem:[%s201 + $0x70] sm:$0xf]
      %v231 = vld [vmem:[%s201 + $0x74] sm:$0x3]
      %v232 = vld [vmem:[%s201 + $0x78] sm:$0xe]
      %v233 = vld [vmem:[%s201 + $0x7c] sm:$0xf]
      %v234 = vld [vmem:[%s201 + $0x80] sm:$0x3]
      %v235 = vld [vmem:[%s201 + $0x84] sm:$0xe]
      %v236 = vld [vmem:[%s201 + $0x88] sm:$0xf]
      %v237 = vld [vmem:[%s201 + $0x8c] sm:$0x3]
      %v238 = vld [vmem:[%s201 + $0x90] sm:$0xe]
      %v239 = vld [vmem:[%s201 + $0x94] sm:$0xf]
      %v240 = vld [vmem:[%s201 + $0x98] sm:$0x3]
      %v241 = vld [vmem:[%s201 + $0x9c] sm:$0xe]
      %v242 = vld [vmem:[%s201 + $0xa0] sm:$0xf]
      %v243 = vld [vmem:[%s201 + $0xa4] sm:$0x3]
      %v244 = vld [vmem:[%s201 + $0xa8] sm:$0xe]
      %v245 = vld [vmem:[%s201 + $0xac] sm:$0xf]
      %v246 = vld [vmem:[%s201 + $0xb0] sm:$0x3]
      %v247 = vld [vmem:[%s201 + $0xb4] sm:$0xe]
      %v248 = vld [vmem:[%s201 + $0xb8] sm:$0xf]
      %v249 = vld [vmem:[%s201 + $0xbc] sm:$0x3]
      %vm250 = vsmask.f32 2304
      %vm251 = vsmask.f32 6416
      %vm252 = vmor %vm250, %vm251
      %v254 = vshrl.u32 %v202, 16
      %v256 = vrot.slane %v254, 5
      %v257 = vshll.u32 %v202, 16
      %v259 = vrot.slane %v257, 6
      %v260 = vor.u32 %v256, %v259
      %v261 = vrot.slane %v260, 4
      %v263 = vshrl.u32 %v203, 16
      %v265 = vrot.slane %v263, 5
      %v266 = vshll.u32 %v203, 16
      %v268 = vrot.slane %v266, 6
      %v269 = vor.u32 %v265, %v268
      %v270 = vsel %vm252, %v261, %v269
      %v271 = vrot.slane %v269, 4
      %v273 = vshrl.u32 %v204, 16
      %v275 = vrot.slane %v273, 5
      %v276 = vshll.u32 %v204, 16
      %v278 = vrot.slane %v276, 6
      %v279 = vor.u32 %v275, %v278
      %v280 = vsel %vm252, %v271, %v279
      %v282 = vshrl.u32 %v205, 16
      %v284 = vrot.slane %v282, 5
      %v285 = vshll.u32 %v205, 16
      %v287 = vrot.slane %v285, 6
      %v288 = vor.u32 %v284, %v287
      %v289 = vrot.slane %v288, 4
      %v291 = vshrl.u32 %v206, 16
      %v293 = vrot.slane %v291, 5
      %v294 = vshll.u32 %v206, 16
      %v296 = vrot.slane %v294, 6
      %v297 = vor.u32 %v293, %v296
      %v298 = vsel %vm252, %v289, %v297
      %v299 = vrot.slane %v297, 4
      %v301 = vshrl.u32 %v207, 16
      %v303 = vrot.slane %v301, 5
      %v304 = vshll.u32 %v207, 16
      %v306 = vrot.slane %v304, 6
      %v307 = vor.u32 %v303, %v306
      %v308 = vsel %vm252, %v299, %v307
      %v310 = vshrl.u32 %v208, 16
      %v312 = vrot.slane %v310, 5
      %v313 = vshll.u32 %v208, 16
      %v315 = vrot.slane %v313, 6
      %v316 = vor.u32 %v312, %v315
      %v317 = vrot.slane %v316, 4
      %v319 = vshrl.u32 %v209, 16
      %v321 = vrot.slane %v319, 5
      %v322 = vshll.u32 %v209, 16
      %v324 = vrot.slane %v322, 6
      %v325 = vor.u32 %v321, %v324
      %v326 = vsel %vm252, %v317, %v325
      %v327 = vrot.slane %v325, 4
      %v329 = vshrl.u32 %v210, 16
      %v331 = vrot.slane %v329, 5
      %v332 = vshll.u32 %v210, 16
      %v334 = vrot.slane %v332, 6
      %v335 = vor.u32 %v331, %v334
      %v336 = vsel %vm252, %v327, %v335
      %v338 = vshrl.u32 %v211, 16
      %v340 = vrot.slane %v338, 5
      %v341 = vshll.u32 %v211, 16
      %v343 = vrot.slane %v341, 6
      %v344 = vor.u32 %v340, %v343
      %v345 = vrot.slane %v344, 4
      %v347 = vshrl.u32 %v212, 16
      %v349 = vrot.slane %v347, 5
      %v350 = vshll.u32 %v212, 16
      %v352 = vrot.slane %v350, 6
      %v353 = vor.u32 %v349, %v352
      %v354 = vsel %vm252, %v345, %v353
      %v355 = vrot.slane %v353, 4
      %v357 = vshrl.u32 %v213, 16
      %v359 = vrot.slane %v357, 5
      %v360 = vshll.u32 %v213, 16
      %v362 = vrot.slane %v360, 6
      %v363 = vor.u32 %v359, %v362
      %v364 = vsel %vm252, %v355, %v363
      %v366 = vshrl.u32 %v214, 16
      %v368 = vrot.slane %v366, 5
      %v369 = vshll.u32 %v214, 16
      %v371 = vrot.slane %v369, 6
      %v372 = vor.u32 %v368, %v371
      %v373 = vrot.slane %v372, 4
      %v375 = vshrl.u32 %v215, 16
      %v377 = vrot.slane %v375, 5
      %v378 = vshll.u32 %v215, 16
      %v380 = vrot.slane %v378, 6
      %v381 = vor.u32 %v377, %v380
      %v382 = vsel %vm252, %v373, %v381
      %v383 = vrot.slane %v381, 4
      %v385 = vshrl.u32 %v216, 16
      %v387 = vrot.slane %v385, 5
      %v388 = vshll.u32 %v216, 16
      %v390 = vrot.slane %v388, 6
      %v391 = vor.u32 %v387, %v390
      %v392 = vsel %vm252, %v383, %v391
      %v394 = vshrl.u32 %v217, 16
      %v396 = vrot.slane %v394, 5
      %v397 = vshll.u32 %v217, 16
      %v399 = vrot.slane %v397, 6
      %v400 = vor.u32 %v396, %v399
      %v401 = vrot.slane %v400, 4
      %v403 = vshrl.u32 %v218, 16
      %v405 = vrot.slane %v403, 5
      %v406 = vshll.u32 %v218, 16
      %v408 = vrot.slane %v406, 6
      %v409 = vor.u32 %v405, %v408
      %v410 = vsel %vm252, %v401, %v409
      %v411 = vrot.slane %v409, 4
      %v413 = vshrl.u32 %v219, 16
      %v415 = vrot.slane %v413, 5
      %v416 = vshll.u32 %v219, 16
      %v418 = vrot.slane %v416, 6
      %v419 = vor.u32 %v415, %v418
      %v420 = vsel %vm252, %v411, %v419
      %v422 = vshrl.u32 %v220, 16
      %v424 = vrot.slane %v422, 5
      %v425 = vshll.u32 %v220, 16
      %v427 = vrot.slane %v425, 6
      %v428 = vor.u32 %v424, %v427
      %v429 = vrot.slane %v428, 4
      %v431 = vshrl.u32 %v221, 16
      %v433 = vrot.slane %v431, 5
      %v434 = vshll.u32 %v221, 16
      %v436 = vrot.slane %v434, 6
      %v437 = vor.u32 %v433, %v436
      %v438 = vsel %vm252, %v429, %v437
      %v439 = vrot.slane %v437, 4
      %v441 = vshrl.u32 %v222, 16
      %v443 = vrot.slane %v441, 5
      %v444 = vshll.u32 %v222, 16
      %v446 = vrot.slane %v444, 6
      %v447 = vor.u32 %v443, %v446
      %v448 = vsel %vm252, %v439, %v447
      %v450 = vshrl.u32 %v223, 16
      %v452 = vrot.slane %v450, 5
      %v453 = vshll.u32 %v223, 16
      %v455 = vrot.slane %v453, 6
      %v456 = vor.u32 %v452, %v455
      %v457 = vrot.slane %v456, 4
      %v459 = vshrl.u32 %v224, 16
      %v461 = vrot.slane %v459, 5
      %v462 = vshll.u32 %v224, 16
      %v464 = vrot.slane %v462, 6
      %v465 = vor.u32 %v461, %v464
      %v466 = vsel %vm252, %v457, %v465
      %v467 = vrot.slane %v465, 4
      %v469 = vshrl.u32 %v225, 16
      %v471 = vrot.slane %v469, 5
      %v472 = vshll.u32 %v225, 16
      %v474 = vrot.slane %v472, 6
      %v475 = vor.u32 %v471, %v474
      %v476 = vsel %vm252, %v467, %v475
      %v478 = vshrl.u32 %v226, 16
      %v480 = vrot.slane %v478, 5
      %v481 = vshll.u32 %v226, 16
      %v483 = vrot.slane %v481, 6
      %v484 = vor.u32 %v480, %v483
      %v485 = vrot.slane %v484, 4
      %v487 = vshrl.u32 %v227, 16
      %v489 = vrot.slane %v487, 5
      %v490 = vshll.u32 %v227, 16
      %v492 = vrot.slane %v490, 6
      %v493 = vor.u32 %v489, %v492
      %v494 = vsel %vm252, %v485, %v493
      %v495 = vrot.slane %v493, 4
      %v497 = vshrl.u32 %v228, 16
      %v499 = vrot.slane %v497, 5
      %v500 = vshll.u32 %v228, 16
      %v502 = vrot.slane %v500, 6
      %v503 = vor.u32 %v499, %v502
      %v504 = vsel %vm252, %v495, %v503
      %v506 = vshrl.u32 %v229, 16
      %v508 = vrot.slane %v506, 5
      %v509 = vshll.u32 %v229, 16
      %v511 = vrot.slane %v509, 6
      %v512 = vor.u32 %v508, %v511
      %v513 = vrot.slane %v512, 4
      %v515 = vshrl.u32 %v230, 16
      %v517 = vrot.slane %v515, 5
      %v518 = vshll.u32 %v230, 16
      %v520 = vrot.slane %v518, 6
      %v521 = vor.u32 %v517, %v520
      %v522 = vsel %vm252, %v513, %v521
      %v523 = vrot.slane %v521, 4
      %v525 = vshrl.u32 %v231, 16
      %v527 = vrot.slane %v525, 5
      %v528 = vshll.u32 %v231, 16
      %v530 = vrot.slane %v528, 6
      %v531 = vor.u32 %v527, %v530
      %v532 = vsel %vm252, %v523, %v531
      %v534 = vshrl.u32 %v232, 16
      %v536 = vrot.slane %v534, 5
      %v537 = vshll.u32 %v232, 16
      %v539 = vrot.slane %v537, 6
      %v540 = vor.u32 %v536, %v539
      %v541 = vrot.slane %v540, 4
      %v543 = vshrl.u32 %v233, 16
      %v545 = vrot.slane %v543, 5
      %v546 = vshll.u32 %v233, 16
      %v548 = vrot.slane %v546, 6
      %v549 = vor.u32 %v545, %v548
      %v550 = vsel %vm252, %v541, %v549
      %v551 = vrot.slane %v549, 4
      %v553 = vshrl.u32 %v234, 16
      %v555 = vrot.slane %v553, 5
      %v556 = vshll.u32 %v234, 16
      %v558 = vrot.slane %v556, 6
      %v559 = vor.u32 %v555, %v558
      %v560 = vsel %vm252, %v551, %v559
      %v562 = vshrl.u32 %v235, 16
      %v564 = vrot.slane %v562, 5
      %v565 = vshll.u32 %v235, 16
      %v567 = vrot.slane %v565, 6
      %v568 = vor.u32 %v564, %v567
      %v569 = vrot.slane %v568, 4
      %v571 = vshrl.u32 %v236, 16
      %v573 = vrot.slane %v571, 5
      %v574 = vshll.u32 %v236, 16
      %v576 = vrot.slane %v574, 6
      %v577 = vor.u32 %v573, %v576
      %v578 = vsel %vm252, %v569, %v577
      %v579 = vrot.slane %v577, 4
      %v581 = vshrl.u32 %v237, 16
      %v583 = vrot.slane %v581, 5
      %v584 = vshll.u32 %v237, 16
      %v586 = vrot.slane %v584, 6
      %v587 = vor.u32 %v583, %v586
      %v588 = vsel %vm252, %v579, %v587
      %v590 = vshrl.u32 %v238, 16
      %v592 = vrot.slane %v590, 5
      %v593 = vshll.u32 %v238, 16
      %v595 = vrot.slane %v593, 6
      %v596 = vor.u32 %v592, %v595
      %v597 = vrot.slane %v596, 4
      %v599 = vshrl.u32 %v239, 16
      %v601 = vrot.slane %v599, 5
      %v602 = vshll.u32 %v239, 16
      %v604 = vrot.slane %v602, 6
      %v605 = vor.u32 %v601, %v604
      %v606 = vsel %vm252, %v597, %v605
      %v607 = vrot.slane %v605, 4
      %v609 = vshrl.u32 %v240, 16
      %v611 = vrot.slane %v609, 5
      %v612 = vshll.u32 %v240, 16
      %v614 = vrot.slane %v612, 6
      %v615 = vor.u32 %v611, %v614
      %v616 = vsel %vm252, %v607, %v615
      %v618 = vshrl.u32 %v241, 16
      %v620 = vrot.slane %v618, 5
      %v621 = vshll.u32 %v241, 16
      %v623 = vrot.slane %v621, 6
      %v624 = vor.u32 %v620, %v623
      %v625 = vrot.slane %v624, 4
      %v627 = vshrl.u32 %v242, 16
      %v629 = vrot.slane %v627, 5
      %v630 = vshll.u32 %v242, 16
      %v632 = vrot.slane %v630, 6
      %v633 = vor.u32 %v629, %v632
      %v634 = vsel %vm252, %v625, %v633
      %v635 = vrot.slane %v633, 4
      %v637 = vshrl.u32 %v243, 16
      %v639 = vrot.slane %v637, 5
      %v640 = vshll.u32 %v243, 16
      %v642 = vrot.slane %v640, 6
      %v643 = vor.u32 %v639, %v642
      %v644 = vsel %vm252, %v635, %v643
      %v646 = vshrl.u32 %v244, 16
      %v648 = vrot.slane %v646, 5
      %v649 = vshll.u32 %v244, 16
      %v651 = vrot.slane %v649, 6
      %v652 = vor.u32 %v648, %v651
      %v653 = vrot.slane %v652, 4
      %v655 = vshrl.u32 %v245, 16
      %v657 = vrot.slane %v655, 5
      %v658 = vshll.u32 %v245, 16
      %v660 = vrot.slane %v658, 6
      %v661 = vor.u32 %v657, %v660
      %v662 = vsel %vm252, %v653, %v661
      %v663 = vrot.slane %v661, 4
      %v665 = vshrl.u32 %v246, 16
      %v667 = vrot.slane %v665, 5
      %v668 = vshll.u32 %v246, 16
      %v670 = vrot.slane %v668, 6
      %v671 = vor.u32 %v667, %v670
      %v672 = vsel %vm252, %v663, %v671
      %v674 = vshrl.u32 %v247, 16
      %v676 = vrot.slane %v674, 5
      %v677 = vshll.u32 %v247, 16
      %v679 = vrot.slane %v677, 6
      %v680 = vor.u32 %v676, %v679
      %v681 = vrot.slane %v680, 4
      %v683 = vshrl.u32 %v248, 16
      %v685 = vrot.slane %v683, 5
      %v686 = vshll.u32 %v248, 16
      %v688 = vrot.slane %v686, 6
      %v689 = vor.u32 %v685, %v688
      %v690 = vsel %vm252, %v681, %v689
      %v691 = vrot.slane %v689, 4
      %v693 = vshrl.u32 %v249, 16
      %v695 = vrot.slane %v693, 5
      %v696 = vshll.u32 %v249, 16
      %v698 = vrot.slane %v696, 6
      %v699 = vor.u32 %v695, %v698
      %v700 = vsel %vm252, %v691, %v699
      %v701 = vld [vmem:[%s201] sm:$0xc]
      %v702 = vld [vmem:[%s201 + $0xc] sm:$0xc]
      %v703 = vld [vmem:[%s201 + $0x18] sm:$0xc]
      %v704 = vld [vmem:[%s201 + $0x24] sm:$0xc]
      %v705 = vld [vmem:[%s201 + $0x30] sm:$0xc]
      %v706 = vld [vmem:[%s201 + $0x3c] sm:$0xc]
      %v707 = vld [vmem:[%s201 + $0x48] sm:$0xc]
      %v708 = vld [vmem:[%s201 + $0x54] sm:$0xc]
      %v709 = vld [vmem:[%s201 + $0x60] sm:$0xc]
      %v710 = vld [vmem:[%s201 + $0x6c] sm:$0xc]
      %v711 = vld [vmem:[%s201 + $0x78] sm:$0xc]
      %v712 = vld [vmem:[%s201 + $0x84] sm:$0xc]
      %v713 = vld [vmem:[%s201 + $0x90] sm:$0xc]
      %v714 = vld [vmem:[%s201 + $0x9c] sm:$0xc]
      %v715 = vld [vmem:[%s201 + $0xa8] sm:$0xc]
      %v716 = vld [vmem:[%s201 + $0xb4] sm:$0xc]
      %vm765 = vcmask 1041408
      %vm766 = vcmask 1045508
      %vm767 = vmor %vm765, %vm766
      %v768 = vrot.slane %v701, 6
      %v769 = vrot.slane %v768, 4
      %v770 = vrot.slane %v203, 6
      %v771 = vsel %vm767, %v769, %v770
      %v772 = vrot.slane %v770, 4
      %v773 = vrot.slane %v204, 6
      %v774 = vsel %vm767, %v772, %v773
      %v775 = vrot.slane %v702, 6
      %v776 = vrot.slane %v775, 4
      %v777 = vrot.slane %v206, 6
      %v778 = vsel %vm767, %v776, %v777
      %v779 = vrot.slane %v777, 4
      %v780 = vrot.slane %v207, 6
      %v781 = vsel %vm767, %v779, %v780
      %v782 = vrot.slane %v703, 6
      %v783 = vrot.slane %v782, 4
      %v784 = vrot.slane %v209, 6
      %v785 = vsel %vm767, %v783, %v784
      %v786 = vrot.slane %v784, 4
      %v787 = vrot.slane %v210, 6
      %v788 = vsel %vm767, %v786, %v787
      %v789 = vrot.slane %v704, 6
      %v790 = vrot.slane %v789, 4
      %v791 = vrot.slane %v212, 6
      %v792 = vsel %vm767, %v790, %v791
      %v793 = vrot.slane %v791, 4
      %v794 = vrot.slane %v213, 6
      %v795 = vsel %vm767, %v793, %v794
      %v796 = vrot.slane %v705, 6
      %v797 = vrot.slane %v796, 4
      %v798 = vrot.slane %v215, 6
      %v799 = vsel %vm767, %v797, %v798
      %v800 = vrot.slane %v798, 4
      %v801 = vrot.slane %v216, 6
      %v802 = vsel %vm767, %v800, %v801
      %v803 = vrot.slane %v706, 6
      %v804 = vrot.slane %v803, 4
      %v805 = vrot.slane %v218, 6
      %v806 = vsel %vm767, %v804, %v805
      %v807 = vrot.slane %v805, 4
      %v808 = vrot.slane %v219, 6
      %v809 = vsel %vm767, %v807, %v808
      %v810 = vrot.slane %v707, 6
      %v811 = vrot.slane %v810, 4
      %v812 = vrot.slane %v221, 6
      %v813 = vsel %vm767, %v811, %v812
      %v814 = vrot.slane %v812, 4
      %v815 = vrot.slane %v222, 6
      %v816 = vsel %vm767, %v814, %v815
      %v817 = vrot.slane %v708, 6
      %v818 = vrot.slane %v817, 4
      %v819 = vrot.slane %v224, 6
      %v820 = vsel %vm767, %v818, %v819
      %v821 = vrot.slane %v819, 4
      %v822 = vrot.slane %v225, 6
      %v823 = vsel %vm767, %v821, %v822
      %v824 = vrot.slane %v709, 6
      %v825 = vrot.slane %v824, 4
      %v826 = vrot.slane %v227, 6
      %v827 = vsel %vm767, %v825, %v826
      %v828 = vrot.slane %v826, 4
      %v829 = vrot.slane %v228, 6
      %v830 = vsel %vm767, %v828, %v829
      %v831 = vrot.slane %v710, 6
      %v832 = vrot.slane %v831, 4
      %v833 = vrot.slane %v230, 6
      %v834 = vsel %vm767, %v832, %v833
      %v835 = vrot.slane %v833, 4
      %v836 = vrot.slane %v231, 6
      %v837 = vsel %vm767, %v835, %v836
      %v838 = vrot.slane %v711, 6
      %v839 = vrot.slane %v838, 4
      %v840 = vrot.slane %v233, 6
      %v841 = vsel %vm767, %v839, %v840
      %v842 = vrot.slane %v840, 4
      %v843 = vrot.slane %v234, 6
      %v844 = vsel %vm767, %v842, %v843
      %v845 = vrot.slane %v712, 6
      %v846 = vrot.slane %v845, 4
      %v847 = vrot.slane %v236, 6
      %v848 = vsel %vm767, %v846, %v847
      %v849 = vrot.slane %v847, 4
      %v850 = vrot.slane %v237, 6
      %v851 = vsel %vm767, %v849, %v850
      %v852 = vrot.slane %v713, 6
      %v853 = vrot.slane %v852, 4
      %v854 = vrot.slane %v239, 6
      %v855 = vsel %vm767, %v853, %v854
      %v856 = vrot.slane %v854, 4
      %v857 = vrot.slane %v240, 6
      %v858 = vsel %vm767, %v856, %v857
      %v859 = vrot.slane %v714, 6
      %v860 = vrot.slane %v859, 4
      %v861 = vrot.slane %v242, 6
      %v862 = vsel %vm767, %v860, %v861
      %v863 = vrot.slane %v861, 4
      %v864 = vrot.slane %v243, 6
      %v865 = vsel %vm767, %v863, %v864
      %v866 = vrot.slane %v715, 6
      %v867 = vrot.slane %v866, 4
      %v868 = vrot.slane %v245, 6
      %v869 = vsel %vm767, %v867, %v868
      %v870 = vrot.slane %v868, 4
      %v871 = vrot.slane %v246, 6
      %v872 = vsel %vm767, %v870, %v871
      %v873 = vrot.slane %v716, 6
      %v874 = vrot.slane %v873, 4
      %v875 = vrot.slane %v248, 6
      %v876 = vsel %vm767, %v874, %v875
      %v877 = vrot.slane %v875, 4
      %v878 = vrot.slane %v249, 6
      %v879 = vsel %vm767, %v877, %v878
      %v880 = vld [vmem:[%s201 + $0x8] sm:$0x7]
      %v881 = vld [vmem:[%s201 + $0x14] sm:$0x7]
      %v882 = vld [vmem:[%s201 + $0x20] sm:$0x7]
      %v883 = vld [vmem:[%s201 + $0x2c] sm:$0x7]
      %v884 = vld [vmem:[%s201 + $0x38] sm:$0x7]
      %v885 = vld [vmem:[%s201 + $0x44] sm:$0x7]
      %v886 = vld [vmem:[%s201 + $0x50] sm:$0x7]
      %v887 = vld [vmem:[%s201 + $0x5c] sm:$0x7]
      %v888 = vld [vmem:[%s201 + $0x68] sm:$0x7]
      %v889 = vld [vmem:[%s201 + $0x74] sm:$0x7]
      %v890 = vld [vmem:[%s201 + $0x80] sm:$0x7]
      %v891 = vld [vmem:[%s201 + $0x8c] sm:$0x7]
      %v892 = vld [vmem:[%s201 + $0x98] sm:$0x7]
      %v893 = vld [vmem:[%s201 + $0xa4] sm:$0x7]
      %v894 = vld [vmem:[%s201 + $0xb0] sm:$0x7]
      %v895 = vld [vmem:[%s201 + $0xbc] sm:$0x7]
      %vm896 = vsmask.f32 1280
      %vm897 = vsmask.f32 5392
      %vm898 = vmor %vm896, %vm897
      %v900 = vshrl.u32 %v701, 16
      %v902 = vrot.slane %v900, 6
      %v903 = vshll.u32 %v701, 16
      %v905 = vrot.slane %v903, 7
      %v906 = vor.u32 %v902, %v905
      %v907 = vrot.slane %v906, 4
      %v908 = vrot.slane %v263, 6
      %v909 = vrot.slane %v266, 7
      %v910 = vor.u32 %v908, %v909
      %v911 = vsel %vm898, %v907, %v910
      %v912 = vrot.slane %v910, 4
      %v914 = vshrl.u32 %v880, 16
      %v916 = vrot.slane %v914, 6
      %v917 = vshll.u32 %v880, 16
      %v919 = vrot.slane %v917, 7
      %v920 = vor.u32 %v916, %v919
      %v921 = vsel %vm898, %v912, %v920
      %v923 = vshrl.u32 %v702, 16
      %v925 = vrot.slane %v923, 6
      %v926 = vshll.u32 %v702, 16
      %v928 = vrot.slane %v926, 7
      %v929 = vor.u32 %v925, %v928
      %v930 = vrot.slane %v929, 4
      %v931 = vrot.slane %v291, 6
      %v932 = vrot.slane %v294, 7
      %v933 = vor.u32 %v931, %v932
      %v934 = vsel %vm898, %v930, %v933
      %v935 = vrot.slane %v933, 4
      %v937 = vshrl.u32 %v881, 16
      %v939 = vrot.slane %v937, 6
      %v940 = vshll.u32 %v881, 16
      %v942 = vrot.slane %v940, 7
      %v943 = vor.u32 %v939, %v942
      %v944 = vsel %vm898, %v935, %v943
      %v946 = vshrl.u32 %v703, 16
      %v948 = vrot.slane %v946, 6
      %v949 = vshll.u32 %v703, 16
      %v951 = vrot.slane %v949, 7
      %v952 = vor.u32 %v948, %v951
      %v953 = vrot.slane %v952, 4
      %v954 = vrot.slane %v319, 6
      %v955 = vrot.slane %v322, 7
      %v956 = vor.u32 %v954, %v955
      %v957 = vsel %vm898, %v953, %v956
      %v958 = vrot.slane %v956, 4
      %v960 = vshrl.u32 %v882, 16
      %v962 = vrot.slane %v960, 6
      %v963 = vshll.u32 %v882, 16
      %v965 = vrot.slane %v963, 7
      %v966 = vor.u32 %v962, %v965
      %v967 = vsel %vm898, %v958, %v966
      %v969 = vshrl.u32 %v704, 16
      %v971 = vrot.slane %v969, 6
      %v972 = vshll.u32 %v704, 16
      %v974 = vrot.slane %v972, 7
      %v975 = vor.u32 %v971, %v974
      %v976 = vrot.slane %v975, 4
      %v977 = vrot.slane %v347, 6
      %v978 = vrot.slane %v350, 7
      %v979 = vor.u32 %v977, %v978
      %v980 = vsel %vm898, %v976, %v979
      %v981 = vrot.slane %v979, 4
      %v983 = vshrl.u32 %v883, 16
      %v985 = vrot.slane %v983, 6
      %v986 = vshll.u32 %v883, 16
      %v988 = vrot.slane %v986, 7
      %v989 = vor.u32 %v985, %v988
      %v990 = vsel %vm898, %v981, %v989
      %v992 = vshrl.u32 %v705, 16
      %v994 = vrot.slane %v992, 6
      %v995 = vshll.u32 %v705, 16
      %v997 = vrot.slane %v995, 7
      %v998 = vor.u32 %v994, %v997
      %v999 = vrot.slane %v998, 4
      %v1000 = vrot.slane %v375, 6
      %v1001 = vrot.slane %v378, 7
      %v1002 = vor.u32 %v1000, %v1001
      %v1003 = vsel %vm898, %v999, %v1002
      %v1004 = vrot.slane %v1002, 4
      %v1006 = vshrl.u32 %v884, 16
      %v1008 = vrot.slane %v1006, 6
      %v1009 = vshll.u32 %v884, 16
      %v1011 = vrot.slane %v1009, 7
      %v1012 = vor.u32 %v1008, %v1011
      %v1013 = vsel %vm898, %v1004, %v1012
      %v1015 = vshrl.u32 %v706, 16
      %v1017 = vrot.slane %v1015, 6
      %v1018 = vshll.u32 %v706, 16
      %v1020 = vrot.slane %v1018, 7
      %v1021 = vor.u32 %v1017, %v1020
      %v1022 = vrot.slane %v1021, 4
      %v1023 = vrot.slane %v403, 6
      %v1024 = vrot.slane %v406, 7
      %v1025 = vor.u32 %v1023, %v1024
      %v1026 = vsel %vm898, %v1022, %v1025
      %v1027 = vrot.slane %v1025, 4
      %v1029 = vshrl.u32 %v885, 16
      %v1031 = vrot.slane %v1029, 6
      %v1032 = vshll.u32 %v885, 16
      %v1034 = vrot.slane %v1032, 7
      %v1035 = vor.u32 %v1031, %v1034
      %v1036 = vsel %vm898, %v1027, %v1035
      %v1038 = vshrl.u32 %v707, 16
      %v1040 = vrot.slane %v1038, 6
      %v1041 = vshll.u32 %v707, 16
      %v1043 = vrot.slane %v1041, 7
      %v1044 = vor.u32 %v1040, %v1043
      %v1045 = vrot.slane %v1044, 4
      %v1046 = vrot.slane %v431, 6
      %v1047 = vrot.slane %v434, 7
      %v1048 = vor.u32 %v1046, %v1047
      %v1049 = vsel %vm898, %v1045, %v1048
      %v1050 = vrot.slane %v1048, 4
      %v1052 = vshrl.u32 %v886, 16
      %v1054 = vrot.slane %v1052, 6
      %v1055 = vshll.u32 %v886, 16
      %v1057 = vrot.slane %v1055, 7
      %v1058 = vor.u32 %v1054, %v1057
      %v1059 = vsel %vm898, %v1050, %v1058
      %v1061 = vshrl.u32 %v708, 16
      %v1063 = vrot.slane %v1061, 6
      %v1064 = vshll.u32 %v708, 16
      %v1066 = vrot.slane %v1064, 7
      %v1067 = vor.u32 %v1063, %v1066
      %v1068 = vrot.slane %v1067, 4
      %v1069 = vrot.slane %v459, 6
      %v1070 = vrot.slane %v462, 7
      %v1071 = vor.u32 %v1069, %v1070
      %v1072 = vsel %vm898, %v1068, %v1071
      %v1073 = vrot.slane %v1071, 4
      %v1075 = vshrl.u32 %v887, 16
      %v1077 = vrot.slane %v1075, 6
      %v1078 = vshll.u32 %v887, 16
      %v1080 = vrot.slane %v1078, 7
      %v1081 = vor.u32 %v1077, %v1080
      %v1082 = vsel %vm898, %v1073, %v1081
      %v1084 = vshrl.u32 %v709, 16
      %v1086 = vrot.slane %v1084, 6
      %v1087 = vshll.u32 %v709, 16
      %v1089 = vrot.slane %v1087, 7
      %v1090 = vor.u32 %v1086, %v1089
      %v1091 = vrot.slane %v1090, 4
      %v1092 = vrot.slane %v487, 6
      %v1093 = vrot.slane %v490, 7
      %v1094 = vor.u32 %v1092, %v1093
      %v1095 = vsel %vm898, %v1091, %v1094
      %v1096 = vrot.slane %v1094, 4
      %v1098 = vshrl.u32 %v888, 16
      %v1100 = vrot.slane %v1098, 6
      %v1101 = vshll.u32 %v888, 16
      %v1103 = vrot.slane %v1101, 7
      %v1104 = vor.u32 %v1100, %v1103
      %v1105 = vsel %vm898, %v1096, %v1104
      %v1107 = vshrl.u32 %v710, 16
      %v1109 = vrot.slane %v1107, 6
      %v1110 = vshll.u32 %v710, 16
      %v1112 = vrot.slane %v1110, 7
      %v1113 = vor.u32 %v1109, %v1112
      %v1114 = vrot.slane %v1113, 4
      %v1115 = vrot.slane %v515, 6
      %v1116 = vrot.slane %v518, 7
      %v1117 = vor.u32 %v1115, %v1116
      %v1118 = vsel %vm898, %v1114, %v1117
      %v1119 = vrot.slane %v1117, 4
      %v1121 = vshrl.u32 %v889, 16
      %v1123 = vrot.slane %v1121, 6
      %v1124 = vshll.u32 %v889, 16
      %v1126 = vrot.slane %v1124, 7
      %v1127 = vor.u32 %v1123, %v1126
      %v1128 = vsel %vm898, %v1119, %v1127
      %v1130 = vshrl.u32 %v711, 16
      %v1132 = vrot.slane %v1130, 6
      %v1133 = vshll.u32 %v711, 16
      %v1135 = vrot.slane %v1133, 7
      %v1136 = vor.u32 %v1132, %v1135
      %v1137 = vrot.slane %v1136, 4
      %v1138 = vrot.slane %v543, 6
      %v1139 = vrot.slane %v546, 7
      %v1140 = vor.u32 %v1138, %v1139
      %v1141 = vsel %vm898, %v1137, %v1140
      %v1142 = vrot.slane %v1140, 4
      %v1144 = vshrl.u32 %v890, 16
      %v1146 = vrot.slane %v1144, 6
      %v1147 = vshll.u32 %v890, 16
      %v1149 = vrot.slane %v1147, 7
      %v1150 = vor.u32 %v1146, %v1149
      %v1151 = vsel %vm898, %v1142, %v1150
      %v1153 = vshrl.u32 %v712, 16
      %v1155 = vrot.slane %v1153, 6
      %v1156 = vshll.u32 %v712, 16
      %v1158 = vrot.slane %v1156, 7
      %v1159 = vor.u32 %v1155, %v1158
      %v1160 = vrot.slane %v1159, 4
      %v1161 = vrot.slane %v571, 6
      %v1162 = vrot.slane %v574, 7
      %v1163 = vor.u32 %v1161, %v1162
      %v1164 = vsel %vm898, %v1160, %v1163
      %v1165 = vrot.slane %v1163, 4
      %v1167 = vshrl.u32 %v891, 16
      %v1169 = vrot.slane %v1167, 6
      %v1170 = vshll.u32 %v891, 16
      %v1172 = vrot.slane %v1170, 7
      %v1173 = vor.u32 %v1169, %v1172
      %v1174 = vsel %vm898, %v1165, %v1173
      %v1176 = vshrl.u32 %v713, 16
      %v1178 = vrot.slane %v1176, 6
      %v1179 = vshll.u32 %v713, 16
      %v1181 = vrot.slane %v1179, 7
      %v1182 = vor.u32 %v1178, %v1181
      %v1183 = vrot.slane %v1182, 4
      %v1184 = vrot.slane %v599, 6
      %v1185 = vrot.slane %v602, 7
      %v1186 = vor.u32 %v1184, %v1185
      %v1187 = vsel %vm898, %v1183, %v1186
      %v1188 = vrot.slane %v1186, 4
      %v1190 = vshrl.u32 %v892, 16
      %v1192 = vrot.slane %v1190, 6
      %v1193 = vshll.u32 %v892, 16
      %v1195 = vrot.slane %v1193, 7
      %v1196 = vor.u32 %v1192, %v1195
      %v1197 = vsel %vm898, %v1188, %v1196
      %v1199 = vshrl.u32 %v714, 16
      %v1201 = vrot.slane %v1199, 6
      %v1202 = vshll.u32 %v714, 16
      %v1204 = vrot.slane %v1202, 7
      %v1205 = vor.u32 %v1201, %v1204
      %v1206 = vrot.slane %v1205, 4
      %v1207 = vrot.slane %v627, 6
      %v1208 = vrot.slane %v630, 7
      %v1209 = vor.u32 %v1207, %v1208
      %v1210 = vsel %vm898, %v1206, %v1209
      %v1211 = vrot.slane %v1209, 4
      %v1213 = vshrl.u32 %v893, 16
      %v1215 = vrot.slane %v1213, 6
      %v1216 = vshll.u32 %v893, 16
      %v1218 = vrot.slane %v1216, 7
      %v1219 = vor.u32 %v1215, %v1218
      %v1220 = vsel %vm898, %v1211, %v1219
      %v1222 = vshrl.u32 %v715, 16
      %v1224 = vrot.slane %v1222, 6
      %v1225 = vshll.u32 %v715, 16
      %v1227 = vrot.slane %v1225, 7
      %v1228 = vor.u32 %v1224, %v1227
      %v1229 = vrot.slane %v1228, 4
      %v1230 = vrot.slane %v655, 6
      %v1231 = vrot.slane %v658, 7
      %v1232 = vor.u32 %v1230, %v1231
      %v1233 = vsel %vm898, %v1229, %v1232
      %v1234 = vrot.slane %v1232, 4
      %v1236 = vshrl.u32 %v894, 16
      %v1238 = vrot.slane %v1236, 6
      %v1239 = vshll.u32 %v894, 16
      %v1241 = vrot.slane %v1239, 7
      %v1242 = vor.u32 %v1238, %v1241
      %v1243 = vsel %vm898, %v1234, %v1242
      %v1245 = vshrl.u32 %v716, 16
      %v1247 = vrot.slane %v1245, 6
      %v1248 = vshll.u32 %v716, 16
      %v1250 = vrot.slane %v1248, 7
      %v1251 = vor.u32 %v1247, %v1250
      %v1252 = vrot.slane %v1251, 4
      %v1253 = vrot.slane %v683, 6
      %v1254 = vrot.slane %v686, 7
      %v1255 = vor.u32 %v1253, %v1254
      %v1256 = vsel %vm898, %v1252, %v1255
      %v1257 = vrot.slane %v1255, 4
      %v1259 = vshrl.u32 %v895, 16
      %v1261 = vrot.slane %v1259, 6
      %v1262 = vshll.u32 %v895, 16
      %v1264 = vrot.slane %v1262, 7
      %v1265 = vor.u32 %v1261, %v1264
      %v1266 = vsel %vm898, %v1257, %v1265
      %s1267 = sadd.s32 %s197, 4
      %s1268 = smul.u32 %s1267, 3
      %s1269 = smul.addr %s1268, 4
      %s1270 = scalar_lea.vmem %s184, %s1269
      %v1271 = vld [vmem:[%s1270] sm:$0xe]
      %v1272 = vld [vmem:[%s1270 + $0x4] sm:$0xf]
      %v1273 = vld [vmem:[%s1270 + $0x8] sm:$0x3]
      %v1274 = vld [vmem:[%s1270 + $0xc] sm:$0xe]
      %v1275 = vld [vmem:[%s1270 + $0x10] sm:$0xf]
      %v1276 = vld [vmem:[%s1270 + $0x14] sm:$0x3]
      %v1277 = vld [vmem:[%s1270 + $0x18] sm:$0xe]
      %v1278 = vld [vmem:[%s1270 + $0x1c] sm:$0xf]
      %v1279 = vld [vmem:[%s1270 + $0x20] sm:$0x3]
      %v1280 = vld [vmem:[%s1270 + $0x24] sm:$0xe]
      %v1281 = vld [vmem:[%s1270 + $0x28] sm:$0xf]
      %v1282 = vld [vmem:[%s1270 + $0x2c] sm:$0x3]
      %v1283 = vld [vmem:[%s1270 + $0x30] sm:$0xe]
      %v1284 = vld [vmem:[%s1270 + $0x34] sm:$0xf]
      %v1285 = vld [vmem:[%s1270 + $0x38] sm:$0x3]
      %v1286 = vld [vmem:[%s1270 + $0x3c] sm:$0xe]
      %v1287 = vld [vmem:[%s1270 + $0x40] sm:$0xf]
      %v1288 = vld [vmem:[%s1270 + $0x44] sm:$0x3]
      %v1289 = vld [vmem:[%s1270 + $0x48] sm:$0xe]
      %v1290 = vld [vmem:[%s1270 + $0x4c] sm:$0xf]
      %v1291 = vld [vmem:[%s1270 + $0x50] sm:$0x3]
      %v1292 = vld [vmem:[%s1270 + $0x54] sm:$0xe]
      %v1293 = vld [vmem:[%s1270 + $0x58] sm:$0xf]
      %v1294 = vld [vmem:[%s1270 + $0x5c] sm:$0x3]
      %v1295 = vld [vmem:[%s1270 + $0x60] sm:$0xe]
      %v1296 = vld [vmem:[%s1270 + $0x64] sm:$0xf]
      %v1297 = vld [vmem:[%s1270 + $0x68] sm:$0x3]
      %v1298 = vld [vmem:[%s1270 + $0x6c] sm:$0xe]
      %v1299 = vld [vmem:[%s1270 + $0x70] sm:$0xf]
      %v1300 = vld [vmem:[%s1270 + $0x74] sm:$0x3]
      %v1301 = vld [vmem:[%s1270 + $0x78] sm:$0xe]
      %v1302 = vld [vmem:[%s1270 + $0x7c] sm:$0xf]
      %v1303 = vld [vmem:[%s1270 + $0x80] sm:$0x3]
      %v1304 = vld [vmem:[%s1270 + $0x84] sm:$0xe]
      %v1305 = vld [vmem:[%s1270 + $0x88] sm:$0xf]
      %v1306 = vld [vmem:[%s1270 + $0x8c] sm:$0x3]
      %v1307 = vld [vmem:[%s1270 + $0x90] sm:$0xe]
      %v1308 = vld [vmem:[%s1270 + $0x94] sm:$0xf]
      %v1309 = vld [vmem:[%s1270 + $0x98] sm:$0x3]
      %v1310 = vld [vmem:[%s1270 + $0x9c] sm:$0xe]
      %v1311 = vld [vmem:[%s1270 + $0xa0] sm:$0xf]
      %v1312 = vld [vmem:[%s1270 + $0xa4] sm:$0x3]
      %v1313 = vld [vmem:[%s1270 + $0xa8] sm:$0xe]
      %v1314 = vld [vmem:[%s1270 + $0xac] sm:$0xf]
      %v1315 = vld [vmem:[%s1270 + $0xb0] sm:$0x3]
      %v1316 = vld [vmem:[%s1270 + $0xb4] sm:$0xe]
      %v1317 = vld [vmem:[%s1270 + $0xb8] sm:$0xf]
      %v1318 = vld [vmem:[%s1270 + $0xbc] sm:$0x3]
      %v1320 = vshrl.u32 %v1271, 16
      %v1322 = vrot.slane %v1320, 5
      %v1323 = vshll.u32 %v1271, 16
      %v1325 = vrot.slane %v1323, 6
      %v1326 = vor.u32 %v1322, %v1325
      %v1327 = vrot.slane %v1326, 4
      %v1329 = vshrl.u32 %v1272, 16
      %v1331 = vrot.slane %v1329, 5
      %v1332 = vshll.u32 %v1272, 16
      %v1334 = vrot.slane %v1332, 6
      %v1335 = vor.u32 %v1331, %v1334
      %v1336 = vsel %vm252, %v1327, %v1335
      %v1337 = vrot.slane %v1335, 4
      %v1339 = vshrl.u32 %v1273, 16
      %v1341 = vrot.slane %v1339, 5
      %v1342 = vshll.u32 %v1273, 16
      %v1344 = vrot.slane %v1342, 6
      %v1345 = vor.u32 %v1341, %v1344
      %v1346 = vsel %vm252, %v1337, %v1345
      %v1348 = vshrl.u32 %v1274, 16
      %v1350 = vrot.slane %v1348, 5
      %v1351 = vshll.u32 %v1274, 16
      %v1353 = vrot.slane %v1351, 6
      %v1354 = vor.u32 %v1350, %v1353
      %v1355 = vrot.slane %v1354, 4
      %v1357 = vshrl.u32 %v1275, 16
      %v1359 = vrot.slane %v1357, 5
      %v1360 = vshll.u32 %v1275, 16
      %v1362 = vrot.slane %v1360, 6
      %v1363 = vor.u32 %v1359, %v1362
      %v1364 = vsel %vm252, %v1355, %v1363
      %v1365 = vrot.slane %v1363, 4
      %v1367 = vshrl.u32 %v1276, 16
      %v1369 = vrot.slane %v1367, 5
      %v1370 = vshll.u32 %v1276, 16
      %v1372 = vrot.slane %v1370, 6
      %v1373 = vor.u32 %v1369, %v1372
      %v1374 = vsel %vm252, %v1365, %v1373
      %v1376 = vshrl.u32 %v1277, 16
      %v1378 = vrot.slane %v1376, 5
      %v1379 = vshll.u32 %v1277, 16
      %v1381 = vrot.slane %v1379, 6
      %v1382 = vor.u32 %v1378, %v1381
      %v1383 = vrot.slane %v1382, 4
      %v1385 = vshrl.u32 %v1278, 16
      %v1387 = vrot.slane %v1385, 5
      %v1388 = vshll.u32 %v1278, 16
      %v1390 = vrot.slane %v1388, 6
      %v1391 = vor.u32 %v1387, %v1390
      %v1392 = vsel %vm252, %v1383, %v1391
      %v1393 = vrot.slane %v1391, 4
      %v1395 = vshrl.u32 %v1279, 16
      %v1397 = vrot.slane %v1395, 5
      %v1398 = vshll.u32 %v1279, 16
      %v1400 = vrot.slane %v1398, 6
      %v1401 = vor.u32 %v1397, %v1400
      %v1402 = vsel %vm252, %v1393, %v1401
      %v1404 = vshrl.u32 %v1280, 16
      %v1406 = vrot.slane %v1404, 5
      %v1407 = vshll.u32 %v1280, 16
      %v1409 = vrot.slane %v1407, 6
      %v1410 = vor.u32 %v1406, %v1409
      %v1411 = vrot.slane %v1410, 4
      %v1413 = vshrl.u32 %v1281, 16
      %v1415 = vrot.slane %v1413, 5
      %v1416 = vshll.u32 %v1281, 16
      %v1418 = vrot.slane %v1416, 6
      %v1419 = vor.u32 %v1415, %v1418
      %v1420 = vsel %vm252, %v1411, %v1419
      %v1421 = vrot.slane %v1419, 4
      %v1423 = vshrl.u32 %v1282, 16
      %v1425 = vrot.slane %v1423, 5
      %v1426 = vshll.u32 %v1282, 16
      %v1428 = vrot.slane %v1426, 6
      %v1429 = vor.u32 %v1425, %v1428
      %v1430 = vsel %vm252, %v1421, %v1429
      %v1432 = vshrl.u32 %v1283, 16
      %v1434 = vrot.slane %v1432, 5
      %v1435 = vshll.u32 %v1283, 16
      %v1437 = vrot.slane %v1435, 6
      %v1438 = vor.u32 %v1434, %v1437
      %v1439 = vrot.slane %v1438, 4
      %v1441 = vshrl.u32 %v1284, 16
      %v1443 = vrot.slane %v1441, 5
      %v1444 = vshll.u32 %v1284, 16
      %v1446 = vrot.slane %v1444, 6
      %v1447 = vor.u32 %v1443, %v1446
      %v1448 = vsel %vm252, %v1439, %v1447
      %v1449 = vrot.slane %v1447, 4
      %v1451 = vshrl.u32 %v1285, 16
      %v1453 = vrot.slane %v1451, 5
      %v1454 = vshll.u32 %v1285, 16
      %v1456 = vrot.slane %v1454, 6
      %v1457 = vor.u32 %v1453, %v1456
      %v1458 = vsel %vm252, %v1449, %v1457
      %v1460 = vshrl.u32 %v1286, 16
      %v1462 = vrot.slane %v1460, 5
      %v1463 = vshll.u32 %v1286, 16
      %v1465 = vrot.slane %v1463, 6
      %v1466 = vor.u32 %v1462, %v1465
      %v1467 = vrot.slane %v1466, 4
      %v1469 = vshrl.u32 %v1287, 16
      %v1471 = vrot.slane %v1469, 5
      %v1472 = vshll.u32 %v1287, 16
      %v1474 = vrot.slane %v1472, 6
      %v1475 = vor.u32 %v1471, %v1474
      %v1476 = vsel %vm252, %v1467, %v1475
      %v1477 = vrot.slane %v1475, 4
      %v1479 = vshrl.u32 %v1288, 16
      %v1481 = vrot.slane %v1479, 5
      %v1482 = vshll.u32 %v1288, 16
      %v1484 = vrot.slane %v1482, 6
      %v1485 = vor.u32 %v1481, %v1484
      %v1486 = vsel %vm252, %v1477, %v1485
      %v1488 = vshrl.u32 %v1289, 16
      %v1490 = vrot.slane %v1488, 5
      %v1491 = vshll.u32 %v1289, 16
      %v1493 = vrot.slane %v1491, 6
      %v1494 = vor.u32 %v1490, %v1493
      %v1495 = vrot.slane %v1494, 4
      %v1497 = vshrl.u32 %v1290, 16
      %v1499 = vrot.slane %v1497, 5
      %v1500 = vshll.u32 %v1290, 16
      %v1502 = vrot.slane %v1500, 6
      %v1503 = vor.u32 %v1499, %v1502
      %v1504 = vsel %vm252, %v1495, %v1503
      %v1505 = vrot.slane %v1503, 4
      %v1507 = vshrl.u32 %v1291, 16
      %v1509 = vrot.slane %v1507, 5
      %v1510 = vshll.u32 %v1291, 16
      %v1512 = vrot.slane %v1510, 6
      %v1513 = vor.u32 %v1509, %v1512
      %v1514 = vsel %vm252, %v1505, %v1513
      %v1516 = vshrl.u32 %v1292, 16
      %v1518 = vrot.slane %v1516, 5
      %v1519 = vshll.u32 %v1292, 16
      %v1521 = vrot.slane %v1519, 6
      %v1522 = vor.u32 %v1518, %v1521
      %v1523 = vrot.slane %v1522, 4
      %v1525 = vshrl.u32 %v1293, 16
      %v1527 = vrot.slane %v1525, 5
      %v1528 = vshll.u32 %v1293, 16
      %v1530 = vrot.slane %v1528, 6
      %v1531 = vor.u32 %v1527, %v1530
      %v1532 = vsel %vm252, %v1523, %v1531
      %v1533 = vrot.slane %v1531, 4
      %v1535 = vshrl.u32 %v1294, 16
      %v1537 = vrot.slane %v1535, 5
      %v1538 = vshll.u32 %v1294, 16
      %v1540 = vrot.slane %v1538, 6
      %v1541 = vor.u32 %v1537, %v1540
      %v1542 = vsel %vm252, %v1533, %v1541
      %v1544 = vshrl.u32 %v1295, 16
      %v1546 = vrot.slane %v1544, 5
      %v1547 = vshll.u32 %v1295, 16
      %v1549 = vrot.slane %v1547, 6
      %v1550 = vor.u32 %v1546, %v1549
      %v1551 = vrot.slane %v1550, 4
      %v1553 = vshrl.u32 %v1296, 16
      %v1555 = vrot.slane %v1553, 5
      %v1556 = vshll.u32 %v1296, 16
      %v1558 = vrot.slane %v1556, 6
      %v1559 = vor.u32 %v1555, %v1558
      %v1560 = vsel %vm252, %v1551, %v1559
      %v1561 = vrot.slane %v1559, 4
      %v1563 = vshrl.u32 %v1297, 16
      %v1565 = vrot.slane %v1563, 5
      %v1566 = vshll.u32 %v1297, 16
      %v1568 = vrot.slane %v1566, 6
      %v1569 = vor.u32 %v1565, %v1568
      %v1570 = vsel %vm252, %v1561, %v1569
      %v1572 = vshrl.u32 %v1298, 16
      %v1574 = vrot.slane %v1572, 5
      %v1575 = vshll.u32 %v1298, 16
      %v1577 = vrot.slane %v1575, 6
      %v1578 = vor.u32 %v1574, %v1577
      %v1579 = vrot.slane %v1578, 4
      %v1581 = vshrl.u32 %v1299, 16
      %v1583 = vrot.slane %v1581, 5
      %v1584 = vshll.u32 %v1299, 16
      %v1586 = vrot.slane %v1584, 6
      %v1587 = vor.u32 %v1583, %v1586
      %v1588 = vsel %vm252, %v1579, %v1587
      %v1589 = vrot.slane %v1587, 4
      %v1591 = vshrl.u32 %v1300, 16
      %v1593 = vrot.slane %v1591, 5
      %v1594 = vshll.u32 %v1300, 16
      %v1596 = vrot.slane %v1594, 6
      %v1597 = vor.u32 %v1593, %v1596
      %v1598 = vsel %vm252, %v1589, %v1597
      %v1600 = vshrl.u32 %v1301, 16
      %v1602 = vrot.slane %v1600, 5
      %v1603 = vshll.u32 %v1301, 16
      %v1605 = vrot.slane %v1603, 6
      %v1606 = vor.u32 %v1602, %v1605
      %v1607 = vrot.slane %v1606, 4
      %v1609 = vshrl.u32 %v1302, 16
      %v1611 = vrot.slane %v1609, 5
      %v1612 = vshll.u32 %v1302, 16
      %v1614 = vrot.slane %v1612, 6
      %v1615 = vor.u32 %v1611, %v1614
      %v1616 = vsel %vm252, %v1607, %v1615
      %v1617 = vrot.slane %v1615, 4
      %v1619 = vshrl.u32 %v1303, 16
      %v1621 = vrot.slane %v1619, 5
      %v1622 = vshll.u32 %v1303, 16
      %v1624 = vrot.slane %v1622, 6
      %v1625 = vor.u32 %v1621, %v1624
      %v1626 = vsel %vm252, %v1617, %v1625
      %v1628 = vshrl.u32 %v1304, 16
      %v1630 = vrot.slane %v1628, 5
      %v1631 = vshll.u32 %v1304, 16
      %v1633 = vrot.slane %v1631, 6
      %v1634 = vor.u32 %v1630, %v1633
      %v1635 = vrot.slane %v1634, 4
      %v1637 = vshrl.u32 %v1305, 16
      %v1639 = vrot.slane %v1637, 5
      %v1640 = vshll.u32 %v1305, 16
      %v1642 = vrot.slane %v1640, 6
      %v1643 = vor.u32 %v1639, %v1642
      %v1644 = vsel %vm252, %v1635, %v1643
      %v1645 = vrot.slane %v1643, 4
      %v1647 = vshrl.u32 %v1306, 16
      %v1649 = vrot.slane %v1647, 5
      %v1650 = vshll.u32 %v1306, 16
      %v1652 = vrot.slane %v1650, 6
      %v1653 = vor.u32 %v1649, %v1652
      %v1654 = vsel %vm252, %v1645, %v1653
      %v1656 = vshrl.u32 %v1307, 16
      %v1658 = vrot.slane %v1656, 5
      %v1659 = vshll.u32 %v1307, 16
      %v1661 = vrot.slane %v1659, 6
      %v1662 = vor.u32 %v1658, %v1661
      %v1663 = vrot.slane %v1662, 4
      %v1665 = vshrl.u32 %v1308, 16
      %v1667 = vrot.slane %v1665, 5
      %v1668 = vshll.u32 %v1308, 16
      %v1670 = vrot.slane %v1668, 6
      %v1671 = vor.u32 %v1667, %v1670
      %v1672 = vsel %vm252, %v1663, %v1671
      %v1673 = vrot.slane %v1671, 4
      %v1675 = vshrl.u32 %v1309, 16
      %v1677 = vrot.slane %v1675, 5
      %v1678 = vshll.u32 %v1309, 16
      %v1680 = vrot.slane %v1678, 6
      %v1681 = vor.u32 %v1677, %v1680
      %v1682 = vsel %vm252, %v1673, %v1681
      %v1684 = vshrl.u32 %v1310, 16
      %v1686 = vrot.slane %v1684, 5
      %v1687 = vshll.u32 %v1310, 16
      %v1689 = vrot.slane %v1687, 6
      %v1690 = vor.u32 %v1686, %v1689
      %v1691 = vrot.slane %v1690, 4
      %v1693 = vshrl.u32 %v1311, 16
      %v1695 = vrot.slane %v1693, 5
      %v1696 = vshll.u32 %v1311, 16
      %v1698 = vrot.slane %v1696, 6
      %v1699 = vor.u32 %v1695, %v1698
      %v1700 = vsel %vm252, %v1691, %v1699
      %v1701 = vrot.slane %v1699, 4
      %v1703 = vshrl.u32 %v1312, 16
      %v1705 = vrot.slane %v1703, 5
      %v1706 = vshll.u32 %v1312, 16
      %v1708 = vrot.slane %v1706, 6
      %v1709 = vor.u32 %v1705, %v1708
      %v1710 = vsel %vm252, %v1701, %v1709
      %v1712 = vshrl.u32 %v1313, 16
      %v1714 = vrot.slane %v1712, 5
      %v1715 = vshll.u32 %v1313, 16
      %v1717 = vrot.slane %v1715, 6
      %v1718 = vor.u32 %v1714, %v1717
      %v1719 = vrot.slane %v1718, 4
      %v1721 = vshrl.u32 %v1314, 16
      %v1723 = vrot.slane %v1721, 5
      %v1724 = vshll.u32 %v1314, 16
      %v1726 = vrot.slane %v1724, 6
      %v1727 = vor.u32 %v1723, %v1726
      %v1728 = vsel %vm252, %v1719, %v1727
      %v1729 = vrot.slane %v1727, 4
      %v1731 = vshrl.u32 %v1315, 16
      %v1733 = vrot.slane %v1731, 5
      %v1734 = vshll.u32 %v1315, 16
      %v1736 = vrot.slane %v1734, 6
      %v1737 = vor.u32 %v1733, %v1736
      %v1738 = vsel %vm252, %v1729, %v1737
      %v1740 = vshrl.u32 %v1316, 16
      %v1742 = vrot.slane %v1740, 5
      %v1743 = vshll.u32 %v1316, 16
      %v1745 = vrot.slane %v1743, 6
      %v1746 = vor.u32 %v1742, %v1745
      %v1747 = vrot.slane %v1746, 4
      %v1749 = vshrl.u32 %v1317, 16
      %v1751 = vrot.slane %v1749, 5
      %v1752 = vshll.u32 %v1317, 16
      %v1754 = vrot.slane %v1752, 6
      %v1755 = vor.u32 %v1751, %v1754
      %v1756 = vsel %vm252, %v1747, %v1755
      %v1757 = vrot.slane %v1755, 4
      %v1759 = vshrl.u32 %v1318, 16
      %v1761 = vrot.slane %v1759, 5
      %v1762 = vshll.u32 %v1318, 16
      %v1764 = vrot.slane %v1762, 6
      %v1765 = vor.u32 %v1761, %v1764
      %v1766 = vsel %vm252, %v1757, %v1765
      %v1767 = vld [vmem:[%s1270] sm:$0xc]
      %v1768 = vld [vmem:[%s1270 + $0xc] sm:$0xc]
      %v1769 = vld [vmem:[%s1270 + $0x18] sm:$0xc]
      %v1770 = vld [vmem:[%s1270 + $0x24] sm:$0xc]
      %v1771 = vld [vmem:[%s1270 + $0x30] sm:$0xc]
      %v1772 = vld [vmem:[%s1270 + $0x3c] sm:$0xc]
      %v1773 = vld [vmem:[%s1270 + $0x48] sm:$0xc]
      %v1774 = vld [vmem:[%s1270 + $0x54] sm:$0xc]
      %v1775 = vld [vmem:[%s1270 + $0x60] sm:$0xc]
      %v1776 = vld [vmem:[%s1270 + $0x6c] sm:$0xc]
      %v1777 = vld [vmem:[%s1270 + $0x78] sm:$0xc]
      %v1778 = vld [vmem:[%s1270 + $0x84] sm:$0xc]
      %v1779 = vld [vmem:[%s1270 + $0x90] sm:$0xc]
      %v1780 = vld [vmem:[%s1270 + $0x9c] sm:$0xc]
      %v1781 = vld [vmem:[%s1270 + $0xa8] sm:$0xc]
      %v1782 = vld [vmem:[%s1270 + $0xb4] sm:$0xc]
      %v1831 = vrot.slane %v1767, 6
      %v1832 = vrot.slane %v1831, 4
      %v1833 = vrot.slane %v1272, 6
      %v1834 = vsel %vm767, %v1832, %v1833
      %v1835 = vrot.slane %v1833, 4
      %v1836 = vrot.slane %v1273, 6
      %v1837 = vsel %vm767, %v1835, %v1836
      %v1838 = vrot.slane %v1768, 6
      %v1839 = vrot.slane %v1838, 4
      %v1840 = vrot.slane %v1275, 6
      %v1841 = vsel %vm767, %v1839, %v1840
      %v1842 = vrot.slane %v1840, 4
      %v1843 = vrot.slane %v1276, 6
      %v1844 = vsel %vm767, %v1842, %v1843
      %v1845 = vrot.slane %v1769, 6
      %v1846 = vrot.slane %v1845, 4
      %v1847 = vrot.slane %v1278, 6
      %v1848 = vsel %vm767, %v1846, %v1847
      %v1849 = vrot.slane %v1847, 4
      %v1850 = vrot.slane %v1279, 6
      %v1851 = vsel %vm767, %v1849, %v1850
      %v1852 = vrot.slane %v1770, 6
      %v1853 = vrot.slane %v1852, 4
      %v1854 = vrot.slane %v1281, 6
      %v1855 = vsel %vm767, %v1853, %v1854
      %v1856 = vrot.slane %v1854, 4
      %v1857 = vrot.slane %v1282, 6
      %v1858 = vsel %vm767, %v1856, %v1857
      %v1859 = vrot.slane %v1771, 6
      %v1860 = vrot.slane %v1859, 4
      %v1861 = vrot.slane %v1284, 6
      %v1862 = vsel %vm767, %v1860, %v1861
      %v1863 = vrot.slane %v1861, 4
      %v1864 = vrot.slane %v1285, 6
      %v1865 = vsel %vm767, %v1863, %v1864
      %v1866 = vrot.slane %v1772, 6
      %v1867 = vrot.slane %v1866, 4
      %v1868 = vrot.slane %v1287, 6
      %v1869 = vsel %vm767, %v1867, %v1868
      %v1870 = vrot.slane %v1868, 4
      %v1871 = vrot.slane %v1288, 6
      %v1872 = vsel %vm767, %v1870, %v1871
      %v1873 = vrot.slane %v1773, 6
      %v1874 = vrot.slane %v1873, 4
      %v1875 = vrot.slane %v1290, 6
      %v1876 = vsel %vm767, %v1874, %v1875
      %v1877 = vrot.slane %v1875, 4
      %v1878 = vrot.slane %v1291, 6
      %v1879 = vsel %vm767, %v1877, %v1878
      %v1880 = vrot.slane %v1774, 6
      %v1881 = vrot.slane %v1880, 4
      %v1882 = vrot.slane %v1293, 6
      %v1883 = vsel %vm767, %v1881, %v1882
      %v1884 = vrot.slane %v1882, 4
      %v1885 = vrot.slane %v1294, 6
      %v1886 = vsel %vm767, %v1884, %v1885
      %v1887 = vrot.slane %v1775, 6
      %v1888 = vrot.slane %v1887, 4
      %v1889 = vrot.slane %v1296, 6
      %v1890 = vsel %vm767, %v1888, %v1889
      %v1891 = vrot.slane %v1889, 4
      %v1892 = vrot.slane %v1297, 6
      %v1893 = vsel %vm767, %v1891, %v1892
      %v1894 = vrot.slane %v1776, 6
      %v1895 = vrot.slane %v1894, 4
      %v1896 = vrot.slane %v1299, 6
      %v1897 = vsel %vm767, %v1895, %v1896
      %v1898 = vrot.slane %v1896, 4
      %v1899 = vrot.slane %v1300, 6
      %v1900 = vsel %vm767, %v1898, %v1899
      %v1901 = vrot.slane %v1777, 6
      %v1902 = vrot.slane %v1901, 4
      %v1903 = vrot.slane %v1302, 6
      %v1904 = vsel %vm767, %v1902, %v1903
      %v1905 = vrot.slane %v1903, 4
      %v1906 = vrot.slane %v1303, 6
      %v1907 = vsel %vm767, %v1905, %v1906
      %v1908 = vrot.slane %v1778, 6
      %v1909 = vrot.slane %v1908, 4
      %v1910 = vrot.slane %v1305, 6
      %v1911 = vsel %vm767, %v1909, %v1910
      %v1912 = vrot.slane %v1910, 4
      %v1913 = vrot.slane %v1306, 6
      %v1914 = vsel %vm767, %v1912, %v1913
      %v1915 = vrot.slane %v1779, 6
      %v1916 = vrot.slane %v1915, 4
      %v1917 = vrot.slane %v1308, 6
      %v1918 = vsel %vm767, %v1916, %v1917
      %v1919 = vrot.slane %v1917, 4
      %v1920 = vrot.slane %v1309, 6
      %v1921 = vsel %vm767, %v1919, %v1920
      %v1922 = vrot.slane %v1780, 6
      %v1923 = vrot.slane %v1922, 4
      %v1924 = vrot.slane %v1311, 6
      %v1925 = vsel %vm767, %v1923, %v1924
      %v1926 = vrot.slane %v1924, 4
      %v1927 = vrot.slane %v1312, 6
      %v1928 = vsel %vm767, %v1926, %v1927
      %v1929 = vrot.slane %v1781, 6
      %v1930 = vrot.slane %v1929, 4
      %v1931 = vrot.slane %v1314, 6
      %v1932 = vsel %vm767, %v1930, %v1931
      %v1933 = vrot.slane %v1931, 4
      %v1934 = vrot.slane %v1315, 6
      %v1935 = vsel %vm767, %v1933, %v1934
      %v1936 = vrot.slane %v1782, 6
      %v1937 = vrot.slane %v1936, 4
      %v1938 = vrot.slane %v1317, 6
      %v1939 = vsel %vm767, %v1937, %v1938
      %v1940 = vrot.slane %v1938, 4
      %v1941 = vrot.slane %v1318, 6
      %v1942 = vsel %vm767, %v1940, %v1941
      %v1943 = vld [vmem:[%s1270 + $0x8] sm:$0x7]
      %v1944 = vld [vmem:[%s1270 + $0x14] sm:$0x7]
      %v1945 = vld [vmem:[%s1270 + $0x20] sm:$0x7]
      %v1946 = vld [vmem:[%s1270 + $0x2c] sm:$0x7]
      %v1947 = vld [vmem:[%s1270 + $0x38] sm:$0x7]
      %v1948 = vld [vmem:[%s1270 + $0x44] sm:$0x7]
      %v1949 = vld [vmem:[%s1270 + $0x50] sm:$0x7]
      %v1950 = vld [vmem:[%s1270 + $0x5c] sm:$0x7]
      %v1951 = vld [vmem:[%s1270 + $0x68] sm:$0x7]
      %v1952 = vld [vmem:[%s1270 + $0x74] sm:$0x7]
      %v1953 = vld [vmem:[%s1270 + $0x80] sm:$0x7]
      %v1954 = vld [vmem:[%s1270 + $0x8c] sm:$0x7]
      %v1955 = vld [vmem:[%s1270 + $0x98] sm:$0x7]
      %v1956 = vld [vmem:[%s1270 + $0xa4] sm:$0x7]
      %v1957 = vld [vmem:[%s1270 + $0xb0] sm:$0x7]
      %v1958 = vld [vmem:[%s1270 + $0xbc] sm:$0x7]
      %v1960 = vshrl.u32 %v1767, 16
      %v1962 = vrot.slane %v1960, 6
      %v1963 = vshll.u32 %v1767, 16
      %v1965 = vrot.slane %v1963, 7
      %v1966 = vor.u32 %v1962, %v1965
      %v1967 = vrot.slane %v1966, 4
      %v1968 = vrot.slane %v1329, 6
      %v1969 = vrot.slane %v1332, 7
      %v1970 = vor.u32 %v1968, %v1969
      %v1971 = vsel %vm898, %v1967, %v1970
      %v1972 = vrot.slane %v1970, 4
      %v1974 = vshrl.u32 %v1943, 16
      %v1976 = vrot.slane %v1974, 6
      %v1977 = vshll.u32 %v1943, 16
      %v1979 = vrot.slane %v1977, 7
      %v1980 = vor.u32 %v1976, %v1979
      %v1981 = vsel %vm898, %v1972, %v1980
      %v1983 = vshrl.u32 %v1768, 16
      %v1985 = vrot.slane %v1983, 6
      %v1986 = vshll.u32 %v1768, 16
      %v1988 = vrot.slane %v1986, 7
      %v1989 = vor.u32 %v1985, %v1988
      %v1990 = vrot.slane %v1989, 4
      %v1991 = vrot.slane %v1357, 6
      %v1992 = vrot.slane %v1360, 7
      %v1993 = vor.u32 %v1991, %v1992
      %v1994 = vsel %vm898, %v1990, %v1993
      %v1995 = vrot.slane %v1993, 4
      %v1997 = vshrl.u32 %v1944, 16
      %v1999 = vrot.slane %v1997, 6
      %v2000 = vshll.u32 %v1944, 16
      %v2002 = vrot.slane %v2000, 7
      %v2003 = vor.u32 %v1999, %v2002
      %v2004 = vsel %vm898, %v1995, %v2003
      %v2006 = vshrl.u32 %v1769, 16
      %v2008 = vrot.slane %v2006, 6
      %v2009 = vshll.u32 %v1769, 16
      %v2011 = vrot.slane %v2009, 7
      %v2012 = vor.u32 %v2008, %v2011
      %v2013 = vrot.slane %v2012, 4
      %v2014 = vrot.slane %v1385, 6
      %v2015 = vrot.slane %v1388, 7
      %v2016 = vor.u32 %v2014, %v2015
      %v2017 = vsel %vm898, %v2013, %v2016
      %v2018 = vrot.slane %v2016, 4
      %v2020 = vshrl.u32 %v1945, 16
      %v2022 = vrot.slane %v2020, 6
      %v2023 = vshll.u32 %v1945, 16
      %v2025 = vrot.slane %v2023, 7
      %v2026 = vor.u32 %v2022, %v2025
      %v2027 = vsel %vm898, %v2018, %v2026
      %v2029 = vshrl.u32 %v1770, 16
      %v2031 = vrot.slane %v2029, 6
      %v2032 = vshll.u32 %v1770, 16
      %v2034 = vrot.slane %v2032, 7
      %v2035 = vor.u32 %v2031, %v2034
      %v2036 = vrot.slane %v2035, 4
      %v2037 = vrot.slane %v1413, 6
      %v2038 = vrot.slane %v1416, 7
      %v2039 = vor.u32 %v2037, %v2038
      %v2040 = vsel %vm898, %v2036, %v2039
      %v2041 = vrot.slane %v2039, 4
      %v2043 = vshrl.u32 %v1946, 16
      %v2045 = vrot.slane %v2043, 6
      %v2046 = vshll.u32 %v1946, 16
      %v2048 = vrot.slane %v2046, 7
      %v2049 = vor.u32 %v2045, %v2048
      %v2050 = vsel %vm898, %v2041, %v2049
      %v2052 = vshrl.u32 %v1771, 16
      %v2054 = vrot.slane %v2052, 6
      %v2055 = vshll.u32 %v1771, 16
      %v2057 = vrot.slane %v2055, 7
      %v2058 = vor.u32 %v2054, %v2057
      %v2059 = vrot.slane %v2058, 4
      %v2060 = vrot.slane %v1441, 6
      %v2061 = vrot.slane %v1444, 7
      %v2062 = vor.u32 %v2060, %v2061
      %v2063 = vsel %vm898, %v2059, %v2062
      %v2064 = vrot.slane %v2062, 4
      %v2066 = vshrl.u32 %v1947, 16
      %v2068 = vrot.slane %v2066, 6
      %v2069 = vshll.u32 %v1947, 16
      %v2071 = vrot.slane %v2069, 7
      %v2072 = vor.u32 %v2068, %v2071
      %v2073 = vsel %vm898, %v2064, %v2072
      %v2075 = vshrl.u32 %v1772, 16
      %v2077 = vrot.slane %v2075, 6
      %v2078 = vshll.u32 %v1772, 16
      %v2080 = vrot.slane %v2078, 7
      %v2081 = vor.u32 %v2077, %v2080
      %v2082 = vrot.slane %v2081, 4
      %v2083 = vrot.slane %v1469, 6
      %v2084 = vrot.slane %v1472, 7
      %v2085 = vor.u32 %v2083, %v2084
      %v2086 = vsel %vm898, %v2082, %v2085
      %v2087 = vrot.slane %v2085, 4
      %v2089 = vshrl.u32 %v1948, 16
      %v2091 = vrot.slane %v2089, 6
      %v2092 = vshll.u32 %v1948, 16
      %v2094 = vrot.slane %v2092, 7
      %v2095 = vor.u32 %v2091, %v2094
      %v2096 = vsel %vm898, %v2087, %v2095
      %v2098 = vshrl.u32 %v1773, 16
      %v2100 = vrot.slane %v2098, 6
      %v2101 = vshll.u32 %v1773, 16
      %v2103 = vrot.slane %v2101, 7
      %v2104 = vor.u32 %v2100, %v2103
      %v2105 = vrot.slane %v2104, 4
      %v2106 = vrot.slane %v1497, 6
      %v2107 = vrot.slane %v1500, 7
      %v2108 = vor.u32 %v2106, %v2107
      %v2109 = vsel %vm898, %v2105, %v2108
      %v2110 = vrot.slane %v2108, 4
      %v2112 = vshrl.u32 %v1949, 16
      %v2114 = vrot.slane %v2112, 6
      %v2115 = vshll.u32 %v1949, 16
      %v2117 = vrot.slane %v2115, 7
      %v2118 = vor.u32 %v2114, %v2117
      %v2119 = vsel %vm898, %v2110, %v2118
      %v2121 = vshrl.u32 %v1774, 16
      %v2123 = vrot.slane %v2121, 6
      %v2124 = vshll.u32 %v1774, 16
      %v2126 = vrot.slane %v2124, 7
      %v2127 = vor.u32 %v2123, %v2126
      %v2128 = vrot.slane %v2127, 4
      %v2129 = vrot.slane %v1525, 6
      %v2130 = vrot.slane %v1528, 7
      %v2131 = vor.u32 %v2129, %v2130
      %v2132 = vsel %vm898, %v2128, %v2131
      %v2133 = vrot.slane %v2131, 4
      %v2135 = vshrl.u32 %v1950, 16
      %v2137 = vrot.slane %v2135, 6
      %v2138 = vshll.u32 %v1950, 16
      %v2140 = vrot.slane %v2138, 7
      %v2141 = vor.u32 %v2137, %v2140
      %v2142 = vsel %vm898, %v2133, %v2141
      %v2144 = vshrl.u32 %v1775, 16
      %v2146 = vrot.slane %v2144, 6
      %v2147 = vshll.u32 %v1775, 16
      %v2149 = vrot.slane %v2147, 7
      %v2150 = vor.u32 %v2146, %v2149
      %v2151 = vrot.slane %v2150, 4
      %v2152 = vrot.slane %v1553, 6
      %v2153 = vrot.slane %v1556, 7
      %v2154 = vor.u32 %v2152, %v2153
      %v2155 = vsel %vm898, %v2151, %v2154
      %v2156 = vrot.slane %v2154, 4
      %v2158 = vshrl.u32 %v1951, 16
      %v2160 = vrot.slane %v2158, 6
      %v2161 = vshll.u32 %v1951, 16
      %v2163 = vrot.slane %v2161, 7
      %v2164 = vor.u32 %v2160, %v2163
      %v2165 = vsel %vm898, %v2156, %v2164
      %v2167 = vshrl.u32 %v1776, 16
      %v2169 = vrot.slane %v2167, 6
      %v2170 = vshll.u32 %v1776, 16
      %v2172 = vrot.slane %v2170, 7
      %v2173 = vor.u32 %v2169, %v2172
      %v2174 = vrot.slane %v2173, 4
      %v2175 = vrot.slane %v1581, 6
      %v2176 = vrot.slane %v1584, 7
      %v2177 = vor.u32 %v2175, %v2176
      %v2178 = vsel %vm898, %v2174, %v2177
      %v2179 = vrot.slane %v2177, 4
      %v2181 = vshrl.u32 %v1952, 16
      %v2183 = vrot.slane %v2181, 6
      %v2184 = vshll.u32 %v1952, 16
      %v2186 = vrot.slane %v2184, 7
      %v2187 = vor.u32 %v2183, %v2186
      %v2188 = vsel %vm898, %v2179, %v2187
      %v2190 = vshrl.u32 %v1777, 16
      %v2192 = vrot.slane %v2190, 6
      %v2193 = vshll.u32 %v1777, 16
      %v2195 = vrot.slane %v2193, 7
      %v2196 = vor.u32 %v2192, %v2195
      %v2197 = vrot.slane %v2196, 4
      %v2198 = vrot.slane %v1609, 6
      %v2199 = vrot.slane %v1612, 7
      %v2200 = vor.u32 %v2198, %v2199
      %v2201 = vsel %vm898, %v2197, %v2200
      %v2202 = vrot.slane %v2200, 4
      %v2204 = vshrl.u32 %v1953, 16
      %v2206 = vrot.slane %v2204, 6
      %v2207 = vshll.u32 %v1953, 16
      %v2209 = vrot.slane %v2207, 7
      %v2210 = vor.u32 %v2206, %v2209
      %v2211 = vsel %vm898, %v2202, %v2210
      %v2213 = vshrl.u32 %v1778, 16
      %v2215 = vrot.slane %v2213, 6
      %v2216 = vshll.u32 %v1778, 16
      %v2218 = vrot.slane %v2216, 7
      %v2219 = vor.u32 %v2215, %v2218
      %v2220 = vrot.slane %v2219, 4
      %v2221 = vrot.slane %v1637, 6
      %v2222 = vrot.slane %v1640, 7
      %v2223 = vor.u32 %v2221, %v2222
      %v2224 = vsel %vm898, %v2220, %v2223
      %v2225 = vrot.slane %v2223, 4
      %v2227 = vshrl.u32 %v1954, 16
      %v2229 = vrot.slane %v2227, 6
      %v2230 = vshll.u32 %v1954, 16
      %v2232 = vrot.slane %v2230, 7
      %v2233 = vor.u32 %v2229, %v2232
      %v2234 = vsel %vm898, %v2225, %v2233
      %v2236 = vshrl.u32 %v1779, 16
      %v2238 = vrot.slane %v2236, 6
      %v2239 = vshll.u32 %v1779, 16
      %v2241 = vrot.slane %v2239, 7
      %v2242 = vor.u32 %v2238, %v2241
      %v2243 = vrot.slane %v2242, 4
      %v2244 = vrot.slane %v1665, 6
      %v2245 = vrot.slane %v1668, 7
      %v2246 = vor.u32 %v2244, %v2245
      %v2247 = vsel %vm898, %v2243, %v2246
      %v2248 = vrot.slane %v2246, 4
      %v2250 = vshrl.u32 %v1955, 16
      %v2252 = vrot.slane %v2250, 6
      %v2253 = vshll.u32 %v1955, 16
      %v2255 = vrot.slane %v2253, 7
      %v2256 = vor.u32 %v2252, %v2255
      %v2257 = vsel %vm898, %v2248, %v2256
      %v2259 = vshrl.u32 %v1780, 16
      %v2261 = vrot.slane %v2259, 6
      %v2262 = vshll.u32 %v1780, 16
      %v2264 = vrot.slane %v2262, 7
      %v2265 = vor.u32 %v2261, %v2264
      %v2266 = vrot.slane %v2265, 4
      %v2267 = vrot.slane %v1693, 6
      %v2268 = vrot.slane %v1696, 7
      %v2269 = vor.u32 %v2267, %v2268
      %v2270 = vsel %vm898, %v2266, %v2269
      %v2271 = vrot.slane %v2269, 4
      %v2273 = vshrl.u32 %v1956, 16
      %v2275 = vrot.slane %v2273, 6
      %v2276 = vshll.u32 %v1956, 16
      %v2278 = vrot.slane %v2276, 7
      %v2279 = vor.u32 %v2275, %v2278
      %v2280 = vsel %vm898, %v2271, %v2279
      %v2282 = vshrl.u32 %v1781, 16
      %v2284 = vrot.slane %v2282, 6
      %v2285 = vshll.u32 %v1781, 16
      %v2287 = vrot.slane %v2285, 7
      %v2288 = vor.u32 %v2284, %v2287
      %v2289 = vrot.slane %v2288, 4
      %v2290 = vrot.slane %v1721, 6
      %v2291 = vrot.slane %v1724, 7
      %v2292 = vor.u32 %v2290, %v2291
      %v2293 = vsel %vm898, %v2289, %v2292
      %v2294 = vrot.slane %v2292, 4
      %v2296 = vshrl.u32 %v1957, 16
      %v2298 = vrot.slane %v2296, 6
      %v2299 = vshll.u32 %v1957, 16
      %v2301 = vrot.slane %v2299, 7
      %v2302 = vor.u32 %v2298, %v2301
      %v2303 = vsel %vm898, %v2294, %v2302
      %v2305 = vshrl.u32 %v1782, 16
      %v2307 = vrot.slane %v2305, 6
      %v2308 = vshll.u32 %v1782, 16
      %v2310 = vrot.slane %v2308, 7
      %v2311 = vor.u32 %v2307, %v2310
      %v2312 = vrot.slane %v2311, 4
      %v2313 = vrot.slane %v1749, 6
      %v2314 = vrot.slane %v1752, 7
      %v2315 = vor.u32 %v2313, %v2314
      %v2316 = vsel %vm898, %v2312, %v2315
      %v2317 = vrot.slane %v2315, 4
      %v2319 = vshrl.u32 %v1958, 16
      %v2321 = vrot.slane %v2319, 6
      %v2322 = vshll.u32 %v1958, 16
      %v2324 = vrot.slane %v2322, 7
      %v2325 = vor.u32 %v2321, %v2324
      %v2326 = vsel %vm898, %v2317, %v2325
      %s2327 = sadd.s32 %s197, 5
      %s2328 = smul.u32 %s2327, 3
      %s2329 = smul.addr %s2328, 4
      %s2330 = scalar_lea.vmem %s184, %s2329
      %v2331 = vld [vmem:[%s2330] sm:$0xe]
      %v2332 = vld [vmem:[%s2330 + $0x4] sm:$0xf]
      %v2333 = vld [vmem:[%s2330 + $0x8] sm:$0x3]
      %v2334 = vld [vmem:[%s2330 + $0xc] sm:$0xe]
      %v2335 = vld [vmem:[%s2330 + $0x10] sm:$0xf]
      %v2336 = vld [vmem:[%s2330 + $0x14] sm:$0x3]
      %v2337 = vld [vmem:[%s2330 + $0x18] sm:$0xe]
      %v2338 = vld [vmem:[%s2330 + $0x1c] sm:$0xf]
      %v2339 = vld [vmem:[%s2330 + $0x20] sm:$0x3]
      %v2340 = vld [vmem:[%s2330 + $0x24] sm:$0xe]
      %v2341 = vld [vmem:[%s2330 + $0x28] sm:$0xf]
      %v2342 = vld [vmem:[%s2330 + $0x2c] sm:$0x3]
      %v2343 = vld [vmem:[%s2330 + $0x30] sm:$0xe]
      %v2344 = vld [vmem:[%s2330 + $0x34] sm:$0xf]
      %v2345 = vld [vmem:[%s2330 + $0x38] sm:$0x3]
      %v2346 = vld [vmem:[%s2330 + $0x3c] sm:$0xe]
      %v2347 = vld [vmem:[%s2330 + $0x40] sm:$0xf]
      %v2348 = vld [vmem:[%s2330 + $0x44] sm:$0x3]
      %v2349 = vld [vmem:[%s2330 + $0x48] sm:$0xe]
      %v2350 = vld [vmem:[%s2330 + $0x4c] sm:$0xf]
      %v2351 = vld [vmem:[%s2330 + $0x50] sm:$0x3]
      %v2352 = vld [vmem:[%s2330 + $0x54] sm:$0xe]
      %v2353 = vld [vmem:[%s2330 + $0x58] sm:$0xf]
      %v2354 = vld [vmem:[%s2330 + $0x5c] sm:$0x3]
      %v2355 = vld [vmem:[%s2330 + $0x60] sm:$0xe]
      %v2356 = vld [vmem:[%s2330 + $0x64] sm:$0xf]
      %v2357 = vld [vmem:[%s2330 + $0x68] sm:$0x3]
      %v2358 = vld [vmem:[%s2330 + $0x6c] sm:$0xe]
      %v2359 = vld [vmem:[%s2330 + $0x70] sm:$0xf]
      %v2360 = vld [vmem:[%s2330 + $0x74] sm:$0x3]
      %v2361 = vld [vmem:[%s2330 + $0x78] sm:$0xe]
      %v2362 = vld [vmem:[%s2330 + $0x7c] sm:$0xf]
      %v2363 = vld [vmem:[%s2330 + $0x80] sm:$0x3]
      %v2364 = vld [vmem:[%s2330 + $0x84] sm:$0xe]
      %v2365 = vld [vmem:[%s2330 + $0x88] sm:$0xf]
      %v2366 = vld [vmem:[%s2330 + $0x8c] sm:$0x3]
      %v2367 = vld [vmem:[%s2330 + $0x90] sm:$0xe]
      %v2368 = vld [vmem:[%s2330 + $0x94] sm:$0xf]
      %v2369 = vld [vmem:[%s2330 + $0x98] sm:$0x3]
      %v2370 = vld [vmem:[%s2330 + $0x9c] sm:$0xe]
      %v2371 = vld [vmem:[%s2330 + $0xa0] sm:$0xf]
      %v2372 = vld [vmem:[%s2330 + $0xa4] sm:$0x3]
      %v2373 = vld [vmem:[%s2330 + $0xa8] sm:$0xe]
      %v2374 = vld [vmem:[%s2330 + $0xac] sm:$0xf]
      %v2375 = vld [vmem:[%s2330 + $0xb0] sm:$0x3]
      %v2376 = vld [vmem:[%s2330 + $0xb4] sm:$0xe]
      %v2377 = vld [vmem:[%s2330 + $0xb8] sm:$0xf]
      %v2378 = vld [vmem:[%s2330 + $0xbc] sm:$0x3]
      %v2380 = vshrl.u32 %v2331, 16
      %v2382 = vrot.slane %v2380, 5
      %v2383 = vshll.u32 %v2331, 16
      %v2385 = vrot.slane %v2383, 6
      %v2386 = vor.u32 %v2382, %v2385
      %v2387 = vrot.slane %v2386, 4
      %v2389 = vshrl.u32 %v2332, 16
      %v2391 = vrot.slane %v2389, 5
      %v2392 = vshll.u32 %v2332, 16
      %v2394 = vrot.slane %v2392, 6
      %v2395 = vor.u32 %v2391, %v2394
      %v2396 = vsel %vm252, %v2387, %v2395
      %v2397 = vrot.slane %v2395, 4
      %v2399 = vshrl.u32 %v2333, 16
      %v2401 = vrot.slane %v2399, 5
      %v2402 = vshll.u32 %v2333, 16
      %v2404 = vrot.slane %v2402, 6
      %v2405 = vor.u32 %v2401, %v2404
      %v2406 = vsel %vm252, %v2397, %v2405
      %v2408 = vshrl.u32 %v2334, 16
      %v2410 = vrot.slane %v2408, 5
      %v2411 = vshll.u32 %v2334, 16
      %v2413 = vrot.slane %v2411, 6
      %v2414 = vor.u32 %v2410, %v2413
      %v2415 = vrot.slane %v2414, 4
      %v2417 = vshrl.u32 %v2335, 16
      %v2419 = vrot.slane %v2417, 5
      %v2420 = vshll.u32 %v2335, 16
      %v2422 = vrot.slane %v2420, 6
      %v2423 = vor.u32 %v2419, %v2422
      %v2424 = vsel %vm252, %v2415, %v2423
      %v2425 = vrot.slane %v2423, 4
      %v2427 = vshrl.u32 %v2336, 16
      %v2429 = vrot.slane %v2427, 5
      %v2430 = vshll.u32 %v2336, 16
      %v2432 = vrot.slane %v2430, 6
      %v2433 = vor.u32 %v2429, %v2432
      %v2434 = vsel %vm252, %v2425, %v2433
      %v2436 = vshrl.u32 %v2337, 16
      %v2438 = vrot.slane %v2436, 5
      %v2439 = vshll.u32 %v2337, 16
      %v2441 = vrot.slane %v2439, 6
      %v2442 = vor.u32 %v2438, %v2441
      %v2443 = vrot.slane %v2442, 4
      %v2445 = vshrl.u32 %v2338, 16
      %v2447 = vrot.slane %v2445, 5
      %v2448 = vshll.u32 %v2338, 16
      %v2450 = vrot.slane %v2448, 6
      %v2451 = vor.u32 %v2447, %v2450
      %v2452 = vsel %vm252, %v2443, %v2451
      %v2453 = vrot.slane %v2451, 4
      %v2455 = vshrl.u32 %v2339, 16
      %v2457 = vrot.slane %v2455, 5
      %v2458 = vshll.u32 %v2339, 16
      %v2460 = vrot.slane %v2458, 6
      %v2461 = vor.u32 %v2457, %v2460
      %v2462 = vsel %vm252, %v2453, %v2461
      %v2464 = vshrl.u32 %v2340, 16
      %v2466 = vrot.slane %v2464, 5
      %v2467 = vshll.u32 %v2340, 16
      %v2469 = vrot.slane %v2467, 6
      %v2470 = vor.u32 %v2466, %v2469
      %v2471 = vrot.slane %v2470, 4
      %v2473 = vshrl.u32 %v2341, 16
      %v2475 = vrot.slane %v2473, 5
      %v2476 = vshll.u32 %v2341, 16
      %v2478 = vrot.slane %v2476, 6
      %v2479 = vor.u32 %v2475, %v2478
      %v2480 = vsel %vm252, %v2471, %v2479
      %v2481 = vrot.slane %v2479, 4
      %v2483 = vshrl.u32 %v2342, 16
      %v2485 = vrot.slane %v2483, 5
      %v2486 = vshll.u32 %v2342, 16
      %v2488 = vrot.slane %v2486, 6
      %v2489 = vor.u32 %v2485, %v2488
      %v2490 = vsel %vm252, %v2481, %v2489
      %v2492 = vshrl.u32 %v2343, 16
      %v2494 = vrot.slane %v2492, 5
      %v2495 = vshll.u32 %v2343, 16
      %v2497 = vrot.slane %v2495, 6
      %v2498 = vor.u32 %v2494, %v2497
      %v2499 = vrot.slane %v2498, 4
      %v2501 = vshrl.u32 %v2344, 16
      %v2503 = vrot.slane %v2501, 5
      %v2504 = vshll.u32 %v2344, 16
      %v2506 = vrot.slane %v2504, 6
      %v2507 = vor.u32 %v2503, %v2506
      %v2508 = vsel %vm252, %v2499, %v2507
      %v2509 = vrot.slane %v2507, 4
      %v2511 = vshrl.u32 %v2345, 16
      %v2513 = vrot.slane %v2511, 5
      %v2514 = vshll.u32 %v2345, 16
      %v2516 = vrot.slane %v2514, 6
      %v2517 = vor.u32 %v2513, %v2516
      %v2518 = vsel %vm252, %v2509, %v2517
      %v2520 = vshrl.u32 %v2346, 16
      %v2522 = vrot.slane %v2520, 5
      %v2523 = vshll.u32 %v2346, 16
      %v2525 = vrot.slane %v2523, 6
      %v2526 = vor.u32 %v2522, %v2525
      %v2527 = vrot.slane %v2526, 4
      %v2529 = vshrl.u32 %v2347, 16
      %v2531 = vrot.slane %v2529, 5
      %v2532 = vshll.u32 %v2347, 16
      %v2534 = vrot.slane %v2532, 6
      %v2535 = vor.u32 %v2531, %v2534
      %v2536 = vsel %vm252, %v2527, %v2535
      %v2537 = vrot.slane %v2535, 4
      %v2539 = vshrl.u32 %v2348, 16
      %v2541 = vrot.slane %v2539, 5
      %v2542 = vshll.u32 %v2348, 16
      %v2544 = vrot.slane %v2542, 6
      %v2545 = vor.u32 %v2541, %v2544
      %v2546 = vsel %vm252, %v2537, %v2545
      %v2548 = vshrl.u32 %v2349, 16
      %v2550 = vrot.slane %v2548, 5
      %v2551 = vshll.u32 %v2349, 16
      %v2553 = vrot.slane %v2551, 6
      %v2554 = vor.u32 %v2550, %v2553
      %v2555 = vrot.slane %v2554, 4
      %v2557 = vshrl.u32 %v2350, 16
      %v2559 = vrot.slane %v2557, 5
      %v2560 = vshll.u32 %v2350, 16
      %v2562 = vrot.slane %v2560, 6
      %v2563 = vor.u32 %v2559, %v2562
      %v2564 = vsel %vm252, %v2555, %v2563
      %v2565 = vrot.slane %v2563, 4
      %v2567 = vshrl.u32 %v2351, 16
      %v2569 = vrot.slane %v2567, 5
      %v2570 = vshll.u32 %v2351, 16
      %v2572 = vrot.slane %v2570, 6
      %v2573 = vor.u32 %v2569, %v2572
      %v2574 = vsel %vm252, %v2565, %v2573
      %v2576 = vshrl.u32 %v2352, 16
      %v2578 = vrot.slane %v2576, 5
      %v2579 = vshll.u32 %v2352, 16
      %v2581 = vrot.slane %v2579, 6
      %v2582 = vor.u32 %v2578, %v2581
      %v2583 = vrot.slane %v2582, 4
      %v2585 = vshrl.u32 %v2353, 16
      %v2587 = vrot.slane %v2585, 5
      %v2588 = vshll.u32 %v2353, 16
      %v2590 = vrot.slane %v2588, 6
      %v2591 = vor.u32 %v2587, %v2590
      %v2592 = vsel %vm252, %v2583, %v2591
      %v2593 = vrot.slane %v2591, 4
      %v2595 = vshrl.u32 %v2354, 16
      %v2597 = vrot.slane %v2595, 5
      %v2598 = vshll.u32 %v2354, 16
      %v2600 = vrot.slane %v2598, 6
      %v2601 = vor.u32 %v2597, %v2600
      %v2602 = vsel %vm252, %v2593, %v2601
      %v2604 = vshrl.u32 %v2355, 16
      %v2606 = vrot.slane %v2604, 5
      %v2607 = vshll.u32 %v2355, 16
      %v2609 = vrot.slane %v2607, 6
      %v2610 = vor.u32 %v2606, %v2609
      %v2611 = vrot.slane %v2610, 4
      %v2613 = vshrl.u32 %v2356, 16
      %v2615 = vrot.slane %v2613, 5
      %v2616 = vshll.u32 %v2356, 16
      %v2618 = vrot.slane %v2616, 6
      %v2619 = vor.u32 %v2615, %v2618
      %v2620 = vsel %vm252, %v2611, %v2619
      %v2621 = vrot.slane %v2619, 4
      %v2623 = vshrl.u32 %v2357, 16
      %v2625 = vrot.slane %v2623, 5
      %v2626 = vshll.u32 %v2357, 16
      %v2628 = vrot.slane %v2626, 6
      %v2629 = vor.u32 %v2625, %v2628
      %v2630 = vsel %vm252, %v2621, %v2629
      %v2632 = vshrl.u32 %v2358, 16
      %v2634 = vrot.slane %v2632, 5
      %v2635 = vshll.u32 %v2358, 16
      %v2637 = vrot.slane %v2635, 6
      %v2638 = vor.u32 %v2634, %v2637
      %v2639 = vrot.slane %v2638, 4
      %v2641 = vshrl.u32 %v2359, 16
      %v2643 = vrot.slane %v2641, 5
      %v2644 = vshll.u32 %v2359, 16
      %v2646 = vrot.slane %v2644, 6
      %v2647 = vor.u32 %v2643, %v2646
      %v2648 = vsel %vm252, %v2639, %v2647
      %v2649 = vrot.slane %v2647, 4
      %v2651 = vshrl.u32 %v2360, 16
      %v2653 = vrot.slane %v2651, 5
      %v2654 = vshll.u32 %v2360, 16
      %v2656 = vrot.slane %v2654, 6
      %v2657 = vor.u32 %v2653, %v2656
      %v2658 = vsel %vm252, %v2649, %v2657
      %v2660 = vshrl.u32 %v2361, 16
      %v2662 = vrot.slane %v2660, 5
      %v2663 = vshll.u32 %v2361, 16
      %v2665 = vrot.slane %v2663, 6
      %v2666 = vor.u32 %v2662, %v2665
      %v2667 = vrot.slane %v2666, 4
      %v2669 = vshrl.u32 %v2362, 16
      %v2671 = vrot.slane %v2669, 5
      %v2672 = vshll.u32 %v2362, 16
      %v2674 = vrot.slane %v2672, 6
      %v2675 = vor.u32 %v2671, %v2674
      %v2676 = vsel %vm252, %v2667, %v2675
      %v2677 = vrot.slane %v2675, 4
      %v2679 = vshrl.u32 %v2363, 16
      %v2681 = vrot.slane %v2679, 5
      %v2682 = vshll.u32 %v2363, 16
      %v2684 = vrot.slane %v2682, 6
      %v2685 = vor.u32 %v2681, %v2684
      %v2686 = vsel %vm252, %v2677, %v2685
      %v2688 = vshrl.u32 %v2364, 16
      %v2690 = vrot.slane %v2688, 5
      %v2691 = vshll.u32 %v2364, 16
      %v2693 = vrot.slane %v2691, 6
      %v2694 = vor.u32 %v2690, %v2693
      %v2695 = vrot.slane %v2694, 4
      %v2697 = vshrl.u32 %v2365, 16
      %v2699 = vrot.slane %v2697, 5
      %v2700 = vshll.u32 %v2365, 16
      %v2702 = vrot.slane %v2700, 6
      %v2703 = vor.u32 %v2699, %v2702
      %v2704 = vsel %vm252, %v2695, %v2703
      %v2705 = vrot.slane %v2703, 4
      %v2707 = vshrl.u32 %v2366, 16
      %v2709 = vrot.slane %v2707, 5
      %v2710 = vshll.u32 %v2366, 16
      %v2712 = vrot.slane %v2710, 6
      %v2713 = vor.u32 %v2709, %v2712
      %v2714 = vsel %vm252, %v2705, %v2713
      %v2716 = vshrl.u32 %v2367, 16
      %v2718 = vrot.slane %v2716, 5
      %v2719 = vshll.u32 %v2367, 16
      %v2721 = vrot.slane %v2719, 6
      %v2722 = vor.u32 %v2718, %v2721
      %v2723 = vrot.slane %v2722, 4
      %v2725 = vshrl.u32 %v2368, 16
      %v2727 = vrot.slane %v2725, 5
      %v2728 = vshll.u32 %v2368, 16
      %v2730 = vrot.slane %v2728, 6
      %v2731 = vor.u32 %v2727, %v2730
      %v2732 = vsel %vm252, %v2723, %v2731
      %v2733 = vrot.slane %v2731, 4
      %v2735 = vshrl.u32 %v2369, 16
      %v2737 = vrot.slane %v2735, 5
      %v2738 = vshll.u32 %v2369, 16
      %v2740 = vrot.slane %v2738, 6
      %v2741 = vor.u32 %v2737, %v2740
      %v2742 = vsel %vm252, %v2733, %v2741
      %v2744 = vshrl.u32 %v2370, 16
      %v2746 = vrot.slane %v2744, 5
      %v2747 = vshll.u32 %v2370, 16
      %v2749 = vrot.slane %v2747, 6
      %v2750 = vor.u32 %v2746, %v2749
      %v2751 = vrot.slane %v2750, 4
      %v2753 = vshrl.u32 %v2371, 16
      %v2755 = vrot.slane %v2753, 5
      %v2756 = vshll.u32 %v2371, 16
      %v2758 = vrot.slane %v2756, 6
      %v2759 = vor.u32 %v2755, %v2758
      %v2760 = vsel %vm252, %v2751, %v2759
      %v2761 = vrot.slane %v2759, 4
      %v2763 = vshrl.u32 %v2372, 16
      %v2765 = vrot.slane %v2763, 5
      %v2766 = vshll.u32 %v2372, 16
      %v2768 = vrot.slane %v2766, 6
      %v2769 = vor.u32 %v2765, %v2768
      %v2770 = vsel %vm252, %v2761, %v2769
      %v2772 = vshrl.u32 %v2373, 16
      %v2774 = vrot.slane %v2772, 5
      %v2775 = vshll.u32 %v2373, 16
      %v2777 = vrot.slane %v2775, 6
      %v2778 = vor.u32 %v2774, %v2777
      %v2779 = vrot.slane %v2778, 4
      %v2781 = vshrl.u32 %v2374, 16
      %v2783 = vrot.slane %v2781, 5
      %v2784 = vshll.u32 %v2374, 16
      %v2786 = vrot.slane %v2784, 6
      %v2787 = vor.u32 %v2783, %v2786
      %v2788 = vsel %vm252, %v2779, %v2787
      %v2789 = vrot.slane %v2787, 4
      %v2791 = vshrl.u32 %v2375, 16
      %v2793 = vrot.slane %v2791, 5
      %v2794 = vshll.u32 %v2375, 16
      %v2796 = vrot.slane %v2794, 6
      %v2797 = vor.u32 %v2793, %v2796
      %v2798 = vsel %vm252, %v2789, %v2797
      %v2800 = vshrl.u32 %v2376, 16
      %v2802 = vrot.slane %v2800, 5
      %v2803 = vshll.u32 %v2376, 16
      %v2805 = vrot.slane %v2803, 6
      %v2806 = vor.u32 %v2802, %v2805
      %v2807 = vrot.slane %v2806, 4
      %v2809 = vshrl.u32 %v2377, 16
      %v2811 = vrot.slane %v2809, 5
      %v2812 = vshll.u32 %v2377, 16
      %v2814 = vrot.slane %v2812, 6
      %v2815 = vor.u32 %v2811, %v2814
      %v2816 = vsel %vm252, %v2807, %v2815
      %v2817 = vrot.slane %v2815, 4
      %v2819 = vshrl.u32 %v2378, 16
      %v2821 = vrot.slane %v2819, 5
      %v2822 = vshll.u32 %v2378, 16
      %v2824 = vrot.slane %v2822, 6
      %v2825 = vor.u32 %v2821, %v2824
      %v2826 = vsel %vm252, %v2817, %v2825
      %v2827 = vld [vmem:[%s2330] sm:$0xc]
      %v2828 = vld [vmem:[%s2330 + $0xc] sm:$0xc]
      %v2829 = vld [vmem:[%s2330 + $0x18] sm:$0xc]
      %v2830 = vld [vmem:[%s2330 + $0x24] sm:$0xc]
      %v2831 = vld [vmem:[%s2330 + $0x30] sm:$0xc]
      %v2832 = vld [vmem:[%s2330 + $0x3c] sm:$0xc]
      %v2833 = vld [vmem:[%s2330 + $0x48] sm:$0xc]
      %v2834 = vld [vmem:[%s2330 + $0x54] sm:$0xc]
      %v2835 = vld [vmem:[%s2330 + $0x60] sm:$0xc]
      %v2836 = vld [vmem:[%s2330 + $0x6c] sm:$0xc]
      %v2837 = vld [vmem:[%s2330 + $0x78] sm:$0xc]
      %v2838 = vld [vmem:[%s2330 + $0x84] sm:$0xc]
      %v2839 = vld [vmem:[%s2330 + $0x90] sm:$0xc]
      %v2840 = vld [vmem:[%s2330 + $0x9c] sm:$0xc]
      %v2841 = vld [vmem:[%s2330 + $0xa8] sm:$0xc]
      %v2842 = vld [vmem:[%s2330 + $0xb4] sm:$0xc]
      %v2891 = vrot.slane %v2827, 6
      %v2892 = vrot.slane %v2891, 4
      %v2893 = vrot.slane %v2332, 6
      %v2894 = vsel %vm767, %v2892, %v2893
      %v2895 = vrot.slane %v2893, 4
      %v2896 = vrot.slane %v2333, 6
      %v2897 = vsel %vm767, %v2895, %v2896
      %v2898 = vrot.slane %v2828, 6
      %v2899 = vrot.slane %v2898, 4
      %v2900 = vrot.slane %v2335, 6
      %v2901 = vsel %vm767, %v2899, %v2900
      %v2902 = vrot.slane %v2900, 4
      %v2903 = vrot.slane %v2336, 6
      %v2904 = vsel %vm767, %v2902, %v2903
      %v2905 = vrot.slane %v2829, 6
      %v2906 = vrot.slane %v2905, 4
      %v2907 = vrot.slane %v2338, 6
      %v2908 = vsel %vm767, %v2906, %v2907
      %v2909 = vrot.slane %v2907, 4
      %v2910 = vrot.slane %v2339, 6
      %v2911 = vsel %vm767, %v2909, %v2910
      %v2912 = vrot.slane %v2830, 6
      %v2913 = vrot.slane %v2912, 4
      %v2914 = vrot.slane %v2341, 6
      %v2915 = vsel %vm767, %v2913, %v2914
      %v2916 = vrot.slane %v2914, 4
      %v2917 = vrot.slane %v2342, 6
      %v2918 = vsel %vm767, %v2916, %v2917
      %v2919 = vrot.slane %v2831, 6
      %v2920 = vrot.slane %v2919, 4
      %v2921 = vrot.slane %v2344, 6
      %v2922 = vsel %vm767, %v2920, %v2921
      %v2923 = vrot.slane %v2921, 4
      %v2924 = vrot.slane %v2345, 6
      %v2925 = vsel %vm767, %v2923, %v2924
      %v2926 = vrot.slane %v2832, 6
      %v2927 = vrot.slane %v2926, 4
      %v2928 = vrot.slane %v2347, 6
      %v2929 = vsel %vm767, %v2927, %v2928
      %v2930 = vrot.slane %v2928, 4
      %v2931 = vrot.slane %v2348, 6
      %v2932 = vsel %vm767, %v2930, %v2931
      %v2933 = vrot.slane %v2833, 6
      %v2934 = vrot.slane %v2933, 4
      %v2935 = vrot.slane %v2350, 6
      %v2936 = vsel %vm767, %v2934, %v2935
      %v2937 = vrot.slane %v2935, 4
      %v2938 = vrot.slane %v2351, 6
      %v2939 = vsel %vm767, %v2937, %v2938
      %v2940 = vrot.slane %v2834, 6
      %v2941 = vrot.slane %v2940, 4
      %v2942 = vrot.slane %v2353, 6
      %v2943 = vsel %vm767, %v2941, %v2942
      %v2944 = vrot.slane %v2942, 4
      %v2945 = vrot.slane %v2354, 6
      %v2946 = vsel %vm767, %v2944, %v2945
      %v2947 = vrot.slane %v2835, 6
      %v2948 = vrot.slane %v2947, 4
      %v2949 = vrot.slane %v2356, 6
      %v2950 = vsel %vm767, %v2948, %v2949
      %v2951 = vrot.slane %v2949, 4
      %v2952 = vrot.slane %v2357, 6
      %v2953 = vsel %vm767, %v2951, %v2952
      %v2954 = vrot.slane %v2836, 6
      %v2955 = vrot.slane %v2954, 4
      %v2956 = vrot.slane %v2359, 6
      %v2957 = vsel %vm767, %v2955, %v2956
      %v2958 = vrot.slane %v2956, 4
      %v2959 = vrot.slane %v2360, 6
      %v2960 = vsel %vm767, %v2958, %v2959
      %v2961 = vrot.slane %v2837, 6
      %v2962 = vrot.slane %v2961, 4
      %v2963 = vrot.slane %v2362, 6
      %v2964 = vsel %vm767, %v2962, %v2963
      %v2965 = vrot.slane %v2963, 4
      %v2966 = vrot.slane %v2363, 6
      %v2967 = vsel %vm767, %v2965, %v2966
      %v2968 = vrot.slane %v2838, 6
      %v2969 = vrot.slane %v2968, 4
      %v2970 = vrot.slane %v2365, 6
      %v2971 = vsel %vm767, %v2969, %v2970
      %v2972 = vrot.slane %v2970, 4
      %v2973 = vrot.slane %v2366, 6
      %v2974 = vsel %vm767, %v2972, %v2973
      %v2975 = vrot.slane %v2839, 6
      %v2976 = vrot.slane %v2975, 4
      %v2977 = vrot.slane %v2368, 6
      %v2978 = vsel %vm767, %v2976, %v2977
      %v2979 = vrot.slane %v2977, 4
      %v2980 = vrot.slane %v2369, 6
      %v2981 = vsel %vm767, %v2979, %v2980
      %v2982 = vrot.slane %v2840, 6
      %v2983 = vrot.slane %v2982, 4
      %v2984 = vrot.slane %v2371, 6
      %v2985 = vsel %vm767, %v2983, %v2984
      %v2986 = vrot.slane %v2984, 4
      %v2987 = vrot.slane %v2372, 6
      %v2988 = vsel %vm767, %v2986, %v2987
      %v2989 = vrot.slane %v2841, 6
      %v2990 = vrot.slane %v2989, 4
      %v2991 = vrot.slane %v2374, 6
      %v2992 = vsel %vm767, %v2990, %v2991
      %v2993 = vrot.slane %v2991, 4
      %v2994 = vrot.slane %v2375, 6
      %v2995 = vsel %vm767, %v2993, %v2994
      %v2996 = vrot.slane %v2842, 6
      %v2997 = vrot.slane %v2996, 4
      %v2998 = vrot.slane %v2377, 6
      %v2999 = vsel %vm767, %v2997, %v2998
      %v3000 = vrot.slane %v2998, 4
      %v3001 = vrot.slane %v2378, 6
      %v3002 = vsel %vm767, %v3000, %v3001
      %v3003 = vld [vmem:[%s2330 + $0x8] sm:$0x7]
      %v3004 = vld [vmem:[%s2330 + $0x14] sm:$0x7]
      %v3005 = vld [vmem:[%s2330 + $0x20] sm:$0x7]
      %v3006 = vld [vmem:[%s2330 + $0x2c] sm:$0x7]
      %v3007 = vld [vmem:[%s2330 + $0x38] sm:$0x7]
      %v3008 = vld [vmem:[%s2330 + $0x44] sm:$0x7]
      %v3009 = vld [vmem:[%s2330 + $0x50] sm:$0x7]
      %v3010 = vld [vmem:[%s2330 + $0x5c] sm:$0x7]
      %v3011 = vld [vmem:[%s2330 + $0x68] sm:$0x7]
      %v3012 = vld [vmem:[%s2330 + $0x74] sm:$0x7]
      %v3013 = vld [vmem:[%s2330 + $0x80] sm:$0x7]
      %v3014 = vld [vmem:[%s2330 + $0x8c] sm:$0x7]
      %v3015 = vld [vmem:[%s2330 + $0x98] sm:$0x7]
      %v3016 = vld [vmem:[%s2330 + $0xa4] sm:$0x7]
      %v3017 = vld [vmem:[%s2330 + $0xb0] sm:$0x7]
      %v3018 = vld [vmem:[%s2330 + $0xbc] sm:$0x7]
      %v3020 = vshrl.u32 %v2827, 16
      %v3022 = vrot.slane %v3020, 6
      %v3023 = vshll.u32 %v2827, 16
      %v3025 = vrot.slane %v3023, 7
      %v3026 = vor.u32 %v3022, %v3025
      %v3027 = vrot.slane %v3026, 4
      %v3028 = vrot.slane %v2389, 6
      %v3029 = vrot.slane %v2392, 7
      %v3030 = vor.u32 %v3028, %v3029
      %v3031 = vsel %vm898, %v3027, %v3030
      %v3032 = vrot.slane %v3030, 4
      %v3034 = vshrl.u32 %v3003, 16
      %v3036 = vrot.slane %v3034, 6
      %v3037 = vshll.u32 %v3003, 16
      %v3039 = vrot.slane %v3037, 7
      %v3040 = vor.u32 %v3036, %v3039
      %v3041 = vsel %vm898, %v3032, %v3040
      %v3043 = vshrl.u32 %v2828, 16
      %v3045 = vrot.slane %v3043, 6
      %v3046 = vshll.u32 %v2828, 16
      %v3048 = vrot.slane %v3046, 7
      %v3049 = vor.u32 %v3045, %v3048
      %v3050 = vrot.slane %v3049, 4
      %v3051 = vrot.slane %v2417, 6
      %v3052 = vrot.slane %v2420, 7
      %v3053 = vor.u32 %v3051, %v3052
      %v3054 = vsel %vm898, %v3050, %v3053
      %v3055 = vrot.slane %v3053, 4
      %v3057 = vshrl.u32 %v3004, 16
      %v3059 = vrot.slane %v3057, 6
      %v3060 = vshll.u32 %v3004, 16
      %v3062 = vrot.slane %v3060, 7
      %v3063 = vor.u32 %v3059, %v3062
      %v3064 = vsel %vm898, %v3055, %v3063
      %v3066 = vshrl.u32 %v2829, 16
      %v3068 = vrot.slane %v3066, 6
      %v3069 = vshll.u32 %v2829, 16
      %v3071 = vrot.slane %v3069, 7
      %v3072 = vor.u32 %v3068, %v3071
      %v3073 = vrot.slane %v3072, 4
      %v3074 = vrot.slane %v2445, 6
      %v3075 = vrot.slane %v2448, 7
      %v3076 = vor.u32 %v3074, %v3075
      %v3077 = vsel %vm898, %v3073, %v3076
      %v3078 = vrot.slane %v3076, 4
      %v3080 = vshrl.u32 %v3005, 16
      %v3082 = vrot.slane %v3080, 6
      %v3083 = vshll.u32 %v3005, 16
      %v3085 = vrot.slane %v3083, 7
      %v3086 = vor.u32 %v3082, %v3085
      %v3087 = vsel %vm898, %v3078, %v3086
      %v3089 = vshrl.u32 %v2830, 16
      %v3091 = vrot.slane %v3089, 6
      %v3092 = vshll.u32 %v2830, 16
      %v3094 = vrot.slane %v3092, 7
      %v3095 = vor.u32 %v3091, %v3094
      %v3096 = vrot.slane %v3095, 4
      %v3097 = vrot.slane %v2473, 6
      %v3098 = vrot.slane %v2476, 7
      %v3099 = vor.u32 %v3097, %v3098
      %v3100 = vsel %vm898, %v3096, %v3099
      %v3101 = vrot.slane %v3099, 4
      %v3103 = vshrl.u32 %v3006, 16
      %v3105 = vrot.slane %v3103, 6
      %v3106 = vshll.u32 %v3006, 16
      %v3108 = vrot.slane %v3106, 7
      %v3109 = vor.u32 %v3105, %v3108
      %v3110 = vsel %vm898, %v3101, %v3109
      %v3112 = vshrl.u32 %v2831, 16
      %v3114 = vrot.slane %v3112, 6
      %v3115 = vshll.u32 %v2831, 16
      %v3117 = vrot.slane %v3115, 7
      %v3118 = vor.u32 %v3114, %v3117
      %v3119 = vrot.slane %v3118, 4
      %v3120 = vrot.slane %v2501, 6
      %v3121 = vrot.slane %v2504, 7
      %v3122 = vor.u32 %v3120, %v3121
      %v3123 = vsel %vm898, %v3119, %v3122
      %v3124 = vrot.slane %v3122, 4
      %v3126 = vshrl.u32 %v3007, 16
      %v3128 = vrot.slane %v3126, 6
      %v3129 = vshll.u32 %v3007, 16
      %v3131 = vrot.slane %v3129, 7
      %v3132 = vor.u32 %v3128, %v3131
      %v3133 = vsel %vm898, %v3124, %v3132
      %v3135 = vshrl.u32 %v2832, 16
      %v3137 = vrot.slane %v3135, 6
      %v3138 = vshll.u32 %v2832, 16
      %v3140 = vrot.slane %v3138, 7
      %v3141 = vor.u32 %v3137, %v3140
      %v3142 = vrot.slane %v3141, 4
      %v3143 = vrot.slane %v2529, 6
      %v3144 = vrot.slane %v2532, 7
      %v3145 = vor.u32 %v3143, %v3144
      %v3146 = vsel %vm898, %v3142, %v3145
      %v3147 = vrot.slane %v3145, 4
      %v3149 = vshrl.u32 %v3008, 16
      %v3151 = vrot.slane %v3149, 6
      %v3152 = vshll.u32 %v3008, 16
      %v3154 = vrot.slane %v3152, 7
      %v3155 = vor.u32 %v3151, %v3154
      %v3156 = vsel %vm898, %v3147, %v3155
      %v3158 = vshrl.u32 %v2833, 16
      %v3160 = vrot.slane %v3158, 6
      %v3161 = vshll.u32 %v2833, 16
      %v3163 = vrot.slane %v3161, 7
      %v3164 = vor.u32 %v3160, %v3163
      %v3165 = vrot.slane %v3164, 4
      %v3166 = vrot.slane %v2557, 6
      %v3167 = vrot.slane %v2560, 7
      %v3168 = vor.u32 %v3166, %v3167
      %v3169 = vsel %vm898, %v3165, %v3168
      %v3170 = vrot.slane %v3168, 4
      %v3172 = vshrl.u32 %v3009, 16
      %v3174 = vrot.slane %v3172, 6
      %v3175 = vshll.u32 %v3009, 16
      %v3177 = vrot.slane %v3175, 7
      %v3178 = vor.u32 %v3174, %v3177
      %v3179 = vsel %vm898, %v3170, %v3178
      %v3181 = vshrl.u32 %v2834, 16
      %v3183 = vrot.slane %v3181, 6
      %v3184 = vshll.u32 %v2834, 16
      %v3186 = vrot.slane %v3184, 7
      %v3187 = vor.u32 %v3183, %v3186
      %v3188 = vrot.slane %v3187, 4
      %v3189 = vrot.slane %v2585, 6
      %v3190 = vrot.slane %v2588, 7
      %v3191 = vor.u32 %v3189, %v3190
      %v3192 = vsel %vm898, %v3188, %v3191
      %v3193 = vrot.slane %v3191, 4
      %v3195 = vshrl.u32 %v3010, 16
      %v3197 = vrot.slane %v3195, 6
      %v3198 = vshll.u32 %v3010, 16
      %v3200 = vrot.slane %v3198, 7
      %v3201 = vor.u32 %v3197, %v3200
      %v3202 = vsel %vm898, %v3193, %v3201
      %v3204 = vshrl.u32 %v2835, 16
      %v3206 = vrot.slane %v3204, 6
      %v3207 = vshll.u32 %v2835, 16
      %v3209 = vrot.slane %v3207, 7
      %v3210 = vor.u32 %v3206, %v3209
      %v3211 = vrot.slane %v3210, 4
      %v3212 = vrot.slane %v2613, 6
      %v3213 = vrot.slane %v2616, 7
      %v3214 = vor.u32 %v3212, %v3213
      %v3215 = vsel %vm898, %v3211, %v3214
      %v3216 = vrot.slane %v3214, 4
      %v3218 = vshrl.u32 %v3011, 16
      %v3220 = vrot.slane %v3218, 6
      %v3221 = vshll.u32 %v3011, 16
      %v3223 = vrot.slane %v3221, 7
      %v3224 = vor.u32 %v3220, %v3223
      %v3225 = vsel %vm898, %v3216, %v3224
      %v3227 = vshrl.u32 %v2836, 16
      %v3229 = vrot.slane %v3227, 6
      %v3230 = vshll.u32 %v2836, 16
      %v3232 = vrot.slane %v3230, 7
      %v3233 = vor.u32 %v3229, %v3232
      %v3234 = vrot.slane %v3233, 4
      %v3235 = vrot.slane %v2641, 6
      %v3236 = vrot.slane %v2644, 7
      %v3237 = vor.u32 %v3235, %v3236
      %v3238 = vsel %vm898, %v3234, %v3237
      %v3239 = vrot.slane %v3237, 4
      %v3241 = vshrl.u32 %v3012, 16
      %v3243 = vrot.slane %v3241, 6
      %v3244 = vshll.u32 %v3012, 16
      %v3246 = vrot.slane %v3244, 7
      %v3247 = vor.u32 %v3243, %v3246
      %v3248 = vsel %vm898, %v3239, %v3247
      %v3250 = vshrl.u32 %v2837, 16
      %v3252 = vrot.slane %v3250, 6
      %v3253 = vshll.u32 %v2837, 16
      %v3255 = vrot.slane %v3253, 7
      %v3256 = vor.u32 %v3252, %v3255
      %v3257 = vrot.slane %v3256, 4
      %v3258 = vrot.slane %v2669, 6
      %v3259 = vrot.slane %v2672, 7
      %v3260 = vor.u32 %v3258, %v3259
      %v3261 = vsel %vm898, %v3257, %v3260
      %v3262 = vrot.slane %v3260, 4
      %v3264 = vshrl.u32 %v3013, 16
      %v3266 = vrot.slane %v3264, 6
      %v3267 = vshll.u32 %v3013, 16
      %v3269 = vrot.slane %v3267, 7
      %v3270 = vor.u32 %v3266, %v3269
      %v3271 = vsel %vm898, %v3262, %v3270
      %v3273 = vshrl.u32 %v2838, 16
      %v3275 = vrot.slane %v3273, 6
      %v3276 = vshll.u32 %v2838, 16
      %v3278 = vrot.slane %v3276, 7
      %v3279 = vor.u32 %v3275, %v3278
      %v3280 = vrot.slane %v3279, 4
      %v3281 = vrot.slane %v2697, 6
      %v3282 = vrot.slane %v2700, 7
      %v3283 = vor.u32 %v3281, %v3282
      %v3284 = vsel %vm898, %v3280, %v3283
      %v3285 = vrot.slane %v3283, 4
      %v3287 = vshrl.u32 %v3014, 16
      %v3289 = vrot.slane %v3287, 6
      %v3290 = vshll.u32 %v3014, 16
      %v3292 = vrot.slane %v3290, 7
      %v3293 = vor.u32 %v3289, %v3292
      %v3294 = vsel %vm898, %v3285, %v3293
      %v3296 = vshrl.u32 %v2839, 16
      %v3298 = vrot.slane %v3296, 6
      %v3299 = vshll.u32 %v2839, 16
      %v3301 = vrot.slane %v3299, 7
      %v3302 = vor.u32 %v3298, %v3301
      %v3303 = vrot.slane %v3302, 4
      %v3304 = vrot.slane %v2725, 6
      %v3305 = vrot.slane %v2728, 7
      %v3306 = vor.u32 %v3304, %v3305
      %v3307 = vsel %vm898, %v3303, %v3306
      %v3308 = vrot.slane %v3306, 4
      %v3310 = vshrl.u32 %v3015, 16
      %v3312 = vrot.slane %v3310, 6
      %v3313 = vshll.u32 %v3015, 16
      %v3315 = vrot.slane %v3313, 7
      %v3316 = vor.u32 %v3312, %v3315
      %v3317 = vsel %vm898, %v3308, %v3316
      %v3319 = vshrl.u32 %v2840, 16
      %v3321 = vrot.slane %v3319, 6
      %v3322 = vshll.u32 %v2840, 16
      %v3324 = vrot.slane %v3322, 7
      %v3325 = vor.u32 %v3321, %v3324
      %v3326 = vrot.slane %v3325, 4
      %v3327 = vrot.slane %v2753, 6
      %v3328 = vrot.slane %v2756, 7
      %v3329 = vor.u32 %v3327, %v3328
      %v3330 = vsel %vm898, %v3326, %v3329
      %v3331 = vrot.slane %v3329, 4
      %v3333 = vshrl.u32 %v3016, 16
      %v3335 = vrot.slane %v3333, 6
      %v3336 = vshll.u32 %v3016, 16
      %v3338 = vrot.slane %v3336, 7
      %v3339 = vor.u32 %v3335, %v3338
      %v3340 = vsel %vm898, %v3331, %v3339
      %v3342 = vshrl.u32 %v2841, 16
      %v3344 = vrot.slane %v3342, 6
      %v3345 = vshll.u32 %v2841, 16
      %v3347 = vrot.slane %v3345, 7
      %v3348 = vor.u32 %v3344, %v3347
      %v3349 = vrot.slane %v3348, 4
      %v3350 = vrot.slane %v2781, 6
      %v3351 = vrot.slane %v2784, 7
      %v3352 = vor.u32 %v3350, %v3351
      %v3353 = vsel %vm898, %v3349, %v3352
      %v3354 = vrot.slane %v3352, 4
      %v3356 = vshrl.u32 %v3017, 16
      %v3358 = vrot.slane %v3356, 6
      %v3359 = vshll.u32 %v3017, 16
      %v3361 = vrot.slane %v3359, 7
      %v3362 = vor.u32 %v3358, %v3361
      %v3363 = vsel %vm898, %v3354, %v3362
      %v3365 = vshrl.u32 %v2842, 16
      %v3367 = vrot.slane %v3365, 6
      %v3368 = vshll.u32 %v2842, 16
      %v3370 = vrot.slane %v3368, 7
      %v3371 = vor.u32 %v3367, %v3370
      %v3372 = vrot.slane %v3371, 4
      %v3373 = vrot.slane %v2809, 6
      %v3374 = vrot.slane %v2812, 7
      %v3375 = vor.u32 %v3373, %v3374
      %v3376 = vsel %vm898, %v3372, %v3375
      %v3377 = vrot.slane %v3375, 4
      %v3379 = vshrl.u32 %v3018, 16
      %v3381 = vrot.slane %v3379, 6
      %v3382 = vshll.u32 %v3018, 16
      %v3384 = vrot.slane %v3382, 7
      %v3385 = vor.u32 %v3381, %v3384
      %v3386 = vsel %vm898, %v3377, %v3385
      %v3387 = vunpack.c.l.b16 %v270
      %v3388 = vunpack.c.l.b16 %v280
      %v3389 = vunpack.c.l.b16 %v298
      %v3390 = vunpack.c.l.b16 %v308
      %v3391 = vunpack.c.l.b16 %v326
      %v3392 = vunpack.c.l.b16 %v336
      %v3393 = vunpack.c.l.b16 %v354
      %v3394 = vunpack.c.l.b16 %v364
      %v3395 = vunpack.c.l.b16 %v382
      %v3396 = vunpack.c.l.b16 %v392
      %v3397 = vunpack.c.l.b16 %v410
      %v3398 = vunpack.c.l.b16 %v420
      %v3399 = vunpack.c.l.b16 %v438
      %v3400 = vunpack.c.l.b16 %v448
      %v3401 = vunpack.c.l.b16 %v466
      %v3402 = vunpack.c.l.b16 %v476
      %v3403 = vunpack.c.l.b16 %v494
      %v3404 = vunpack.c.l.b16 %v504
      %v3405 = vunpack.c.l.b16 %v522
      %v3406 = vunpack.c.l.b16 %v532
      %v3407 = vunpack.c.l.b16 %v550
      %v3408 = vunpack.c.l.b16 %v560
      %v3409 = vunpack.c.l.b16 %v578
      %v3410 = vunpack.c.l.b16 %v588
      %v3411 = vunpack.c.l.b16 %v606
      %v3412 = vunpack.c.l.b16 %v616
      %v3413 = vunpack.c.l.b16 %v634
      %v3414 = vunpack.c.l.b16 %v644
      %v3415 = vunpack.c.l.b16 %v662
      %v3416 = vunpack.c.l.b16 %v672
      %v3417 = vunpack.c.l.b16 %v690
      %v3418 = vunpack.c.l.b16 %v700
      %v3419 = vpack.c.b16 %v3388, %v3387
      %v3420 = vpack.c.b16 %v3390, %v3389
      %v3421 = vpack.c.b16 %v3392, %v3391
      %v3422 = vpack.c.b16 %v3394, %v3393
      %v3423 = vpack.c.b16 %v3396, %v3395
      %v3424 = vpack.c.b16 %v3398, %v3397
      %v3425 = vpack.c.b16 %v3400, %v3399
      %v3426 = vpack.c.b16 %v3402, %v3401
      %v3427 = vpack.c.b16 %v3404, %v3403
      %v3428 = vpack.c.b16 %v3406, %v3405
      %v3429 = vpack.c.b16 %v3408, %v3407
      %v3430 = vpack.c.b16 %v3410, %v3409
      %v3431 = vpack.c.b16 %v3412, %v3411
      %v3432 = vpack.c.b16 %v3414, %v3413
      %v3433 = vpack.c.b16 %v3416, %v3415
      %v3434 = vpack.c.b16 %v3418, %v3417
      %v3435 = vunpack.c.l.b16 %v771
      %v3436 = vunpack.c.l.b16 %v774
      %v3437 = vunpack.c.l.b16 %v778
      %v3438 = vunpack.c.l.b16 %v781
      %v3439 = vunpack.c.l.b16 %v785
      %v3440 = vunpack.c.l.b16 %v788
      %v3441 = vunpack.c.l.b16 %v792
      %v3442 = vunpack.c.l.b16 %v795
      %v3443 = vunpack.c.l.b16 %v799
      %v3444 = vunpack.c.l.b16 %v802
      %v3445 = vunpack.c.l.b16 %v806
      %v3446 = vunpack.c.l.b16 %v809
      %v3447 = vunpack.c.l.b16 %v813
      %v3448 = vunpack.c.l.b16 %v816
      %v3449 = vunpack.c.l.b16 %v820
      %v3450 = vunpack.c.l.b16 %v823
      %v3451 = vunpack.c.l.b16 %v827
      %v3452 = vunpack.c.l.b16 %v830
      %v3453 = vunpack.c.l.b16 %v834
      %v3454 = vunpack.c.l.b16 %v837
      %v3455 = vunpack.c.l.b16 %v841
      %v3456 = vunpack.c.l.b16 %v844
      %v3457 = vunpack.c.l.b16 %v848
      %v3458 = vunpack.c.l.b16 %v851
      %v3459 = vunpack.c.l.b16 %v855
      %v3460 = vunpack.c.l.b16 %v858
      %v3461 = vunpack.c.l.b16 %v862
      %v3462 = vunpack.c.l.b16 %v865
      %v3463 = vunpack.c.l.b16 %v869
      %v3464 = vunpack.c.l.b16 %v872
      %v3465 = vunpack.c.l.b16 %v876
      %v3466 = vunpack.c.l.b16 %v879
      %v3467 = vpack.c.b16 %v3436, %v3435
      %v3468 = vpack.c.b16 %v3438, %v3437
      %v3469 = vpack.c.b16 %v3440, %v3439
      %v3470 = vpack.c.b16 %v3442, %v3441
      %v3471 = vpack.c.b16 %v3444, %v3443
      %v3472 = vpack.c.b16 %v3446, %v3445
      %v3473 = vpack.c.b16 %v3448, %v3447
      %v3474 = vpack.c.b16 %v3450, %v3449
      %v3475 = vpack.c.b16 %v3452, %v3451
      %v3476 = vpack.c.b16 %v3454, %v3453
      %v3477 = vpack.c.b16 %v3456, %v3455
      %v3478 = vpack.c.b16 %v3458, %v3457
      %v3479 = vpack.c.b16 %v3460, %v3459
      %v3480 = vpack.c.b16 %v3462, %v3461
      %v3481 = vpack.c.b16 %v3464, %v3463
      %v3482 = vpack.c.b16 %v3466, %v3465
      %3483 = vrot.lane.b32.xlu0 %v3467, 8
      %v3484 = vpop.permute.xlu0 %3483
      %3485 = vrot.lane.b32.xlu0 %v3468, 8
      %v3486 = vpop.permute.xlu0 %3485
      %3487 = vrot.lane.b32.xlu0 %v3469, 8
      %v3488 = vpop.permute.xlu0 %3487
      %3489 = vrot.lane.b32.xlu0 %v3470, 8
      %v3490 = vpop.permute.xlu0 %3489
      %3491 = vrot.lane.b32.xlu0 %v3471, 8
      %v3492 = vpop.permute.xlu0 %3491
      %3493 = vrot.lane.b32.xlu0 %v3472, 8
      %v3494 = vpop.permute.xlu0 %3493
      %3495 = vrot.lane.b32.xlu0 %v3473, 8
      %v3496 = vpop.permute.xlu0 %3495
      %3497 = vrot.lane.b32.xlu0 %v3474, 8
      %v3498 = vpop.permute.xlu0 %3497
      %3499 = vrot.lane.b32.xlu0 %v3475, 8
      %v3500 = vpop.permute.xlu0 %3499
      %3501 = vrot.lane.b32.xlu0 %v3476, 8
      %v3502 = vpop.permute.xlu0 %3501
      %3503 = vrot.lane.b32.xlu0 %v3477, 8
      %v3504 = vpop.permute.xlu0 %3503
      %3505 = vrot.lane.b32.xlu0 %v3478, 8
      %v3506 = vpop.permute.xlu0 %3505
      %3507 = vrot.lane.b32.xlu0 %v3479, 8
      %v3508 = vpop.permute.xlu0 %3507
      %3509 = vrot.lane.b32.xlu0 %v3480, 8
      %v3510 = vpop.permute.xlu0 %3509
      %3511 = vrot.lane.b32.xlu0 %v3481, 8
      %v3512 = vpop.permute.xlu0 %3511
      %3513 = vrot.lane.b32.xlu0 %v3482, 8
      %v3514 = vpop.permute.xlu0 %3513
      %v3515 = vunpack.c.l.b16 %v911
      %v3516 = vunpack.c.l.b16 %v921
      %v3517 = vunpack.c.l.b16 %v934
      %v3518 = vunpack.c.l.b16 %v944
      %v3519 = vunpack.c.l.b16 %v957
      %v3520 = vunpack.c.l.b16 %v967
      %v3521 = vunpack.c.l.b16 %v980
      %v3522 = vunpack.c.l.b16 %v990
      %v3523 = vunpack.c.l.b16 %v1003
      %v3524 = vunpack.c.l.b16 %v1013
      %v3525 = vunpack.c.l.b16 %v1026
      %v3526 = vunpack.c.l.b16 %v1036
      %v3527 = vunpack.c.l.b16 %v1049
      %v3528 = vunpack.c.l.b16 %v1059
      %v3529 = vunpack.c.l.b16 %v1072
      %v3530 = vunpack.c.l.b16 %v1082
      %v3531 = vunpack.c.l.b16 %v1095
      %v3532 = vunpack.c.l.b16 %v1105
      %v3533 = vunpack.c.l.b16 %v1118
      %v3534 = vunpack.c.l.b16 %v1128
      %v3535 = vunpack.c.l.b16 %v1141
      %v3536 = vunpack.c.l.b16 %v1151
      %v3537 = vunpack.c.l.b16 %v1164
      %v3538 = vunpack.c.l.b16 %v1174
      %v3539 = vunpack.c.l.b16 %v1187
      %v3540 = vunpack.c.l.b16 %v1197
      %v3541 = vunpack.c.l.b16 %v1210
      %v3542 = vunpack.c.l.b16 %v1220
      %v3543 = vunpack.c.l.b16 %v1233
      %v3544 = vunpack.c.l.b16 %v1243
      %v3545 = vunpack.c.l.b16 %v1256
      %v3546 = vunpack.c.l.b16 %v1266
      %v3547 = vpack.c.b16 %v3516, %v3515
      %v3548 = vpack.c.b16 %v3518, %v3517
      %v3549 = vpack.c.b16 %v3520, %v3519
      %v3550 = vpack.c.b16 %v3522, %v3521
      %v3551 = vpack.c.b16 %v3524, %v3523
      %v3552 = vpack.c.b16 %v3526, %v3525
      %v3553 = vpack.c.b16 %v3528, %v3527
      %v3554 = vpack.c.b16 %v3530, %v3529
      %v3555 = vpack.c.b16 %v3532, %v3531
      %v3556 = vpack.c.b16 %v3534, %v3533
      %v3557 = vpack.c.b16 %v3536, %v3535
      %v3558 = vpack.c.b16 %v3538, %v3537
      %v3559 = vpack.c.b16 %v3540, %v3539
      %v3560 = vpack.c.b16 %v3542, %v3541
      %v3561 = vpack.c.b16 %v3544, %v3543
      %v3562 = vpack.c.b16 %v3546, %v3545
      %3563 = vrot.lane.b32.xlu0 %v3547, 16
      %v3564 = vpop.permute.xlu0 %3563
      %3565 = vrot.lane.b32.xlu0 %v3548, 16
      %v3566 = vpop.permute.xlu0 %3565
      %3567 = vrot.lane.b32.xlu0 %v3549, 16
      %v3568 = vpop.permute.xlu0 %3567
      %3569 = vrot.lane.b32.xlu0 %v3550, 16
      %v3570 = vpop.permute.xlu0 %3569
      %3571 = vrot.lane.b32.xlu0 %v3551, 16
      %v3572 = vpop.permute.xlu0 %3571
      %3573 = vrot.lane.b32.xlu0 %v3552, 16
      %v3574 = vpop.permute.xlu0 %3573
      %3575 = vrot.lane.b32.xlu0 %v3553, 16
      %v3576 = vpop.permute.xlu0 %3575
      %3577 = vrot.lane.b32.xlu0 %v3554, 16
      %v3578 = vpop.permute.xlu0 %3577
      %3579 = vrot.lane.b32.xlu0 %v3555, 16
      %v3580 = vpop.permute.xlu0 %3579
      %3581 = vrot.lane.b32.xlu0 %v3556, 16
      %v3582 = vpop.permute.xlu0 %3581
      %3583 = vrot.lane.b32.xlu0 %v3557, 16
      %v3584 = vpop.permute.xlu0 %3583
      %3585 = vrot.lane.b32.xlu0 %v3558, 16
      %v3586 = vpop.permute.xlu0 %3585
      %3587 = vrot.lane.b32.xlu0 %v3559, 16
      %v3588 = vpop.permute.xlu0 %3587
      %3589 = vrot.lane.b32.xlu0 %v3560, 16
      %v3590 = vpop.permute.xlu0 %3589
      %3591 = vrot.lane.b32.xlu0 %v3561, 16
      %v3592 = vpop.permute.xlu0 %3591
      %3593 = vrot.lane.b32.xlu0 %v3562, 16
      %v3594 = vpop.permute.xlu0 %3593
      %v3595 = vunpack.c.l.b16 %v1336
      %v3596 = vunpack.c.l.b16 %v1346
      %v3597 = vunpack.c.l.b16 %v1364
      %v3598 = vunpack.c.l.b16 %v1374
      %v3599 = vunpack.c.l.b16 %v1392
      %v3600 = vunpack.c.l.b16 %v1402
      %v3601 = vunpack.c.l.b16 %v1420
      %v3602 = vunpack.c.l.b16 %v1430
      %v3603 = vunpack.c.l.b16 %v1448
      %v3604 = vunpack.c.l.b16 %v1458
      %v3605 = vunpack.c.l.b16 %v1476
      %v3606 = vunpack.c.l.b16 %v1486
      %v3607 = vunpack.c.l.b16 %v1504
      %v3608 = vunpack.c.l.b16 %v1514
      %v3609 = vunpack.c.l.b16 %v1532
      %v3610 = vunpack.c.l.b16 %v1542
      %v3611 = vunpack.c.l.b16 %v1560
      %v3612 = vunpack.c.l.b16 %v1570
      %v3613 = vunpack.c.l.b16 %v1588
      %v3614 = vunpack.c.l.b16 %v1598
      %v3615 = vunpack.c.l.b16 %v1616
      %v3616 = vunpack.c.l.b16 %v1626
      %v3617 = vunpack.c.l.b16 %v1644
      %v3618 = vunpack.c.l.b16 %v1654
      %v3619 = vunpack.c.l.b16 %v1672
      %v3620 = vunpack.c.l.b16 %v1682
      %v3621 = vunpack.c.l.b16 %v1700
      %v3622 = vunpack.c.l.b16 %v1710
      %v3623 = vunpack.c.l.b16 %v1728
      %v3624 = vunpack.c.l.b16 %v1738
      %v3625 = vunpack.c.l.b16 %v1756
      %v3626 = vunpack.c.l.b16 %v1766
      %v3627 = vpack.c.b16 %v3596, %v3595
      %v3628 = vpack.c.b16 %v3598, %v3597
      %v3629 = vpack.c.b16 %v3600, %v3599
      %v3630 = vpack.c.b16 %v3602, %v3601
      %v3631 = vpack.c.b16 %v3604, %v3603
      %v3632 = vpack.c.b16 %v3606, %v3605
      %v3633 = vpack.c.b16 %v3608, %v3607
      %v3634 = vpack.c.b16 %v3610, %v3609
      %v3635 = vpack.c.b16 %v3612, %v3611
      %v3636 = vpack.c.b16 %v3614, %v3613
      %v3637 = vpack.c.b16 %v3616, %v3615
      %v3638 = vpack.c.b16 %v3618, %v3617
      %v3639 = vpack.c.b16 %v3620, %v3619
      %v3640 = vpack.c.b16 %v3622, %v3621
      %v3641 = vpack.c.b16 %v3624, %v3623
      %v3642 = vpack.c.b16 %v3626, %v3625
      %3643 = vrot.lane.b32.xlu0 %v3627, 24
      %v3644 = vpop.permute.xlu0 %3643
      %3645 = vrot.lane.b32.xlu0 %v3628, 24
      %v3646 = vpop.permute.xlu0 %3645
      %3647 = vrot.lane.b32.xlu0 %v3629, 24
      %v3648 = vpop.permute.xlu0 %3647
      %3649 = vrot.lane.b32.xlu0 %v3630, 24
      %v3650 = vpop.permute.xlu0 %3649
      %3651 = vrot.lane.b32.xlu0 %v3631, 24
      %v3652 = vpop.permute.xlu0 %3651
      %3653 = vrot.lane.b32.xlu0 %v3632, 24
      %v3654 = vpop.permute.xlu0 %3653
      %3655 = vrot.lane.b32.xlu0 %v3633, 24
      %v3656 = vpop.permute.xlu0 %3655
      %3657 = vrot.lane.b32.xlu0 %v3634, 24
      %v3658 = vpop.permute.xlu0 %3657
      %3659 = vrot.lane.b32.xlu0 %v3635, 24
      %v3660 = vpop.permute.xlu0 %3659
      %3661 = vrot.lane.b32.xlu0 %v3636, 24
      %v3662 = vpop.permute.xlu0 %3661
      %3663 = vrot.lane.b32.xlu0 %v3637, 24
      %v3664 = vpop.permute.xlu0 %3663
      %3665 = vrot.lane.b32.xlu0 %v3638, 24
      %v3666 = vpop.permute.xlu0 %3665
      %3667 = vrot.lane.b32.xlu0 %v3639, 24
      %v3668 = vpop.permute.xlu0 %3667
      %3669 = vrot.lane.b32.xlu0 %v3640, 24
      %v3670 = vpop.permute.xlu0 %3669
      %3671 = vrot.lane.b32.xlu0 %v3641, 24
      %v3672 = vpop.permute.xlu0 %3671
      %3673 = vrot.lane.b32.xlu0 %v3642, 24
      %v3674 = vpop.permute.xlu0 %3673
      %v3675 = vunpack.c.l.b16 %v1834
      %v3676 = vunpack.c.l.b16 %v1837
      %v3677 = vunpack.c.l.b16 %v1841
      %v3678 = vunpack.c.l.b16 %v1844
      %v3679 = vunpack.c.l.b16 %v1848
      %v3680 = vunpack.c.l.b16 %v1851
      %v3681 = vunpack.c.l.b16 %v1855
      %v3682 = vunpack.c.l.b16 %v1858
      %v3683 = vunpack.c.l.b16 %v1862
      %v3684 = vunpack.c.l.b16 %v1865
      %v3685 = vunpack.c.l.b16 %v1869
      %v3686 = vunpack.c.l.b16 %v1872
      %v3687 = vunpack.c.l.b16 %v1876
      %v3688 = vunpack.c.l.b16 %v1879
      %v3689 = vunpack.c.l.b16 %v1883
      %v3690 = vunpack.c.l.b16 %v1886
      %v3691 = vunpack.c.l.b16 %v1890
      %v3692 = vunpack.c.l.b16 %v1893
      %v3693 = vunpack.c.l.b16 %v1897
      %v3694 = vunpack.c.l.b16 %v1900
      %v3695 = vunpack.c.l.b16 %v1904
      %v3696 = vunpack.c.l.b16 %v1907
      %v3697 = vunpack.c.l.b16 %v1911
      %v3698 = vunpack.c.l.b16 %v1914
      %v3699 = vunpack.c.l.b16 %v1918
      %v3700 = vunpack.c.l.b16 %v1921
      %v3701 = vunpack.c.l.b16 %v1925
      %v3702 = vunpack.c.l.b16 %v1928
      %v3703 = vunpack.c.l.b16 %v1932
      %v3704 = vunpack.c.l.b16 %v1935
      %v3705 = vunpack.c.l.b16 %v1939
      %v3706 = vunpack.c.l.b16 %v1942
      %v3707 = vpack.c.b16 %v3676, %v3675
      %v3708 = vpack.c.b16 %v3678, %v3677
      %v3709 = vpack.c.b16 %v3680, %v3679
      %v3710 = vpack.c.b16 %v3682, %v3681
      %v3711 = vpack.c.b16 %v3684, %v3683
      %v3712 = vpack.c.b16 %v3686, %v3685
      %v3713 = vpack.c.b16 %v3688, %v3687
      %v3714 = vpack.c.b16 %v3690, %v3689
      %v3715 = vpack.c.b16 %v3692, %v3691
      %v3716 = vpack.c.b16 %v3694, %v3693
      %v3717 = vpack.c.b16 %v3696, %v3695
      %v3718 = vpack.c.b16 %v3698, %v3697
      %v3719 = vpack.c.b16 %v3700, %v3699
      %v3720 = vpack.c.b16 %v3702, %v3701
      %v3721 = vpack.c.b16 %v3704, %v3703
      %v3722 = vpack.c.b16 %v3706, %v3705
      %3723 = vrot.lane.b32.xlu0 %v3707, 32
      %v3724 = vpop.permute.xlu0 %3723
      %3725 = vrot.lane.b32.xlu0 %v3708, 32
      %v3726 = vpop.permute.xlu0 %3725
      %3727 = vrot.lane.b32.xlu0 %v3709, 32
      %v3728 = vpop.permute.xlu0 %3727
      %3729 = vrot.lane.b32.xlu0 %v3710, 32
      %v3730 = vpop.permute.xlu0 %3729
      %3731 = vrot.lane.b32.xlu0 %v3711, 32
      %v3732 = vpop.permute.xlu0 %3731
      %3733 = vrot.lane.b32.xlu0 %v3712, 32
      %v3734 = vpop.permute.xlu0 %3733
      %3735 = vrot.lane.b32.xlu0 %v3713, 32
      %v3736 = vpop.permute.xlu0 %3735
      %3737 = vrot.lane.b32.xlu0 %v3714, 32
      %v3738 = vpop.permute.xlu0 %3737
      %3739 = vrot.lane.b32.xlu0 %v3715, 32
      %v3740 = vpop.permute.xlu0 %3739
      %3741 = vrot.lane.b32.xlu0 %v3716, 32
      %v3742 = vpop.permute.xlu0 %3741
      %3743 = vrot.lane.b32.xlu0 %v3717, 32
      %v3744 = vpop.permute.xlu0 %3743
      %3745 = vrot.lane.b32.xlu0 %v3718, 32
      %v3746 = vpop.permute.xlu0 %3745
      %3747 = vrot.lane.b32.xlu0 %v3719, 32
      %v3748 = vpop.permute.xlu0 %3747
      %3749 = vrot.lane.b32.xlu0 %v3720, 32
      %v3750 = vpop.permute.xlu0 %3749
      %3751 = vrot.lane.b32.xlu0 %v3721, 32
      %v3752 = vpop.permute.xlu0 %3751
      %3753 = vrot.lane.b32.xlu0 %v3722, 32
      %v3754 = vpop.permute.xlu0 %3753
      %v3755 = vunpack.c.l.b16 %v1971
      %v3756 = vunpack.c.l.b16 %v1981
      %v3757 = vunpack.c.l.b16 %v1994
      %v3758 = vunpack.c.l.b16 %v2004
      %v3759 = vunpack.c.l.b16 %v2017
      %v3760 = vunpack.c.l.b16 %v2027
      %v3761 = vunpack.c.l.b16 %v2040
      %v3762 = vunpack.c.l.b16 %v2050
      %v3763 = vunpack.c.l.b16 %v2063
      %v3764 = vunpack.c.l.b16 %v2073
      %v3765 = vunpack.c.l.b16 %v2086
      %v3766 = vunpack.c.l.b16 %v2096
      %v3767 = vunpack.c.l.b16 %v2109
      %v3768 = vunpack.c.l.b16 %v2119
      %v3769 = vunpack.c.l.b16 %v2132
      %v3770 = vunpack.c.l.b16 %v2142
      %v3771 = vunpack.c.l.b16 %v2155
      %v3772 = vunpack.c.l.b16 %v2165
      %v3773 = vunpack.c.l.b16 %v2178
      %v3774 = vunpack.c.l.b16 %v2188
      %v3775 = vunpack.c.l.b16 %v2201
      %v3776 = vunpack.c.l.b16 %v2211
      %v3777 = vunpack.c.l.b16 %v2224
      %v3778 = vunpack.c.l.b16 %v2234
      %v3779 = vunpack.c.l.b16 %v2247
      %v3780 = vunpack.c.l.b16 %v2257
      %v3781 = vunpack.c.l.b16 %v2270
      %v3782 = vunpack.c.l.b16 %v2280
      %v3783 = vunpack.c.l.b16 %v2293
      %v3784 = vunpack.c.l.b16 %v2303
      %v3785 = vunpack.c.l.b16 %v2316
      %v3786 = vunpack.c.l.b16 %v2326
      %v3787 = vpack.c.b16 %v3756, %v3755
      %v3788 = vpack.c.b16 %v3758, %v3757
      %v3789 = vpack.c.b16 %v3760, %v3759
      %v3790 = vpack.c.b16 %v3762, %v3761
      %v3791 = vpack.c.b16 %v3764, %v3763
      %v3792 = vpack.c.b16 %v3766, %v3765
      %v3793 = vpack.c.b16 %v3768, %v3767
      %v3794 = vpack.c.b16 %v3770, %v3769
      %v3795 = vpack.c.b16 %v3772, %v3771
      %v3796 = vpack.c.b16 %v3774, %v3773
      %v3797 = vpack.c.b16 %v3776, %v3775
      %v3798 = vpack.c.b16 %v3778, %v3777
      %v3799 = vpack.c.b16 %v3780, %v3779
      %v3800 = vpack.c.b16 %v3782, %v3781
      %v3801 = vpack.c.b16 %v3784, %v3783
      %v3802 = vpack.c.b16 %v3786, %v3785
      %3803 = vrot.lane.b32.xlu0 %v3787, 40
      %v3804 = vpop.permute.xlu0 %3803
      %3805 = vrot.lane.b32.xlu0 %v3788, 40
      %v3806 = vpop.permute.xlu0 %3805
      %3807 = vrot.lane.b32.xlu0 %v3789, 40
      %v3808 = vpop.permute.xlu0 %3807
      %3809 = vrot.lane.b32.xlu0 %v3790, 40
      %v3810 = vpop.permute.xlu0 %3809
      %3811 = vrot.lane.b32.xlu0 %v3791, 40
      %v3812 = vpop.permute.xlu0 %3811
      %3813 = vrot.lane.b32.xlu0 %v3792, 40
      %v3814 = vpop.permute.xlu0 %3813
      %3815 = vrot.lane.b32.xlu0 %v3793, 40
      %v3816 = vpop.permute.xlu0 %3815
      %3817 = vrot.lane.b32.xlu0 %v3794, 40
      %v3818 = vpop.permute.xlu0 %3817
      %3819 = vrot.lane.b32.xlu0 %v3795, 40
      %v3820 = vpop.permute.xlu0 %3819
      %3821 = vrot.lane.b32.xlu0 %v3796, 40
      %v3822 = vpop.permute.xlu0 %3821
      %3823 = vrot.lane.b32.xlu0 %v3797, 40
      %v3824 = vpop.permute.xlu0 %3823
      %3825 = vrot.lane.b32.xlu0 %v3798, 40
      %v3826 = vpop.permute.xlu0 %3825
      %3827 = vrot.lane.b32.xlu0 %v3799, 40
      %v3828 = vpop.permute.xlu0 %3827
      %3829 = vrot.lane.b32.xlu0 %v3800, 40
      %v3830 = vpop.permute.xlu0 %3829
      %3831 = vrot.lane.b32.xlu0 %v3801, 40
      %v3832 = vpop.permute.xlu0 %3831
      %3833 = vrot.lane.b32.xlu0 %v3802, 40
      %v3834 = vpop.permute.xlu0 %3833
      %v3835 = vunpack.c.l.b16 %v2396
      %v3836 = vunpack.c.l.b16 %v2406
      %v3837 = vunpack.c.l.b16 %v2424
      %v3838 = vunpack.c.l.b16 %v2434
      %v3839 = vunpack.c.l.b16 %v2452
      %v3840 = vunpack.c.l.b16 %v2462
      %v3841 = vunpack.c.l.b16 %v2480
      %v3842 = vunpack.c.l.b16 %v2490
      %v3843 = vunpack.c.l.b16 %v2508
      %v3844 = vunpack.c.l.b16 %v2518
      %v3845 = vunpack.c.l.b16 %v2536
      %v3846 = vunpack.c.l.b16 %v2546
      %v3847 = vunpack.c.l.b16 %v2564
      %v3848 = vunpack.c.l.b16 %v2574
      %v3849 = vunpack.c.l.b16 %v2592
      %v3850 = vunpack.c.l.b16 %v2602
      %v3851 = vunpack.c.l.b16 %v2620
      %v3852 = vunpack.c.l.b16 %v2630
      %v3853 = vunpack.c.l.b16 %v2648
      %v3854 = vunpack.c.l.b16 %v2658
      %v3855 = vunpack.c.l.b16 %v2676
      %v3856 = vunpack.c.l.b16 %v2686
      %v3857 = vunpack.c.l.b16 %v2704
      %v3858 = vunpack.c.l.b16 %v2714
      %v3859 = vunpack.c.l.b16 %v2732
      %v3860 = vunpack.c.l.b16 %v2742
      %v3861 = vunpack.c.l.b16 %v2760
      %v3862 = vunpack.c.l.b16 %v2770
      %v3863 = vunpack.c.l.b16 %v2788
      %v3864 = vunpack.c.l.b16 %v2798
      %v3865 = vunpack.c.l.b16 %v2816
      %v3866 = vunpack.c.l.b16 %v2826
      %v3867 = vpack.c.b16 %v3836, %v3835
      %v3868 = vpack.c.b16 %v3838, %v3837
      %v3869 = vpack.c.b16 %v3840, %v3839
      %v3870 = vpack.c.b16 %v3842, %v3841
      %v3871 = vpack.c.b16 %v3844, %v3843
      %v3872 = vpack.c.b16 %v3846, %v3845
      %v3873 = vpack.c.b16 %v3848, %v3847
      %v3874 = vpack.c.b16 %v3850, %v3849
      %v3875 = vpack.c.b16 %v3852, %v3851
      %v3876 = vpack.c.b16 %v3854, %v3853
      %v3877 = vpack.c.b16 %v3856, %v3855
      %v3878 = vpack.c.b16 %v3858, %v3857
      %v3879 = vpack.c.b16 %v3860, %v3859
      %v3880 = vpack.c.b16 %v3862, %v3861
      %v3881 = vpack.c.b16 %v3864, %v3863
      %v3882 = vpack.c.b16 %v3866, %v3865
      %3883 = vrot.lane.b32.xlu0 %v3867, 48
      %v3884 = vpop.permute.xlu0 %3883
      %3885 = vrot.lane.b32.xlu0 %v3868, 48
      %v3886 = vpop.permute.xlu0 %3885
      %3887 = vrot.lane.b32.xlu0 %v3869, 48
      %v3888 = vpop.permute.xlu0 %3887
      %3889 = vrot.lane.b32.xlu0 %v3870, 48
      %v3890 = vpop.permute.xlu0 %3889
      %3891 = vrot.lane.b32.xlu0 %v3871, 48
      %v3892 = vpop.permute.xlu0 %3891
      %3893 = vrot.lane.b32.xlu0 %v3872, 48
      %v3894 = vpop.permute.xlu0 %3893
      %3895 = vrot.lane.b32.xlu0 %v3873, 48
      %v3896 = vpop.permute.xlu0 %3895
      %3897 = vrot.lane.b32.xlu0 %v3874, 48
      %v3898 = vpop.permute.xlu0 %3897
      %3899 = vrot.lane.b32.xlu0 %v3875, 48
      %v3900 = vpop.permute.xlu0 %3899
      %3901 = vrot.lane.b32.xlu0 %v3876, 48
      %v3902 = vpop.permute.xlu0 %3901
      %3903 = vrot.lane.b32.xlu0 %v3877, 48
      %v3904 = vpop.permute.xlu0 %3903
      %3905 = vrot.lane.b32.xlu0 %v3878, 48
      %v3906 = vpop.permute.xlu0 %3905
      %3907 = vrot.lane.b32.xlu0 %v3879, 48
      %v3908 = vpop.permute.xlu0 %3907
      %3909 = vrot.lane.b32.xlu0 %v3880, 48
      %v3910 = vpop.permute.xlu0 %3909
      %3911 = vrot.lane.b32.xlu0 %v3881, 48
      %v3912 = vpop.permute.xlu0 %3911
      %3913 = vrot.lane.b32.xlu0 %v3882, 48
      %v3914 = vpop.permute.xlu0 %3913
      %v3915 = vunpack.c.l.b16 %v2894
      %v3916 = vunpack.c.l.b16 %v2897
      %v3917 = vunpack.c.l.b16 %v2901
      %v3918 = vunpack.c.l.b16 %v2904
      %v3919 = vunpack.c.l.b16 %v2908
      %v3920 = vunpack.c.l.b16 %v2911
      %v3921 = vunpack.c.l.b16 %v2915
      %v3922 = vunpack.c.l.b16 %v2918
      %v3923 = vunpack.c.l.b16 %v2922
      %v3924 = vunpack.c.l.b16 %v2925
      %v3925 = vunpack.c.l.b16 %v2929
      %v3926 = vunpack.c.l.b16 %v2932
      %v3927 = vunpack.c.l.b16 %v2936
      %v3928 = vunpack.c.l.b16 %v2939
      %v3929 = vunpack.c.l.b16 %v2943
      %v3930 = vunpack.c.l.b16 %v2946
      %v3931 = vunpack.c.l.b16 %v2950
      %v3932 = vunpack.c.l.b16 %v2953
      %v3933 = vunpack.c.l.b16 %v2957
      %v3934 = vunpack.c.l.b16 %v2960
      %v3935 = vunpack.c.l.b16 %v2964
      %v3936 = vunpack.c.l.b16 %v2967
      %v3937 = vunpack.c.l.b16 %v2971
      %v3938 = vunpack.c.l.b16 %v2974
      %v3939 = vunpack.c.l.b16 %v2978
      %v3940 = vunpack.c.l.b16 %v2981
      %v3941 = vunpack.c.l.b16 %v2985
      %v3942 = vunpack.c.l.b16 %v2988
      %v3943 = vunpack.c.l.b16 %v2992
      %v3944 = vunpack.c.l.b16 %v2995
      %v3945 = vunpack.c.l.b16 %v2999
      %v3946 = vunpack.c.l.b16 %v3002
      %v3947 = vpack.c.b16 %v3916, %v3915
      %v3948 = vpack.c.b16 %v3918, %v3917
      %v3949 = vpack.c.b16 %v3920, %v3919
      %v3950 = vpack.c.b16 %v3922, %v3921
      %v3951 = vpack.c.b16 %v3924, %v3923
      %v3952 = vpack.c.b16 %v3926, %v3925
      %v3953 = vpack.c.b16 %v3928, %v3927
      %v3954 = vpack.c.b16 %v3930, %v3929
      %v3955 = vpack.c.b16 %v3932, %v3931
      %v3956 = vpack.c.b16 %v3934, %v3933
      %v3957 = vpack.c.b16 %v3936, %v3935
      %v3958 = vpack.c.b16 %v3938, %v3937
      %v3959 = vpack.c.b16 %v3940, %v3939
      %v3960 = vpack.c.b16 %v3942, %v3941
      %v3961 = vpack.c.b16 %v3944, %v3943
      %v3962 = vpack.c.b16 %v3946, %v3945
      %3963 = vrot.lane.b32.xlu0 %v3947, 56
      %v3964 = vpop.permute.xlu0 %3963
      %3965 = vrot.lane.b32.xlu0 %v3948, 56
      %v3966 = vpop.permute.xlu0 %3965
      %3967 = vrot.lane.b32.xlu0 %v3949, 56
      %v3968 = vpop.permute.xlu0 %3967
      %3969 = vrot.lane.b32.xlu0 %v3950, 56
      %v3970 = vpop.permute.xlu0 %3969
      %3971 = vrot.lane.b32.xlu0 %v3951, 56
      %v3972 = vpop.permute.xlu0 %3971
      %3973 = vrot.lane.b32.xlu0 %v3952, 56
      %v3974 = vpop.permute.xlu0 %3973
      %3975 = vrot.lane.b32.xlu0 %v3953, 56
      %v3976 = vpop.permute.xlu0 %3975
      %3977 = vrot.lane.b32.xlu0 %v3954, 56
      %v3978 = vpop.permute.xlu0 %3977
      %3979 = vrot.lane.b32.xlu0 %v3955, 56
      %v3980 = vpop.permute.xlu0 %3979
      %3981 = vrot.lane.b32.xlu0 %v3956, 56
      %v3982 = vpop.permute.xlu0 %3981
      %3983 = vrot.lane.b32.xlu0 %v3957, 56
      %v3984 = vpop.permute.xlu0 %3983
      %3985 = vrot.lane.b32.xlu0 %v3958, 56
      %v3986 = vpop.permute.xlu0 %3985
      %3987 = vrot.lane.b32.xlu0 %v3959, 56
      %v3988 = vpop.permute.xlu0 %3987
      %3989 = vrot.lane.b32.xlu0 %v3960, 56
      %v3990 = vpop.permute.xlu0 %3989
      %3991 = vrot.lane.b32.xlu0 %v3961, 56
      %v3992 = vpop.permute.xlu0 %3991
      %3993 = vrot.lane.b32.xlu0 %v3962, 56
      %v3994 = vpop.permute.xlu0 %3993
      %v3995 = vunpack.c.l.b16 %v3031
      %v3996 = vunpack.c.l.b16 %v3041
      %v3997 = vunpack.c.l.b16 %v3054
      %v3998 = vunpack.c.l.b16 %v3064
      %v3999 = vunpack.c.l.b16 %v3077
      %v4000 = vunpack.c.l.b16 %v3087
      %v4001 = vunpack.c.l.b16 %v3100
      %v4002 = vunpack.c.l.b16 %v3110
      %v4003 = vunpack.c.l.b16 %v3123
      %v4004 = vunpack.c.l.b16 %v3133
      %v4005 = vunpack.c.l.b16 %v3146
      %v4006 = vunpack.c.l.b16 %v3156
      %v4007 = vunpack.c.l.b16 %v3169
      %v4008 = vunpack.c.l.b16 %v3179
      %v4009 = vunpack.c.l.b16 %v3192
      %v4010 = vunpack.c.l.b16 %v3202
      %v4011 = vunpack.c.l.b16 %v3215
      %v4012 = vunpack.c.l.b16 %v3225
      %v4013 = vunpack.c.l.b16 %v3238
      %v4014 = vunpack.c.l.b16 %v3248
      %v4015 = vunpack.c.l.b16 %v3261
      %v4016 = vunpack.c.l.b16 %v3271
      %v4017 = vunpack.c.l.b16 %v3284
      %v4018 = vunpack.c.l.b16 %v3294
      %v4019 = vunpack.c.l.b16 %v3307
      %v4020 = vunpack.c.l.b16 %v3317
      %v4021 = vunpack.c.l.b16 %v3330
      %v4022 = vunpack.c.l.b16 %v3340
      %v4023 = vunpack.c.l.b16 %v3353
      %v4024 = vunpack.c.l.b16 %v3363
      %v4025 = vunpack.c.l.b16 %v3376
      %v4026 = vunpack.c.l.b16 %v3386
      %v4027 = vpack.c.b16 %v3996, %v3995
      %v4028 = vpack.c.b16 %v3998, %v3997
      %v4029 = vpack.c.b16 %v4000, %v3999
      %v4030 = vpack.c.b16 %v4002, %v4001
      %v4031 = vpack.c.b16 %v4004, %v4003
      %v4032 = vpack.c.b16 %v4006, %v4005
      %v4033 = vpack.c.b16 %v4008, %v4007
      %v4034 = vpack.c.b16 %v4010, %v4009
      %v4035 = vpack.c.b16 %v4012, %v4011
      %v4036 = vpack.c.b16 %v4014, %v4013
      %v4037 = vpack.c.b16 %v4016, %v4015
      %v4038 = vpack.c.b16 %v4018, %v4017
      %v4039 = vpack.c.b16 %v4020, %v4019
      %v4040 = vpack.c.b16 %v4022, %v4021
      %v4041 = vpack.c.b16 %v4024, %v4023
      %v4042 = vpack.c.b16 %v4026, %v4025
      %4043 = vrot.lane.b32.xlu0 %v4027, 64
      %v4044 = vpop.permute.xlu0 %4043
      %4045 = vrot.lane.b32.xlu0 %v4028, 64
      %v4046 = vpop.permute.xlu0 %4045
      %4047 = vrot.lane.b32.xlu0 %v4029, 64
      %v4048 = vpop.permute.xlu0 %4047
      %4049 = vrot.lane.b32.xlu0 %v4030, 64
      %v4050 = vpop.permute.xlu0 %4049
      %4051 = vrot.lane.b32.xlu0 %v4031, 64
      %v4052 = vpop.permute.xlu0 %4051
      %4053 = vrot.lane.b32.xlu0 %v4032, 64
      %v4054 = vpop.permute.xlu0 %4053
      %4055 = vrot.lane.b32.xlu0 %v4033, 64
      %v4056 = vpop.permute.xlu0 %4055
      %4057 = vrot.lane.b32.xlu0 %v4034, 64
      %v4058 = vpop.permute.xlu0 %4057
      %4059 = vrot.lane.b32.xlu0 %v4035, 64
      %v4060 = vpop.permute.xlu0 %4059
      %4061 = vrot.lane.b32.xlu0 %v4036, 64
      %v4062 = vpop.permute.xlu0 %4061
      %4063 = vrot.lane.b32.xlu0 %v4037, 64
      %v4064 = vpop.permute.xlu0 %4063
      %4065 = vrot.lane.b32.xlu0 %v4038, 64
      %v4066 = vpop.permute.xlu0 %4065
      %4067 = vrot.lane.b32.xlu0 %v4039, 64
      %v4068 = vpop.permute.xlu0 %4067
      %4069 = vrot.lane.b32.xlu0 %v4040, 64
      %v4070 = vpop.permute.xlu0 %4069
      %4071 = vrot.lane.b32.xlu0 %v4041, 64
      %v4072 = vpop.permute.xlu0 %4071
      %4073 = vrot.lane.b32.xlu0 %v4042, 64
      %v4074 = vpop.permute.xlu0 %4073
      %vm4075 = vcmask 64512
      %v4078 = vsel %vm4075, %v3419, %v3484
      %v4081 = vsel %vm4075, %v3420, %v3486
      %v4084 = vsel %vm4075, %v3421, %v3488
      %v4087 = vsel %vm4075, %v3422, %v3490
      %v4090 = vsel %vm4075, %v3423, %v3492
      %v4093 = vsel %vm4075, %v3424, %v3494
      %v4096 = vsel %vm4075, %v3425, %v3496
      %v4099 = vsel %vm4075, %v3426, %v3498
      %v4102 = vsel %vm4075, %v3427, %v3500
      %v4105 = vsel %vm4075, %v3428, %v3502
      %v4108 = vsel %vm4075, %v3429, %v3504
      %v4111 = vsel %vm4075, %v3430, %v3506
      %v4114 = vsel %vm4075, %v3431, %v3508
      %v4117 = vsel %vm4075, %v3432, %v3510
      %v4120 = vsel %vm4075, %v3433, %v3512
      %v4123 = vsel %vm4075, %v3434, %v3514
      %vm4124 = vcmask 130048
      %v4126 = vsel %vm4124, %v4078, %v3564
      %v4128 = vsel %vm4124, %v4081, %v3566
      %v4130 = vsel %vm4124, %v4084, %v3568
      %v4132 = vsel %vm4124, %v4087, %v3570
      %v4134 = vsel %vm4124, %v4090, %v3572
      %v4136 = vsel %vm4124, %v4093, %v3574
      %v4138 = vsel %vm4124, %v4096, %v3576
      %v4140 = vsel %vm4124, %v4099, %v3578
      %v4142 = vsel %vm4124, %v4102, %v3580
      %v4144 = vsel %vm4124, %v4105, %v3582
      %v4146 = vsel %vm4124, %v4108, %v3584
      %v4148 = vsel %vm4124, %v4111, %v3586
      %v4150 = vsel %vm4124, %v4114, %v3588
      %v4152 = vsel %vm4124, %v4117, %v3590
      %v4154 = vsel %vm4124, %v4120, %v3592
      %v4156 = vsel %vm4124, %v4123, %v3594
      %vm4157 = vcmask 195584
      %v4159 = vsel %vm4157, %v4126, %v3644
      %v4161 = vsel %vm4157, %v4128, %v3646
      %v4163 = vsel %vm4157, %v4130, %v3648
      %v4165 = vsel %vm4157, %v4132, %v3650
      %v4167 = vsel %vm4157, %v4134, %v3652
      %v4169 = vsel %vm4157, %v4136, %v3654
      %v4171 = vsel %vm4157, %v4138, %v3656
      %v4173 = vsel %vm4157, %v4140, %v3658
      %v4175 = vsel %vm4157, %v4142, %v3660
      %v4177 = vsel %vm4157, %v4144, %v3662
      %v4179 = vsel %vm4157, %v4146, %v3664
      %v4181 = vsel %vm4157, %v4148, %v3666
      %v4183 = vsel %vm4157, %v4150, %v3668
      %v4185 = vsel %vm4157, %v4152, %v3670
      %v4187 = vsel %vm4157, %v4154, %v3672
      %v4189 = vsel %vm4157, %v4156, %v3674
      %vm4190 = vcmask 261120
      %v4192 = vsel %vm4190, %v4159, %v3724
      %v4194 = vsel %vm4190, %v4161, %v3726
      %v4196 = vsel %vm4190, %v4163, %v3728
      %v4198 = vsel %vm4190, %v4165, %v3730
      %v4200 = vsel %vm4190, %v4167, %v3732
      %v4202 = vsel %vm4190, %v4169, %v3734
      %v4204 = vsel %vm4190, %v4171, %v3736
      %v4206 = vsel %vm4190, %v4173, %v3738
      %v4208 = vsel %vm4190, %v4175, %v3740
      %v4210 = vsel %vm4190, %v4177, %v3742
      %v4212 = vsel %vm4190, %v4179, %v3744
      %v4214 = vsel %vm4190, %v4181, %v3746
      %v4216 = vsel %vm4190, %v4183, %v3748
      %v4218 = vsel %vm4190, %v4185, %v3750
      %v4220 = vsel %vm4190, %v4187, %v3752
      %v4222 = vsel %vm4190, %v4189, %v3754
      %vm4223 = vcmask 326656
      %v4225 = vsel %vm4223, %v4192, %v3804
      %v4227 = vsel %vm4223, %v4194, %v3806
      %v4229 = vsel %vm4223, %v4196, %v3808
      %v4231 = vsel %vm4223, %v4198, %v3810
      %v4233 = vsel %vm4223, %v4200, %v3812
      %v4235 = vsel %vm4223, %v4202, %v3814
      %v4237 = vsel %vm4223, %v4204, %v3816
      %v4239 = vsel %vm4223, %v4206, %v3818
      %v4241 = vsel %vm4223, %v4208, %v3820
      %v4243 = vsel %vm4223, %v4210, %v3822
      %v4245 = vsel %vm4223, %v4212, %v3824
      %v4247 = vsel %vm4223, %v4214, %v3826
      %v4249 = vsel %vm4223, %v4216, %v3828
      %v4251 = vsel %vm4223, %v4218, %v3830
      %v4253 = vsel %vm4223, %v4220, %v3832
      %v4255 = vsel %vm4223, %v4222, %v3834
      %vm4256 = vcmask 392192
      %v4258 = vsel %vm4256, %v4225, %v3884
      %v4260 = vsel %vm4256, %v4227, %v3886
      %v4262 = vsel %vm4256, %v4229, %v3888
      %v4264 = vsel %vm4256, %v4231, %v3890
      %v4266 = vsel %vm4256, %v4233, %v3892
      %v4268 = vsel %vm4256, %v4235, %v3894
      %v4270 = vsel %vm4256, %v4237, %v3896
      %v4272 = vsel %vm4256, %v4239, %v3898
      %v4274 = vsel %vm4256, %v4241, %v3900
      %v4276 = vsel %vm4256, %v4243, %v3902
      %v4278 = vsel %vm4256, %v4245, %v3904
      %v4280 = vsel %vm4256, %v4247, %v3906
      %v4282 = vsel %vm4256, %v4249, %v3908
      %v4284 = vsel %vm4256, %v4251, %v3910
      %v4286 = vsel %vm4256, %v4253, %v3912
      %v4288 = vsel %vm4256, %v4255, %v3914
      %vm4289 = vcmask 457728
      %v4291 = vsel %vm4289, %v4258, %v3964
      %v4293 = vsel %vm4289, %v4260, %v3966
      %v4295 = vsel %vm4289, %v4262, %v3968
      %v4297 = vsel %vm4289, %v4264, %v3970
      %v4299 = vsel %vm4289, %v4266, %v3972
      %v4301 = vsel %vm4289, %v4268, %v3974
      %v4303 = vsel %vm4289, %v4270, %v3976
      %v4305 = vsel %vm4289, %v4272, %v3978
      %v4307 = vsel %vm4289, %v4274, %v3980
      %v4309 = vsel %vm4289, %v4276, %v3982
      %v4311 = vsel %vm4289, %v4278, %v3984
      %v4313 = vsel %vm4289, %v4280, %v3986
      %v4315 = vsel %vm4289, %v4282, %v3988
      %v4317 = vsel %vm4289, %v4284, %v3990
      %v4319 = vsel %vm4289, %v4286, %v3992
      %v4321 = vsel %vm4289, %v4288, %v3994
      %vm4322 = vcmask 523264
      %v4324 = vsel %vm4322, %v4291, %v4044
      %v4326 = vsel %vm4322, %v4293, %v4046
      %v4328 = vsel %vm4322, %v4295, %v4048
      %v4330 = vsel %vm4322, %v4297, %v4050
      %v4332 = vsel %vm4322, %v4299, %v4052
      %v4334 = vsel %vm4322, %v4301, %v4054
      %v4336 = vsel %vm4322, %v4303, %v4056
      %v4338 = vsel %vm4322, %v4305, %v4058
      %v4340 = vsel %vm4322, %v4307, %v4060
      %v4342 = vsel %vm4322, %v4309, %v4062
      %v4344 = vsel %vm4322, %v4311, %v4064
      %v4346 = vsel %vm4322, %v4313, %v4066
      %v4348 = vsel %vm4322, %v4315, %v4068
      %v4350 = vsel %vm4322, %v4317, %v4070
      %v4352 = vsel %vm4322, %v4319, %v4072
      %v4354 = vsel %vm4322, %v4321, %v4074
      %v4355 = vld [vmem:[%s1] sm:$0xf]
      %v4356 = vld [vmem:[%s1 + $0x4] sm:$0xf]
      %v4357 = vld [vmem:[%s1 + $0x8] sm:$0xf]
      %v4358 = vld [vmem:[%s1 + $0xc] sm:$0xf]
      %v4359 = vld [vmem:[%s1 + $0x10] sm:$0xf]
      %v4360 = vld [vmem:[%s1 + $0x14] sm:$0xf]
      %v4361 = vld [vmem:[%s1 + $0x18] sm:$0xf]
      %v4362 = vld [vmem:[%s1 + $0x1c] sm:$0xf]
      %v4363 = vld [vmem:[%s1 + $0x20] sm:$0xf]
      %v4373 = vunpack.c.l.b16 %v4355
      %v4374 = vunpack.c.l.b16 %v4356
      %v4375 = vunpack.c.l.b16 %v4357
      %v4376 = vunpack.c.l.b16 %v4358
      %v4377 = vunpack.c.l.b16 %v4359
      %v4378 = vunpack.c.l.b16 %v4360
      %v4379 = vunpack.c.l.b16 %v4361
      %v4380 = vunpack.c.l.b16 %v4362
      %v4381 = vunpack.c.l.b16 %v4363
      %v4382 = vpack.c.b16 %v4374, %v4373
      %v4383 = vpack.c.b16 %v4376, %v4375
      %v4384 = vpack.c.b16 %v4378, %v4377
      %v4385 = vpack.c.b16 %v4380, %v4379
      %v4386 = vpack.c.b16 %v4381, %v4381
      %vm4391 = vcmask 588800
      %v4392 = vsel %vm4391, %v4324, 0
      %v4394 = vsel %vm4391, %v4326, 0
      %v4396 = vsel %vm4391, %v4328, 0
      %v4398 = vsel %vm4391, %v4330, 0
      %v4400 = vsel %vm4391, %v4332, 0
      %v4402 = vsel %vm4391, %v4334, 0
      %v4404 = vsel %vm4391, %v4336, 0
      %v4406 = vsel %vm4391, %v4338, 0
      %v4408 = vsel %vm4391, %v4340, 0
      %v4410 = vsel %vm4391, %v4342, 0
      %v4412 = vsel %vm4391, %v4344, 0
      %v4414 = vsel %vm4391, %v4346, 0
      %v4416 = vsel %vm4391, %v4348, 0
      %v4418 = vsel %vm4391, %v4350, 0
      %v4420 = vsel %vm4391, %v4352, 0
      %v4422 = vsel %vm4391, %v4354, 0
      %vm4424 = vcmask 1043456
      %v4426 = vsel %vm4424, %v4386, 0
      %4428 = vmatprep.subr.bf16.mxu0 0
      %4429 = vmatpush1.bf16.msra.mxu0 %v4382
      %4430 = vmatprep.subr.bf16.mxu0 0
      %4431 = vmatpush1.bf16.msra.mxu0 %v4383
      %4432 = vmatprep.subr.bf16.mxu0 0
      %4433 = vmatpush1.bf16.msra.mxu0 %v4384
      %4434 = vmatprep.subr.bf16.mxu0 0
      %4435 = vmatpush1.bf16.msra.mxu0 %v4385
      %4436 = vmatprep.subr.bf16.mxu0 0
      %4437 = vmatpush1.bf16.msra.mxu0 %v4426
      %4438 = vmatprep.subr.bf16.mxu0 0
      %4439 = vmatpush1.bf16.msra.mxu0 0
      %4440 = vmatprep.subr.bf16.mxu0 0
      %4441 = vmatpush1.bf16.msra.mxu0 0
      %4442 = vmatprep.subr.bf16.mxu0 0
      %4443 = vmatpush1.bf16.msra.mxu0 0
      %4444 = vmatprep.subr.bf16.mxu0 0
      %4445 = vmatpush1.bf16.msra.mxu0 0
      %4446 = vmatprep.subr.bf16.mxu0 0
      %4447 = vmatpush1.bf16.msra.mxu0 0
      %4448 = vmatprep.subr.bf16.mxu0 0
      %4449 = vmatpush1.bf16.msra.mxu0 0
      %4450 = vmatprep.subr.bf16.mxu0 0
      %4451 = vmatpush1.bf16.msra.mxu0 0
      %4452 = vmatprep.subr.bf16.mxu0 0
      %4453 = vmatpush1.bf16.msra.mxu0 0
      %4454 = vmatprep.subr.bf16.mxu0 0
      %4455 = vmatpush1.bf16.msra.mxu0 0
      %4456 = vmatprep.subr.bf16.mxu0 0
      %4457 = vmatpush1.bf16.msra.mxu0 0
      %4458 = vmatprep.subr.bf16.mxu0 0
      %4459 = vmatpush1.bf16.msra.mxu0 0
      %4460 = vmatprep.mubr.bf16.mxu0 0
      %4461 = vmatmul.mubr.bf16.gmra.mrb[0].mxu0 %v4392
      %v4462 = vpop.f32.mrb[0].mxu0
      %v4463 = vadd.f32 0.0, %v4462
      %v4464 = vpop.f32.mrb[0].mxu0
      %v4465 = vpop.f32.mrb[0].mxu0
      %v4466 = vadd.f32 0.0, %v4465
      %v4467 = vpop.f32.mrb[0].mxu0
      %4468 = vmatprep.mubr.bf16.mxu0 0
      %4469 = vmatmul.mubr.bf16.gmra.mrb[0].mxu0 %v4394
      %v4470 = vpop.f32.mrb[0].mxu0
      %v4471 = vadd.f32 0.0, %v4470
      %v4472 = vpop.f32.mrb[0].mxu0
      %v4473 = vpop.f32.mrb[0].mxu0
      %v4474 = vadd.f32 0.0, %v4473
      %v4475 = vpop.f32.mrb[0].mxu0
      %4476 = vmatprep.mubr.bf16.mxu0 0
      %4477 = vmatmul.mubr.bf16.gmra.mrb[0].mxu0 %v4396
      %v4478 = vpop.f32.mrb[0].mxu0
      %v4479 = vadd.f32 0.0, %v4478
      %v4480 = vpop.f32.mrb[0].mxu0
      %v4481 = vpop.f32.mrb[0].mxu0
      %v4482 = vadd.f32 0.0, %v4481
      %v4483 = vpop.f32.mrb[0].mxu0
      %4484 = vmatprep.mubr.bf16.mxu0 0
      %4485 = vmatmul.mubr.bf16.gmra.mrb[0].mxu0 %v4398
      %v4486 = vpop.f32.mrb[0].mxu0
      %v4487 = vadd.f32 0.0, %v4486
      %v4488 = vpop.f32.mrb[0].mxu0
      %v4489 = vpop.f32.mrb[0].mxu0
      %v4490 = vadd.f32 0.0, %v4489
      %v4491 = vpop.f32.mrb[0].mxu0
      %4492 = vmatprep.mubr.bf16.mxu0 0
      %4493 = vmatmul.mubr.bf16.gmra.mrb[0].mxu0 %v4400
      %v4494 = vpop.f32.mrb[0].mxu0
      %v4495 = vadd.f32 0.0, %v4494
      %v4496 = vpop.f32.mrb[0].mxu0
      %v4497 = vpop.f32.mrb[0].mxu0
      %v4498 = vadd.f32 0.0, %v4497
      %v4499 = vpop.f32.mrb[0].mxu0
      %4500 = vmatprep.mubr.bf16.mxu0 0
      %4501 = vmatmul.mubr.bf16.gmra.mrb[0].mxu0 %v4402
      %v4502 = vpop.f32.mrb[0].mxu0
      %v4503 = vadd.f32 0.0, %v4502
      %v4504 = vpop.f32.mrb[0].mxu0
      %v4505 = vpop.f32.mrb[0].mxu0
      %v4506 = vadd.f32 0.0, %v4505
      %v4507 = vpop.f32.mrb[0].mxu0
      %4508 = vmatprep.mubr.bf16.mxu0 0
      %4509 = vmatmul.mubr.bf16.gmra.mrb[0].mxu0 %v4404
      %v4510 = vpop.f32.mrb[0].mxu0
      %v4511 = vadd.f32 0.0, %v4510
      %v4512 = vpop.f32.mrb[0].mxu0
      %v4513 = vpop.f32.mrb[0].mxu0
      %v4514 = vadd.f32 0.0, %v4513
      %v4515 = vpop.f32.mrb[0].mxu0
      %4516 = vmatprep.mubr.bf16.mxu0 0
      %4517 = vmatmul.mubr.bf16.gmra.mrb[0].mxu0 %v4406
      %v4518 = vpop.f32.mrb[0].mxu0
      %v4519 = vadd.f32 0.0, %v4518
      %v4520 = vpop.f32.mrb[0].mxu0
      %v4521 = vpop.f32.mrb[0].mxu0
      %v4522 = vadd.f32 0.0, %v4521
      %v4523 = vpop.f32.mrb[0].mxu0
      %4524 = vmatprep.mubr.bf16.mxu0 0
      %4525 = vmatmul.mubr.bf16.gmra.mrb[0].mxu0 %v4408
      %v4526 = vpop.f32.mrb[0].mxu0
      %v4527 = vadd.f32 0.0, %v4526
      %v4528 = vpop.f32.mrb[0].mxu0
      %v4529 = vpop.f32.mrb[0].mxu0
      %v4530 = vadd.f32 0.0, %v4529
      %v4531 = vpop.f32.mrb[0].mxu0
      %4532 = vmatprep.mubr.bf16.mxu0 0
      %4533 = vmatmul.mubr.bf16.gmra.mrb[0].mxu0 %v4410
      %v4534 = vpop.f32.mrb[0].mxu0
      %v4535 = vadd.f32 0.0, %v4534
      %v4536 = vpop.f32.mrb[0].mxu0
      %v4537 = vpop.f32.mrb[0].mxu0
      %v4538 = vadd.f32 0.0, %v4537
      %v4539 = vpop.f32.mrb[0].mxu0
      %4540 = vmatprep.mubr.bf16.mxu0 0
      %4541 = vmatmul.mubr.bf16.gmra.mrb[0].mxu0 %v4412
      %v4542 = vpop.f32.mrb[0].mxu0
      %v4543 = vadd.f32 0.0, %v4542
      %v4544 = vpop.f32.mrb[0].mxu0
      %v4545 = vpop.f32.mrb[0].mxu0
      %v4546 = vadd.f32 0.0, %v4545
      %v4547 = vpop.f32.mrb[0].mxu0
      %4548 = vmatprep.mubr.bf16.mxu0 0
      %4549 = vmatmul.mubr.bf16.gmra.mrb[0].mxu0 %v4414
      %v4550 = vpop.f32.mrb[0].mxu0
      %v4551 = vadd.f32 0.0, %v4550
      %v4552 = vpop.f32.mrb[0].mxu0
      %v4553 = vpop.f32.mrb[0].mxu0
      %v4554 = vadd.f32 0.0, %v4553
      %v4555 = vpop.f32.mrb[0].mxu0
      %4556 = vmatprep.mubr.bf16.mxu0 0
      %4557 = vmatmul.mubr.bf16.gmra.mrb[0].mxu0 %v4416
      %v4558 = vpop.f32.mrb[0].mxu0
      %v4559 = vadd.f32 0.0, %v4558
      %v4560 = vpop.f32.mrb[0].mxu0
      %v4561 = vpop.f32.mrb[0].mxu0
      %v4562 = vadd.f32 0.0, %v4561
      %v4563 = vpop.f32.mrb[0].mxu0
      %4564 = vmatprep.mubr.bf16.mxu0 0
      %4565 = vmatmul.mubr.bf16.gmra.mrb[0].mxu0 %v4418
      %v4566 = vpop.f32.mrb[0].mxu0
      %v4567 = vadd.f32 0.0, %v4566
      %v4568 = vpop.f32.mrb[0].mxu0
      %v4569 = vpop.f32.mrb[0].mxu0
      %v4570 = vadd.f32 0.0, %v4569
      %v4571 = vpop.f32.mrb[0].mxu0
      %4572 = vmatprep.mubr.bf16.mxu0 0
      %4573 = vmatmul.mubr.bf16.gmra.mrb[0].mxu0 %v4420
      %v4574 = vpop.f32.mrb[0].mxu0
      %v4575 = vadd.f32 0.0, %v4574
      %v4576 = vpop.f32.mrb[0].mxu0
      %v4577 = vpop.f32.mrb[0].mxu0
      %v4578 = vadd.f32 0.0, %v4577
      %v4579 = vpop.f32.mrb[0].mxu0
      %4580 = vmatprep.mubr.bf16.mxu0 0
      %4581 = vmatmul.mubr.bf16.gmra.mrb[0].mxu0 %v4422
      %v4582 = vpop.f32.mrb[0].mxu0
      %v4583 = vadd.f32 0.0, %v4582
      %v4584 = vpop.f32.mrb[0].mxu0
      %v4585 = vpop.f32.mrb[0].mxu0
      %v4586 = vadd.f32 0.0, %v4585
      %v4587 = vpop.f32.mrb[0].mxu0
      %4588 = vdwg.mxu0
      %s4589 = sadd.s32 %s197, 2
      %s4590 = smul.u32 %s4589, 3
      %s4591 = smul.addr %s4590, 4
      %s4592 = scalar_lea.vmem %s184, %s4591
      %v4593 = vld [vmem:[%s4592] sm:$0xe]
      %v4594 = vld [vmem:[%s4592 + $0x4] sm:$0xf]
      %v4595 = vld [vmem:[%s4592 + $0x8] sm:$0x1]
      %v4596 = vld [vmem:[%s4592 + $0xc] sm:$0xe]
      %v4597 = vld [vmem:[%s4592 + $0x10] sm:$0xf]
      %v4598 = vld [vmem:[%s4592 + $0x14] sm:$0x1]
      %v4599 = vld [vmem:[%s4592 + $0x18] sm:$0xe]
      %v4600 = vld [vmem:[%s4592 + $0x1c] sm:$0xf]
      %v4601 = vld [vmem:[%s4592 + $0x20] sm:$0x1]
      %v4602 = vld [vmem:[%s4592 + $0x24] sm:$0xe]
      %v4603 = vld [vmem:[%s4592 + $0x28] sm:$0xf]
      %v4604 = vld [vmem:[%s4592 + $0x2c] sm:$0x1]
      %v4605 = vld [vmem:[%s4592 + $0x30] sm:$0xe]
      %v4606 = vld [vmem:[%s4592 + $0x34] sm:$0xf]
      %v4607 = vld [vmem:[%s4592 + $0x38] sm:$0x1]
      %v4608 = vld [vmem:[%s4592 + $0x3c] sm:$0xe]
      %v4609 = vld [vmem:[%s4592 + $0x40] sm:$0xf]
      %v4610 = vld [vmem:[%s4592 + $0x44] sm:$0x1]
      %v4611 = vld [vmem:[%s4592 + $0x48] sm:$0xe]
      %v4612 = vld [vmem:[%s4592 + $0x4c] sm:$0xf]
      %v4613 = vld [vmem:[%s4592 + $0x50] sm:$0x1]
      %v4614 = vld [vmem:[%s4592 + $0x54] sm:$0xe]
      %v4615 = vld [vmem:[%s4592 + $0x58] sm:$0xf]
      %v4616 = vld [vmem:[%s4592 + $0x5c] sm:$0x1]
      %v4617 = vld [vmem:[%s4592 + $0x60] sm:$0xe]
      %v4618 = vld [vmem:[%s4592 + $0x64] sm:$0xf]
      %v4619 = vld [vmem:[%s4592 + $0x68] sm:$0x1]
      %v4620 = vld [vmem:[%s4592 + $0x6c] sm:$0xe]
      %v4621 = vld [vmem:[%s4592 + $0x70] sm:$0xf]
      %v4622 = vld [vmem:[%s4592 + $0x74] sm:$0x1]
      %v4623 = vld [vmem:[%s4592 + $0x78] sm:$0xe]
      %v4624 = vld [vmem:[%s4592 + $0x7c] sm:$0xf]
      %v4625 = vld [vmem:[%s4592 + $0x80] sm:$0x1]
      %v4626 = vld [vmem:[%s4592 + $0x84] sm:$0xe]
      %v4627 = vld [vmem:[%s4592 + $0x88] sm:$0xf]
      %v4628 = vld [vmem:[%s4592 + $0x8c] sm:$0x1]
      %v4629 = vld [vmem:[%s4592 + $0x90] sm:$0xe]
      %v4630 = vld [vmem:[%s4592 + $0x94] sm:$0xf]
      %v4631 = vld [vmem:[%s4592 + $0x98] sm:$0x1]
      %v4632 = vld [vmem:[%s4592 + $0x9c] sm:$0xe]
      %v4633 = vld [vmem:[%s4592 + $0xa0] sm:$0xf]
      %v4634 = vld [vmem:[%s4592 + $0xa4] sm:$0x1]
      %v4635 = vld [vmem:[%s4592 + $0xa8] sm:$0xe]
      %v4636 = vld [vmem:[%s4592 + $0xac] sm:$0xf]
      %v4637 = vld [vmem:[%s4592 + $0xb0] sm:$0x1]
      %v4638 = vld [vmem:[%s4592 + $0xb4] sm:$0xe]
      %v4639 = vld [vmem:[%s4592 + $0xb8] sm:$0xf]
      %v4640 = vld [vmem:[%s4592 + $0xbc] sm:$0x1]
      %vm4689 = vcmask 1042432
      %vm4690 = vcmask 1046532
      %vm4691 = vmor %vm4689, %vm4690
      %v4692 = vrot.slane %v4593, 5
      %v4693 = vrot.slane %v4692, 4
      %v4694 = vrot.slane %v4594, 5
      %v4695 = vsel %vm4691, %v4693, %v4694
      %v4696 = vrot.slane %v4694, 4
      %v4697 = vrot.slane %v4595, 5
      %v4698 = vsel %vm4691, %v4696, %v4697
      %v4699 = vrot.slane %v4596, 5
      %v4700 = vrot.slane %v4699, 4
      %v4701 = vrot.slane %v4597, 5
      %v4702 = vsel %vm4691, %v4700, %v4701
      %v4703 = vrot.slane %v4701, 4
      %v4704 = vrot.slane %v4598, 5
      %v4705 = vsel %vm4691, %v4703, %v4704
      %v4706 = vrot.slane %v4599, 5
      %v4707 = vrot.slane %v4706, 4
      %v4708 = vrot.slane %v4600, 5
      %v4709 = vsel %vm4691, %v4707, %v4708
      %v4710 = vrot.slane %v4708, 4
      %v4711 = vrot.slane %v4601, 5
      %v4712 = vsel %vm4691, %v4710, %v4711
      %v4713 = vrot.slane %v4602, 5
      %v4714 = vrot.slane %v4713, 4
      %v4715 = vrot.slane %v4603, 5
      %v4716 = vsel %vm4691, %v4714, %v4715
      %v4717 = vrot.slane %v4715, 4
      %v4718 = vrot.slane %v4604, 5
      %v4719 = vsel %vm4691, %v4717, %v4718
      %v4720 = vrot.slane %v4605, 5
      %v4721 = vrot.slane %v4720, 4
      %v4722 = vrot.slane %v4606, 5
      %v4723 = vsel %vm4691, %v4721, %v4722
      %v4724 = vrot.slane %v4722, 4
      %v4725 = vrot.slane %v4607, 5
      %v4726 = vsel %vm4691, %v4724, %v4725
      %v4727 = vrot.slane %v4608, 5
      %v4728 = vrot.slane %v4727, 4
      %v4729 = vrot.slane %v4609, 5
      %v4730 = vsel %vm4691, %v4728, %v4729
      %v4731 = vrot.slane %v4729, 4
      %v4732 = vrot.slane %v4610, 5
      %v4733 = vsel %vm4691, %v4731, %v4732
      %v4734 = vrot.slane %v4611, 5
      %v4735 = vrot.slane %v4734, 4
      %v4736 = vrot.slane %v4612, 5
      %v4737 = vsel %vm4691, %v4735, %v4736
      %v4738 = vrot.slane %v4736, 4
      %v4739 = vrot.slane %v4613, 5
      %v4740 = vsel %vm4691, %v4738, %v4739
      %v4741 = vrot.slane %v4614, 5
      %v4742 = vrot.slane %v4741, 4
      %v4743 = vrot.slane %v4615, 5
      %v4744 = vsel %vm4691, %v4742, %v4743
      %v4745 = vrot.slane %v4743, 4
      %v4746 = vrot.slane %v4616, 5
      %v4747 = vsel %vm4691, %v4745, %v4746
      %v4748 = vrot.slane %v4617, 5
      %v4749 = vrot.slane %v4748, 4
      %v4750 = vrot.slane %v4618, 5
      %v4751 = vsel %vm4691, %v4749, %v4750
      %v4752 = vrot.slane %v4750, 4
      %v4753 = vrot.slane %v4619, 5
      %v4754 = vsel %vm4691, %v4752, %v4753
      %v4755 = vrot.slane %v4620, 5
      %v4756 = vrot.slane %v4755, 4
      %v4757 = vrot.slane %v4621, 5
      %v4758 = vsel %vm4691, %v4756, %v4757
      %v4759 = vrot.slane %v4757, 4
      %v4760 = vrot.slane %v4622, 5
      %v4761 = vsel %vm4691, %v4759, %v4760
      %v4762 = vrot.slane %v4623, 5
      %v4763 = vrot.slane %v4762, 4
      %v4764 = vrot.slane %v4624, 5
      %v4765 = vsel %vm4691, %v4763, %v4764
      %v4766 = vrot.slane %v4764, 4
      %v4767 = vrot.slane %v4625, 5
      %v4768 = vsel %vm4691, %v4766, %v4767
      %v4769 = vrot.slane %v4626, 5
      %v4770 = vrot.slane %v4769, 4
      %v4771 = vrot.slane %v4627, 5
      %v4772 = vsel %vm4691, %v4770, %v4771
      %v4773 = vrot.slane %v4771, 4
      %v4774 = vrot.slane %v4628, 5
      %v4775 = vsel %vm4691, %v4773, %v4774
      %v4776 = vrot.slane %v4629, 5
      %v4777 = vrot.slane %v4776, 4
      %v4778 = vrot.slane %v4630, 5
      %v4779 = vsel %vm4691, %v4777, %v4778
      %v4780 = vrot.slane %v4778, 4
      %v4781 = vrot.slane %v4631, 5
      %v4782 = vsel %vm4691, %v4780, %v4781
      %v4783 = vrot.slane %v4632, 5
      %v4784 = vrot.slane %v4783, 4
      %v4785 = vrot.slane %v4633, 5
      %v4786 = vsel %vm4691, %v4784, %v4785
      %v4787 = vrot.slane %v4785, 4
      %v4788 = vrot.slane %v4634, 5
      %v4789 = vsel %vm4691, %v4787, %v4788
      %v4790 = vrot.slane %v4635, 5
      %v4791 = vrot.slane %v4790, 4
      %v4792 = vrot.slane %v4636, 5
      %v4793 = vsel %vm4691, %v4791, %v4792
      %v4794 = vrot.slane %v4792, 4
      %v4795 = vrot.slane %v4637, 5
      %v4796 = vsel %vm4691, %v4794, %v4795
      %v4797 = vrot.slane %v4638, 5
      %v4798 = vrot.slane %v4797, 4
      %v4799 = vrot.slane %v4639, 5
      %v4800 = vsel %vm4691, %v4798, %v4799
      %v4801 = vrot.slane %v4799, 4
      %v4802 = vrot.slane %v4640, 5
      %v4803 = vsel %vm4691, %v4801, %v4802
      %v4804 = vld [vmem:[%s4592] sm:$0xc]
      %v4805 = vld [vmem:[%s4592 + $0x8] sm:$0x3]
      %v4806 = vld [vmem:[%s4592 + $0xc] sm:$0xc]
      %v4807 = vld [vmem:[%s4592 + $0x14] sm:$0x3]
      %v4808 = vld [vmem:[%s4592 + $0x18] sm:$0xc]
      %v4809 = vld [vmem:[%s4592 + $0x20] sm:$0x3]
      %v4810 = vld [vmem:[%s4592 + $0x24] sm:$0xc]
      %v4811 = vld [vmem:[%s4592 + $0x2c] sm:$0x3]
      %v4812 = vld [vmem:[%s4592 + $0x30] sm:$0xc]
      %v4813 = vld [vmem:[%s4592 + $0x38] sm:$0x3]
      %v4814 = vld [vmem:[%s4592 + $0x3c] sm:$0xc]
      %v4815 = vld [vmem:[%s4592 + $0x44] sm:$0x3]
      %v4816 = vld [vmem:[%s4592 + $0x48] sm:$0xc]
      %v4817 = vld [vmem:[%s4592 + $0x50] sm:$0x3]
      %v4818 = vld [vmem:[%s4592 + $0x54] sm:$0xc]
      %v4819 = vld [vmem:[%s4592 + $0x5c] sm:$0x3]
      %v4820 = vld [vmem:[%s4592 + $0x60] sm:$0xc]
      %v4821 = vld [vmem:[%s4592 + $0x68] sm:$0x3]
      %v4822 = vld [vmem:[%s4592 + $0x6c] sm:$0xc]
      %v4823 = vld [vmem:[%s4592 + $0x74] sm:$0x3]
      %v4824 = vld [vmem:[%s4592 + $0x78] sm:$0xc]
      %v4825 = vld [vmem:[%s4592 + $0x80] sm:$0x3]
      %v4826 = vld [vmem:[%s4592 + $0x84] sm:$0xc]
      %v4827 = vld [vmem:[%s4592 + $0x8c] sm:$0x3]
      %v4828 = vld [vmem:[%s4592 + $0x90] sm:$0xc]
      %v4829 = vld [vmem:[%s4592 + $0x98] sm:$0x3]
      %v4830 = vld [vmem:[%s4592 + $0x9c] sm:$0xc]
      %v4831 = vld [vmem:[%s4592 + $0xa4] sm:$0x3]
      %v4832 = vld [vmem:[%s4592 + $0xa8] sm:$0xc]
      %v4833 = vld [vmem:[%s4592 + $0xb0] sm:$0x3]
      %v4834 = vld [vmem:[%s4592 + $0xb4] sm:$0xc]
      %v4835 = vld [vmem:[%s4592 + $0xbc] sm:$0x3]
      %v4868 = vrot.slane %v4804, 6
      %v4869 = vrot.slane %v4868, 4
      %v4870 = vrot.slane %v4594, 6
      %v4871 = vsel %vm767, %v4869, %v4870
      %v4872 = vrot.slane %v4870, 4
      %v4873 = vrot.slane %v4805, 6
      %v4874 = vsel %vm767, %v4872, %v4873
      %v4875 = vrot.slane %v4806, 6
      %v4876 = vrot.slane %v4875, 4
      %v4877 = vrot.slane %v4597, 6
      %v4878 = vsel %vm767, %v4876, %v4877
      %v4879 = vrot.slane %v4877, 4
      %v4880 = vrot.slane %v4807, 6
      %v4881 = vsel %vm767, %v4879, %v4880
      %v4882 = vrot.slane %v4808, 6
      %v4883 = vrot.slane %v4882, 4
      %v4884 = vrot.slane %v4600, 6
      %v4885 = vsel %vm767, %v4883, %v4884
      %v4886 = vrot.slane %v4884, 4
      %v4887 = vrot.slane %v4809, 6
      %v4888 = vsel %vm767, %v4886, %v4887
      %v4889 = vrot.slane %v4810, 6
      %v4890 = vrot.slane %v4889, 4
      %v4891 = vrot.slane %v4603, 6
      %v4892 = vsel %vm767, %v4890, %v4891
      %v4893 = vrot.slane %v4891, 4
      %v4894 = vrot.slane %v4811, 6
      %v4895 = vsel %vm767, %v4893, %v4894
      %v4896 = vrot.slane %v4812, 6
      %v4897 = vrot.slane %v4896, 4
      %v4898 = vrot.slane %v4606, 6
      %v4899 = vsel %vm767, %v4897, %v4898
      %v4900 = vrot.slane %v4898, 4
      %v4901 = vrot.slane %v4813, 6
      %v4902 = vsel %vm767, %v4900, %v4901
      %v4903 = vrot.slane %v4814, 6
      %v4904 = vrot.slane %v4903, 4
      %v4905 = vrot.slane %v4609, 6
      %v4906 = vsel %vm767, %v4904, %v4905
      %v4907 = vrot.slane %v4905, 4
      %v4908 = vrot.slane %v4815, 6
      %v4909 = vsel %vm767, %v4907, %v4908
      %v4910 = vrot.slane %v4816, 6
      %v4911 = vrot.slane %v4910, 4
      %v4912 = vrot.slane %v4612, 6
      %v4913 = vsel %vm767, %v4911, %v4912
      %v4914 = vrot.slane %v4912, 4
      %v4915 = vrot.slane %v4817, 6
      %v4916 = vsel %vm767, %v4914, %v4915
      %v4917 = vrot.slane %v4818, 6
      %v4918 = vrot.slane %v4917, 4
      %v4919 = vrot.slane %v4615, 6
      %v4920 = vsel %vm767, %v4918, %v4919
      %v4921 = vrot.slane %v4919, 4
      %v4922 = vrot.slane %v4819, 6
      %v4923 = vsel %vm767, %v4921, %v4922
      %v4924 = vrot.slane %v4820, 6
      %v4925 = vrot.slane %v4924, 4
      %v4926 = vrot.slane %v4618, 6
      %v4927 = vsel %vm767, %v4925, %v4926
      %v4928 = vrot.slane %v4926, 4
      %v4929 = vrot.slane %v4821, 6
      %v4930 = vsel %vm767, %v4928, %v4929
      %v4931 = vrot.slane %v4822, 6
      %v4932 = vrot.slane %v4931, 4
      %v4933 = vrot.slane %v4621, 6
      %v4934 = vsel %vm767, %v4932, %v4933
      %v4935 = vrot.slane %v4933, 4
      %v4936 = vrot.slane %v4823, 6
      %v4937 = vsel %vm767, %v4935, %v4936
      %v4938 = vrot.slane %v4824, 6
      %v4939 = vrot.slane %v4938, 4
      %v4940 = vrot.slane %v4624, 6
      %v4941 = vsel %vm767, %v4939, %v4940
      %v4942 = vrot.slane %v4940, 4
      %v4943 = vrot.slane %v4825, 6
      %v4944 = vsel %vm767, %v4942, %v4943
      %v4945 = vrot.slane %v4826, 6
      %v4946 = vrot.slane %v4945, 4
      %v4947 = vrot.slane %v4627, 6
      %v4948 = vsel %vm767, %v4946, %v4947
      %v4949 = vrot.slane %v4947, 4
      %v4950 = vrot.slane %v4827, 6
      %v4951 = vsel %vm767, %v4949, %v4950
      %v4952 = vrot.slane %v4828, 6
      %v4953 = vrot.slane %v4952, 4
      %v4954 = vrot.slane %v4630, 6
      %v4955 = vsel %vm767, %v4953, %v4954
      %v4956 = vrot.slane %v4954, 4
      %v4957 = vrot.slane %v4829, 6
      %v4958 = vsel %vm767, %v4956, %v4957
      %v4959 = vrot.slane %v4830, 6
      %v4960 = vrot.slane %v4959, 4
      %v4961 = vrot.slane %v4633, 6
      %v4962 = vsel %vm767, %v4960, %v4961
      %v4963 = vrot.slane %v4961, 4
      %v4964 = vrot.slane %v4831, 6
      %v4965 = vsel %vm767, %v4963, %v4964
      %v4966 = vrot.slane %v4832, 6
      %v4967 = vrot.slane %v4966, 4
      %v4968 = vrot.slane %v4636, 6
      %v4969 = vsel %vm767, %v4967, %v4968
      %v4970 = vrot.slane %v4968, 4
      %v4971 = vrot.slane %v4833, 6
      %v4972 = vsel %vm767, %v4970, %v4971
      %v4973 = vrot.slane %v4834, 6
      %v4974 = vrot.slane %v4973, 4
      %v4975 = vrot.slane %v4639, 6
      %v4976 = vsel %vm767, %v4974, %v4975
      %v4977 = vrot.slane %v4975, 4
      %v4978 = vrot.slane %v4835, 6
      %v4979 = vsel %vm767, %v4977, %v4978
      %v4980 = vld [vmem:[%s4592] sm:$0x8]
      %v4981 = vld [vmem:[%s4592 + $0x8] sm:$0x7]
      %v4982 = vld [vmem:[%s4592 + $0xc] sm:$0x8]
      %v4983 = vld [vmem:[%s4592 + $0x14] sm:$0x7]
      %v4984 = vld [vmem:[%s4592 + $0x18] sm:$0x8]
      %v4985 = vld [vmem:[%s4592 + $0x20] sm:$0x7]
      %v4986 = vld [vmem:[%s4592 + $0x24] sm:$0x8]
      %v4987 = vld [vmem:[%s4592 + $0x2c] sm:$0x7]
      %v4988 = vld [vmem:[%s4592 + $0x30] sm:$0x8]
      %v4989 = vld [vmem:[%s4592 + $0x38] sm:$0x7]
      %v4990 = vld [vmem:[%s4592 + $0x3c] sm:$0x8]
      %v4991 = vld [vmem:[%s4592 + $0x44] sm:$0x7]
      %v4992 = vld [vmem:[%s4592 + $0x48] sm:$0x8]
      %v4993 = vld [vmem:[%s4592 + $0x50] sm:$0x7]
      %v4994 = vld [vmem:[%s4592 + $0x54] sm:$0x8]
      %v4995 = vld [vmem:[%s4592 + $0x5c] sm:$0x7]
      %v4996 = vld [vmem:[%s4592 + $0x60] sm:$0x8]
      %v4997 = vld [vmem:[%s4592 + $0x68] sm:$0x7]
      %v4998 = vld [vmem:[%s4592 + $0x6c] sm:$0x8]
      %v4999 = vld [vmem:[%s4592 + $0x74] sm:$0x7]
      %v5000 = vld [vmem:[%s4592 + $0x78] sm:$0x8]
      %v5001 = vld [vmem:[%s4592 + $0x80] sm:$0x7]
      %v5002 = vld [vmem:[%s4592 + $0x84] sm:$0x8]
      %v5003 = vld [vmem:[%s4592 + $0x8c] sm:$0x7]
      %v5004 = vld [vmem:[%s4592 + $0x90] sm:$0x8]
      %v5005 = vld [vmem:[%s4592 + $0x98] sm:$0x7]
      %v5006 = vld [vmem:[%s4592 + $0x9c] sm:$0x8]
      %v5007 = vld [vmem:[%s4592 + $0xa4] sm:$0x7]
      %v5008 = vld [vmem:[%s4592 + $0xa8] sm:$0x8]
      %v5009 = vld [vmem:[%s4592 + $0xb0] sm:$0x7]
      %v5010 = vld [vmem:[%s4592 + $0xb4] sm:$0x8]
      %v5011 = vld [vmem:[%s4592 + $0xbc] sm:$0x7]
      %vm5044 = vcmask 1040384
      %vm5045 = vcmask 1044484
      %vm5046 = vmor %vm5044, %vm5045
      %v5047 = vrot.slane %v4980, 7
      %v5048 = vrot.slane %v5047, 4
      %v5049 = vrot.slane %v4594, 7
      %v5050 = vsel %vm5046, %v5048, %v5049
      %v5051 = vrot.slane %v5049, 4
      %v5052 = vrot.slane %v4981, 7
      %v5053 = vsel %vm5046, %v5051, %v5052
      %v5054 = vrot.slane %v4982, 7
      %v5055 = vrot.slane %v5054, 4
      %v5056 = vrot.slane %v4597, 7
      %v5057 = vsel %vm5046, %v5055, %v5056
      %v5058 = vrot.slane %v5056, 4
      %v5059 = vrot.slane %v4983, 7
      %v5060 = vsel %vm5046, %v5058, %v5059
      %v5061 = vrot.slane %v4984, 7
      %v5062 = vrot.slane %v5061, 4
      %v5063 = vrot.slane %v4600, 7
      %v5064 = vsel %vm5046, %v5062, %v5063
      %v5065 = vrot.slane %v5063, 4
      %v5066 = vrot.slane %v4985, 7
      %v5067 = vsel %vm5046, %v5065, %v5066
      %v5068 = vrot.slane %v4986, 7
      %v5069 = vrot.slane %v5068, 4
      %v5070 = vrot.slane %v4603, 7
      %v5071 = vsel %vm5046, %v5069, %v5070
      %v5072 = vrot.slane %v5070, 4
      %v5073 = vrot.slane %v4987, 7
      %v5074 = vsel %vm5046, %v5072, %v5073
      %v5075 = vrot.slane %v4988, 7
      %v5076 = vrot.slane %v5075, 4
      %v5077 = vrot.slane %v4606, 7
      %v5078 = vsel %vm5046, %v5076, %v5077
      %v5079 = vrot.slane %v5077, 4
      %v5080 = vrot.slane %v4989, 7
      %v5081 = vsel %vm5046, %v5079, %v5080
      %v5082 = vrot.slane %v4990, 7
      %v5083 = vrot.slane %v5082, 4
      %v5084 = vrot.slane %v4609, 7
      %v5085 = vsel %vm5046, %v5083, %v5084
      %v5086 = vrot.slane %v5084, 4
      %v5087 = vrot.slane %v4991, 7
      %v5088 = vsel %vm5046, %v5086, %v5087
      %v5089 = vrot.slane %v4992, 7
      %v5090 = vrot.slane %v5089, 4
      %v5091 = vrot.slane %v4612, 7
      %v5092 = vsel %vm5046, %v5090, %v5091
      %v5093 = vrot.slane %v5091, 4
      %v5094 = vrot.slane %v4993, 7
      %v5095 = vsel %vm5046, %v5093, %v5094
      %v5096 = vrot.slane %v4994, 7
      %v5097 = vrot.slane %v5096, 4
      %v5098 = vrot.slane %v4615, 7
      %v5099 = vsel %vm5046, %v5097, %v5098
      %v5100 = vrot.slane %v5098, 4
      %v5101 = vrot.slane %v4995, 7
      %v5102 = vsel %vm5046, %v5100, %v5101
      %v5103 = vrot.slane %v4996, 7
      %v5104 = vrot.slane %v5103, 4
      %v5105 = vrot.slane %v4618, 7
      %v5106 = vsel %vm5046, %v5104, %v5105
      %v5107 = vrot.slane %v5105, 4
      %v5108 = vrot.slane %v4997, 7
      %v5109 = vsel %vm5046, %v5107, %v5108
      %v5110 = vrot.slane %v4998, 7
      %v5111 = vrot.slane %v5110, 4
      %v5112 = vrot.slane %v4621, 7
      %v5113 = vsel %vm5046, %v5111, %v5112
      %v5114 = vrot.slane %v5112, 4
      %v5115 = vrot.slane %v4999, 7
      %v5116 = vsel %vm5046, %v5114, %v5115
      %v5117 = vrot.slane %v5000, 7
      %v5118 = vrot.slane %v5117, 4
      %v5119 = vrot.slane %v4624, 7
      %v5120 = vsel %vm5046, %v5118, %v5119
      %v5121 = vrot.slane %v5119, 4
      %v5122 = vrot.slane %v5001, 7
      %v5123 = vsel %vm5046, %v5121, %v5122
      %v5124 = vrot.slane %v5002, 7
      %v5125 = vrot.slane %v5124, 4
      %v5126 = vrot.slane %v4627, 7
      %v5127 = vsel %vm5046, %v5125, %v5126
      %v5128 = vrot.slane %v5126, 4
      %v5129 = vrot.slane %v5003, 7
      %v5130 = vsel %vm5046, %v5128, %v5129
      %v5131 = vrot.slane %v5004, 7
      %v5132 = vrot.slane %v5131, 4
      %v5133 = vrot.slane %v4630, 7
      %v5134 = vsel %vm5046, %v5132, %v5133
      %v5135 = vrot.slane %v5133, 4
      %v5136 = vrot.slane %v5005, 7
      %v5137 = vsel %vm5046, %v5135, %v5136
      %v5138 = vrot.slane %v5006, 7
      %v5139 = vrot.slane %v5138, 4
      %v5140 = vrot.slane %v4633, 7
      %v5141 = vsel %vm5046, %v5139, %v5140
      %v5142 = vrot.slane %v5140, 4
      %v5143 = vrot.slane %v5007, 7
      %v5144 = vsel %vm5046, %v5142, %v5143
      %v5145 = vrot.slane %v5008, 7
      %v5146 = vrot.slane %v5145, 4
      %v5147 = vrot.slane %v4636, 7
      %v5148 = vsel %vm5046, %v5146, %v5147
      %v5149 = vrot.slane %v5147, 4
      %v5150 = vrot.slane %v5009, 7
      %v5151 = vsel %vm5046, %v5149, %v5150
      %v5152 = vrot.slane %v5010, 7
      %v5153 = vrot.slane %v5152, 4
      %v5154 = vrot.slane %v4639, 7
      %v5155 = vsel %vm5046, %v5153, %v5154
      %v5156 = vrot.slane %v5154, 4
      %v5157 = vrot.slane %v5011, 7
      %v5158 = vsel %vm5046, %v5156, %v5157
      %v5159 = vld [vmem:[%s1270 + $0x8] sm:$0x1]
      %v5160 = vld [vmem:[%s1270 + $0x14] sm:$0x1]
      %v5161 = vld [vmem:[%s1270 + $0x20] sm:$0x1]
      %v5162 = vld [vmem:[%s1270 + $0x2c] sm:$0x1]
      %v5163 = vld [vmem:[%s1270 + $0x38] sm:$0x1]
      %v5164 = vld [vmem:[%s1270 + $0x44] sm:$0x1]
      %v5165 = vld [vmem:[%s1270 + $0x50] sm:$0x1]
      %v5166 = vld [vmem:[%s1270 + $0x5c] sm:$0x1]
      %v5167 = vld [vmem:[%s1270 + $0x68] sm:$0x1]
      %v5168 = vld [vmem:[%s1270 + $0x74] sm:$0x1]
      %v5169 = vld [vmem:[%s1270 + $0x80] sm:$0x1]
      %v5170 = vld [vmem:[%s1270 + $0x8c] sm:$0x1]
      %v5171 = vld [vmem:[%s1270 + $0x98] sm:$0x1]
      %v5172 = vld [vmem:[%s1270 + $0xa4] sm:$0x1]
      %v5173 = vld [vmem:[%s1270 + $0xb0] sm:$0x1]
      %v5174 = vld [vmem:[%s1270 + $0xbc] sm:$0x1]
      %v5207 = vrot.slane %v1271, 5
      %v5208 = vrot.slane %v5207, 4
      %v5209 = vrot.slane %v1272, 5
      %v5210 = vsel %vm4691, %v5208, %v5209
      %v5211 = vrot.slane %v5209, 4
      %v5212 = vrot.slane %v5159, 5
      %v5213 = vsel %vm4691, %v5211, %v5212
      %v5214 = vrot.slane %v1274, 5
      %v5215 = vrot.slane %v5214, 4
      %v5216 = vrot.slane %v1275, 5
      %v5217 = vsel %vm4691, %v5215, %v5216
      %v5218 = vrot.slane %v5216, 4
      %v5219 = vrot.slane %v5160, 5
      %v5220 = vsel %vm4691, %v5218, %v5219
      %v5221 = vrot.slane %v1277, 5
      %v5222 = vrot.slane %v5221, 4
      %v5223 = vrot.slane %v1278, 5
      %v5224 = vsel %vm4691, %v5222, %v5223
      %v5225 = vrot.slane %v5223, 4
      %v5226 = vrot.slane %v5161, 5
      %v5227 = vsel %vm4691, %v5225, %v5226
      %v5228 = vrot.slane %v1280, 5
      %v5229 = vrot.slane %v5228, 4
      %v5230 = vrot.slane %v1281, 5
      %v5231 = vsel %vm4691, %v5229, %v5230
      %v5232 = vrot.slane %v5230, 4
      %v5233 = vrot.slane %v5162, 5
      %v5234 = vsel %vm4691, %v5232, %v5233
      %v5235 = vrot.slane %v1283, 5
      %v5236 = vrot.slane %v5235, 4
      %v5237 = vrot.slane %v1284, 5
      %v5238 = vsel %vm4691, %v5236, %v5237
      %v5239 = vrot.slane %v5237, 4
      %v5240 = vrot.slane %v5163, 5
      %v5241 = vsel %vm4691, %v5239, %v5240
      %v5242 = vrot.slane %v1286, 5
      %v5243 = vrot.slane %v5242, 4
      %v5244 = vrot.slane %v1287, 5
      %v5245 = vsel %vm4691, %v5243, %v5244
      %v5246 = vrot.slane %v5244, 4
      %v5247 = vrot.slane %v5164, 5
      %v5248 = vsel %vm4691, %v5246, %v5247
      %v5249 = vrot.slane %v1289, 5
      %v5250 = vrot.slane %v5249, 4
      %v5251 = vrot.slane %v1290, 5
      %v5252 = vsel %vm4691, %v5250, %v5251
      %v5253 = vrot.slane %v5251, 4
      %v5254 = vrot.slane %v5165, 5
      %v5255 = vsel %vm4691, %v5253, %v5254
      %v5256 = vrot.slane %v1292, 5
      %v5257 = vrot.slane %v5256, 4
      %v5258 = vrot.slane %v1293, 5
      %v5259 = vsel %vm4691, %v5257, %v5258
      %v5260 = vrot.slane %v5258, 4
      %v5261 = vrot.slane %v5166, 5
      %v5262 = vsel %vm4691, %v5260, %v5261
      %v5263 = vrot.slane %v1295, 5
      %v5264 = vrot.slane %v5263, 4
      %v5265 = vrot.slane %v1296, 5
      %v5266 = vsel %vm4691, %v5264, %v5265
      %v5267 = vrot.slane %v5265, 4
      %v5268 = vrot.slane %v5167, 5
      %v5269 = vsel %vm4691, %v5267, %v5268
      %v5270 = vrot.slane %v1298, 5
      %v5271 = vrot.slane %v5270, 4
      %v5272 = vrot.slane %v1299, 5
      %v5273 = vsel %vm4691, %v5271, %v5272
      %v5274 = vrot.slane %v5272, 4
      %v5275 = vrot.slane %v5168, 5
      %v5276 = vsel %vm4691, %v5274, %v5275
      %v5277 = vrot.slane %v1301, 5
      %v5278 = vrot.slane %v5277, 4
      %v5279 = vrot.slane %v1302, 5
      %v5280 = vsel %vm4691, %v5278, %v5279
      %v5281 = vrot.slane %v5279, 4
      %v5282 = vrot.slane %v5169, 5
      %v5283 = vsel %vm4691, %v5281, %v5282
      %v5284 = vrot.slane %v1304, 5
      %v5285 = vrot.slane %v5284, 4
      %v5286 = vrot.slane %v1305, 5
      %v5287 = vsel %vm4691, %v5285, %v5286
      %v5288 = vrot.slane %v5286, 4
      %v5289 = vrot.slane %v5170, 5
      %v5290 = vsel %vm4691, %v5288, %v5289
      %v5291 = vrot.slane %v1307, 5
      %v5292 = vrot.slane %v5291, 4
      %v5293 = vrot.slane %v1308, 5
      %v5294 = vsel %vm4691, %v5292, %v5293
      %v5295 = vrot.slane %v5293, 4
      %v5296 = vrot.slane %v5171, 5
      %v5297 = vsel %vm4691, %v5295, %v5296
      %v5298 = vrot.slane %v1310, 5
      %v5299 = vrot.slane %v5298, 4
      %v5300 = vrot.slane %v1311, 5
      %v5301 = vsel %vm4691, %v5299, %v5300
      %v5302 = vrot.slane %v5300, 4
      %v5303 = vrot.slane %v5172, 5
      %v5304 = vsel %vm4691, %v5302, %v5303
      %v5305 = vrot.slane %v1313, 5
      %v5306 = vrot.slane %v5305, 4
      %v5307 = vrot.slane %v1314, 5
      %v5308 = vsel %vm4691, %v5306, %v5307
      %v5309 = vrot.slane %v5307, 4
      %v5310 = vrot.slane %v5173, 5
      %v5311 = vsel %vm4691, %v5309, %v5310
      %v5312 = vrot.slane %v1316, 5
      %v5313 = vrot.slane %v5312, 4
      %v5314 = vrot.slane %v1317, 5
      %v5315 = vsel %vm4691, %v5313, %v5314
      %v5316 = vrot.slane %v5314, 4
      %v5317 = vrot.slane %v5174, 5
      %v5318 = vsel %vm4691, %v5316, %v5317
      %v5319 = vld [vmem:[%s1270] sm:$0x8]
      %v5320 = vld [vmem:[%s1270 + $0xc] sm:$0x8]
      %v5321 = vld [vmem:[%s1270 + $0x18] sm:$0x8]
      %v5322 = vld [vmem:[%s1270 + $0x24] sm:$0x8]
      %v5323 = vld [vmem:[%s1270 + $0x30] sm:$0x8]
      %v5324 = vld [vmem:[%s1270 + $0x3c] sm:$0x8]
      %v5325 = vld [vmem:[%s1270 + $0x48] sm:$0x8]
      %v5326 = vld [vmem:[%s1270 + $0x54] sm:$0x8]
      %v5327 = vld [vmem:[%s1270 + $0x60] sm:$0x8]
      %v5328 = vld [vmem:[%s1270 + $0x6c] sm:$0x8]
      %v5329 = vld [vmem:[%s1270 + $0x78] sm:$0x8]
      %v5330 = vld [vmem:[%s1270 + $0x84] sm:$0x8]
      %v5331 = vld [vmem:[%s1270 + $0x90] sm:$0x8]
      %v5332 = vld [vmem:[%s1270 + $0x9c] sm:$0x8]
      %v5333 = vld [vmem:[%s1270 + $0xa8] sm:$0x8]
      %v5334 = vld [vmem:[%s1270 + $0xb4] sm:$0x8]
      %v5367 = vrot.slane %v5319, 7
      %v5368 = vrot.slane %v5367, 4
      %v5369 = vrot.slane %v1272, 7
      %v5370 = vsel %vm5046, %v5368, %v5369
      %v5371 = vrot.slane %v5369, 4
      %v5372 = vrot.slane %v1943, 7
      %v5373 = vsel %vm5046, %v5371, %v5372
      %v5374 = vrot.slane %v5320, 7
      %v5375 = vrot.slane %v5374, 4
      %v5376 = vrot.slane %v1275, 7
      %v5377 = vsel %vm5046, %v5375, %v5376
      %v5378 = vrot.slane %v5376, 4
      %v5379 = vrot.slane %v1944, 7
      %v5380 = vsel %vm5046, %v5378, %v5379
      %v5381 = vrot.slane %v5321, 7
      %v5382 = vrot.slane %v5381, 4
      %v5383 = vrot.slane %v1278, 7
      %v5384 = vsel %vm5046, %v5382, %v5383
      %v5385 = vrot.slane %v5383, 4
      %v5386 = vrot.slane %v1945, 7
      %v5387 = vsel %vm5046, %v5385, %v5386
      %v5388 = vrot.slane %v5322, 7
      %v5389 = vrot.slane %v5388, 4
      %v5390 = vrot.slane %v1281, 7
      %v5391 = vsel %vm5046, %v5389, %v5390
      %v5392 = vrot.slane %v5390, 4
      %v5393 = vrot.slane %v1946, 7
      %v5394 = vsel %vm5046, %v5392, %v5393
      %v5395 = vrot.slane %v5323, 7
      %v5396 = vrot.slane %v5395, 4
      %v5397 = vrot.slane %v1284, 7
      %v5398 = vsel %vm5046, %v5396, %v5397
      %v5399 = vrot.slane %v5397, 4
      %v5400 = vrot.slane %v1947, 7
      %v5401 = vsel %vm5046, %v5399, %v5400
      %v5402 = vrot.slane %v5324, 7
      %v5403 = vrot.slane %v5402, 4
      %v5404 = vrot.slane %v1287, 7
      %v5405 = vsel %vm5046, %v5403, %v5404
      %v5406 = vrot.slane %v5404, 4
      %v5407 = vrot.slane %v1948, 7
      %v5408 = vsel %vm5046, %v5406, %v5407
      %v5409 = vrot.slane %v5325, 7
      %v5410 = vrot.slane %v5409, 4
      %v5411 = vrot.slane %v1290, 7
      %v5412 = vsel %vm5046, %v5410, %v5411
      %v5413 = vrot.slane %v5411, 4
      %v5414 = vrot.slane %v1949, 7
      %v5415 = vsel %vm5046, %v5413, %v5414
      %v5416 = vrot.slane %v5326, 7
      %v5417 = vrot.slane %v5416, 4
      %v5418 = vrot.slane %v1293, 7
      %v5419 = vsel %vm5046, %v5417, %v5418
      %v5420 = vrot.slane %v5418, 4
      %v5421 = vrot.slane %v1950, 7
      %v5422 = vsel %vm5046, %v5420, %v5421
      %v5423 = vrot.slane %v5327, 7
      %v5424 = vrot.slane %v5423, 4
      %v5425 = vrot.slane %v1296, 7
      %v5426 = vsel %vm5046, %v5424, %v5425
      %v5427 = vrot.slane %v5425, 4
      %v5428 = vrot.slane %v1951, 7
      %v5429 = vsel %vm5046, %v5427, %v5428
      %v5430 = vrot.slane %v5328, 7
      %v5431 = vrot.slane %v5430, 4
      %v5432 = vrot.slane %v1299, 7
      %v5433 = vsel %vm5046, %v5431, %v5432
      %v5434 = vrot.slane %v5432, 4
      %v5435 = vrot.slane %v1952, 7
      %v5436 = vsel %vm5046, %v5434, %v5435
      %v5437 = vrot.slane %v5329, 7
      %v5438 = vrot.slane %v5437, 4
      %v5439 = vrot.slane %v1302, 7
      %v5440 = vsel %vm5046, %v5438, %v5439
      %v5441 = vrot.slane %v5439, 4
      %v5442 = vrot.slane %v1953, 7
      %v5443 = vsel %vm5046, %v5441, %v5442
      %v5444 = vrot.slane %v5330, 7
      %v5445 = vrot.slane %v5444, 4
      %v5446 = vrot.slane %v1305, 7
      %v5447 = vsel %vm5046, %v5445, %v5446
      %v5448 = vrot.slane %v5446, 4
      %v5449 = vrot.slane %v1954, 7
      %v5450 = vsel %vm5046, %v5448, %v5449
      %v5451 = vrot.slane %v5331, 7
      %v5452 = vrot.slane %v5451, 4
      %v5453 = vrot.slane %v1308, 7
      %v5454 = vsel %vm5046, %v5452, %v5453
      %v5455 = vrot.slane %v5453, 4
      %v5456 = vrot.slane %v1955, 7
      %v5457 = vsel %vm5046, %v5455, %v5456
      %v5458 = vrot.slane %v5332, 7
      %v5459 = vrot.slane %v5458, 4
      %v5460 = vrot.slane %v1311, 7
      %v5461 = vsel %vm5046, %v5459, %v5460
      %v5462 = vrot.slane %v5460, 4
      %v5463 = vrot.slane %v1956, 7
      %v5464 = vsel %vm5046, %v5462, %v5463
      %v5465 = vrot.slane %v5333, 7
      %v5466 = vrot.slane %v5465, 4
      %v5467 = vrot.slane %v1314, 7
      %v5468 = vsel %vm5046, %v5466, %v5467
      %v5469 = vrot.slane %v5467, 4
      %v5470 = vrot.slane %v1957, 7
      %v5471 = vsel %vm5046, %v5469, %v5470
      %v5472 = vrot.slane %v5334, 7
      %v5473 = vrot.slane %v5472, 4
      %v5474 = vrot.slane %v1317, 7
      %v5475 = vsel %vm5046, %v5473, %v5474
      %v5476 = vrot.slane %v5474, 4
      %v5477 = vrot.slane %v1958, 7
      %v5478 = vsel %vm5046, %v5476, %v5477
      %s5479 = sadd.s32 %s197, 6
      %s5480 = smul.u32 %s5479, 3
      %s5481 = smul.addr %s5480, 4
      %s5482 = scalar_lea.vmem %s184, %s5481
      %v5483 = vld [vmem:[%s5482] sm:$0xe]
      %v5484 = vld [vmem:[%s5482 + $0x4] sm:$0xf]
      %v5485 = vld [vmem:[%s5482 + $0x8] sm:$0x1]
      %v5486 = vld [vmem:[%s5482 + $0xc] sm:$0xe]
      %v5487 = vld [vmem:[%s5482 + $0x10] sm:$0xf]
      %v5488 = vld [vmem:[%s5482 + $0x14] sm:$0x1]
      %v5489 = vld [vmem:[%s5482 + $0x18] sm:$0xe]
      %v5490 = vld [vmem:[%s5482 + $0x1c] sm:$0xf]
      %v5491 = vld [vmem:[%s5482 + $0x20] sm:$0x1]
      %v5492 = vld [vmem:[%s5482 + $0x24] sm:$0xe]
      %v5493 = vld [vmem:[%s5482 + $0x28] sm:$0xf]
      %v5494 = vld [vmem:[%s5482 + $0x2c] sm:$0x1]
      %v5495 = vld [vmem:[%s5482 + $0x30] sm:$0xe]
      %v5496 = vld [vmem:[%s5482 + $0x34] sm:$0xf]
      %v5497 = vld [vmem:[%s5482 + $0x38] sm:$0x1]
      %v5498 = vld [vmem:[%s5482 + $0x3c] sm:$0xe]
      %v5499 = vld [vmem:[%s5482 + $0x40] sm:$0xf]
      %v5500 = vld [vmem:[%s5482 + $0x44] sm:$0x1]
      %v5501 = vld [vmem:[%s5482 + $0x48] sm:$0xe]
      %v5502 = vld [vmem:[%s5482 + $0x4c] sm:$0xf]
      %v5503 = vld [vmem:[%s5482 + $0x50] sm:$0x1]
      %v5504 = vld [vmem:[%s5482 + $0x54] sm:$0xe]
      %v5505 = vld [vmem:[%s5482 + $0x58] sm:$0xf]
      %v5506 = vld [vmem:[%s5482 + $0x5c] sm:$0x1]
      %v5507 = vld [vmem:[%s5482 + $0x60] sm:$0xe]
      %v5508 = vld [vmem:[%s5482 + $0x64] sm:$0xf]
      %v5509 = vld [vmem:[%s5482 + $0x68] sm:$0x1]
      %v5510 = vld [vmem:[%s5482 + $0x6c] sm:$0xe]
      %v5511 = vld [vmem:[%s5482 + $0x70] sm:$0xf]
      %v5512 = vld [vmem:[%s5482 + $0x74] sm:$0x1]
      %v5513 = vld [vmem:[%s5482 + $0x78] sm:$0xe]
      %v5514 = vld [vmem:[%s5482 + $0x7c] sm:$0xf]
      %v5515 = vld [vmem:[%s5482 + $0x80] sm:$0x1]
      %v5516 = vld [vmem:[%s5482 + $0x84] sm:$0xe]
      %v5517 = vld [vmem:[%s5482 + $0x88] sm:$0xf]
      %v5518 = vld [vmem:[%s5482 + $0x8c] sm:$0x1]
      %v5519 = vld [vmem:[%s5482 + $0x90] sm:$0xe]
      %v5520 = vld [vmem:[%s5482 + $0x94] sm:$0xf]
      %v5521 = vld [vmem:[%s5482 + $0x98] sm:$0x1]
      %v5522 = vld [vmem:[%s5482 + $0x9c] sm:$0xe]
      %v5523 = vld [vmem:[%s5482 + $0xa0] sm:$0xf]
      %v5524 = vld [vmem:[%s5482 + $0xa4] sm:$0x1]
      %v5525 = vld [vmem:[%s5482 + $0xa8] sm:$0xe]
      %v5526 = vld [vmem:[%s5482 + $0xac] sm:$0xf]
      %v5527 = vld [vmem:[%s5482 + $0xb0] sm:$0x1]
      %v5528 = vld [vmem:[%s5482 + $0xb4] sm:$0xe]
      %v5529 = vld [vmem:[%s5482 + $0xb8] sm:$0xf]
      %v5530 = vld [vmem:[%s5482 + $0xbc] sm:$0x1]
      %v5579 = vrot.slane %v5483, 5
      %v5580 = vrot.slane %v5579, 4
      %v5581 = vrot.slane %v5484, 5
      %v5582 = vsel %vm4691, %v5580, %v5581
      %v5583 = vrot.slane %v5581, 4
      %v5584 = vrot.slane %v5485, 5
      %v5585 = vsel %vm4691, %v5583, %v5584
      %v5586 = vrot.slane %v5486, 5
      %v5587 = vrot.slane %v5586, 4
      %v5588 = vrot.slane %v5487, 5
      %v5589 = vsel %vm4691, %v5587, %v5588
      %v5590 = vrot.slane %v5588, 4
      %v5591 = vrot.slane %v5488, 5
      %v5592 = vsel %vm4691, %v5590, %v5591
      %v5593 = vrot.slane %v5489, 5
      %v5594 = vrot.slane %v5593, 4
      %v5595 = vrot.slane %v5490, 5
      %v5596 = vsel %vm4691, %v5594, %v5595
      %v5597 = vrot.slane %v5595, 4
      %v5598 = vrot.slane %v5491, 5
      %v5599 = vsel %vm4691, %v5597, %v5598
      %v5600 = vrot.slane %v5492, 5
      %v5601 = vrot.slane %v5600, 4
      %v5602 = vrot.slane %v5493, 5
      %v5603 = vsel %vm4691, %v5601, %v5602
      %v5604 = vrot.slane %v5602, 4
      %v5605 = vrot.slane %v5494, 5
      %v5606 = vsel %vm4691, %v5604, %v5605
      %v5607 = vrot.slane %v5495, 5
      %v5608 = vrot.slane %v5607, 4
      %v5609 = vrot.slane %v5496, 5
      %v5610 = vsel %vm4691, %v5608, %v5609
      %v5611 = vrot.slane %v5609, 4
      %v5612 = vrot.slane %v5497, 5
      %v5613 = vsel %vm4691, %v5611, %v5612
      %v5614 = vrot.slane %v5498, 5
      %v5615 = vrot.slane %v5614, 4
      %v5616 = vrot.slane %v5499, 5
      %v5617 = vsel %vm4691, %v5615, %v5616
      %v5618 = vrot.slane %v5616, 4
      %v5619 = vrot.slane %v5500, 5
      %v5620 = vsel %vm4691, %v5618, %v5619
      %v5621 = vrot.slane %v5501, 5
      %v5622 = vrot.slane %v5621, 4
      %v5623 = vrot.slane %v5502, 5
      %v5624 = vsel %vm4691, %v5622, %v5623
      %v5625 = vrot.slane %v5623, 4
      %v5626 = vrot.slane %v5503, 5
      %v5627 = vsel %vm4691, %v5625, %v5626
      %v5628 = vrot.slane %v5504, 5
      %v5629 = vrot.slane %v5628, 4
      %v5630 = vrot.slane %v5505, 5
      %v5631 = vsel %vm4691, %v5629, %v5630
      %v5632 = vrot.slane %v5630, 4
      %v5633 = vrot.slane %v5506, 5
      %v5634 = vsel %vm4691, %v5632, %v5633
      %v5635 = vrot.slane %v5507, 5
      %v5636 = vrot.slane %v5635, 4
      %v5637 = vrot.slane %v5508, 5
      %v5638 = vsel %vm4691, %v5636, %v5637
      %v5639 = vrot.slane %v5637, 4
      %v5640 = vrot.slane %v5509, 5
      %v5641 = vsel %vm4691, %v5639, %v5640
      %v5642 = vrot.slane %v5510, 5
      %v5643 = vrot.slane %v5642, 4
      %v5644 = vrot.slane %v5511, 5
      %v5645 = vsel %vm4691, %v5643, %v5644
      %v5646 = vrot.slane %v5644, 4
      %v5647 = vrot.slane %v5512, 5
      %v5648 = vsel %vm4691, %v5646, %v5647
      %v5649 = vrot.slane %v5513, 5
      %v5650 = vrot.slane %v5649, 4
      %v5651 = vrot.slane %v5514, 5
      %v5652 = vsel %vm4691, %v5650, %v5651
      %v5653 = vrot.slane %v5651, 4
      %v5654 = vrot.slane %v5515, 5
      %v5655 = vsel %vm4691, %v5653, %v5654
      %v5656 = vrot.slane %v5516, 5
      %v5657 = vrot.slane %v5656, 4
      %v5658 = vrot.slane %v5517, 5
      %v5659 = vsel %vm4691, %v5657, %v5658
      %v5660 = vrot.slane %v5658, 4
      %v5661 = vrot.slane %v5518, 5
      %v5662 = vsel %vm4691, %v5660, %v5661
      %v5663 = vrot.slane %v5519, 5
      %v5664 = vrot.slane %v5663, 4
      %v5665 = vrot.slane %v5520, 5
      %v5666 = vsel %vm4691, %v5664, %v5665
      %v5667 = vrot.slane %v5665, 4
      %v5668 = vrot.slane %v5521, 5
      %v5669 = vsel %vm4691, %v5667, %v5668
      %v5670 = vrot.slane %v5522, 5
      %v5671 = vrot.slane %v5670, 4
      %v5672 = vrot.slane %v5523, 5
      %v5673 = vsel %vm4691, %v5671, %v5672
      %v5674 = vrot.slane %v5672, 4
      %v5675 = vrot.slane %v5524, 5
      %v5676 = vsel %vm4691, %v5674, %v5675
      %v5677 = vrot.slane %v5525, 5
      %v5678 = vrot.slane %v5677, 4
      %v5679 = vrot.slane %v5526, 5
      %v5680 = vsel %vm4691, %v5678, %v5679
      %v5681 = vrot.slane %v5679, 4
      %v5682 = vrot.slane %v5527, 5
      %v5683 = vsel %vm4691, %v5681, %v5682
      %v5684 = vrot.slane %v5528, 5
      %v5685 = vrot.slane %v5684, 4
      %v5686 = vrot.slane %v5529, 5
      %v5687 = vsel %vm4691, %v5685, %v5686
      %v5688 = vrot.slane %v5686, 4
      %v5689 = vrot.slane %v5530, 5
      %v5690 = vsel %vm4691, %v5688, %v5689
      %v5691 = vld [vmem:[%s5482] sm:$0xc]
      %v5692 = vld [vmem:[%s5482 + $0x8] sm:$0x3]
      %v5693 = vld [vmem:[%s5482 + $0xc] sm:$0xc]
      %v5694 = vld [vmem:[%s5482 + $0x14] sm:$0x3]
      %v5695 = vld [vmem:[%s5482 + $0x18] sm:$0xc]
      %v5696 = vld [vmem:[%s5482 + $0x20] sm:$0x3]
      %v5697 = vld [vmem:[%s5482 + $0x24] sm:$0xc]
      %v5698 = vld [vmem:[%s5482 + $0x2c] sm:$0x3]
      %v5699 = vld [vmem:[%s5482 + $0x30] sm:$0xc]
      %v5700 = vld [vmem:[%s5482 + $0x38] sm:$0x3]
      %v5701 = vld [vmem:[%s5482 + $0x3c] sm:$0xc]
      %v5702 = vld [vmem:[%s5482 + $0x44] sm:$0x3]
      %v5703 = vld [vmem:[%s5482 + $0x48] sm:$0xc]
      %v5704 = vld [vmem:[%s5482 + $0x50] sm:$0x3]
      %v5705 = vld [vmem:[%s5482 + $0x54] sm:$0xc]
      %v5706 = vld [vmem:[%s5482 + $0x5c] sm:$0x3]
      %v5707 = vld [vmem:[%s5482 + $0x60] sm:$0xc]
      %v5708 = vld [vmem:[%s5482 + $0x68] sm:$0x3]
      %v5709 = vld [vmem:[%s5482 + $0x6c] sm:$0xc]
      %v5710 = vld [vmem:[%s5482 + $0x74] sm:$0x3]
      %v5711 = vld [vmem:[%s5482 + $0x78] sm:$0xc]
      %v5712 = vld [vmem:[%s5482 + $0x80] sm:$0x3]
      %v5713 = vld [vmem:[%s5482 + $0x84] sm:$0xc]
      %v5714 = vld [vmem:[%s5482 + $0x8c] sm:$0x3]
      %v5715 = vld [vmem:[%s5482 + $0x90] sm:$0xc]
      %v5716 = vld [vmem:[%s5482 + $0x98] sm:$0x3]
      %v5717 = vld [vmem:[%s5482 + $0x9c] sm:$0xc]
      %v5718 = vld [vmem:[%s5482 + $0xa4] sm:$0x3]
      %v5719 = vld [vmem:[%s5482 + $0xa8] sm:$0xc]
      %v5720 = vld [vmem:[%s5482 + $0xb0] sm:$0x3]
      %v5721 = vld [vmem:[%s5482 + $0xb4] sm:$0xc]
      %v5722 = vld [vmem:[%s5482 + $0xbc] sm:$0x3]
      %v5755 = vrot.slane %v5691, 6
      %v5756 = vrot.slane %v5755, 4
      %v5757 = vrot.slane %v5484, 6
      %v5758 = vsel %vm767, %v5756, %v5757
      %v5759 = vrot.slane %v5757, 4
      %v5760 = vrot.slane %v5692, 6
      %v5761 = vsel %vm767, %v5759, %v5760
      %v5762 = vrot.slane %v5693, 6
      %v5763 = vrot.slane %v5762, 4
      %v5764 = vrot.slane %v5487, 6
      %v5765 = vsel %vm767, %v5763, %v5764
      %v5766 = vrot.slane %v5764, 4
      %v5767 = vrot.slane %v5694, 6
      %v5768 = vsel %vm767, %v5766, %v5767
      %v5769 = vrot.slane %v5695, 6
      %v5770 = vrot.slane %v5769, 4
      %v5771 = vrot.slane %v5490, 6
      %v5772 = vsel %vm767, %v5770, %v5771
      %v5773 = vrot.slane %v5771, 4
      %v5774 = vrot.slane %v5696, 6
      %v5775 = vsel %vm767, %v5773, %v5774
      %v5776 = vrot.slane %v5697, 6
      %v5777 = vrot.slane %v5776, 4
      %v5778 = vrot.slane %v5493, 6
      %v5779 = vsel %vm767, %v5777, %v5778
      %v5780 = vrot.slane %v5778, 4
      %v5781 = vrot.slane %v5698, 6
      %v5782 = vsel %vm767, %v5780, %v5781
      %v5783 = vrot.slane %v5699, 6
      %v5784 = vrot.slane %v5783, 4
      %v5785 = vrot.slane %v5496, 6
      %v5786 = vsel %vm767, %v5784, %v5785
      %v5787 = vrot.slane %v5785, 4
      %v5788 = vrot.slane %v5700, 6
      %v5789 = vsel %vm767, %v5787, %v5788
      %v5790 = vrot.slane %v5701, 6
      %v5791 = vrot.slane %v5790, 4
      %v5792 = vrot.slane %v5499, 6
      %v5793 = vsel %vm767, %v5791, %v5792
      %v5794 = vrot.slane %v5792, 4
      %v5795 = vrot.slane %v5702, 6
      %v5796 = vsel %vm767, %v5794, %v5795
      %v5797 = vrot.slane %v5703, 6
      %v5798 = vrot.slane %v5797, 4
      %v5799 = vrot.slane %v5502, 6
      %v5800 = vsel %vm767, %v5798, %v5799
      %v5801 = vrot.slane %v5799, 4
      %v5802 = vrot.slane %v5704, 6
      %v5803 = vsel %vm767, %v5801, %v5802
      %v5804 = vrot.slane %v5705, 6
      %v5805 = vrot.slane %v5804, 4
      %v5806 = vrot.slane %v5505, 6
      %v5807 = vsel %vm767, %v5805, %v5806
      %v5808 = vrot.slane %v5806, 4
      %v5809 = vrot.slane %v5706, 6
      %v5810 = vsel %vm767, %v5808, %v5809
      %v5811 = vrot.slane %v5707, 6
      %v5812 = vrot.slane %v5811, 4
      %v5813 = vrot.slane %v5508, 6
      %v5814 = vsel %vm767, %v5812, %v5813
      %v5815 = vrot.slane %v5813, 4
      %v5816 = vrot.slane %v5708, 6
      %v5817 = vsel %vm767, %v5815, %v5816
      %v5818 = vrot.slane %v5709, 6
      %v5819 = vrot.slane %v5818, 4
      %v5820 = vrot.slane %v5511, 6
      %v5821 = vsel %vm767, %v5819, %v5820
      %v5822 = vrot.slane %v5820, 4
      %v5823 = vrot.slane %v5710, 6
      %v5824 = vsel %vm767, %v5822, %v5823
      %v5825 = vrot.slane %v5711, 6
      %v5826 = vrot.slane %v5825, 4
      %v5827 = vrot.slane %v5514, 6
      %v5828 = vsel %vm767, %v5826, %v5827
      %v5829 = vrot.slane %v5827, 4
      %v5830 = vrot.slane %v5712, 6
      %v5831 = vsel %vm767, %v5829, %v5830
      %v5832 = vrot.slane %v5713, 6
      %v5833 = vrot.slane %v5832, 4
      %v5834 = vrot.slane %v5517, 6
      %v5835 = vsel %vm767, %v5833, %v5834
      %v5836 = vrot.slane %v5834, 4
      %v5837 = vrot.slane %v5714, 6
      %v5838 = vsel %vm767, %v5836, %v5837
      %v5839 = vrot.slane %v5715, 6
      %v5840 = vrot.slane %v5839, 4
      %v5841 = vrot.slane %v5520, 6
      %v5842 = vsel %vm767, %v5840, %v5841
      %v5843 = vrot.slane %v5841, 4
      %v5844 = vrot.slane %v5716, 6
      %v5845 = vsel %vm767, %v5843, %v5844
      %v5846 = vrot.slane %v5717, 6
      %v5847 = vrot.slane %v5846, 4
      %v5848 = vrot.slane %v5523, 6
      %v5849 = vsel %vm767, %v5847, %v5848
      %v5850 = vrot.slane %v5848, 4
      %v5851 = vrot.slane %v5718, 6
      %v5852 = vsel %vm767, %v5850, %v5851
      %v5853 = vrot.slane %v5719, 6
      %v5854 = vrot.slane %v5853, 4
      %v5855 = vrot.slane %v5526, 6
      %v5856 = vsel %vm767, %v5854, %v5855
      %v5857 = vrot.slane %v5855, 4
      %v5858 = vrot.slane %v5720, 6
      %v5859 = vsel %vm767, %v5857, %v5858
      %v5860 = vrot.slane %v5721, 6
      %v5861 = vrot.slane %v5860, 4
      %v5862 = vrot.slane %v5529, 6
      %v5863 = vsel %vm767, %v5861, %v5862
      %v5864 = vrot.slane %v5862, 4
      %v5865 = vrot.slane %v5722, 6
      %v5866 = vsel %vm767, %v5864, %v5865
      %v5867 = vld [vmem:[%s5482] sm:$0x8]
      %v5868 = vld [vmem:[%s5482 + $0x8] sm:$0x7]
      %v5869 = vld [vmem:[%s5482 + $0xc] sm:$0x8]
      %v5870 = vld [vmem:[%s5482 + $0x14] sm:$0x7]
      %v5871 = vld [vmem:[%s5482 + $0x18] sm:$0x8]
      %v5872 = vld [vmem:[%s5482 + $0x20] sm:$0x7]
      %v5873 = vld [vmem:[%s5482 + $0x24] sm:$0x8]
      %v5874 = vld [vmem:[%s5482 + $0x2c] sm:$0x7]
      %v5875 = vld [vmem:[%s5482 + $0x30] sm:$0x8]
      %v5876 = vld [vmem:[%s5482 + $0x38] sm:$0x7]
      %v5877 = vld [vmem:[%s5482 + $0x3c] sm:$0x8]
      %v5878 = vld [vmem:[%s5482 + $0x44] sm:$0x7]
      %v5879 = vld [vmem:[%s5482 + $0x48] sm:$0x8]
      %v5880 = vld [vmem:[%s5482 + $0x50] sm:$0x7]
      %v5881 = vld [vmem:[%s5482 + $0x54] sm:$0x8]
      %v5882 = vld [vmem:[%s5482 + $0x5c] sm:$0x7]
      %v5883 = vld [vmem:[%s5482 + $0x60] sm:$0x8]
      %v5884 = vld [vmem:[%s5482 + $0x68] sm:$0x7]
      %v5885 = vld [vmem:[%s5482 + $0x6c] sm:$0x8]
      %v5886 = vld [vmem:[%s5482 + $0x74] sm:$0x7]
      %v5887 = vld [vmem:[%s5482 + $0x78] sm:$0x8]
      %v5888 = vld [vmem:[%s5482 + $0x80] sm:$0x7]
      %v5889 = vld [vmem:[%s5482 + $0x84] sm:$0x8]
      %v5890 = vld [vmem:[%s5482 + $0x8c] sm:$0x7]
      %v5891 = vld [vmem:[%s5482 + $0x90] sm:$0x8]
      %v5892 = vld [vmem:[%s5482 + $0x98] sm:$0x7]
      %v5893 = vld [vmem:[%s5482 + $0x9c] sm:$0x8]
      %v5894 = vld [vmem:[%s5482 + $0xa4] sm:$0x7]
      %v5895 = vld [vmem:[%s5482 + $0xa8] sm:$0x8]
      %v5896 = vld [vmem:[%s5482 + $0xb0] sm:$0x7]
      %v5897 = vld [vmem:[%s5482 + $0xb4] sm:$0x8]
      %v5898 = vld [vmem:[%s5482 + $0xbc] sm:$0x7]
      %v5931 = vrot.slane %v5867, 7
      %v5932 = vrot.slane %v5931, 4
      %v5933 = vrot.slane %v5484, 7
      %v5934 = vsel %vm5046, %v5932, %v5933
      %v5935 = vrot.slane %v5933, 4
      %v5936 = vrot.slane %v5868, 7
      %v5937 = vsel %vm5046, %v5935, %v5936
      %v5938 = vrot.slane %v5869, 7
      %v5939 = vrot.slane %v5938, 4
      %v5940 = vrot.slane %v5487, 7
      %v5941 = vsel %vm5046, %v5939, %v5940
      %v5942 = vrot.slane %v5940, 4
      %v5943 = vrot.slane %v5870, 7
      %v5944 = vsel %vm5046, %v5942, %v5943
      %v5945 = vrot.slane %v5871, 7
      %v5946 = vrot.slane %v5945, 4
      %v5947 = vrot.slane %v5490, 7
      %v5948 = vsel %vm5046, %v5946, %v5947
      %v5949 = vrot.slane %v5947, 4
      %v5950 = vrot.slane %v5872, 7
      %v5951 = vsel %vm5046, %v5949, %v5950
      %v5952 = vrot.slane %v5873, 7
      %v5953 = vrot.slane %v5952, 4
      %v5954 = vrot.slane %v5493, 7
      %v5955 = vsel %vm5046, %v5953, %v5954
      %v5956 = vrot.slane %v5954, 4
      %v5957 = vrot.slane %v5874, 7
      %v5958 = vsel %vm5046, %v5956, %v5957
      %v5959 = vrot.slane %v5875, 7
      %v5960 = vrot.slane %v5959, 4
      %v5961 = vrot.slane %v5496, 7
      %v5962 = vsel %vm5046, %v5960, %v5961
      %v5963 = vrot.slane %v5961, 4
      %v5964 = vrot.slane %v5876, 7
      %v5965 = vsel %vm5046, %v5963, %v5964
      %v5966 = vrot.slane %v5877, 7
      %v5967 = vrot.slane %v5966, 4
      %v5968 = vrot.slane %v5499, 7
      %v5969 = vsel %vm5046, %v5967, %v5968
      %v5970 = vrot.slane %v5968, 4
      %v5971 = vrot.slane %v5878, 7
      %v5972 = vsel %vm5046, %v5970, %v5971
      %v5973 = vrot.slane %v5879, 7
      %v5974 = vrot.slane %v5973, 4
      %v5975 = vrot.slane %v5502, 7
      %v5976 = vsel %vm5046, %v5974, %v5975
      %v5977 = vrot.slane %v5975, 4
      %v5978 = vrot.slane %v5880, 7
      %v5979 = vsel %vm5046, %v5977, %v5978
      %v5980 = vrot.slane %v5881, 7
      %v5981 = vrot.slane %v5980, 4
      %v5982 = vrot.slane %v5505, 7
      %v5983 = vsel %vm5046, %v5981, %v5982
      %v5984 = vrot.slane %v5982, 4
      %v5985 = vrot.slane %v5882, 7
      %v5986 = vsel %vm5046, %v5984, %v5985
      %v5987 = vrot.slane %v5883, 7
      %v5988 = vrot.slane %v5987, 4
      %v5989 = vrot.slane %v5508, 7
      %v5990 = vsel %vm5046, %v5988, %v5989
      %v5991 = vrot.slane %v5989, 4
      %v5992 = vrot.slane %v5884, 7
      %v5993 = vsel %vm5046, %v5991, %v5992
      %v5994 = vrot.slane %v5885, 7
      %v5995 = vrot.slane %v5994, 4
      %v5996 = vrot.slane %v5511, 7
      %v5997 = vsel %vm5046, %v5995, %v5996
      %v5998 = vrot.slane %v5996, 4
      %v5999 = vrot.slane %v5886, 7
      %v6000 = vsel %vm5046, %v5998, %v5999
      %v6001 = vrot.slane %v5887, 7
      %v6002 = vrot.slane %v6001, 4
      %v6003 = vrot.slane %v5514, 7
      %v6004 = vsel %vm5046, %v6002, %v6003
      %v6005 = vrot.slane %v6003, 4
      %v6006 = vrot.slane %v5888, 7
      %v6007 = vsel %vm5046, %v6005, %v6006
      %v6008 = vrot.slane %v5889, 7
      %v6009 = vrot.slane %v6008, 4
      %v6010 = vrot.slane %v5517, 7
      %v6011 = vsel %vm5046, %v6009, %v6010
      %v6012 = vrot.slane %v6010, 4
      %v6013 = vrot.slane %v5890, 7
      %v6014 = vsel %vm5046, %v6012, %v6013
      %v6015 = vrot.slane %v5891, 7
      %v6016 = vrot.slane %v6015, 4
      %v6017 = vrot.slane %v5520, 7
      %v6018 = vsel %vm5046, %v6016, %v6017
      %v6019 = vrot.slane %v6017, 4
      %v6020 = vrot.slane %v5892, 7
      %v6021 = vsel %vm5046, %v6019, %v6020
      %v6022 = vrot.slane %v5893, 7
      %v6023 = vrot.slane %v6022, 4
      %v6024 = vrot.slane %v5523, 7
      %v6025 = vsel %vm5046, %v6023, %v6024
      %v6026 = vrot.slane %v6024, 4
      %v6027 = vrot.slane %v5894, 7
      %v6028 = vsel %vm5046, %v6026, %v6027
      %v6029 = vrot.slane %v5895, 7
      %v6030 = vrot.slane %v6029, 4
      %v6031 = vrot.slane %v5526, 7
      %v6032 = vsel %vm5046, %v6030, %v6031
      %v6033 = vrot.slane %v6031, 4
      %v6034 = vrot.slane %v5896, 7
      %v6035 = vsel %vm5046, %v6033, %v6034
      %v6036 = vrot.slane %v5897, 7
      %v6037 = vrot.slane %v6036, 4
      %v6038 = vrot.slane %v5529, 7
      %v6039 = vsel %vm5046, %v6037, %v6038
      %v6040 = vrot.slane %v6038, 4
      %v6041 = vrot.slane %v5898, 7
      %v6042 = vsel %vm5046, %v6040, %v6041
      %v6043 = vunpack.c.l.b16 %v4695
      %v6044 = vunpack.c.l.b16 %v4698
      %v6045 = vunpack.c.l.b16 %v4702
      %v6046 = vunpack.c.l.b16 %v4705
      %v6047 = vunpack.c.l.b16 %v4709
      %v6048 = vunpack.c.l.b16 %v4712
      %v6049 = vunpack.c.l.b16 %v4716
      %v6050 = vunpack.c.l.b16 %v4719
      %v6051 = vunpack.c.l.b16 %v4723
      %v6052 = vunpack.c.l.b16 %v4726
      %v6053 = vunpack.c.l.b16 %v4730
      %v6054 = vunpack.c.l.b16 %v4733
      %v6055 = vunpack.c.l.b16 %v4737
      %v6056 = vunpack.c.l.b16 %v4740
      %v6057 = vunpack.c.l.b16 %v4744
      %v6058 = vunpack.c.l.b16 %v4747
      %v6059 = vunpack.c.l.b16 %v4751
      %v6060 = vunpack.c.l.b16 %v4754
      %v6061 = vunpack.c.l.b16 %v4758
      %v6062 = vunpack.c.l.b16 %v4761
      %v6063 = vunpack.c.l.b16 %v4765
      %v6064 = vunpack.c.l.b16 %v4768
      %v6065 = vunpack.c.l.b16 %v4772
      %v6066 = vunpack.c.l.b16 %v4775
      %v6067 = vunpack.c.l.b16 %v4779
      %v6068 = vunpack.c.l.b16 %v4782
      %v6069 = vunpack.c.l.b16 %v4786
      %v6070 = vunpack.c.l.b16 %v4789
      %v6071 = vunpack.c.l.b16 %v4793
      %v6072 = vunpack.c.l.b16 %v4796
      %v6073 = vunpack.c.l.b16 %v4800
      %v6074 = vunpack.c.l.b16 %v4803
      %v6075 = vpack.c.b16 %v6044, %v6043
      %v6076 = vpack.c.b16 %v6046, %v6045
      %v6077 = vpack.c.b16 %v6048, %v6047
      %v6078 = vpack.c.b16 %v6050, %v6049
      %v6079 = vpack.c.b16 %v6052, %v6051
      %v6080 = vpack.c.b16 %v6054, %v6053
      %v6081 = vpack.c.b16 %v6056, %v6055
      %v6082 = vpack.c.b16 %v6058, %v6057
      %v6083 = vpack.c.b16 %v6060, %v6059
      %v6084 = vpack.c.b16 %v6062, %v6061
      %v6085 = vpack.c.b16 %v6064, %v6063
      %v6086 = vpack.c.b16 %v6066, %v6065
      %v6087 = vpack.c.b16 %v6068, %v6067
      %v6088 = vpack.c.b16 %v6070, %v6069
      %v6089 = vpack.c.b16 %v6072, %v6071
      %v6090 = vpack.c.b16 %v6074, %v6073
      %v6091 = vunpack.c.l.b16 %v4871
      %v6092 = vunpack.c.l.b16 %v4874
      %v6093 = vunpack.c.l.b16 %v4878
      %v6094 = vunpack.c.l.b16 %v4881
      %v6095 = vunpack.c.l.b16 %v4885
      %v6096 = vunpack.c.l.b16 %v4888
      %v6097 = vunpack.c.l.b16 %v4892
      %v6098 = vunpack.c.l.b16 %v4895
      %v6099 = vunpack.c.l.b16 %v4899
      %v6100 = vunpack.c.l.b16 %v4902
      %v6101 = vunpack.c.l.b16 %v4906
      %v6102 = vunpack.c.l.b16 %v4909
      %v6103 = vunpack.c.l.b16 %v4913
      %v6104 = vunpack.c.l.b16 %v4916
      %v6105 = vunpack.c.l.b16 %v4920
      %v6106 = vunpack.c.l.b16 %v4923
      %v6107 = vunpack.c.l.b16 %v4927
      %v6108 = vunpack.c.l.b16 %v4930
      %v6109 = vunpack.c.l.b16 %v4934
      %v6110 = vunpack.c.l.b16 %v4937
      %v6111 = vunpack.c.l.b16 %v4941
      %v6112 = vunpack.c.l.b16 %v4944
      %v6113 = vunpack.c.l.b16 %v4948
      %v6114 = vunpack.c.l.b16 %v4951
      %v6115 = vunpack.c.l.b16 %v4955
      %v6116 = vunpack.c.l.b16 %v4958
      %v6117 = vunpack.c.l.b16 %v4962
      %v6118 = vunpack.c.l.b16 %v4965
      %v6119 = vunpack.c.l.b16 %v4969
      %v6120 = vunpack.c.l.b16 %v4972
      %v6121 = vunpack.c.l.b16 %v4976
      %v6122 = vunpack.c.l.b16 %v4979
      %v6123 = vpack.c.b16 %v6092, %v6091
      %v6124 = vpack.c.b16 %v6094, %v6093
      %v6125 = vpack.c.b16 %v6096, %v6095
      %v6126 = vpack.c.b16 %v6098, %v6097
      %v6127 = vpack.c.b16 %v6100, %v6099
      %v6128 = vpack.c.b16 %v6102, %v6101
      %v6129 = vpack.c.b16 %v6104, %v6103
      %v6130 = vpack.c.b16 %v6106, %v6105
      %v6131 = vpack.c.b16 %v6108, %v6107
      %v6132 = vpack.c.b16 %v6110, %v6109
      %v6133 = vpack.c.b16 %v6112, %v6111
      %v6134 = vpack.c.b16 %v6114, %v6113
      %v6135 = vpack.c.b16 %v6116, %v6115
      %v6136 = vpack.c.b16 %v6118, %v6117
      %v6137 = vpack.c.b16 %v6120, %v6119
      %v6138 = vpack.c.b16 %v6122, %v6121
      %6139 = vrot.lane.b32.xlu0 %v6123, 8
      %v6140 = vpop.permute.xlu0 %6139
      %6141 = vrot.lane.b32.xlu0 %v6124, 8
      %v6142 = vpop.permute.xlu0 %6141
      %6143 = vrot.lane.b32.xlu0 %v6125, 8
      %v6144 = vpop.permute.xlu0 %6143
      %6145 = vrot.lane.b32.xlu0 %v6126, 8
      %v6146 = vpop.permute.xlu0 %6145
      %6147 = vrot.lane.b32.xlu0 %v6127, 8
      %v6148 = vpop.permute.xlu0 %6147
      %6149 = vrot.lane.b32.xlu0 %v6128, 8
      %v6150 = vpop.permute.xlu0 %6149
      %6151 = vrot.lane.b32.xlu0 %v6129, 8
      %v6152 = vpop.permute.xlu0 %6151
      %6153 = vrot.lane.b32.xlu0 %v6130, 8
      %v6154 = vpop.permute.xlu0 %6153
      %6155 = vrot.lane.b32.xlu0 %v6131, 8
      %v6156 = vpop.permute.xlu0 %6155
      %6157 = vrot.lane.b32.xlu0 %v6132, 8
      %v6158 = vpop.permute.xlu0 %6157
      %6159 = vrot.lane.b32.xlu0 %v6133, 8
      %v6160 = vpop.permute.xlu0 %6159
      %6161 = vrot.lane.b32.xlu0 %v6134, 8
      %v6162 = vpop.permute.xlu0 %6161
      %6163 = vrot.lane.b32.xlu0 %v6135, 8
      %v6164 = vpop.permute.xlu0 %6163
      %6165 = vrot.lane.b32.xlu0 %v6136, 8
      %v6166 = vpop.permute.xlu0 %6165
      %6167 = vrot.lane.b32.xlu0 %v6137, 8
      %v6168 = vpop.permute.xlu0 %6167
      %6169 = vrot.lane.b32.xlu0 %v6138, 8
      %v6170 = vpop.permute.xlu0 %6169
      %v6171 = vunpack.c.l.b16 %v5050
      %v6172 = vunpack.c.l.b16 %v5053
      %v6173 = vunpack.c.l.b16 %v5057
      %v6174 = vunpack.c.l.b16 %v5060
      %v6175 = vunpack.c.l.b16 %v5064
      %v6176 = vunpack.c.l.b16 %v5067
      %v6177 = vunpack.c.l.b16 %v5071
      %v6178 = vunpack.c.l.b16 %v5074
      %v6179 = vunpack.c.l.b16 %v5078
      %v6180 = vunpack.c.l.b16 %v5081
      %v6181 = vunpack.c.l.b16 %v5085
      %v6182 = vunpack.c.l.b16 %v5088
      %v6183 = vunpack.c.l.b16 %v5092
      %v6184 = vunpack.c.l.b16 %v5095
      %v6185 = vunpack.c.l.b16 %v5099
      %v6186 = vunpack.c.l.b16 %v5102
      %v6187 = vunpack.c.l.b16 %v5106
      %v6188 = vunpack.c.l.b16 %v5109
      %v6189 = vunpack.c.l.b16 %v5113
      %v6190 = vunpack.c.l.b16 %v5116
      %v6191 = vunpack.c.l.b16 %v5120
      %v6192 = vunpack.c.l.b16 %v5123
      %v6193 = vunpack.c.l.b16 %v5127
      %v6194 = vunpack.c.l.b16 %v5130
      %v6195 = vunpack.c.l.b16 %v5134
      %v6196 = vunpack.c.l.b16 %v5137
      %v6197 = vunpack.c.l.b16 %v5141
      %v6198 = vunpack.c.l.b16 %v5144
      %v6199 = vunpack.c.l.b16 %v5148
      %v6200 = vunpack.c.l.b16 %v5151
      %v6201 = vunpack.c.l.b16 %v5155
      %v6202 = vunpack.c.l.b16 %v5158
      %v6203 = vpack.c.b16 %v6172, %v6171
      %v6204 = vpack.c.b16 %v6174, %v6173
      %v6205 = vpack.c.b16 %v6176, %v6175
      %v6206 = vpack.c.b16 %v6178, %v6177
      %v6207 = vpack.c.b16 %v6180, %v6179
      %v6208 = vpack.c.b16 %v6182, %v6181
      %v6209 = vpack.c.b16 %v6184, %v6183
      %v6210 = vpack.c.b16 %v6186, %v6185
      %v6211 = vpack.c.b16 %v6188, %v6187
      %v6212 = vpack.c.b16 %v6190, %v6189
      %v6213 = vpack.c.b16 %v6192, %v6191
      %v6214 = vpack.c.b16 %v6194, %v6193
      %v6215 = vpack.c.b16 %v6196, %v6195
      %v6216 = vpack.c.b16 %v6198, %v6197
      %v6217 = vpack.c.b16 %v6200, %v6199
      %v6218 = vpack.c.b16 %v6202, %v6201
      %6219 = vrot.lane.b32.xlu0 %v6203, 16
      %v6220 = vpop.permute.xlu0 %6219
      %6221 = vrot.lane.b32.xlu0 %v6204, 16
      %v6222 = vpop.permute.xlu0 %6221
      %6223 = vrot.lane.b32.xlu0 %v6205, 16
      %v6224 = vpop.permute.xlu0 %6223
      %6225 = vrot.lane.b32.xlu0 %v6206, 16
      %v6226 = vpop.permute.xlu0 %6225
      %6227 = vrot.lane.b32.xlu0 %v6207, 16
      %v6228 = vpop.permute.xlu0 %6227
      %6229 = vrot.lane.b32.xlu0 %v6208, 16
      %v6230 = vpop.permute.xlu0 %6229
      %6231 = vrot.lane.b32.xlu0 %v6209, 16
      %v6232 = vpop.permute.xlu0 %6231
      %6233 = vrot.lane.b32.xlu0 %v6210, 16
      %v6234 = vpop.permute.xlu0 %6233
      %6235 = vrot.lane.b32.xlu0 %v6211, 16
      %v6236 = vpop.permute.xlu0 %6235
      %6237 = vrot.lane.b32.xlu0 %v6212, 16
      %v6238 = vpop.permute.xlu0 %6237
      %6239 = vrot.lane.b32.xlu0 %v6213, 16
      %v6240 = vpop.permute.xlu0 %6239
      %6241 = vrot.lane.b32.xlu0 %v6214, 16
      %v6242 = vpop.permute.xlu0 %6241
      %6243 = vrot.lane.b32.xlu0 %v6215, 16
      %v6244 = vpop.permute.xlu0 %6243
      %6245 = vrot.lane.b32.xlu0 %v6216, 16
      %v6246 = vpop.permute.xlu0 %6245
      %6247 = vrot.lane.b32.xlu0 %v6217, 16
      %v6248 = vpop.permute.xlu0 %6247
      %6249 = vrot.lane.b32.xlu0 %v6218, 16
      %v6250 = vpop.permute.xlu0 %6249
      %v6251 = vunpack.c.l.b16 %v5210
      %v6252 = vunpack.c.l.b16 %v5213
      %v6253 = vunpack.c.l.b16 %v5217
      %v6254 = vunpack.c.l.b16 %v5220
      %v6255 = vunpack.c.l.b16 %v5224
      %v6256 = vunpack.c.l.b16 %v5227
      %v6257 = vunpack.c.l.b16 %v5231
      %v6258 = vunpack.c.l.b16 %v5234
      %v6259 = vunpack.c.l.b16 %v5238
      %v6260 = vunpack.c.l.b16 %v5241
      %v6261 = vunpack.c.l.b16 %v5245
      %v6262 = vunpack.c.l.b16 %v5248
      %v6263 = vunpack.c.l.b16 %v5252
      %v6264 = vunpack.c.l.b16 %v5255
      %v6265 = vunpack.c.l.b16 %v5259
      %v6266 = vunpack.c.l.b16 %v5262
      %v6267 = vunpack.c.l.b16 %v5266
      %v6268 = vunpack.c.l.b16 %v5269
      %v6269 = vunpack.c.l.b16 %v5273
      %v6270 = vunpack.c.l.b16 %v5276
      %v6271 = vunpack.c.l.b16 %v5280
      %v6272 = vunpack.c.l.b16 %v5283
      %v6273 = vunpack.c.l.b16 %v5287
      %v6274 = vunpack.c.l.b16 %v5290
      %v6275 = vunpack.c.l.b16 %v5294
      %v6276 = vunpack.c.l.b16 %v5297
      %v6277 = vunpack.c.l.b16 %v5301
      %v6278 = vunpack.c.l.b16 %v5304
      %v6279 = vunpack.c.l.b16 %v5308
      %v6280 = vunpack.c.l.b16 %v5311
      %v6281 = vunpack.c.l.b16 %v5315
      %v6282 = vunpack.c.l.b16 %v5318
      %v6283 = vpack.c.b16 %v6252, %v6251
      %v6284 = vpack.c.b16 %v6254, %v6253
      %v6285 = vpack.c.b16 %v6256, %v6255
      %v6286 = vpack.c.b16 %v6258, %v6257
      %v6287 = vpack.c.b16 %v6260, %v6259
      %v6288 = vpack.c.b16 %v6262, %v6261
      %v6289 = vpack.c.b16 %v6264, %v6263
      %v6290 = vpack.c.b16 %v6266, %v6265
      %v6291 = vpack.c.b16 %v6268, %v6267
      %v6292 = vpack.c.b16 %v6270, %v6269
      %v6293 = vpack.c.b16 %v6272, %v6271
      %v6294 = vpack.c.b16 %v6274, %v6273
      %v6295 = vpack.c.b16 %v6276, %v6275
      %v6296 = vpack.c.b16 %v6278, %v6277
      %v6297 = vpack.c.b16 %v6280, %v6279
      %v6298 = vpack.c.b16 %v6282, %v6281
      %6299 = vrot.lane.b32.xlu0 %v6283, 24
      %v6300 = vpop.permute.xlu0 %6299
      %6301 = vrot.lane.b32.xlu0 %v6284, 24
      %v6302 = vpop.permute.xlu0 %6301
      %6303 = vrot.lane.b32.xlu0 %v6285, 24
      %v6304 = vpop.permute.xlu0 %6303
      %6305 = vrot.lane.b32.xlu0 %v6286, 24
      %v6306 = vpop.permute.xlu0 %6305
      %6307 = vrot.lane.b32.xlu0 %v6287, 24
      %v6308 = vpop.permute.xlu0 %6307
      %6309 = vrot.lane.b32.xlu0 %v6288, 24
      %v6310 = vpop.permute.xlu0 %6309
      %6311 = vrot.lane.b32.xlu0 %v6289, 24
      %v6312 = vpop.permute.xlu0 %6311
      %6313 = vrot.lane.b32.xlu0 %v6290, 24
      %v6314 = vpop.permute.xlu0 %6313
      %6315 = vrot.lane.b32.xlu0 %v6291, 24
      %v6316 = vpop.permute.xlu0 %6315
      %6317 = vrot.lane.b32.xlu0 %v6292, 24
      %v6318 = vpop.permute.xlu0 %6317
      %6319 = vrot.lane.b32.xlu0 %v6293, 24
      %v6320 = vpop.permute.xlu0 %6319
      %6321 = vrot.lane.b32.xlu0 %v6294, 24
      %v6322 = vpop.permute.xlu0 %6321
      %6323 = vrot.lane.b32.xlu0 %v6295, 24
      %v6324 = vpop.permute.xlu0 %6323
      %6325 = vrot.lane.b32.xlu0 %v6296, 24
      %v6326 = vpop.permute.xlu0 %6325
      %6327 = vrot.lane.b32.xlu0 %v6297, 24
      %v6328 = vpop.permute.xlu0 %6327
      %6329 = vrot.lane.b32.xlu0 %v6298, 24
      %v6330 = vpop.permute.xlu0 %6329
      %v6331 = vunpack.c.l.b16 %v5370
      %v6332 = vunpack.c.l.b16 %v5373
      %v6333 = vunpack.c.l.b16 %v5377
      %v6334 = vunpack.c.l.b16 %v5380
      %v6335 = vunpack.c.l.b16 %v5384
      %v6336 = vunpack.c.l.b16 %v5387
      %v6337 = vunpack.c.l.b16 %v5391
      %v6338 = vunpack.c.l.b16 %v5394
      %v6339 = vunpack.c.l.b16 %v5398
      %v6340 = vunpack.c.l.b16 %v5401
      %v6341 = vunpack.c.l.b16 %v5405
      %v6342 = vunpack.c.l.b16 %v5408
      %v6343 = vunpack.c.l.b16 %v5412
      %v6344 = vunpack.c.l.b16 %v5415
      %v6345 = vunpack.c.l.b16 %v5419
      %v6346 = vunpack.c.l.b16 %v5422
      %v6347 = vunpack.c.l.b16 %v5426
      %v6348 = vunpack.c.l.b16 %v5429
      %v6349 = vunpack.c.l.b16 %v5433
      %v6350 = vunpack.c.l.b16 %v5436
      %v6351 = vunpack.c.l.b16 %v5440
      %v6352 = vunpack.c.l.b16 %v5443
      %v6353 = vunpack.c.l.b16 %v5447
      %v6354 = vunpack.c.l.b16 %v5450
      %v6355 = vunpack.c.l.b16 %v5454
      %v6356 = vunpack.c.l.b16 %v5457
      %v6357 = vunpack.c.l.b16 %v5461
      %v6358 = vunpack.c.l.b16 %v5464
      %v6359 = vunpack.c.l.b16 %v5468
      %v6360 = vunpack.c.l.b16 %v5471
      %v6361 = vunpack.c.l.b16 %v5475
      %v6362 = vunpack.c.l.b16 %v5478
      %v6363 = vpack.c.b16 %v6332, %v6331
      %v6364 = vpack.c.b16 %v6334, %v6333
      %v6365 = vpack.c.b16 %v6336, %v6335
      %v6366 = vpack.c.b16 %v6338, %v6337
      %v6367 = vpack.c.b16 %v6340, %v6339
      %v6368 = vpack.c.b16 %v6342, %v6341
      %v6369 = vpack.c.b16 %v6344, %v6343
      %v6370 = vpack.c.b16 %v6346, %v6345
      %v6371 = vpack.c.b16 %v6348, %v6347
      %v6372 = vpack.c.b16 %v6350, %v6349
      %v6373 = vpack.c.b16 %v6352, %v6351
      %v6374 = vpack.c.b16 %v6354, %v6353
      %v6375 = vpack.c.b16 %v6356, %v6355
      %v6376 = vpack.c.b16 %v6358, %v6357
      %v6377 = vpack.c.b16 %v6360, %v6359
      %v6378 = vpack.c.b16 %v6362, %v6361
      %6379 = vrot.lane.b32.xlu0 %v6363, 40
      %v6380 = vpop.permute.xlu0 %6379
      %6381 = vrot.lane.b32.xlu0 %v6364, 40
      %v6382 = vpop.permute.xlu0 %6381
      %6383 = vrot.lane.b32.xlu0 %v6365, 40
      %v6384 = vpop.permute.xlu0 %6383
      %6385 = vrot.lane.b32.xlu0 %v6366, 40
      %v6386 = vpop.permute.xlu0 %6385
      %6387 = vrot.lane.b32.xlu0 %v6367, 40
      %v6388 = vpop.permute.xlu0 %6387
      %6389 = vrot.lane.b32.xlu0 %v6368, 40
      %v6390 = vpop.permute.xlu0 %6389
      %6391 = vrot.lane.b32.xlu0 %v6369, 40
      %v6392 = vpop.permute.xlu0 %6391
      %6393 = vrot.lane.b32.xlu0 %v6370, 40
      %v6394 = vpop.permute.xlu0 %6393
      %6395 = vrot.lane.b32.xlu0 %v6371, 40
      %v6396 = vpop.permute.xlu0 %6395
      %6397 = vrot.lane.b32.xlu0 %v6372, 40
      %v6398 = vpop.permute.xlu0 %6397
      %6399 = vrot.lane.b32.xlu0 %v6373, 40
      %v6400 = vpop.permute.xlu0 %6399
      %6401 = vrot.lane.b32.xlu0 %v6374, 40
      %v6402 = vpop.permute.xlu0 %6401
      %6403 = vrot.lane.b32.xlu0 %v6375, 40
      %v6404 = vpop.permute.xlu0 %6403
      %6405 = vrot.lane.b32.xlu0 %v6376, 40
      %v6406 = vpop.permute.xlu0 %6405
      %6407 = vrot.lane.b32.xlu0 %v6377, 40
      %v6408 = vpop.permute.xlu0 %6407
      %6409 = vrot.lane.b32.xlu0 %v6378, 40
      %v6410 = vpop.permute.xlu0 %6409
      %v6411 = vunpack.c.l.b16 %v5582
      %v6412 = vunpack.c.l.b16 %v5585
      %v6413 = vunpack.c.l.b16 %v5589
      %v6414 = vunpack.c.l.b16 %v5592
      %v6415 = vunpack.c.l.b16 %v5596
      %v6416 = vunpack.c.l.b16 %v5599
      %v6417 = vunpack.c.l.b16 %v5603
      %v6418 = vunpack.c.l.b16 %v5606
      %v6419 = vunpack.c.l.b16 %v5610
      %v6420 = vunpack.c.l.b16 %v5613
      %v6421 = vunpack.c.l.b16 %v5617
      %v6422 = vunpack.c.l.b16 %v5620
      %v6423 = vunpack.c.l.b16 %v5624
      %v6424 = vunpack.c.l.b16 %v5627
      %v6425 = vunpack.c.l.b16 %v5631
      %v6426 = vunpack.c.l.b16 %v5634
      %v6427 = vunpack.c.l.b16 %v5638
      %v6428 = vunpack.c.l.b16 %v5641
      %v6429 = vunpack.c.l.b16 %v5645
      %v6430 = vunpack.c.l.b16 %v5648
      %v6431 = vunpack.c.l.b16 %v5652
      %v6432 = vunpack.c.l.b16 %v5655
      %v6433 = vunpack.c.l.b16 %v5659
      %v6434 = vunpack.c.l.b16 %v5662
      %v6435 = vunpack.c.l.b16 %v5666
      %v6436 = vunpack.c.l.b16 %v5669
      %v6437 = vunpack.c.l.b16 %v5673
      %v6438 = vunpack.c.l.b16 %v5676
      %v6439 = vunpack.c.l.b16 %v5680
      %v6440 = vunpack.c.l.b16 %v5683
      %v6441 = vunpack.c.l.b16 %v5687
      %v6442 = vunpack.c.l.b16 %v5690
      %v6443 = vpack.c.b16 %v6412, %v6411
      %v6444 = vpack.c.b16 %v6414, %v6413
      %v6445 = vpack.c.b16 %v6416, %v6415
      %v6446 = vpack.c.b16 %v6418, %v6417
      %v6447 = vpack.c.b16 %v6420, %v6419
      %v6448 = vpack.c.b16 %v6422, %v6421
      %v6449 = vpack.c.b16 %v6424, %v6423
      %v6450 = vpack.c.b16 %v6426, %v6425
      %v6451 = vpack.c.b16 %v6428, %v6427
      %v6452 = vpack.c.b16 %v6430, %v6429
      %v6453 = vpack.c.b16 %v6432, %v6431
      %v6454 = vpack.c.b16 %v6434, %v6433
      %v6455 = vpack.c.b16 %v6436, %v6435
      %v6456 = vpack.c.b16 %v6438, %v6437
      %v6457 = vpack.c.b16 %v6440, %v6439
      %v6458 = vpack.c.b16 %v6442, %v6441
      %6459 = vrot.lane.b32.xlu0 %v6443, 48
      %v6460 = vpop.permute.xlu0 %6459
      %6461 = vrot.lane.b32.xlu0 %v6444, 48
      %v6462 = vpop.permute.xlu0 %6461
      %6463 = vrot.lane.b32.xlu0 %v6445, 48
      %v6464 = vpop.permute.xlu0 %6463
      %6465 = vrot.lane.b32.xlu0 %v6446, 48
      %v6466 = vpop.permute.xlu0 %6465
      %6467 = vrot.lane.b32.xlu0 %v6447, 48
      %v6468 = vpop.permute.xlu0 %6467
      %6469 = vrot.lane.b32.xlu0 %v6448, 48
      %v6470 = vpop.permute.xlu0 %6469
      %6471 = vrot.lane.b32.xlu0 %v6449, 48
      %v6472 = vpop.permute.xlu0 %6471
      %6473 = vrot.lane.b32.xlu0 %v6450, 48
      %v6474 = vpop.permute.xlu0 %6473
      %6475 = vrot.lane.b32.xlu0 %v6451, 48
      %v6476 = vpop.permute.xlu0 %6475
      %6477 = vrot.lane.b32.xlu0 %v6452, 48
      %v6478 = vpop.permute.xlu0 %6477
      %6479 = vrot.lane.b32.xlu0 %v6453, 48
      %v6480 = vpop.permute.xlu0 %6479
      %6481 = vrot.lane.b32.xlu0 %v6454, 48
      %v6482 = vpop.permute.xlu0 %6481
      %6483 = vrot.lane.b32.xlu0 %v6455, 48
      %v6484 = vpop.permute.xlu0 %6483
      %6485 = vrot.lane.b32.xlu0 %v6456, 48
      %v6486 = vpop.permute.xlu0 %6485
      %6487 = vrot.lane.b32.xlu0 %v6457, 48
      %v6488 = vpop.permute.xlu0 %6487
      %6489 = vrot.lane.b32.xlu0 %v6458, 48
      %v6490 = vpop.permute.xlu0 %6489
      %v6491 = vunpack.c.l.b16 %v5758
      %v6492 = vunpack.c.l.b16 %v5761
      %v6493 = vunpack.c.l.b16 %v5765
      %v6494 = vunpack.c.l.b16 %v5768
      %v6495 = vunpack.c.l.b16 %v5772
      %v6496 = vunpack.c.l.b16 %v5775
      %v6497 = vunpack.c.l.b16 %v5779
      %v6498 = vunpack.c.l.b16 %v5782
      %v6499 = vunpack.c.l.b16 %v5786
      %v6500 = vunpack.c.l.b16 %v5789
      %v6501 = vunpack.c.l.b16 %v5793
      %v6502 = vunpack.c.l.b16 %v5796
      %v6503 = vunpack.c.l.b16 %v5800
      %v6504 = vunpack.c.l.b16 %v5803
      %v6505 = vunpack.c.l.b16 %v5807
      %v6506 = vunpack.c.l.b16 %v5810
      %v6507 = vunpack.c.l.b16 %v5814
      %v6508 = vunpack.c.l.b16 %v5817
      %v6509 = vunpack.c.l.b16 %v5821
      %v6510 = vunpack.c.l.b16 %v5824
      %v6511 = vunpack.c.l.b16 %v5828
      %v6512 = vunpack.c.l.b16 %v5831
      %v6513 = vunpack.c.l.b16 %v5835
      %v6514 = vunpack.c.l.b16 %v5838
      %v6515 = vunpack.c.l.b16 %v5842
      %v6516 = vunpack.c.l.b16 %v5845
      %v6517 = vunpack.c.l.b16 %v5849
      %v6518 = vunpack.c.l.b16 %v5852
      %v6519 = vunpack.c.l.b16 %v5856
      %v6520 = vunpack.c.l.b16 %v5859
      %v6521 = vunpack.c.l.b16 %v5863
      %v6522 = vunpack.c.l.b16 %v5866
      %v6523 = vpack.c.b16 %v6492, %v6491
      %v6524 = vpack.c.b16 %v6494, %v6493
      %v6525 = vpack.c.b16 %v6496, %v6495
      %v6526 = vpack.c.b16 %v6498, %v6497
      %v6527 = vpack.c.b16 %v6500, %v6499
      %v6528 = vpack.c.b16 %v6502, %v6501
      %v6529 = vpack.c.b16 %v6504, %v6503
      %v6530 = vpack.c.b16 %v6506, %v6505
      %v6531 = vpack.c.b16 %v6508, %v6507
      %v6532 = vpack.c.b16 %v6510, %v6509
      %v6533 = vpack.c.b16 %v6512, %v6511
      %v6534 = vpack.c.b16 %v6514, %v6513
      %v6535 = vpack.c.b16 %v6516, %v6515
      %v6536 = vpack.c.b16 %v6518, %v6517
      %v6537 = vpack.c.b16 %v6520, %v6519
      %v6538 = vpack.c.b16 %v6522, %v6521
      %6539 = vrot.lane.b32.xlu0 %v6523, 56
      %v6540 = vpop.permute.xlu0 %6539
      %6541 = vrot.lane.b32.xlu0 %v6524, 56
      %v6542 = vpop.permute.xlu0 %6541
      %6543 = vrot.lane.b32.xlu0 %v6525, 56
      %v6544 = vpop.permute.xlu0 %6543
      %6545 = vrot.lane.b32.xlu0 %v6526, 56
      %v6546 = vpop.permute.xlu0 %6545
      %6547 = vrot.lane.b32.xlu0 %v6527, 56
      %v6548 = vpop.permute.xlu0 %6547
      %6549 = vrot.lane.b32.xlu0 %v6528, 56
      %v6550 = vpop.permute.xlu0 %6549
      %6551 = vrot.lane.b32.xlu0 %v6529, 56
      %v6552 = vpop.permute.xlu0 %6551
      %6553 = vrot.lane.b32.xlu0 %v6530, 56
      %v6554 = vpop.permute.xlu0 %6553
      %6555 = vrot.lane.b32.xlu0 %v6531, 56
      %v6556 = vpop.permute.xlu0 %6555
      %6557 = vrot.lane.b32.xlu0 %v6532, 56
      %v6558 = vpop.permute.xlu0 %6557
      %6559 = vrot.lane.b32.xlu0 %v6533, 56
      %v6560 = vpop.permute.xlu0 %6559
      %6561 = vrot.lane.b32.xlu0 %v6534, 56
      %v6562 = vpop.permute.xlu0 %6561
      %6563 = vrot.lane.b32.xlu0 %v6535, 56
      %v6564 = vpop.permute.xlu0 %6563
      %6565 = vrot.lane.b32.xlu0 %v6536, 56
      %v6566 = vpop.permute.xlu0 %6565
      %6567 = vrot.lane.b32.xlu0 %v6537, 56
      %v6568 = vpop.permute.xlu0 %6567
      %6569 = vrot.lane.b32.xlu0 %v6538, 56
      %v6570 = vpop.permute.xlu0 %6569
      %v6571 = vunpack.c.l.b16 %v5934
      %v6572 = vunpack.c.l.b16 %v5937
      %v6573 = vunpack.c.l.b16 %v5941
      %v6574 = vunpack.c.l.b16 %v5944
      %v6575 = vunpack.c.l.b16 %v5948
      %v6576 = vunpack.c.l.b16 %v5951
      %v6577 = vunpack.c.l.b16 %v5955
      %v6578 = vunpack.c.l.b16 %v5958
      %v6579 = vunpack.c.l.b16 %v5962
      %v6580 = vunpack.c.l.b16 %v5965
      %v6581 = vunpack.c.l.b16 %v5969
      %v6582 = vunpack.c.l.b16 %v5972
      %v6583 = vunpack.c.l.b16 %v5976
      %v6584 = vunpack.c.l.b16 %v5979
      %v6585 = vunpack.c.l.b16 %v5983
      %v6586 = vunpack.c.l.b16 %v5986
      %v6587 = vunpack.c.l.b16 %v5990
      %v6588 = vunpack.c.l.b16 %v5993
      %v6589 = vunpack.c.l.b16 %v5997
      %v6590 = vunpack.c.l.b16 %v6000
      %v6591 = vunpack.c.l.b16 %v6004
      %v6592 = vunpack.c.l.b16 %v6007
      %v6593 = vunpack.c.l.b16 %v6011
      %v6594 = vunpack.c.l.b16 %v6014
      %v6595 = vunpack.c.l.b16 %v6018
      %v6596 = vunpack.c.l.b16 %v6021
      %v6597 = vunpack.c.l.b16 %v6025
      %v6598 = vunpack.c.l.b16 %v6028
      %v6599 = vunpack.c.l.b16 %v6032
      %v6600 = vunpack.c.l.b16 %v6035
      %v6601 = vunpack.c.l.b16 %v6039
      %v6602 = vunpack.c.l.b16 %v6042
      %v6603 = vpack.c.b16 %v6572, %v6571
      %v6604 = vpack.c.b16 %v6574, %v6573
      %v6605 = vpack.c.b16 %v6576, %v6575
      %v6606 = vpack.c.b16 %v6578, %v6577
      %v6607 = vpack.c.b16 %v6580, %v6579
      %v6608 = vpack.c.b16 %v6582, %v6581
      %v6609 = vpack.c.b16 %v6584, %v6583
      %v6610 = vpack.c.b16 %v6586, %v6585
      %v6611 = vpack.c.b16 %v6588, %v6587
      %v6612 = vpack.c.b16 %v6590, %v6589
      %v6613 = vpack.c.b16 %v6592, %v6591
      %v6614 = vpack.c.b16 %v6594, %v6593
      %v6615 = vpack.c.b16 %v6596, %v6595
      %v6616 = vpack.c.b16 %v6598, %v6597
      %v6617 = vpack.c.b16 %v6600, %v6599
      %v6618 = vpack.c.b16 %v6602, %v6601
      %6619 = vrot.lane.b32.xlu0 %v6603, 64
      %v6620 = vpop.permute.xlu0 %6619
      %6621 = vrot.lane.b32.xlu0 %v6604, 64
      %v6622 = vpop.permute.xlu0 %6621
      %6623 = vrot.lane.b32.xlu0 %v6605, 64
      %v6624 = vpop.permute.xlu0 %6623
      %6625 = vrot.lane.b32.xlu0 %v6606, 64
      %v6626 = vpop.permute.xlu0 %6625
      %6627 = vrot.lane.b32.xlu0 %v6607, 64
      %v6628 = vpop.permute.xlu0 %6627
      %6629 = vrot.lane.b32.xlu0 %v6608, 64
      %v6630 = vpop.permute.xlu0 %6629
      %6631 = vrot.lane.b32.xlu0 %v6609, 64
      %v6632 = vpop.permute.xlu0 %6631
      %6633 = vrot.lane.b32.xlu0 %v6610, 64
      %v6634 = vpop.permute.xlu0 %6633
      %6635 = vrot.lane.b32.xlu0 %v6611, 64
      %v6636 = vpop.permute.xlu0 %6635
      %6637 = vrot.lane.b32.xlu0 %v6612, 64
      %v6638 = vpop.permute.xlu0 %6637
      %6639 = vrot.lane.b32.xlu0 %v6613, 64
      %v6640 = vpop.permute.xlu0 %6639
      %6641 = vrot.lane.b32.xlu0 %v6614, 64
      %v6642 = vpop.permute.xlu0 %6641
      %6643 = vrot.lane.b32.xlu0 %v6615, 64
      %v6644 = vpop.permute.xlu0 %6643
      %6645 = vrot.lane.b32.xlu0 %v6616, 64
      %v6646 = vpop.permute.xlu0 %6645
      %6647 = vrot.lane.b32.xlu0 %v6617, 64
      %v6648 = vpop.permute.xlu0 %6647
      %6649 = vrot.lane.b32.xlu0 %v6618, 64
      %v6650 = vpop.permute.xlu0 %6649
      %v6653 = vsel %vm4075, %v6075, %v6140
      %v6656 = vsel %vm4075, %v6076, %v6142
      %v6659 = vsel %vm4075, %v6077, %v6144
      %v6662 = vsel %vm4075, %v6078, %v6146
      %v6665 = vsel %vm4075, %v6079, %v6148
      %v6668 = vsel %vm4075, %v6080, %v6150
      %v6671 = vsel %vm4075, %v6081, %v6152
      %v6674 = vsel %vm4075, %v6082, %v6154
      %v6677 = vsel %vm4075, %v6083, %v6156
      %v6680 = vsel %vm4075, %v6084, %v6158
      %v6683 = vsel %vm4075, %v6085, %v6160
      %v6686 = vsel %vm4075, %v6086, %v6162
      %v6689 = vsel %vm4075, %v6087, %v6164
      %v6692 = vsel %vm4075, %v6088, %v6166
      %v6695 = vsel %vm4075, %v6089, %v6168
      %v6698 = vsel %vm4075, %v6090, %v6170
      %v6700 = vsel %vm4124, %v6653, %v6220
      %v6702 = vsel %vm4124, %v6656, %v6222
      %v6704 = vsel %vm4124, %v6659, %v6224
      %v6706 = vsel %vm4124, %v6662, %v6226
      %v6708 = vsel %vm4124, %v6665, %v6228
      %v6710 = vsel %vm4124, %v6668, %v6230
      %v6712 = vsel %vm4124, %v6671, %v6232
      %v6714 = vsel %vm4124, %v6674, %v6234
      %v6716 = vsel %vm4124, %v6677, %v6236
      %v6718 = vsel %vm4124, %v6680, %v6238
      %v6720 = vsel %vm4124, %v6683, %v6240
      %v6722 = vsel %vm4124, %v6686, %v6242
      %v6724 = vsel %vm4124, %v6689, %v6244
      %v6726 = vsel %vm4124, %v6692, %v6246
      %v6728 = vsel %vm4124, %v6695, %v6248
      %v6730 = vsel %vm4124, %v6698, %v6250
      %v6732 = vsel %vm4157, %v6700, %v6300
      %v6734 = vsel %vm4157, %v6702, %v6302
      %v6736 = vsel %vm4157, %v6704, %v6304
      %v6738 = vsel %vm4157, %v6706, %v6306
      %v6740 = vsel %vm4157, %v6708, %v6308
      %v6742 = vsel %vm4157, %v6710, %v6310
      %v6744 = vsel %vm4157, %v6712, %v6312
      %v6746 = vsel %vm4157, %v6714, %v6314
      %v6748 = vsel %vm4157, %v6716, %v6316
      %v6750 = vsel %vm4157, %v6718, %v6318
      %v6752 = vsel %vm4157, %v6720, %v6320
      %v6754 = vsel %vm4157, %v6722, %v6322
      %v6756 = vsel %vm4157, %v6724, %v6324
      %v6758 = vsel %vm4157, %v6726, %v6326
      %v6760 = vsel %vm4157, %v6728, %v6328
      %v6762 = vsel %vm4157, %v6730, %v6330
      %v6763 = vsel %vm4190, %v6732, %v3724
      %v6764 = vsel %vm4190, %v6734, %v3726
      %v6765 = vsel %vm4190, %v6736, %v3728
      %v6766 = vsel %vm4190, %v6738, %v3730
      %v6767 = vsel %vm4190, %v6740, %v3732
      %v6768 = vsel %vm4190, %v6742, %v3734
      %v6769 = vsel %vm4190, %v6744, %v3736
      %v6770 = vsel %vm4190, %v6746, %v3738
      %v6771 = vsel %vm4190, %v6748, %v3740
      %v6772 = vsel %vm4190, %v6750, %v3742
      %v6773 = vsel %vm4190, %v6752, %v3744
      %v6774 = vsel %vm4190, %v6754, %v3746
      %v6775 = vsel %vm4190, %v6756, %v3748
      %v6776 = vsel %vm4190, %v6758, %v3750
      %v6777 = vsel %vm4190, %v6760, %v3752
      %v6778 = vsel %vm4190, %v6762, %v3754
      %v6780 = vsel %vm4223, %v6763, %v6380
      %v6782 = vsel %vm4223, %v6764, %v6382
      %v6784 = vsel %vm4223, %v6765, %v6384
      %v6786 = vsel %vm4223, %v6766, %v6386
      %v6788 = vsel %vm4223, %v6767, %v6388
      %v6790 = vsel %vm4223, %v6768, %v6390
      %v6792 = vsel %vm4223, %v6769, %v6392
      %v6794 = vsel %vm4223, %v6770, %v6394
      %v6796 = vsel %vm4223, %v6771, %v6396
      %v6798 = vsel %vm4223, %v6772, %v6398
      %v6800 = vsel %vm4223, %v6773, %v6400
      %v6802 = vsel %vm4223, %v6774, %v6402
      %v6804 = vsel %vm4223, %v6775, %v6404
      %v6806 = vsel %vm4223, %v6776, %v6406
      %v6808 = vsel %vm4223, %v6777, %v6408
      %v6810 = vsel %vm4223, %v6778, %v6410
      %v6812 = vsel %vm4256, %v6780, %v6460
      %v6814 = vsel %vm4256, %v6782, %v6462
      %v6816 = vsel %vm4256, %v6784, %v6464
      %v6818 = vsel %vm4256, %v6786, %v6466
      %v6820 = vsel %vm4256, %v6788, %v6468
      %v6822 = vsel %vm4256, %v6790, %v6470
      %v6824 = vsel %vm4256, %v6792, %v6472
      %v6826 = vsel %vm4256, %v6794, %v6474
      %v6828 = vsel %vm4256, %v6796, %v6476
      %v6830 = vsel %vm4256, %v6798, %v6478
      %v6832 = vsel %vm4256, %v6800, %v6480
      %v6834 = vsel %vm4256, %v6802, %v6482
      %v6836 = vsel %vm4256, %v6804, %v6484
      %v6838 = vsel %vm4256, %v6806, %v6486
      %v6840 = vsel %vm4256, %v6808, %v6488
      %v6842 = vsel %vm4256, %v6810, %v6490
      %v6844 = vsel %vm4289, %v6812, %v6540
      %v6846 = vsel %vm4289, %v6814, %v6542
      %v6848 = vsel %vm4289, %v6816, %v6544
      %v6850 = vsel %vm4289, %v6818, %v6546
      %v6852 = vsel %vm4289, %v6820, %v6548
      %v6854 = vsel %vm4289, %v6822, %v6550
      %v6856 = vsel %vm4289, %v6824, %v6552
      %v6858 = vsel %vm4289, %v6826, %v6554
      %v6860 = vsel %vm4289, %v6828, %v6556
      %v6862 = vsel %vm4289, %v6830, %v6558
      %v6864 = vsel %vm4289, %v6832, %v6560
      %v6866 = vsel %vm4289, %v6834, %v6562
      %v6868 = vsel %vm4289, %v6836, %v6564
      %v6870 = vsel %vm4289, %v6838, %v6566
      %v6872 = vsel %vm4289, %v6840, %v6568
      %v6874 = vsel %vm4289, %v6842, %v6570
      %v6876 = vsel %vm4322, %v6844, %v6620
      %v6878 = vsel %vm4322, %v6846, %v6622
      %v6880 = vsel %vm4322, %v6848, %v6624
      %v6882 = vsel %vm4322, %v6850, %v6626
      %v6884 = vsel %vm4322, %v6852, %v6628
      %v6886 = vsel %vm4322, %v6854, %v6630
      %v6888 = vsel %vm4322, %v6856, %v6632
      %v6890 = vsel %vm4322, %v6858, %v6634
      %v6892 = vsel %vm4322, %v6860, %v6636
      %v6894 = vsel %vm4322, %v6862, %v6638
      %v6896 = vsel %vm4322, %v6864, %v6640
      %v6898 = vsel %vm4322, %v6866, %v6642
      %v6900 = vsel %vm4322, %v6868, %v6644
      %v6902 = vsel %vm4322, %v6870, %v6646
      %v6904 = vsel %vm4322, %v6872, %v6648
      %v6906 = vsel %vm4322, %v6874, %v6650
      %s6907 = scalar_lea.vmem %s1, 36
      %v6908 = vld [vmem:[%s6907] sm:$0xf]
      %v6909 = vld [vmem:[%s6907 + $0x4] sm:$0xf]
      %v6910 = vld [vmem:[%s6907 + $0x8] sm:$0xf]
      %v6911 = vld [vmem:[%s6907 + $0xc] sm:$0xf]
      %v6912 = vld [vmem:[%s6907 + $0x10] sm:$0xf]
      %v6913 = vld [vmem:[%s6907 + $0x14] sm:$0xf]
      %v6914 = vld [vmem:[%s6907 + $0x18] sm:$0xf]
      %v6915 = vld [vmem:[%s6907 + $0x1c] sm:$0xf]
      %v6916 = vld [vmem:[%s6907 + $0x20] sm:$0xf]
      %v6926 = vunpack.c.l.b16 %v6908
      %v6927 = vunpack.c.l.b16 %v6909
      %v6928 = vunpack.c.l.b16 %v6910
      %v6929 = vunpack.c.l.b16 %v6911
      %v6930 = vunpack.c.l.b16 %v6912
      %v6931 = vunpack.c.l.b16 %v6913
      %v6932 = vunpack.c.l.b16 %v6914
      %v6933 = vunpack.c.l.b16 %v6915
      %v6934 = vunpack.c.l.b16 %v6916
      %v6935 = vpack.c.b16 %v6927, %v6926
      %v6936 = vpack.c.b16 %v6929, %v6928
      %v6937 = vpack.c.b16 %v6931, %v6930
      %v6938 = vpack.c.b16 %v6933, %v6932
      %v6939 = vpack.c.b16 %v6934, %v6934
      %v6944 = vsel %vm4391, %v6876, 0
      %v6946 = vsel %vm4391, %v6878, 0
      %v6948 = vsel %vm4391, %v6880, 0
      %v6950 = vsel %vm4391, %v6882, 0
      %v6952 = vsel %vm4391, %v6884, 0
      %v6954 = vsel %vm4391, %v6886, 0
      %v6956 = vsel %vm4391, %v6888, 0
      %v6958 = vsel %vm4391, %v6890, 0
      %v6960 = vsel %vm4391, %v6892, 0
      %v6962 = vsel %vm4391, %v6894, 0
      %v6964 = vsel %vm4391, %v6896, 0
      %v6966 = vsel %vm4391, %v6898, 0
      %v6968 = vsel %vm4391, %v6900, 0
      %v6970 = vsel %vm4391, %v6902, 0
      %v6972 = vsel %vm4391, %v6904, 0
      %v6974 = vsel %vm4391, %v6906, 0
      %v6977 = vsel %vm4424, %v6939, 0
      %6979 = vmatprep.subr.bf16.mxu0 0
      %6980 = vmatpush1.bf16.msra.mxu0 %v6935
      %6981 = vmatprep.subr.bf16.mxu0 0
      %6982 = vmatpush1.bf16.msra.mxu0 %v6936
      %6983 = vmatprep.subr.bf16.mxu0 0
      %6984 = vmatpush1.bf16.msra.mxu0 %v6937
      %6985 = vmatprep.subr.bf16.mxu0 0
      %6986 = vmatpush1.bf16.msra.mxu0 %v6938
      %6987 = vmatprep.subr.bf16.mxu0 0
      %6988 = vmatpush1.bf16.msra.mxu0 %v6977
      %6989 = vmatprep.subr.bf16.mxu0 0
      %6990 = vmatpush1.bf16.msra.mxu0 0
      %6991 = vmatprep.subr.bf16.mxu0 0
      %6992 = vmatpush1.bf16.msra.mxu0 0
      %6993 = vmatprep.subr.bf16.mxu0 0
      %6994 = vmatpush1.bf16.msra.mxu0 0
      %6995 = vmatprep.subr.bf16.mxu0 0
      %6996 = vmatpush1.bf16.msra.mxu0 0
      %6997 = vmatprep.subr.bf16.mxu0 0
      %6998 = vmatpush1.bf16.msra.mxu0 0
      %6999 = vmatprep.subr.bf16.mxu0 0
      %7000 = vmatpush1.bf16.msra.mxu0 0
      %7001 = vmatprep.subr.bf16.mxu0 0
      %7002 = vmatpush1.bf16.msra.mxu0 0
      %7003 = vmatprep.subr.bf16.mxu0 0
      %7004 = vmatpush1.bf16.msra.mxu0 0
      %7005 = vmatprep.subr.bf16.mxu0 0
      %7006 = vmatpush1.bf16.msra.mxu0 0
      %7007 = vmatprep.subr.bf16.mxu0 0
      %7008 = vmatpush1.bf16.msra.mxu0 0
      %7009 = vmatprep.subr.bf16.mxu0 0
      %7010 = vmatpush1.bf16.msra.mxu0 0
      %7011 = vmatprep.mubr.bf16.mxu0 0
      %7012 = vmatmul.mubr.bf16.gmra.mrb[0].mxu0 %v6944
      %v7013 = vpop.f32.mrb[0].mxu0
      %v7014 = vadd.f32 0.0, %v7013
      %v7015 = vpop.f32.mrb[0].mxu0
      %v7016 = vpop.f32.mrb[0].mxu0
      %v7017 = vadd.f32 0.0, %v7016
      %v7018 = vpop.f32.mrb[0].mxu0
      %7019 = vmatprep.mubr.bf16.mxu0 0
      %7020 = vmatmul.mubr.bf16.gmra.mrb[0].mxu0 %v6946
      %v7021 = vpop.f32.mrb[0].mxu0
      %v7022 = vadd.f32 0.0, %v7021
      %v7023 = vpop.f32.mrb[0].mxu0
      %v7024 = vpop.f32.mrb[0].mxu0
      %v7025 = vadd.f32 0.0, %v7024
      %v7026 = vpop.f32.mrb[0].mxu0
      %7027 = vmatprep.mubr.bf16.mxu0 0
      %7028 = vmatmul.mubr.bf16.gmra.mrb[0].mxu0 %v6948
      %v7029 = vpop.f32.mrb[0].mxu0
      %v7030 = vadd.f32 0.0, %v7029
      %v7031 = vpop.f32.mrb[0].mxu0
      %v7032 = vpop.f32.mrb[0].mxu0
      %v7033 = vadd.f32 0.0, %v7032
      %v7034 = vpop.f32.mrb[0].mxu0
      %7035 = vmatprep.mubr.bf16.mxu0 0
      %7036 = vmatmul.mubr.bf16.gmra.mrb[0].mxu0 %v6950
      %v7037 = vpop.f32.mrb[0].mxu0
      %v7038 = vadd.f32 0.0, %v7037
      %v7039 = vpop.f32.mrb[0].mxu0
      %v7040 = vpop.f32.mrb[0].mxu0
      %v7041 = vadd.f32 0.0, %v7040
      %v7042 = vpop.f32.mrb[0].mxu0
      %7043 = vmatprep.mubr.bf16.mxu0 0
      %7044 = vmatmul.mubr.bf16.gmra.mrb[0].mxu0 %v6952
      %v7045 = vpop.f32.mrb[0].mxu0
      %v7046 = vadd.f32 0.0, %v7045
      %v7047 = vpop.f32.mrb[0].mxu0
      %v7048 = vpop.f32.mrb[0].mxu0
      %v7049 = vadd.f32 0.0, %v7048
      %v7050 = vpop.f32.mrb[0].mxu0
      %7051 = vmatprep.mubr.bf16.mxu0 0
      %7052 = vmatmul.mubr.bf16.gmra.mrb[0].mxu0 %v6954
      %v7053 = vpop.f32.mrb[0].mxu0
      %v7054 = vadd.f32 0.0, %v7053
      %v7055 = vpop.f32.mrb[0].mxu0
      %v7056 = vpop.f32.mrb[0].mxu0
      %v7057 = vadd.f32 0.0, %v7056
      %v7058 = vpop.f32.mrb[0].mxu0
      %7059 = vmatprep.mubr.bf16.mxu0 0
      %7060 = vmatmul.mubr.bf16.gmra.mrb[0].mxu0 %v6956
      %v7061 = vpop.f32.mrb[0].mxu0
      %v7062 = vadd.f32 0.0, %v7061
      %v7063 = vpop.f32.mrb[0].mxu0
      %v7064 = vpop.f32.mrb[0].mxu0
      %v7065 = vadd.f32 0.0, %v7064
      %v7066 = vpop.f32.mrb[0].mxu0
      %7067 = vmatprep.mubr.bf16.mxu0 0
      %7068 = vmatmul.mubr.bf16.gmra.mrb[0].mxu0 %v6958
      %v7069 = vpop.f32.mrb[0].mxu0
      %v7070 = vadd.f32 0.0, %v7069
      %v7071 = vpop.f32.mrb[0].mxu0
      %v7072 = vpop.f32.mrb[0].mxu0
      %v7073 = vadd.f32 0.0, %v7072
      %v7074 = vpop.f32.mrb[0].mxu0
      %7075 = vmatprep.mubr.bf16.mxu0 0
      %7076 = vmatmul.mubr.bf16.gmra.mrb[0].mxu0 %v6960
      %v7077 = vpop.f32.mrb[0].mxu0
      %v7078 = vadd.f32 0.0, %v7077
      %v7079 = vpop.f32.mrb[0].mxu0
      %v7080 = vpop.f32.mrb[0].mxu0
      %v7081 = vadd.f32 0.0, %v7080
      %v7082 = vpop.f32.mrb[0].mxu0
      %7083 = vmatprep.mubr.bf16.mxu0 0
      %7084 = vmatmul.mubr.bf16.gmra.mrb[0].mxu0 %v6962
      %v7085 = vpop.f32.mrb[0].mxu0
      %v7086 = vadd.f32 0.0, %v7085
      %v7087 = vpop.f32.mrb[0].mxu0
      %v7088 = vpop.f32.mrb[0].mxu0
      %v7089 = vadd.f32 0.0, %v7088
      %v7090 = vpop.f32.mrb[0].mxu0
      %7091 = vmatprep.mubr.bf16.mxu0 0
      %7092 = vmatmul.mubr.bf16.gmra.mrb[0].mxu0 %v6964
      %v7093 = vpop.f32.mrb[0].mxu0
      %v7094 = vadd.f32 0.0, %v7093
      %v7095 = vpop.f32.mrb[0].mxu0
      %v7096 = vpop.f32.mrb[0].mxu0
      %v7097 = vadd.f32 0.0, %v7096
      %v7098 = vpop.f32.mrb[0].mxu0
      %7099 = vmatprep.mubr.bf16.mxu0 0
      %7100 = vmatmul.mubr.bf16.gmra.mrb[0].mxu0 %v6966
      %v7101 = vpop.f32.mrb[0].mxu0
      %v7102 = vadd.f32 0.0, %v7101
      %v7103 = vpop.f32.mrb[0].mxu0
      %v7104 = vpop.f32.mrb[0].mxu0
      %v7105 = vadd.f32 0.0, %v7104
      %v7106 = vpop.f32.mrb[0].mxu0
      %7107 = vmatprep.mubr.bf16.mxu0 0
      %7108 = vmatmul.mubr.bf16.gmra.mrb[0].mxu0 %v6968
      %v7109 = vpop.f32.mrb[0].mxu0
      %v7110 = vadd.f32 0.0, %v7109
      %v7111 = vpop.f32.mrb[0].mxu0
      %v7112 = vpop.f32.mrb[0].mxu0
      %v7113 = vadd.f32 0.0, %v7112
      %v7114 = vpop.f32.mrb[0].mxu0
      %7115 = vmatprep.mubr.bf16.mxu0 0
      %7116 = vmatmul.mubr.bf16.gmra.mrb[0].mxu0 %v6970
      %v7117 = vpop.f32.mrb[0].mxu0
      %v7118 = vadd.f32 0.0, %v7117
      %v7119 = vpop.f32.mrb[0].mxu0
      %v7120 = vpop.f32.mrb[0].mxu0
      %v7121 = vadd.f32 0.0, %v7120
      %v7122 = vpop.f32.mrb[0].mxu0
      %7123 = vmatprep.mubr.bf16.mxu0 0
      %7124 = vmatmul.mubr.bf16.gmra.mrb[0].mxu0 %v6972
      %v7125 = vpop.f32.mrb[0].mxu0
      %v7126 = vadd.f32 0.0, %v7125
      %v7127 = vpop.f32.mrb[0].mxu0
      %v7128 = vpop.f32.mrb[0].mxu0
      %v7129 = vadd.f32 0.0, %v7128
      %v7130 = vpop.f32.mrb[0].mxu0
      %7131 = vmatprep.mubr.bf16.mxu0 0
      %7132 = vmatmul.mubr.bf16.gmra.mrb[0].mxu0 %v6974
      %v7133 = vpop.f32.mrb[0].mxu0
      %v7134 = vadd.f32 0.0, %v7133
      %v7135 = vpop.f32.mrb[0].mxu0
      %v7136 = vpop.f32.mrb[0].mxu0
      %v7137 = vadd.f32 0.0, %v7136
      %v7138 = vpop.f32.mrb[0].mxu0
      %7139 = vdwg.mxu0
      %s7140 = sadd.s32 %s197, 1
      %s7141 = smul.u32 %s7140, 3
      %s7142 = smul.addr %s7141, 4
      %s7143 = scalar_lea.vmem %s184, %s7142
      %v7144 = vld [vmem:[%s7143] sm:$0xf]
      %v7145 = vld [vmem:[%s7143 + $0x4] sm:$0xf]
      %v7146 = vld [vmem:[%s7143 + $0x8] sm:$0x1]
      %v7147 = vld [vmem:[%s7143 + $0xc] sm:$0xf]
      %v7148 = vld [vmem:[%s7143 + $0x10] sm:$0xf]
      %v7149 = vld [vmem:[%s7143 + $0x14] sm:$0x1]
      %v7150 = vld [vmem:[%s7143 + $0x18] sm:$0xf]
      %v7151 = vld [vmem:[%s7143 + $0x1c] sm:$0xf]
      %v7152 = vld [vmem:[%s7143 + $0x20] sm:$0x1]
      %v7153 = vld [vmem:[%s7143 + $0x24] sm:$0xf]
      %v7154 = vld [vmem:[%s7143 + $0x28] sm:$0xf]
      %v7155 = vld [vmem:[%s7143 + $0x2c] sm:$0x1]
      %v7156 = vld [vmem:[%s7143 + $0x30] sm:$0xf]
      %v7157 = vld [vmem:[%s7143 + $0x34] sm:$0xf]
      %v7158 = vld [vmem:[%s7143 + $0x38] sm:$0x1]
      %v7159 = vld [vmem:[%s7143 + $0x3c] sm:$0xf]
      %v7160 = vld [vmem:[%s7143 + $0x40] sm:$0xf]
      %v7161 = vld [vmem:[%s7143 + $0x44] sm:$0x1]
      %v7162 = vld [vmem:[%s7143 + $0x48] sm:$0xf]
      %v7163 = vld [vmem:[%s7143 + $0x4c] sm:$0xf]
      %v7164 = vld [vmem:[%s7143 + $0x50] sm:$0x1]
      %v7165 = vld [vmem:[%s7143 + $0x54] sm:$0xf]
      %v7166 = vld [vmem:[%s7143 + $0x58] sm:$0xf]
      %v7167 = vld [vmem:[%s7143 + $0x5c] sm:$0x1]
      %v7168 = vld [vmem:[%s7143 + $0x60] sm:$0xf]
      %v7169 = vld [vmem:[%s7143 + $0x64] sm:$0xf]
      %v7170 = vld [vmem:[%s7143 + $0x68] sm:$0x1]
      %v7171 = vld [vmem:[%s7143 + $0x6c] sm:$0xf]
      %v7172 = vld [vmem:[%s7143 + $0x70] sm:$0xf]
      %v7173 = vld [vmem:[%s7143 + $0x74] sm:$0x1]
      %v7174 = vld [vmem:[%s7143 + $0x78] sm:$0xf]
      %v7175 = vld [vmem:[%s7143 + $0x7c] sm:$0xf]
      %v7176 = vld [vmem:[%s7143 + $0x80] sm:$0x1]
      %v7177 = vld [vmem:[%s7143 + $0x84] sm:$0xf]
      %v7178 = vld [vmem:[%s7143 + $0x88] sm:$0xf]
      %v7179 = vld [vmem:[%s7143 + $0x8c] sm:$0x1]
      %v7180 = vld [vmem:[%s7143 + $0x90] sm:$0xf]
      %v7181 = vld [vmem:[%s7143 + $0x94] sm:$0xf]
      %v7182 = vld [vmem:[%s7143 + $0x98] sm:$0x1]
      %v7183 = vld [vmem:[%s7143 + $0x9c] sm:$0xf]
      %v7184 = vld [vmem:[%s7143 + $0xa0] sm:$0xf]
      %v7185 = vld [vmem:[%s7143 + $0xa4] sm:$0x1]
      %v7186 = vld [vmem:[%s7143 + $0xa8] sm:$0xf]
      %v7187 = vld [vmem:[%s7143 + $0xac] sm:$0xf]
      %v7188 = vld [vmem:[%s7143 + $0xb0] sm:$0x1]
      %v7189 = vld [vmem:[%s7143 + $0xb4] sm:$0xf]
      %v7190 = vld [vmem:[%s7143 + $0xb8] sm:$0xf]
      %v7191 = vld [vmem:[%s7143 + $0xbc] sm:$0x1]
      %vm7192 = vsmask.f32 3328
      %vm7193 = vsmask.f32 7440
      %vm7194 = vmor %vm7192, %vm7193
      %v7196 = vshrl.u32 %v7144, 16
      %v7198 = vrot.slane %v7196, 4
      %v7199 = vshll.u32 %v7144, 16
      %v7201 = vrot.slane %v7199, 5
      %v7202 = vor.u32 %v7198, %v7201
      %v7203 = vrot.slane %v7202, 4
      %v7205 = vshll.u32 %v7145, 16
      %v7207 = vrot.slane %v7205, 5
      %v7208 = vsel %vm7194, %v7203, %v7207
      %v7209 = vshrl.u32 %v7145, 16
      %v7211 = vrot.slane %v7209, 4
      %v7212 = vor.u32 %v7211, %v7207
      %v7213 = vrot.slane %v7212, 4
      %v7215 = vshll.u32 %v7146, 16
      %v7217 = vrot.slane %v7215, 5
      %v7218 = vsel %vm7194, %v7213, %v7217
      %v7220 = vshrl.u32 %v7147, 16
      %v7222 = vrot.slane %v7220, 4
      %v7223 = vshll.u32 %v7147, 16
      %v7225 = vrot.slane %v7223, 5
      %v7226 = vor.u32 %v7222, %v7225
      %v7227 = vrot.slane %v7226, 4
      %v7229 = vshll.u32 %v7148, 16
      %v7231 = vrot.slane %v7229, 5
      %v7232 = vsel %vm7194, %v7227, %v7231
      %v7233 = vshrl.u32 %v7148, 16
      %v7235 = vrot.slane %v7233, 4
      %v7236 = vor.u32 %v7235, %v7231
      %v7237 = vrot.slane %v7236, 4
      %v7239 = vshll.u32 %v7149, 16
      %v7241 = vrot.slane %v7239, 5
      %v7242 = vsel %vm7194, %v7237, %v7241
      %v7244 = vshrl.u32 %v7150, 16
      %v7246 = vrot.slane %v7244, 4
      %v7247 = vshll.u32 %v7150, 16
      %v7249 = vrot.slane %v7247, 5
      %v7250 = vor.u32 %v7246, %v7249
      %v7251 = vrot.slane %v7250, 4
      %v7253 = vshll.u32 %v7151, 16
      %v7255 = vrot.slane %v7253, 5
      %v7256 = vsel %vm7194, %v7251, %v7255
      %v7257 = vshrl.u32 %v7151, 16
      %v7259 = vrot.slane %v7257, 4
      %v7260 = vor.u32 %v7259, %v7255
      %v7261 = vrot.slane %v7260, 4
      %v7263 = vshll.u32 %v7152, 16
      %v7265 = vrot.slane %v7263, 5
      %v7266 = vsel %vm7194, %v7261, %v7265
      %v7268 = vshrl.u32 %v7153, 16
      %v7270 = vrot.slane %v7268, 4
      %v7271 = vshll.u32 %v7153, 16
      %v7273 = vrot.slane %v7271, 5
      %v7274 = vor.u32 %v7270, %v7273
      %v7275 = vrot.slane %v7274, 4
      %v7277 = vshll.u32 %v7154, 16
      %v7279 = vrot.slane %v7277, 5
      %v7280 = vsel %vm7194, %v7275, %v7279
      %v7281 = vshrl.u32 %v7154, 16
      %v7283 = vrot.slane %v7281, 4
      %v7284 = vor.u32 %v7283, %v7279
      %v7285 = vrot.slane %v7284, 4
      %v7287 = vshll.u32 %v7155, 16
      %v7289 = vrot.slane %v7287, 5
      %v7290 = vsel %vm7194, %v7285, %v7289
      %v7292 = vshrl.u32 %v7156, 16
      %v7294 = vrot.slane %v7292, 4
      %v7295 = vshll.u32 %v7156, 16
      %v7297 = vrot.slane %v7295, 5
      %v7298 = vor.u32 %v7294, %v7297
      %v7299 = vrot.slane %v7298, 4
      %v7301 = vshll.u32 %v7157, 16
      %v7303 = vrot.slane %v7301, 5
      %v7304 = vsel %vm7194, %v7299, %v7303
      %v7305 = vshrl.u32 %v7157, 16
      %v7307 = vrot.slane %v7305, 4
      %v7308 = vor.u32 %v7307, %v7303
      %v7309 = vrot.slane %v7308, 4
      %v7311 = vshll.u32 %v7158, 16
      %v7313 = vrot.slane %v7311, 5
      %v7314 = vsel %vm7194, %v7309, %v7313
      %v7316 = vshrl.u32 %v7159, 16
      %v7318 = vrot.slane %v7316, 4
      %v7319 = vshll.u32 %v7159, 16
      %v7321 = vrot.slane %v7319, 5
      %v7322 = vor.u32 %v7318, %v7321
      %v7323 = vrot.slane %v7322, 4
      %v7325 = vshll.u32 %v7160, 16
      %v7327 = vrot.slane %v7325, 5
      %v7328 = vsel %vm7194, %v7323, %v7327
      %v7329 = vshrl.u32 %v7160, 16
      %v7331 = vrot.slane %v7329, 4
      %v7332 = vor.u32 %v7331, %v7327
      %v7333 = vrot.slane %v7332, 4
      %v7335 = vshll.u32 %v7161, 16
      %v7337 = vrot.slane %v7335, 5
      %v7338 = vsel %vm7194, %v7333, %v7337
      %v7340 = vshrl.u32 %v7162, 16
      %v7342 = vrot.slane %v7340, 4
      %v7343 = vshll.u32 %v7162, 16
      %v7345 = vrot.slane %v7343, 5
      %v7346 = vor.u32 %v7342, %v7345
      %v7347 = vrot.slane %v7346, 4
      %v7349 = vshll.u32 %v7163, 16
      %v7351 = vrot.slane %v7349, 5
      %v7352 = vsel %vm7194, %v7347, %v7351
      %v7353 = vshrl.u32 %v7163, 16
      %v7355 = vrot.slane %v7353, 4
      %v7356 = vor.u32 %v7355, %v7351
      %v7357 = vrot.slane %v7356, 4
      %v7359 = vshll.u32 %v7164, 16
      %v7361 = vrot.slane %v7359, 5
      %v7362 = vsel %vm7194, %v7357, %v7361
      %v7364 = vshrl.u32 %v7165, 16
      %v7366 = vrot.slane %v7364, 4
      %v7367 = vshll.u32 %v7165, 16
      %v7369 = vrot.slane %v7367, 5
      %v7370 = vor.u32 %v7366, %v7369
      %v7371 = vrot.slane %v7370, 4
      %v7373 = vshll.u32 %v7166, 16
      %v7375 = vrot.slane %v7373, 5
      %v7376 = vsel %vm7194, %v7371, %v7375
      %v7377 = vshrl.u32 %v7166, 16
      %v7379 = vrot.slane %v7377, 4
      %v7380 = vor.u32 %v7379, %v7375
      %v7381 = vrot.slane %v7380, 4
      %v7383 = vshll.u32 %v7167, 16
      %v7385 = vrot.slane %v7383, 5
      %v7386 = vsel %vm7194, %v7381, %v7385
      %v7388 = vshrl.u32 %v7168, 16
      %v7390 = vrot.slane %v7388, 4
      %v7391 = vshll.u32 %v7168, 16
      %v7393 = vrot.slane %v7391, 5
      %v7394 = vor.u32 %v7390, %v7393
      %v7395 = vrot.slane %v7394, 4
      %v7397 = vshll.u32 %v7169, 16
      %v7399 = vrot.slane %v7397, 5
      %v7400 = vsel %vm7194, %v7395, %v7399
      %v7401 = vshrl.u32 %v7169, 16
      %v7403 = vrot.slane %v7401, 4
      %v7404 = vor.u32 %v7403, %v7399
      %v7405 = vrot.slane %v7404, 4
      %v7407 = vshll.u32 %v7170, 16
      %v7409 = vrot.slane %v7407, 5
      %v7410 = vsel %vm7194, %v7405, %v7409
      %v7412 = vshrl.u32 %v7171, 16
      %v7414 = vrot.slane %v7412, 4
      %v7415 = vshll.u32 %v7171, 16
      %v7417 = vrot.slane %v7415, 5
      %v7418 = vor.u32 %v7414, %v7417
      %v7419 = vrot.slane %v7418, 4
      %v7421 = vshll.u32 %v7172, 16
      %v7423 = vrot.slane %v7421, 5
      %v7424 = vsel %vm7194, %v7419, %v7423
      %v7425 = vshrl.u32 %v7172, 16
      %v7427 = vrot.slane %v7425, 4
      %v7428 = vor.u32 %v7427, %v7423
      %v7429 = vrot.slane %v7428, 4
      %v7431 = vshll.u32 %v7173, 16
      %v7433 = vrot.slane %v7431, 5
      %v7434 = vsel %vm7194, %v7429, %v7433
      %v7436 = vshrl.u32 %v7174, 16
      %v7438 = vrot.slane %v7436, 4
      %v7439 = vshll.u32 %v7174, 16
      %v7441 = vrot.slane %v7439, 5
      %v7442 = vor.u32 %v7438, %v7441
      %v7443 = vrot.slane %v7442, 4
      %v7445 = vshll.u32 %v7175, 16
      %v7447 = vrot.slane %v7445, 5
      %v7448 = vsel %vm7194, %v7443, %v7447
      %v7449 = vshrl.u32 %v7175, 16
      %v7451 = vrot.slane %v7449, 4
      %v7452 = vor.u32 %v7451, %v7447
      %v7453 = vrot.slane %v7452, 4
      %v7455 = vshll.u32 %v7176, 16
      %v7457 = vrot.slane %v7455, 5
      %v7458 = vsel %vm7194, %v7453, %v7457
      %v7460 = vshrl.u32 %v7177, 16
      %v7462 = vrot.slane %v7460, 4
      %v7463 = vshll.u32 %v7177, 16
      %v7465 = vrot.slane %v7463, 5
      %v7466 = vor.u32 %v7462, %v7465
      %v7467 = vrot.slane %v7466, 4
      %v7469 = vshll.u32 %v7178, 16
      %v7471 = vrot.slane %v7469, 5
      %v7472 = vsel %vm7194, %v7467, %v7471
      %v7473 = vshrl.u32 %v7178, 16
      %v7475 = vrot.slane %v7473, 4
      %v7476 = vor.u32 %v7475, %v7471
      %v7477 = vrot.slane %v7476, 4
      %v7479 = vshll.u32 %v7179, 16
      %v7481 = vrot.slane %v7479, 5
      %v7482 = vsel %vm7194, %v7477, %v7481
      %v7484 = vshrl.u32 %v7180, 16
      %v7486 = vrot.slane %v7484, 4
      %v7487 = vshll.u32 %v7180, 16
      %v7489 = vrot.slane %v7487, 5
      %v7490 = vor.u32 %v7486, %v7489
      %v7491 = vrot.slane %v7490, 4
      %v7493 = vshll.u32 %v7181, 16
      %v7495 = vrot.slane %v7493, 5
      %v7496 = vsel %vm7194, %v7491, %v7495
      %v7497 = vshrl.u32 %v7181, 16
      %v7499 = vrot.slane %v7497, 4
      %v7500 = vor.u32 %v7499, %v7495
      %v7501 = vrot.slane %v7500, 4
      %v7503 = vshll.u32 %v7182, 16
      %v7505 = vrot.slane %v7503, 5
      %v7506 = vsel %vm7194, %v7501, %v7505
      %v7508 = vshrl.u32 %v7183, 16
      %v7510 = vrot.slane %v7508, 4
      %v7511 = vshll.u32 %v7183, 16
      %v7513 = vrot.slane %v7511, 5
      %v7514 = vor.u32 %v7510, %v7513
      %v7515 = vrot.slane %v7514, 4
      %v7517 = vshll.u32 %v7184, 16
      %v7519 = vrot.slane %v7517, 5
      %v7520 = vsel %vm7194, %v7515, %v7519
      %v7521 = vshrl.u32 %v7184, 16
      %v7523 = vrot.slane %v7521, 4
      %v7524 = vor.u32 %v7523, %v7519
      %v7525 = vrot.slane %v7524, 4
      %v7527 = vshll.u32 %v7185, 16
      %v7529 = vrot.slane %v7527, 5
      %v7530 = vsel %vm7194, %v7525, %v7529
      %v7532 = vshrl.u32 %v7186, 16
      %v7534 = vrot.slane %v7532, 4
      %v7535 = vshll.u32 %v7186, 16
      %v7537 = vrot.slane %v7535, 5
      %v7538 = vor.u32 %v7534, %v7537
      %v7539 = vrot.slane %v7538, 4
      %v7541 = vshll.u32 %v7187, 16
      %v7543 = vrot.slane %v7541, 5
      %v7544 = vsel %vm7194, %v7539, %v7543
      %v7545 = vshrl.u32 %v7187, 16
      %v7547 = vrot.slane %v7545, 4
      %v7548 = vor.u32 %v7547, %v7543
      %v7549 = vrot.slane %v7548, 4
      %v7551 = vshll.u32 %v7188, 16
      %v7553 = vrot.slane %v7551, 5
      %v7554 = vsel %vm7194, %v7549, %v7553
      %v7556 = vshrl.u32 %v7189, 16
      %v7558 = vrot.slane %v7556, 4
      %v7559 = vshll.u32 %v7189, 16
      %v7561 = vrot.slane %v7559, 5
      %v7562 = vor.u32 %v7558, %v7561
      %v7563 = vrot.slane %v7562, 4
      %v7565 = vshll.u32 %v7190, 16
      %v7567 = vrot.slane %v7565, 5
      %v7568 = vsel %vm7194, %v7563, %v7567
      %v7569 = vshrl.u32 %v7190, 16
      %v7571 = vrot.slane %v7569, 4
      %v7572 = vor.u32 %v7571, %v7567
      %v7573 = vrot.slane %v7572, 4
      %v7575 = vshll.u32 %v7191, 16
      %v7577 = vrot.slane %v7575, 5
      %v7578 = vsel %vm7194, %v7573, %v7577
      %v7579 = vld [vmem:[%s7143] sm:$0xc]
      %v7580 = vld [vmem:[%s7143 + $0x8] sm:$0x3]
      %v7581 = vld [vmem:[%s7143 + $0xc] sm:$0xc]
      %v7582 = vld [vmem:[%s7143 + $0x14] sm:$0x3]
      %v7583 = vld [vmem:[%s7143 + $0x18] sm:$0xc]
      %v7584 = vld [vmem:[%s7143 + $0x20] sm:$0x3]
      %v7585 = vld [vmem:[%s7143 + $0x24] sm:$0xc]
      %v7586 = vld [vmem:[%s7143 + $0x2c] sm:$0x3]
      %v7587 = vld [vmem:[%s7143 + $0x30] sm:$0xc]
      %v7588 = vld [vmem:[%s7143 + $0x38] sm:$0x3]
      %v7589 = vld [vmem:[%s7143 + $0x3c] sm:$0xc]
      %v7590 = vld [vmem:[%s7143 + $0x44] sm:$0x3]
      %v7591 = vld [vmem:[%s7143 + $0x48] sm:$0xc]
      %v7592 = vld [vmem:[%s7143 + $0x50] sm:$0x3]
      %v7593 = vld [vmem:[%s7143 + $0x54] sm:$0xc]
      %v7594 = vld [vmem:[%s7143 + $0x5c] sm:$0x3]
      %v7595 = vld [vmem:[%s7143 + $0x60] sm:$0xc]
      %v7596 = vld [vmem:[%s7143 + $0x68] sm:$0x3]
      %v7597 = vld [vmem:[%s7143 + $0x6c] sm:$0xc]
      %v7598 = vld [vmem:[%s7143 + $0x74] sm:$0x3]
      %v7599 = vld [vmem:[%s7143 + $0x78] sm:$0xc]
      %v7600 = vld [vmem:[%s7143 + $0x80] sm:$0x3]
      %v7601 = vld [vmem:[%s7143 + $0x84] sm:$0xc]
      %v7602 = vld [vmem:[%s7143 + $0x8c] sm:$0x3]
      %v7603 = vld [vmem:[%s7143 + $0x90] sm:$0xc]
      %v7604 = vld [vmem:[%s7143 + $0x98] sm:$0x3]
      %v7605 = vld [vmem:[%s7143 + $0x9c] sm:$0xc]
      %v7606 = vld [vmem:[%s7143 + $0xa4] sm:$0x3]
      %v7607 = vld [vmem:[%s7143 + $0xa8] sm:$0xc]
      %v7608 = vld [vmem:[%s7143 + $0xb0] sm:$0x3]
      %v7609 = vld [vmem:[%s7143 + $0xb4] sm:$0xc]
      %v7610 = vld [vmem:[%s7143 + $0xbc] sm:$0x3]
      %v7659 = vrot.slane %v7579, 6
      %v7660 = vrot.slane %v7659, 4
      %v7661 = vrot.slane %v7145, 6
      %v7662 = vsel %vm767, %v7660, %v7661
      %v7663 = vrot.slane %v7661, 4
      %v7664 = vrot.slane %v7580, 6
      %v7665 = vsel %vm767, %v7663, %v7664
      %v7666 = vrot.slane %v7581, 6
      %v7667 = vrot.slane %v7666, 4
      %v7668 = vrot.slane %v7148, 6
      %v7669 = vsel %vm767, %v7667, %v7668
      %v7670 = vrot.slane %v7668, 4
      %v7671 = vrot.slane %v7582, 6
      %v7672 = vsel %vm767, %v7670, %v7671
      %v7673 = vrot.slane %v7583, 6
      %v7674 = vrot.slane %v7673, 4
      %v7675 = vrot.slane %v7151, 6
      %v7676 = vsel %vm767, %v7674, %v7675
      %v7677 = vrot.slane %v7675, 4
      %v7678 = vrot.slane %v7584, 6
      %v7679 = vsel %vm767, %v7677, %v7678
      %v7680 = vrot.slane %v7585, 6
      %v7681 = vrot.slane %v7680, 4
      %v7682 = vrot.slane %v7154, 6
      %v7683 = vsel %vm767, %v7681, %v7682
      %v7684 = vrot.slane %v7682, 4
      %v7685 = vrot.slane %v7586, 6
      %v7686 = vsel %vm767, %v7684, %v7685
      %v7687 = vrot.slane %v7587, 6
      %v7688 = vrot.slane %v7687, 4
      %v7689 = vrot.slane %v7157, 6
      %v7690 = vsel %vm767, %v7688, %v7689
      %v7691 = vrot.slane %v7689, 4
      %v7692 = vrot.slane %v7588, 6
      %v7693 = vsel %vm767, %v7691, %v7692
      %v7694 = vrot.slane %v7589, 6
      %v7695 = vrot.slane %v7694, 4
      %v7696 = vrot.slane %v7160, 6
      %v7697 = vsel %vm767, %v7695, %v7696
      %v7698 = vrot.slane %v7696, 4
      %v7699 = vrot.slane %v7590, 6
      %v7700 = vsel %vm767, %v7698, %v7699
      %v7701 = vrot.slane %v7591, 6
      %v7702 = vrot.slane %v7701, 4
      %v7703 = vrot.slane %v7163, 6
      %v7704 = vsel %vm767, %v7702, %v7703
      %v7705 = vrot.slane %v7703, 4
      %v7706 = vrot.slane %v7592, 6
      %v7707 = vsel %vm767, %v7705, %v7706
      %v7708 = vrot.slane %v7593, 6
      %v7709 = vrot.slane %v7708, 4
      %v7710 = vrot.slane %v7166, 6
      %v7711 = vsel %vm767, %v7709, %v7710
      %v7712 = vrot.slane %v7710, 4
      %v7713 = vrot.slane %v7594, 6
      %v7714 = vsel %vm767, %v7712, %v7713
      %v7715 = vrot.slane %v7595, 6
      %v7716 = vrot.slane %v7715, 4
      %v7717 = vrot.slane %v7169, 6
      %v7718 = vsel %vm767, %v7716, %v7717
      %v7719 = vrot.slane %v7717, 4
      %v7720 = vrot.slane %v7596, 6
      %v7721 = vsel %vm767, %v7719, %v7720
      %v7722 = vrot.slane %v7597, 6
      %v7723 = vrot.slane %v7722, 4
      %v7724 = vrot.slane %v7172, 6
      %v7725 = vsel %vm767, %v7723, %v7724
      %v7726 = vrot.slane %v7724, 4
      %v7727 = vrot.slane %v7598, 6
      %v7728 = vsel %vm767, %v7726, %v7727
      %v7729 = vrot.slane %v7599, 6
      %v7730 = vrot.slane %v7729, 4
      %v7731 = vrot.slane %v7175, 6
      %v7732 = vsel %vm767, %v7730, %v7731
      %v7733 = vrot.slane %v7731, 4
      %v7734 = vrot.slane %v7600, 6
      %v7735 = vsel %vm767, %v7733, %v7734
      %v7736 = vrot.slane %v7601, 6
      %v7737 = vrot.slane %v7736, 4
      %v7738 = vrot.slane %v7178, 6
      %v7739 = vsel %vm767, %v7737, %v7738
      %v7740 = vrot.slane %v7738, 4
      %v7741 = vrot.slane %v7602, 6
      %v7742 = vsel %vm767, %v7740, %v7741
      %v7743 = vrot.slane %v7603, 6
      %v7744 = vrot.slane %v7743, 4
      %v7745 = vrot.slane %v7181, 6
      %v7746 = vsel %vm767, %v7744, %v7745
      %v7747 = vrot.slane %v7745, 4
      %v7748 = vrot.slane %v7604, 6
      %v7749 = vsel %vm767, %v7747, %v7748
      %v7750 = vrot.slane %v7605, 6
      %v7751 = vrot.slane %v7750, 4
      %v7752 = vrot.slane %v7184, 6
      %v7753 = vsel %vm767, %v7751, %v7752
      %v7754 = vrot.slane %v7752, 4
      %v7755 = vrot.slane %v7606, 6
      %v7756 = vsel %vm767, %v7754, %v7755
      %v7757 = vrot.slane %v7607, 6
      %v7758 = vrot.slane %v7757, 4
      %v7759 = vrot.slane %v7187, 6
      %v7760 = vsel %vm767, %v7758, %v7759
      %v7761 = vrot.slane %v7759, 4
      %v7762 = vrot.slane %v7608, 6
      %v7763 = vsel %vm767, %v7761, %v7762
      %v7764 = vrot.slane %v7609, 6
      %v7765 = vrot.slane %v7764, 4
      %v7766 = vrot.slane %v7190, 6
      %v7767 = vsel %vm767, %v7765, %v7766
      %v7768 = vrot.slane %v7766, 4
      %v7769 = vrot.slane %v7610, 6
      %v7770 = vsel %vm767, %v7768, %v7769
      %v7771 = vld [vmem:[%s7143] sm:$0x8]
      %v7772 = vld [vmem:[%s7143 + $0x8] sm:$0xf]
      %v7773 = vld [vmem:[%s7143 + $0xc] sm:$0x8]
      %v7774 = vld [vmem:[%s7143 + $0x14] sm:$0xf]
      %v7775 = vld [vmem:[%s7143 + $0x18] sm:$0x8]
      %v7776 = vld [vmem:[%s7143 + $0x20] sm:$0xf]
      %v7777 = vld [vmem:[%s7143 + $0x24] sm:$0x8]
      %v7778 = vld [vmem:[%s7143 + $0x2c] sm:$0xf]
      %v7779 = vld [vmem:[%s7143 + $0x30] sm:$0x8]
      %v7780 = vld [vmem:[%s7143 + $0x38] sm:$0xf]
      %v7781 = vld [vmem:[%s7143 + $0x3c] sm:$0x8]
      %v7782 = vld [vmem:[%s7143 + $0x44] sm:$0xf]
      %v7783 = vld [vmem:[%s7143 + $0x48] sm:$0x8]
      %v7784 = vld [vmem:[%s7143 + $0x50] sm:$0xf]
      %v7785 = vld [vmem:[%s7143 + $0x54] sm:$0x8]
      %v7786 = vld [vmem:[%s7143 + $0x5c] sm:$0xf]
      %v7787 = vld [vmem:[%s7143 + $0x60] sm:$0x8]
      %v7788 = vld [vmem:[%s7143 + $0x68] sm:$0xf]
      %v7789 = vld [vmem:[%s7143 + $0x6c] sm:$0x8]
      %v7790 = vld [vmem:[%s7143 + $0x74] sm:$0xf]
      %v7791 = vld [vmem:[%s7143 + $0x78] sm:$0x8]
      %v7792 = vld [vmem:[%s7143 + $0x80] sm:$0xf]
      %v7793 = vld [vmem:[%s7143 + $0x84] sm:$0x8]
      %v7794 = vld [vmem:[%s7143 + $0x8c] sm:$0xf]
      %v7795 = vld [vmem:[%s7143 + $0x90] sm:$0x8]
      %v7796 = vld [vmem:[%s7143 + $0x98] sm:$0xf]
      %v7797 = vld [vmem:[%s7143 + $0x9c] sm:$0x8]
      %v7798 = vld [vmem:[%s7143 + $0xa4] sm:$0xf]
      %v7799 = vld [vmem:[%s7143 + $0xa8] sm:$0x8]
      %v7800 = vld [vmem:[%s7143 + $0xb0] sm:$0xf]
      %v7801 = vld [vmem:[%s7143 + $0xb4] sm:$0x8]
      %v7802 = vld [vmem:[%s7143 + $0xbc] sm:$0xf]
      %vm7803 = vsmask.f32 256
      %vm7804 = vsmask.f32 4368
      %vm7805 = vmor %vm7803, %vm7804
      %v7807 = vshrl.u32 %v7771, 16
      %v7809 = vrot.slane %v7807, 7
      %v7810 = vrot.slane %v7809, 4
      %v7811 = vrot.slane %v7209, 7
      %v7812 = vor.u32 %v7811, %v7205
      %v7813 = vsel %vm7805, %v7810, %v7812
      %v7814 = vrot.slane %v7811, 4
      %v7816 = vshrl.u32 %v7772, 16
      %v7818 = vrot.slane %v7816, 7
      %v7819 = vshll.u32 %v7772, 16
      %v7821 = vor.u32 %v7818, %v7819
      %v7822 = vsel %vm7805, %v7814, %v7821
      %v7824 = vshrl.u32 %v7773, 16
      %v7826 = vrot.slane %v7824, 7
      %v7827 = vrot.slane %v7826, 4
      %v7828 = vrot.slane %v7233, 7
      %v7829 = vor.u32 %v7828, %v7229
      %v7830 = vsel %vm7805, %v7827, %v7829
      %v7831 = vrot.slane %v7828, 4
      %v7833 = vshrl.u32 %v7774, 16
      %v7835 = vrot.slane %v7833, 7
      %v7836 = vshll.u32 %v7774, 16
      %v7838 = vor.u32 %v7835, %v7836
      %v7839 = vsel %vm7805, %v7831, %v7838
      %v7841 = vshrl.u32 %v7775, 16
      %v7843 = vrot.slane %v7841, 7
      %v7844 = vrot.slane %v7843, 4
      %v7845 = vrot.slane %v7257, 7
      %v7846 = vor.u32 %v7845, %v7253
      %v7847 = vsel %vm7805, %v7844, %v7846
      %v7848 = vrot.slane %v7845, 4
      %v7850 = vshrl.u32 %v7776, 16
      %v7852 = vrot.slane %v7850, 7
      %v7853 = vshll.u32 %v7776, 16
      %v7855 = vor.u32 %v7852, %v7853
      %v7856 = vsel %vm7805, %v7848, %v7855
      %v7858 = vshrl.u32 %v7777, 16
      %v7860 = vrot.slane %v7858, 7
      %v7861 = vrot.slane %v7860, 4
      %v7862 = vrot.slane %v7281, 7
      %v7863 = vor.u32 %v7862, %v7277
      %v7864 = vsel %vm7805, %v7861, %v7863
      %v7865 = vrot.slane %v7862, 4
      %v7867 = vshrl.u32 %v7778, 16
      %v7869 = vrot.slane %v7867, 7
      %v7870 = vshll.u32 %v7778, 16
      %v7872 = vor.u32 %v7869, %v7870
      %v7873 = vsel %vm7805, %v7865, %v7872
      %v7875 = vshrl.u32 %v7779, 16
      %v7877 = vrot.slane %v7875, 7
      %v7878 = vrot.slane %v7877, 4
      %v7879 = vrot.slane %v7305, 7
      %v7880 = vor.u32 %v7879, %v7301
      %v7881 = vsel %vm7805, %v7878, %v7880
      %v7882 = vrot.slane %v7879, 4
      %v7884 = vshrl.u32 %v7780, 16
      %v7886 = vrot.slane %v7884, 7
      %v7887 = vshll.u32 %v7780, 16
      %v7889 = vor.u32 %v7886, %v7887
      %v7890 = vsel %vm7805, %v7882, %v7889
      %v7892 = vshrl.u32 %v7781, 16
      %v7894 = vrot.slane %v7892, 7
      %v7895 = vrot.slane %v7894, 4
      %v7896 = vrot.slane %v7329, 7
      %v7897 = vor.u32 %v7896, %v7325
      %v7898 = vsel %vm7805, %v7895, %v7897
      %v7899 = vrot.slane %v7896, 4
      %v7901 = vshrl.u32 %v7782, 16
      %v7903 = vrot.slane %v7901, 7
      %v7904 = vshll.u32 %v7782, 16
      %v7906 = vor.u32 %v7903, %v7904
      %v7907 = vsel %vm7805, %v7899, %v7906
      %v7909 = vshrl.u32 %v7783, 16
      %v7911 = vrot.slane %v7909, 7
      %v7912 = vrot.slane %v7911, 4
      %v7913 = vrot.slane %v7353, 7
      %v7914 = vor.u32 %v7913, %v7349
      %v7915 = vsel %vm7805, %v7912, %v7914
      %v7916 = vrot.slane %v7913, 4
      %v7918 = vshrl.u32 %v7784, 16
      %v7920 = vrot.slane %v7918, 7
      %v7921 = vshll.u32 %v7784, 16
      %v7923 = vor.u32 %v7920, %v7921
      %v7924 = vsel %vm7805, %v7916, %v7923
      %v7926 = vshrl.u32 %v7785, 16
      %v7928 = vrot.slane %v7926, 7
      %v7929 = vrot.slane %v7928, 4
      %v7930 = vrot.slane %v7377, 7
      %v7931 = vor.u32 %v7930, %v7373
      %v7932 = vsel %vm7805, %v7929, %v7931
      %v7933 = vrot.slane %v7930, 4
      %v7935 = vshrl.u32 %v7786, 16
      %v7937 = vrot.slane %v7935, 7
      %v7938 = vshll.u32 %v7786, 16
      %v7940 = vor.u32 %v7937, %v7938
      %v7941 = vsel %vm7805, %v7933, %v7940
      %v7943 = vshrl.u32 %v7787, 16
      %v7945 = vrot.slane %v7943, 7
      %v7946 = vrot.slane %v7945, 4
      %v7947 = vrot.slane %v7401, 7
      %v7948 = vor.u32 %v7947, %v7397
      %v7949 = vsel %vm7805, %v7946, %v7948
      %v7950 = vrot.slane %v7947, 4
      %v7952 = vshrl.u32 %v7788, 16
      %v7954 = vrot.slane %v7952, 7
      %v7955 = vshll.u32 %v7788, 16
      %v7957 = vor.u32 %v7954, %v7955
      %v7958 = vsel %vm7805, %v7950, %v7957
      %v7960 = vshrl.u32 %v7789, 16
      %v7962 = vrot.slane %v7960, 7
      %v7963 = vrot.slane %v7962, 4
      %v7964 = vrot.slane %v7425, 7
      %v7965 = vor.u32 %v7964, %v7421
      %v7966 = vsel %vm7805, %v7963, %v7965
      %v7967 = vrot.slane %v7964, 4
      %v7969 = vshrl.u32 %v7790, 16
      %v7971 = vrot.slane %v7969, 7
      %v7972 = vshll.u32 %v7790, 16
      %v7974 = vor.u32 %v7971, %v7972
      %v7975 = vsel %vm7805, %v7967, %v7974
      %v7977 = vshrl.u32 %v7791, 16
      %v7979 = vrot.slane %v7977, 7
      %v7980 = vrot.slane %v7979, 4
      %v7981 = vrot.slane %v7449, 7
      %v7982 = vor.u32 %v7981, %v7445
      %v7983 = vsel %vm7805, %v7980, %v7982
      %v7984 = vrot.slane %v7981, 4
      %v7986 = vshrl.u32 %v7792, 16
      %v7988 = vrot.slane %v7986, 7
      %v7989 = vshll.u32 %v7792, 16
      %v7991 = vor.u32 %v7988, %v7989
      %v7992 = vsel %vm7805, %v7984, %v7991
      %v7994 = vshrl.u32 %v7793, 16
      %v7996 = vrot.slane %v7994, 7
      %v7997 = vrot.slane %v7996, 4
      %v7998 = vrot.slane %v7473, 7
      %v7999 = vor.u32 %v7998, %v7469
      %v8000 = vsel %vm7805, %v7997, %v7999
      %v8001 = vrot.slane %v7998, 4
      %v8003 = vshrl.u32 %v7794, 16
      %v8005 = vrot.slane %v8003, 7
      %v8006 = vshll.u32 %v7794, 16
      %v8008 = vor.u32 %v8005, %v8006
      %v8009 = vsel %vm7805, %v8001, %v8008
      %v8011 = vshrl.u32 %v7795, 16
      %v8013 = vrot.slane %v8011, 7
      %v8014 = vrot.slane %v8013, 4
      %v8015 = vrot.slane %v7497, 7
      %v8016 = vor.u32 %v8015, %v7493
      %v8017 = vsel %vm7805, %v8014, %v8016
      %v8018 = vrot.slane %v8015, 4
      %v8020 = vshrl.u32 %v7796, 16
      %v8022 = vrot.slane %v8020, 7
      %v8023 = vshll.u32 %v7796, 16
      %v8025 = vor.u32 %v8022, %v8023
      %v8026 = vsel %vm7805, %v8018, %v8025
      %v8028 = vshrl.u32 %v7797, 16
      %v8030 = vrot.slane %v8028, 7
      %v8031 = vrot.slane %v8030, 4
      %v8032 = vrot.slane %v7521, 7
      %v8033 = vor.u32 %v8032, %v7517
      %v8034 = vsel %vm7805, %v8031, %v8033
      %v8035 = vrot.slane %v8032, 4
      %v8037 = vshrl.u32 %v7798, 16
      %v8039 = vrot.slane %v8037, 7
      %v8040 = vshll.u32 %v7798, 16
      %v8042 = vor.u32 %v8039, %v8040
      %v8043 = vsel %vm7805, %v8035, %v8042
      %v8045 = vshrl.u32 %v7799, 16
      %v8047 = vrot.slane %v8045, 7
      %v8048 = vrot.slane %v8047, 4
      %v8049 = vrot.slane %v7545, 7
      %v8050 = vor.u32 %v8049, %v7541
      %v8051 = vsel %vm7805, %v8048, %v8050
      %v8052 = vrot.slane %v8049, 4
      %v8054 = vshrl.u32 %v7800, 16
      %v8056 = vrot.slane %v8054, 7
      %v8057 = vshll.u32 %v7800, 16
      %v8059 = vor.u32 %v8056, %v8057
      %v8060 = vsel %vm7805, %v8052, %v8059
      %v8062 = vshrl.u32 %v7801, 16
      %v8064 = vrot.slane %v8062, 7
      %v8065 = vrot.slane %v8064, 4
      %v8066 = vrot.slane %v7569, 7
      %v8067 = vor.u32 %v8066, %v7565
      %v8068 = vsel %vm7805, %v8065, %v8067
      %v8069 = vrot.slane %v8066, 4
      %v8071 = vshrl.u32 %v7802, 16
      %v8073 = vrot.slane %v8071, 7
      %v8074 = vshll.u32 %v7802, 16
      %v8076 = vor.u32 %v8073, %v8074
      %v8077 = vsel %vm7805, %v8069, %v8076
      %v8078 = vld [vmem:[%s1270] sm:$0xf]
      %v8079 = vld [vmem:[%s1270 + $0xc] sm:$0xf]
      %v8080 = vld [vmem:[%s1270 + $0x18] sm:$0xf]
      %v8081 = vld [vmem:[%s1270 + $0x24] sm:$0xf]
      %v8082 = vld [vmem:[%s1270 + $0x30] sm:$0xf]
      %v8083 = vld [vmem:[%s1270 + $0x3c] sm:$0xf]
      %v8084 = vld [vmem:[%s1270 + $0x48] sm:$0xf]
      %v8085 = vld [vmem:[%s1270 + $0x54] sm:$0xf]
      %v8086 = vld [vmem:[%s1270 + $0x60] sm:$0xf]
      %v8087 = vld [vmem:[%s1270 + $0x6c] sm:$0xf]
      %v8088 = vld [vmem:[%s1270 + $0x78] sm:$0xf]
      %v8089 = vld [vmem:[%s1270 + $0x84] sm:$0xf]
      %v8090 = vld [vmem:[%s1270 + $0x90] sm:$0xf]
      %v8091 = vld [vmem:[%s1270 + $0x9c] sm:$0xf]
      %v8092 = vld [vmem:[%s1270 + $0xa8] sm:$0xf]
      %v8093 = vld [vmem:[%s1270 + $0xb4] sm:$0xf]
      %v8095 = vshrl.u32 %v8078, 16
      %v8097 = vrot.slane %v8095, 4
      %v8098 = vshll.u32 %v8078, 16
      %v8100 = vrot.slane %v8098, 5
      %v8101 = vor.u32 %v8097, %v8100
      %v8102 = vrot.slane %v8101, 4
      %v8103 = vrot.slane %v1332, 5
      %v8104 = vsel %vm7194, %v8102, %v8103
      %v8105 = vrot.slane %v1329, 4
      %v8106 = vor.u32 %v8105, %v8103
      %v8107 = vrot.slane %v8106, 4
      %v8109 = vshll.u32 %v5159, 16
      %v8111 = vrot.slane %v8109, 5
      %v8112 = vsel %vm7194, %v8107, %v8111
      %v8114 = vshrl.u32 %v8079, 16
      %v8116 = vrot.slane %v8114, 4
      %v8117 = vshll.u32 %v8079, 16
      %v8119 = vrot.slane %v8117, 5
      %v8120 = vor.u32 %v8116, %v8119
      %v8121 = vrot.slane %v8120, 4
      %v8122 = vrot.slane %v1360, 5
      %v8123 = vsel %vm7194, %v8121, %v8122
      %v8124 = vrot.slane %v1357, 4
      %v8125 = vor.u32 %v8124, %v8122
      %v8126 = vrot.slane %v8125, 4
      %v8128 = vshll.u32 %v5160, 16
      %v8130 = vrot.slane %v8128, 5
      %v8131 = vsel %vm7194, %v8126, %v8130
      %v8133 = vshrl.u32 %v8080, 16
      %v8135 = vrot.slane %v8133, 4
      %v8136 = vshll.u32 %v8080, 16
      %v8138 = vrot.slane %v8136, 5
      %v8139 = vor.u32 %v8135, %v8138
      %v8140 = vrot.slane %v8139, 4
      %v8141 = vrot.slane %v1388, 5
      %v8142 = vsel %vm7194, %v8140, %v8141
      %v8143 = vrot.slane %v1385, 4
      %v8144 = vor.u32 %v8143, %v8141
      %v8145 = vrot.slane %v8144, 4
      %v8147 = vshll.u32 %v5161, 16
      %v8149 = vrot.slane %v8147, 5
      %v8150 = vsel %vm7194, %v8145, %v8149
      %v8152 = vshrl.u32 %v8081, 16
      %v8154 = vrot.slane %v8152, 4
      %v8155 = vshll.u32 %v8081, 16
      %v8157 = vrot.slane %v8155, 5
      %v8158 = vor.u32 %v8154, %v8157
      %v8159 = vrot.slane %v8158, 4
      %v8160 = vrot.slane %v1416, 5
      %v8161 = vsel %vm7194, %v8159, %v8160
      %v8162 = vrot.slane %v1413, 4
      %v8163 = vor.u32 %v8162, %v8160
      %v8164 = vrot.slane %v8163, 4
      %v8166 = vshll.u32 %v5162, 16
      %v8168 = vrot.slane %v8166, 5
      %v8169 = vsel %vm7194, %v8164, %v8168
      %v8171 = vshrl.u32 %v8082, 16
      %v8173 = vrot.slane %v8171, 4
      %v8174 = vshll.u32 %v8082, 16
      %v8176 = vrot.slane %v8174, 5
      %v8177 = vor.u32 %v8173, %v8176
      %v8178 = vrot.slane %v8177, 4
      %v8179 = vrot.slane %v1444, 5
      %v8180 = vsel %vm7194, %v8178, %v8179
      %v8181 = vrot.slane %v1441, 4
      %v8182 = vor.u32 %v8181, %v8179
      %v8183 = vrot.slane %v8182, 4
      %v8185 = vshll.u32 %v5163, 16
      %v8187 = vrot.slane %v8185, 5
      %v8188 = vsel %vm7194, %v8183, %v8187
      %v8190 = vshrl.u32 %v8083, 16
      %v8192 = vrot.slane %v8190, 4
      %v8193 = vshll.u32 %v8083, 16
      %v8195 = vrot.slane %v8193, 5
      %v8196 = vor.u32 %v8192, %v8195
      %v8197 = vrot.slane %v8196, 4
      %v8198 = vrot.slane %v1472, 5
      %v8199 = vsel %vm7194, %v8197, %v8198
      %v8200 = vrot.slane %v1469, 4
      %v8201 = vor.u32 %v8200, %v8198
      %v8202 = vrot.slane %v8201, 4
      %v8204 = vshll.u32 %v5164, 16
      %v8206 = vrot.slane %v8204, 5
      %v8207 = vsel %vm7194, %v8202, %v8206
      %v8209 = vshrl.u32 %v8084, 16
      %v8211 = vrot.slane %v8209, 4
      %v8212 = vshll.u32 %v8084, 16
      %v8214 = vrot.slane %v8212, 5
      %v8215 = vor.u32 %v8211, %v8214
      %v8216 = vrot.slane %v8215, 4
      %v8217 = vrot.slane %v1500, 5
      %v8218 = vsel %vm7194, %v8216, %v8217
      %v8219 = vrot.slane %v1497, 4
      %v8220 = vor.u32 %v8219, %v8217
      %v8221 = vrot.slane %v8220, 4
      %v8223 = vshll.u32 %v5165, 16
      %v8225 = vrot.slane %v8223, 5
      %v8226 = vsel %vm7194, %v8221, %v8225
      %v8228 = vshrl.u32 %v8085, 16
      %v8230 = vrot.slane %v8228, 4
      %v8231 = vshll.u32 %v8085, 16
      %v8233 = vrot.slane %v8231, 5
      %v8234 = vor.u32 %v8230, %v8233
      %v8235 = vrot.slane %v8234, 4
      %v8236 = vrot.slane %v1528, 5
      %v8237 = vsel %vm7194, %v8235, %v8236
      %v8238 = vrot.slane %v1525, 4
      %v8239 = vor.u32 %v8238, %v8236
      %v8240 = vrot.slane %v8239, 4
      %v8242 = vshll.u32 %v5166, 16
      %v8244 = vrot.slane %v8242, 5
      %v8245 = vsel %vm7194, %v8240, %v8244
      %v8247 = vshrl.u32 %v8086, 16
      %v8249 = vrot.slane %v8247, 4
      %v8250 = vshll.u32 %v8086, 16
      %v8252 = vrot.slane %v8250, 5
      %v8253 = vor.u32 %v8249, %v8252
      %v8254 = vrot.slane %v8253, 4
      %v8255 = vrot.slane %v1556, 5
      %v8256 = vsel %vm7194, %v8254, %v8255
      %v8257 = vrot.slane %v1553, 4
      %v8258 = vor.u32 %v8257, %v8255
      %v8259 = vrot.slane %v8258, 4
      %v8261 = vshll.u32 %v5167, 16
      %v8263 = vrot.slane %v8261, 5
      %v8264 = vsel %vm7194, %v8259, %v8263
      %v8266 = vshrl.u32 %v8087, 16
      %v8268 = vrot.slane %v8266, 4
      %v8269 = vshll.u32 %v8087, 16
      %v8271 = vrot.slane %v8269, 5
      %v8272 = vor.u32 %v8268, %v8271
      %v8273 = vrot.slane %v8272, 4
      %v8274 = vrot.slane %v1584, 5
      %v8275 = vsel %vm7194, %v8273, %v8274
      %v8276 = vrot.slane %v1581, 4
      %v8277 = vor.u32 %v8276, %v8274
      %v8278 = vrot.slane %v8277, 4
      %v8280 = vshll.u32 %v5168, 16
      %v8282 = vrot.slane %v8280, 5
      %v8283 = vsel %vm7194, %v8278, %v8282
      %v8285 = vshrl.u32 %v8088, 16
      %v8287 = vrot.slane %v8285, 4
      %v8288 = vshll.u32 %v8088, 16
      %v8290 = vrot.slane %v8288, 5
      %v8291 = vor.u32 %v8287, %v8290
      %v8292 = vrot.slane %v8291, 4
      %v8293 = vrot.slane %v1612, 5
      %v8294 = vsel %vm7194, %v8292, %v8293
      %v8295 = vrot.slane %v1609, 4
      %v8296 = vor.u32 %v8295, %v8293
      %v8297 = vrot.slane %v8296, 4
      %v8299 = vshll.u32 %v5169, 16
      %v8301 = vrot.slane %v8299, 5
      %v8302 = vsel %vm7194, %v8297, %v8301
      %v8304 = vshrl.u32 %v8089, 16
      %v8306 = vrot.slane %v8304, 4
      %v8307 = vshll.u32 %v8089, 16
      %v8309 = vrot.slane %v8307, 5
      %v8310 = vor.u32 %v8306, %v8309
      %v8311 = vrot.slane %v8310, 4
      %v8312 = vrot.slane %v1640, 5
      %v8313 = vsel %vm7194, %v8311, %v8312
      %v8314 = vrot.slane %v1637, 4
      %v8315 = vor.u32 %v8314, %v8312
      %v8316 = vrot.slane %v8315, 4
      %v8318 = vshll.u32 %v5170, 16
      %v8320 = vrot.slane %v8318, 5
      %v8321 = vsel %vm7194, %v8316, %v8320
      %v8323 = vshrl.u32 %v8090, 16
      %v8325 = vrot.slane %v8323, 4
      %v8326 = vshll.u32 %v8090, 16
      %v8328 = vrot.slane %v8326, 5
      %v8329 = vor.u32 %v8325, %v8328
      %v8330 = vrot.slane %v8329, 4
      %v8331 = vrot.slane %v1668, 5
      %v8332 = vsel %vm7194, %v8330, %v8331
      %v8333 = vrot.slane %v1665, 4
      %v8334 = vor.u32 %v8333, %v8331
      %v8335 = vrot.slane %v8334, 4
      %v8337 = vshll.u32 %v5171, 16
      %v8339 = vrot.slane %v8337, 5
      %v8340 = vsel %vm7194, %v8335, %v8339
      %v8342 = vshrl.u32 %v8091, 16
      %v8344 = vrot.slane %v8342, 4
      %v8345 = vshll.u32 %v8091, 16
      %v8347 = vrot.slane %v8345, 5
      %v8348 = vor.u32 %v8344, %v8347
      %v8349 = vrot.slane %v8348, 4
      %v8350 = vrot.slane %v1696, 5
      %v8351 = vsel %vm7194, %v8349, %v8350
      %v8352 = vrot.slane %v1693, 4
      %v8353 = vor.u32 %v8352, %v8350
      %v8354 = vrot.slane %v8353, 4
      %v8356 = vshll.u32 %v5172, 16
      %v8358 = vrot.slane %v8356, 5
      %v8359 = vsel %vm7194, %v8354, %v8358
      %v8361 = vshrl.u32 %v8092, 16
      %v8363 = vrot.slane %v8361, 4
      %v8364 = vshll.u32 %v8092, 16
      %v8366 = vrot.slane %v8364, 5
      %v8367 = vor.u32 %v8363, %v8366
      %v8368 = vrot.slane %v8367, 4
      %v8369 = vrot.slane %v1724, 5
      %v8370 = vsel %vm7194, %v8368, %v8369
      %v8371 = vrot.slane %v1721, 4
      %v8372 = vor.u32 %v8371, %v8369
      %v8373 = vrot.slane %v8372, 4
      %v8375 = vshll.u32 %v5173, 16
      %v8377 = vrot.slane %v8375, 5
      %v8378 = vsel %vm7194, %v8373, %v8377
      %v8380 = vshrl.u32 %v8093, 16
      %v8382 = vrot.slane %v8380, 4
      %v8383 = vshll.u32 %v8093, 16
      %v8385 = vrot.slane %v8383, 5
      %v8386 = vor.u32 %v8382, %v8385
      %v8387 = vrot.slane %v8386, 4
      %v8388 = vrot.slane %v1752, 5
      %v8389 = vsel %vm7194, %v8387, %v8388
      %v8390 = vrot.slane %v1749, 4
      %v8391 = vor.u32 %v8390, %v8388
      %v8392 = vrot.slane %v8391, 4
      %v8394 = vshll.u32 %v5174, 16
      %v8396 = vrot.slane %v8394, 5
      %v8397 = vsel %vm7194, %v8392, %v8396
      %v8398 = vld [vmem:[%s1270 + $0x8] sm:$0xf]
      %v8399 = vld [vmem:[%s1270 + $0x14] sm:$0xf]
      %v8400 = vld [vmem:[%s1270 + $0x20] sm:$0xf]
      %v8401 = vld [vmem:[%s1270 + $0x2c] sm:$0xf]
      %v8402 = vld [vmem:[%s1270 + $0x38] sm:$0xf]
      %v8403 = vld [vmem:[%s1270 + $0x44] sm:$0xf]
      %v8404 = vld [vmem:[%s1270 + $0x50] sm:$0xf]
      %v8405 = vld [vmem:[%s1270 + $0x5c] sm:$0xf]
      %v8406 = vld [vmem:[%s1270 + $0x68] sm:$0xf]
      %v8407 = vld [vmem:[%s1270 + $0x74] sm:$0xf]
      %v8408 = vld [vmem:[%s1270 + $0x80] sm:$0xf]
      %v8409 = vld [vmem:[%s1270 + $0x8c] sm:$0xf]
      %v8410 = vld [vmem:[%s1270 + $0x98] sm:$0xf]
      %v8411 = vld [vmem:[%s1270 + $0xa4] sm:$0xf]
      %v8412 = vld [vmem:[%s1270 + $0xb0] sm:$0xf]
      %v8413 = vld [vmem:[%s1270 + $0xbc] sm:$0xf]
      %v8415 = vshrl.u32 %v5319, 16
      %v8417 = vrot.slane %v8415, 7
      %v8418 = vrot.slane %v8417, 4
      %v8419 = vrot.slane %v1329, 7
      %v8420 = vor.u32 %v8419, %v1332
      %v8421 = vsel %vm7805, %v8418, %v8420
      %v8422 = vrot.slane %v8419, 4
      %v8424 = vshrl.u32 %v8398, 16
      %v8426 = vrot.slane %v8424, 7
      %v8427 = vshll.u32 %v8398, 16
      %v8429 = vor.u32 %v8426, %v8427
      %v8430 = vsel %vm7805, %v8422, %v8429
      %v8432 = vshrl.u32 %v5320, 16
      %v8434 = vrot.slane %v8432, 7
      %v8435 = vrot.slane %v8434, 4
      %v8436 = vrot.slane %v1357, 7
      %v8437 = vor.u32 %v8436, %v1360
      %v8438 = vsel %vm7805, %v8435, %v8437
      %v8439 = vrot.slane %v8436, 4
      %v8441 = vshrl.u32 %v8399, 16
      %v8443 = vrot.slane %v8441, 7
      %v8444 = vshll.u32 %v8399, 16
      %v8446 = vor.u32 %v8443, %v8444
      %v8447 = vsel %vm7805, %v8439, %v8446
      %v8449 = vshrl.u32 %v5321, 16
      %v8451 = vrot.slane %v8449, 7
      %v8452 = vrot.slane %v8451, 4
      %v8453 = vrot.slane %v1385, 7
      %v8454 = vor.u32 %v8453, %v1388
      %v8455 = vsel %vm7805, %v8452, %v8454
      %v8456 = vrot.slane %v8453, 4
      %v8458 = vshrl.u32 %v8400, 16
      %v8460 = vrot.slane %v8458, 7
      %v8461 = vshll.u32 %v8400, 16
      %v8463 = vor.u32 %v8460, %v8461
      %v8464 = vsel %vm7805, %v8456, %v8463
      %v8466 = vshrl.u32 %v5322, 16
      %v8468 = vrot.slane %v8466, 7
      %v8469 = vrot.slane %v8468, 4
      %v8470 = vrot.slane %v1413, 7
      %v8471 = vor.u32 %v8470, %v1416
      %v8472 = vsel %vm7805, %v8469, %v8471
      %v8473 = vrot.slane %v8470, 4
      %v8475 = vshrl.u32 %v8401, 16
      %v8477 = vrot.slane %v8475, 7
      %v8478 = vshll.u32 %v8401, 16
      %v8480 = vor.u32 %v8477, %v8478
      %v8481 = vsel %vm7805, %v8473, %v8480
      %v8483 = vshrl.u32 %v5323, 16
      %v8485 = vrot.slane %v8483, 7
      %v8486 = vrot.slane %v8485, 4
      %v8487 = vrot.slane %v1441, 7
      %v8488 = vor.u32 %v8487, %v1444
      %v8489 = vsel %vm7805, %v8486, %v8488
      %v8490 = vrot.slane %v8487, 4
      %v8492 = vshrl.u32 %v8402, 16
      %v8494 = vrot.slane %v8492, 7
      %v8495 = vshll.u32 %v8402, 16
      %v8497 = vor.u32 %v8494, %v8495
      %v8498 = vsel %vm7805, %v8490, %v8497
      %v8500 = vshrl.u32 %v5324, 16
      %v8502 = vrot.slane %v8500, 7
      %v8503 = vrot.slane %v8502, 4
      %v8504 = vrot.slane %v1469, 7
      %v8505 = vor.u32 %v8504, %v1472
      %v8506 = vsel %vm7805, %v8503, %v8505
      %v8507 = vrot.slane %v8504, 4
      %v8509 = vshrl.u32 %v8403, 16
      %v8511 = vrot.slane %v8509, 7
      %v8512 = vshll.u32 %v8403, 16
      %v8514 = vor.u32 %v8511, %v8512
      %v8515 = vsel %vm7805, %v8507, %v8514
      %v8517 = vshrl.u32 %v5325, 16
      %v8519 = vrot.slane %v8517, 7
      %v8520 = vrot.slane %v8519, 4
      %v8521 = vrot.slane %v1497, 7
      %v8522 = vor.u32 %v8521, %v1500
      %v8523 = vsel %vm7805, %v8520, %v8522
      %v8524 = vrot.slane %v8521, 4
      %v8526 = vshrl.u32 %v8404, 16
      %v8528 = vrot.slane %v8526, 7
      %v8529 = vshll.u32 %v8404, 16
      %v8531 = vor.u32 %v8528, %v8529
      %v8532 = vsel %vm7805, %v8524, %v8531
      %v8534 = vshrl.u32 %v5326, 16
      %v8536 = vrot.slane %v8534, 7
      %v8537 = vrot.slane %v8536, 4
      %v8538 = vrot.slane %v1525, 7
      %v8539 = vor.u32 %v8538, %v1528
      %v8540 = vsel %vm7805, %v8537, %v8539
      %v8541 = vrot.slane %v8538, 4
      %v8543 = vshrl.u32 %v8405, 16
      %v8545 = vrot.slane %v8543, 7
      %v8546 = vshll.u32 %v8405, 16
      %v8548 = vor.u32 %v8545, %v8546
      %v8549 = vsel %vm7805, %v8541, %v8548
      %v8551 = vshrl.u32 %v5327, 16
      %v8553 = vrot.slane %v8551, 7
      %v8554 = vrot.slane %v8553, 4
      %v8555 = vrot.slane %v1553, 7
      %v8556 = vor.u32 %v8555, %v1556
      %v8557 = vsel %vm7805, %v8554, %v8556
      %v8558 = vrot.slane %v8555, 4
      %v8560 = vshrl.u32 %v8406, 16
      %v8562 = vrot.slane %v8560, 7
      %v8563 = vshll.u32 %v8406, 16
      %v8565 = vor.u32 %v8562, %v8563
      %v8566 = vsel %vm7805, %v8558, %v8565
      %v8568 = vshrl.u32 %v5328, 16
      %v8570 = vrot.slane %v8568, 7
      %v8571 = vrot.slane %v8570, 4
      %v8572 = vrot.slane %v1581, 7
      %v8573 = vor.u32 %v8572, %v1584
      %v8574 = vsel %vm7805, %v8571, %v8573
      %v8575 = vrot.slane %v8572, 4
      %v8577 = vshrl.u32 %v8407, 16
      %v8579 = vrot.slane %v8577, 7
      %v8580 = vshll.u32 %v8407, 16
      %v8582 = vor.u32 %v8579, %v8580
      %v8583 = vsel %vm7805, %v8575, %v8582
      %v8585 = vshrl.u32 %v5329, 16
      %v8587 = vrot.slane %v8585, 7
      %v8588 = vrot.slane %v8587, 4
      %v8589 = vrot.slane %v1609, 7
      %v8590 = vor.u32 %v8589, %v1612
      %v8591 = vsel %vm7805, %v8588, %v8590
      %v8592 = vrot.slane %v8589, 4
      %v8594 = vshrl.u32 %v8408, 16
      %v8596 = vrot.slane %v8594, 7
      %v8597 = vshll.u32 %v8408, 16
      %v8599 = vor.u32 %v8596, %v8597
      %v8600 = vsel %vm7805, %v8592, %v8599
      %v8602 = vshrl.u32 %v5330, 16
      %v8604 = vrot.slane %v8602, 7
      %v8605 = vrot.slane %v8604, 4
      %v8606 = vrot.slane %v1637, 7
      %v8607 = vor.u32 %v8606, %v1640
      %v8608 = vsel %vm7805, %v8605, %v8607
      %v8609 = vrot.slane %v8606, 4
      %v8611 = vshrl.u32 %v8409, 16
      %v8613 = vrot.slane %v8611, 7
      %v8614 = vshll.u32 %v8409, 16
      %v8616 = vor.u32 %v8613, %v8614
      %v8617 = vsel %vm7805, %v8609, %v8616
      %v8619 = vshrl.u32 %v5331, 16
      %v8621 = vrot.slane %v8619, 7
      %v8622 = vrot.slane %v8621, 4
      %v8623 = vrot.slane %v1665, 7
      %v8624 = vor.u32 %v8623, %v1668
      %v8625 = vsel %vm7805, %v8622, %v8624
      %v8626 = vrot.slane %v8623, 4
      %v8628 = vshrl.u32 %v8410, 16
      %v8630 = vrot.slane %v8628, 7
      %v8631 = vshll.u32 %v8410, 16
      %v8633 = vor.u32 %v8630, %v8631
      %v8634 = vsel %vm7805, %v8626, %v8633
      %v8636 = vshrl.u32 %v5332, 16
      %v8638 = vrot.slane %v8636, 7
      %v8639 = vrot.slane %v8638, 4
      %v8640 = vrot.slane %v1693, 7
      %v8641 = vor.u32 %v8640, %v1696
      %v8642 = vsel %vm7805, %v8639, %v8641
      %v8643 = vrot.slane %v8640, 4
      %v8645 = vshrl.u32 %v8411, 16
      %v8647 = vrot.slane %v8645, 7
      %v8648 = vshll.u32 %v8411, 16
      %v8650 = vor.u32 %v8647, %v8648
      %v8651 = vsel %vm7805, %v8643, %v8650
      %v8653 = vshrl.u32 %v5333, 16
      %v8655 = vrot.slane %v8653, 7
      %v8656 = vrot.slane %v8655, 4
      %v8657 = vrot.slane %v1721, 7
      %v8658 = vor.u32 %v8657, %v1724
      %v8659 = vsel %vm7805, %v8656, %v8658
      %v8660 = vrot.slane %v8657, 4
      %v8662 = vshrl.u32 %v8412, 16
      %v8664 = vrot.slane %v8662, 7
      %v8665 = vshll.u32 %v8412, 16
      %v8667 = vor.u32 %v8664, %v8665
      %v8668 = vsel %vm7805, %v8660, %v8667
      %v8670 = vshrl.u32 %v5334, 16
      %v8672 = vrot.slane %v8670, 7
      %v8673 = vrot.slane %v8672, 4
      %v8674 = vrot.slane %v1749, 7
      %v8675 = vor.u32 %v8674, %v1752
      %v8676 = vsel %vm7805, %v8673, %v8675
      %v8677 = vrot.slane %v8674, 4
      %v8679 = vshrl.u32 %v8413, 16
      %v8681 = vrot.slane %v8679, 7
      %v8682 = vshll.u32 %v8413, 16
      %v8684 = vor.u32 %v8681, %v8682
      %v8685 = vsel %vm7805, %v8677, %v8684
      %s8686 = sadd.s32 %s197, 7
      %s8687 = smul.u32 %s8686, 3
      %s8688 = smul.addr %s8687, 4
      %s8689 = scalar_lea.vmem %s184, %s8688
      %v8690 = vld [vmem:[%s8689] sm:$0xf]
      %v8691 = vld [vmem:[%s8689 + $0x4] sm:$0xf]
      %v8692 = vld [vmem:[%s8689 + $0x8] sm:$0x1]
      %v8693 = vld [vmem:[%s8689 + $0xc] sm:$0xf]
      %v8694 = vld [vmem:[%s8689 + $0x10] sm:$0xf]
      %v8695 = vld [vmem:[%s8689 + $0x14] sm:$0x1]
      %v8696 = vld [vmem:[%s8689 + $0x18] sm:$0xf]
      %v8697 = vld [vmem:[%s8689 + $0x1c] sm:$0xf]
      %v8698 = vld [vmem:[%s8689 + $0x20] sm:$0x1]
      %v8699 = vld [vmem:[%s8689 + $0x24] sm:$0xf]
      %v8700 = vld [vmem:[%s8689 + $0x28] sm:$0xf]
      %v8701 = vld [vmem:[%s8689 + $0x2c] sm:$0x1]
      %v8702 = vld [vmem:[%s8689 + $0x30] sm:$0xf]
      %v8703 = vld [vmem:[%s8689 + $0x34] sm:$0xf]
      %v8704 = vld [vmem:[%s8689 + $0x38] sm:$0x1]
      %v8705 = vld [vmem:[%s8689 + $0x3c] sm:$0xf]
      %v8706 = vld [vmem:[%s8689 + $0x40] sm:$0xf]
      %v8707 = vld [vmem:[%s8689 + $0x44] sm:$0x1]
      %v8708 = vld [vmem:[%s8689 + $0x48] sm:$0xf]
      %v8709 = vld [vmem:[%s8689 + $0x4c] sm:$0xf]
      %v8710 = vld [vmem:[%s8689 + $0x50] sm:$0x1]
      %v8711 = vld [vmem:[%s8689 + $0x54] sm:$0xf]
      %v8712 = vld [vmem:[%s8689 + $0x58] sm:$0xf]
      %v8713 = vld [vmem:[%s8689 + $0x5c] sm:$0x1]
      %v8714 = vld [vmem:[%s8689 + $0x60] sm:$0xf]
      %v8715 = vld [vmem:[%s8689 + $0x64] sm:$0xf]
      %v8716 = vld [vmem:[%s8689 + $0x68] sm:$0x1]
      %v8717 = vld [vmem:[%s8689 + $0x6c] sm:$0xf]
      %v8718 = vld [vmem:[%s8689 + $0x70] sm:$0xf]
      %v8719 = vld [vmem:[%s8689 + $0x74] sm:$0x1]
      %v8720 = vld [vmem:[%s8689 + $0x78] sm:$0xf]
      %v8721 = vld [vmem:[%s8689 + $0x7c] sm:$0xf]
      %v8722 = vld [vmem:[%s8689 + $0x80] sm:$0x1]
      %v8723 = vld [vmem:[%s8689 + $0x84] sm:$0xf]
      %v8724 = vld [vmem:[%s8689 + $0x88] sm:$0xf]
      %v8725 = vld [vmem:[%s8689 + $0x8c] sm:$0x1]
      %v8726 = vld [vmem:[%s8689 + $0x90] sm:$0xf]
      %v8727 = vld [vmem:[%s8689 + $0x94] sm:$0xf]
      %v8728 = vld [vmem:[%s8689 + $0x98] sm:$0x1]
      %v8729 = vld [vmem:[%s8689 + $0x9c] sm:$0xf]
      %v8730 = vld [vmem:[%s8689 + $0xa0] sm:$0xf]
      %v8731 = vld [vmem:[%s8689 + $0xa4] sm:$0x1]
      %v8732 = vld [vmem:[%s8689 + $0xa8] sm:$0xf]
      %v8733 = vld [vmem:[%s8689 + $0xac] sm:$0xf]
      %v8734 = vld [vmem:[%s8689 + $0xb0] sm:$0x1]
      %v8735 = vld [vmem:[%s8689 + $0xb4] sm:$0xf]
      %v8736 = vld [vmem:[%s8689 + $0xb8] sm:$0xf]
      %v8737 = vld [vmem:[%s8689 + $0xbc] sm:$0x1]
      %v8739 = vshrl.u32 %v8690, 16
      %v8741 = vrot.slane %v8739, 4
      %v8742 = vshll.u32 %v8690, 16
      %v8744 = vrot.slane %v8742, 5
      %v8745 = vor.u32 %v8741, %v8744
      %v8746 = vrot.slane %v8745, 4
      %v8748 = vshll.u32 %v8691, 16
      %v8750 = vrot.slane %v8748, 5
      %v8751 = vsel %vm7194, %v8746, %v8750
      %v8752 = vshrl.u32 %v8691, 16
      %v8754 = vrot.slane %v8752, 4
      %v8755 = vor.u32 %v8754, %v8750
      %v8756 = vrot.slane %v8755, 4
      %v8758 = vshll.u32 %v8692, 16
      %v8760 = vrot.slane %v8758, 5
      %v8761 = vsel %vm7194, %v8756, %v8760
      %v8763 = vshrl.u32 %v8693, 16
      %v8765 = vrot.slane %v8763, 4
      %v8766 = vshll.u32 %v8693, 16
      %v8768 = vrot.slane %v8766, 5
      %v8769 = vor.u32 %v8765, %v8768
      %v8770 = vrot.slane %v8769, 4
      %v8772 = vshll.u32 %v8694, 16
      %v8774 = vrot.slane %v8772, 5
      %v8775 = vsel %vm7194, %v8770, %v8774
      %v8776 = vshrl.u32 %v8694, 16
      %v8778 = vrot.slane %v8776, 4
      %v8779 = vor.u32 %v8778, %v8774
      %v8780 = vrot.slane %v8779, 4
      %v8782 = vshll.u32 %v8695, 16
      %v8784 = vrot.slane %v8782, 5
      %v8785 = vsel %vm7194, %v8780, %v8784
      %v8787 = vshrl.u32 %v8696, 16
      %v8789 = vrot.slane %v8787, 4
      %v8790 = vshll.u32 %v8696, 16
      %v8792 = vrot.slane %v8790, 5
      %v8793 = vor.u32 %v8789, %v8792
      %v8794 = vrot.slane %v8793, 4
      %v8796 = vshll.u32 %v8697, 16
      %v8798 = vrot.slane %v8796, 5
      %v8799 = vsel %vm7194, %v8794, %v8798
      %v8800 = vshrl.u32 %v8697, 16
      %v8802 = vrot.slane %v8800, 4
      %v8803 = vor.u32 %v8802, %v8798
      %v8804 = vrot.slane %v8803, 4
      %v8806 = vshll.u32 %v8698, 16
      %v8808 = vrot.slane %v8806, 5
      %v8809 = vsel %vm7194, %v8804, %v8808
      %v8811 = vshrl.u32 %v8699, 16
      %v8813 = vrot.slane %v8811, 4
      %v8814 = vshll.u32 %v8699, 16
      %v8816 = vrot.slane %v8814, 5
      %v8817 = vor.u32 %v8813, %v8816
      %v8818 = vrot.slane %v8817, 4
      %v8820 = vshll.u32 %v8700, 16
      %v8822 = vrot.slane %v8820, 5
      %v8823 = vsel %vm7194, %v8818, %v8822
      %v8824 = vshrl.u32 %v8700, 16
      %v8826 = vrot.slane %v8824, 4
      %v8827 = vor.u32 %v8826, %v8822
      %v8828 = vrot.slane %v8827, 4
      %v8830 = vshll.u32 %v8701, 16
      %v8832 = vrot.slane %v8830, 5
      %v8833 = vsel %vm7194, %v8828, %v8832
      %v8835 = vshrl.u32 %v8702, 16
      %v8837 = vrot.slane %v8835, 4
      %v8838 = vshll.u32 %v8702, 16
      %v8840 = vrot.slane %v8838, 5
      %v8841 = vor.u32 %v8837, %v8840
      %v8842 = vrot.slane %v8841, 4
      %v8844 = vshll.u32 %v8703, 16
      %v8846 = vrot.slane %v8844, 5
      %v8847 = vsel %vm7194, %v8842, %v8846
      %v8848 = vshrl.u32 %v8703, 16
      %v8850 = vrot.slane %v8848, 4
      %v8851 = vor.u32 %v8850, %v8846
      %v8852 = vrot.slane %v8851, 4
      %v8854 = vshll.u32 %v8704, 16
      %v8856 = vrot.slane %v8854, 5
      %v8857 = vsel %vm7194, %v8852, %v8856
      %v8859 = vshrl.u32 %v8705, 16
      %v8861 = vrot.slane %v8859, 4
      %v8862 = vshll.u32 %v8705, 16
      %v8864 = vrot.slane %v8862, 5
      %v8865 = vor.u32 %v8861, %v8864
      %v8866 = vrot.slane %v8865, 4
      %v8868 = vshll.u32 %v8706, 16
      %v8870 = vrot.slane %v8868, 5
      %v8871 = vsel %vm7194, %v8866, %v8870
      %v8872 = vshrl.u32 %v8706, 16
      %v8874 = vrot.slane %v8872, 4
      %v8875 = vor.u32 %v8874, %v8870
      %v8876 = vrot.slane %v8875, 4
      %v8878 = vshll.u32 %v8707, 16
      %v8880 = vrot.slane %v8878, 5
      %v8881 = vsel %vm7194, %v8876, %v8880
      %v8883 = vshrl.u32 %v8708, 16
      %v8885 = vrot.slane %v8883, 4
      %v8886 = vshll.u32 %v8708, 16
      %v8888 = vrot.slane %v8886, 5
      %v8889 = vor.u32 %v8885, %v8888
      %v8890 = vrot.slane %v8889, 4
      %v8892 = vshll.u32 %v8709, 16
      %v8894 = vrot.slane %v8892, 5
      %v8895 = vsel %vm7194, %v8890, %v8894
      %v8896 = vshrl.u32 %v8709, 16
      %v8898 = vrot.slane %v8896, 4
      %v8899 = vor.u32 %v8898, %v8894
      %v8900 = vrot.slane %v8899, 4
      %v8902 = vshll.u32 %v8710, 16
      %v8904 = vrot.slane %v8902, 5
      %v8905 = vsel %vm7194, %v8900, %v8904
      %v8907 = vshrl.u32 %v8711, 16
      %v8909 = vrot.slane %v8907, 4
      %v8910 = vshll.u32 %v8711, 16
      %v8912 = vrot.slane %v8910, 5
      %v8913 = vor.u32 %v8909, %v8912
      %v8914 = vrot.slane %v8913, 4
      %v8916 = vshll.u32 %v8712, 16
      %v8918 = vrot.slane %v8916, 5
      %v8919 = vsel %vm7194, %v8914, %v8918
      %v8920 = vshrl.u32 %v8712, 16
      %v8922 = vrot.slane %v8920, 4
      %v8923 = vor.u32 %v8922, %v8918
      %v8924 = vrot.slane %v8923, 4
      %v8926 = vshll.u32 %v8713, 16
      %v8928 = vrot.slane %v8926, 5
      %v8929 = vsel %vm7194, %v8924, %v8928
      %v8931 = vshrl.u32 %v8714, 16
      %v8933 = vrot.slane %v8931, 4
      %v8934 = vshll.u32 %v8714, 16
      %v8936 = vrot.slane %v8934, 5
      %v8937 = vor.u32 %v8933, %v8936
      %v8938 = vrot.slane %v8937, 4
      %v8940 = vshll.u32 %v8715, 16
      %v8942 = vrot.slane %v8940, 5
      %v8943 = vsel %vm7194, %v8938, %v8942
      %v8944 = vshrl.u32 %v8715, 16
      %v8946 = vrot.slane %v8944, 4
      %v8947 = vor.u32 %v8946, %v8942
      %v8948 = vrot.slane %v8947, 4
      %v8950 = vshll.u32 %v8716, 16
      %v8952 = vrot.slane %v8950, 5
      %v8953 = vsel %vm7194, %v8948, %v8952
      %v8955 = vshrl.u32 %v8717, 16
      %v8957 = vrot.slane %v8955, 4
      %v8958 = vshll.u32 %v8717, 16
      %v8960 = vrot.slane %v8958, 5
      %v8961 = vor.u32 %v8957, %v8960
      %v8962 = vrot.slane %v8961, 4
      %v8964 = vshll.u32 %v8718, 16
      %v8966 = vrot.slane %v8964, 5
      %v8967 = vsel %vm7194, %v8962, %v8966
      %v8968 = vshrl.u32 %v8718, 16
      %v8970 = vrot.slane %v8968, 4
      %v8971 = vor.u32 %v8970, %v8966
      %v8972 = vrot.slane %v8971, 4
      %v8974 = vshll.u32 %v8719, 16
      %v8976 = vrot.slane %v8974, 5
      %v8977 = vsel %vm7194, %v8972, %v8976
      %v8979 = vshrl.u32 %v8720, 16
      %v8981 = vrot.slane %v8979, 4
      %v8982 = vshll.u32 %v8720, 16
      %v8984 = vrot.slane %v8982, 5
      %v8985 = vor.u32 %v8981, %v8984
      %v8986 = vrot.slane %v8985, 4
      %v8988 = vshll.u32 %v8721, 16
      %v8990 = vrot.slane %v8988, 5
      %v8991 = vsel %vm7194, %v8986, %v8990
      %v8992 = vshrl.u32 %v8721, 16
      %v8994 = vrot.slane %v8992, 4
      %v8995 = vor.u32 %v8994, %v8990
      %v8996 = vrot.slane %v8995, 4
      %v8998 = vshll.u32 %v8722, 16
      %v9000 = vrot.slane %v8998, 5
      %v9001 = vsel %vm7194, %v8996, %v9000
      %v9003 = vshrl.u32 %v8723, 16
      %v9005 = vrot.slane %v9003, 4
      %v9006 = vshll.u32 %v8723, 16
      %v9008 = vrot.slane %v9006, 5
      %v9009 = vor.u32 %v9005, %v9008
      %v9010 = vrot.slane %v9009, 4
      %v9012 = vshll.u32 %v8724, 16
      %v9014 = vrot.slane %v9012, 5
      %v9015 = vsel %vm7194, %v9010, %v9014
      %v9016 = vshrl.u32 %v8724, 16
      %v9018 = vrot.slane %v9016, 4
      %v9019 = vor.u32 %v9018, %v9014
      %v9020 = vrot.slane %v9019, 4
      %v9022 = vshll.u32 %v8725, 16
      %v9024 = vrot.slane %v9022, 5
      %v9025 = vsel %vm7194, %v9020, %v9024
      %v9027 = vshrl.u32 %v8726, 16
      %v9029 = vrot.slane %v9027, 4
      %v9030 = vshll.u32 %v8726, 16
      %v9032 = vrot.slane %v9030, 5
      %v9033 = vor.u32 %v9029, %v9032
      %v9034 = vrot.slane %v9033, 4
      %v9036 = vshll.u32 %v8727, 16
      %v9038 = vrot.slane %v9036, 5
      %v9039 = vsel %vm7194, %v9034, %v9038
      %v9040 = vshrl.u32 %v8727, 16
      %v9042 = vrot.slane %v9040, 4
      %v9043 = vor.u32 %v9042, %v9038
      %v9044 = vrot.slane %v9043, 4
      %v9046 = vshll.u32 %v8728, 16
      %v9048 = vrot.slane %v9046, 5
      %v9049 = vsel %vm7194, %v9044, %v9048
      %v9051 = vshrl.u32 %v8729, 16
      %v9053 = vrot.slane %v9051, 4
      %v9054 = vshll.u32 %v8729, 16
      %v9056 = vrot.slane %v9054, 5
      %v9057 = vor.u32 %v9053, %v9056
      %v9058 = vrot.slane %v9057, 4
      %v9060 = vshll.u32 %v8730, 16
      %v9062 = vrot.slane %v9060, 5
      %v9063 = vsel %vm7194, %v9058, %v9062
      %v9064 = vshrl.u32 %v8730, 16
      %v9066 = vrot.slane %v9064, 4
      %v9067 = vor.u32 %v9066, %v9062
      %v9068 = vrot.slane %v9067, 4
      %v9070 = vshll.u32 %v8731, 16
      %v9072 = vrot.slane %v9070, 5
      %v9073 = vsel %vm7194, %v9068, %v9072
      %v9075 = vshrl.u32 %v8732, 16
      %v9077 = vrot.slane %v9075, 4
      %v9078 = vshll.u32 %v8732, 16
      %v9080 = vrot.slane %v9078, 5
      %v9081 = vor.u32 %v9077, %v9080
      %v9082 = vrot.slane %v9081, 4
      %v9084 = vshll.u32 %v8733, 16
      %v9086 = vrot.slane %v9084, 5
      %v9087 = vsel %vm7194, %v9082, %v9086
      %v9088 = vshrl.u32 %v8733, 16
      %v9090 = vrot.slane %v9088, 4
      %v9091 = vor.u32 %v9090, %v9086
      %v9092 = vrot.slane %v9091, 4
      %v9094 = vshll.u32 %v8734, 16
      %v9096 = vrot.slane %v9094, 5
      %v9097 = vsel %vm7194, %v9092, %v9096
      %v9099 = vshrl.u32 %v8735, 16
      %v9101 = vrot.slane %v9099, 4
      %v9102 = vshll.u32 %v8735, 16
      %v9104 = vrot.slane %v9102, 5
      %v9105 = vor.u32 %v9101, %v9104
      %v9106 = vrot.slane %v9105, 4
      %v9108 = vshll.u32 %v8736, 16
      %v9110 = vrot.slane %v9108, 5
      %v9111 = vsel %vm7194, %v9106, %v9110
      %v9112 = vshrl.u32 %v8736, 16
      %v9114 = vrot.slane %v9112, 4
      %v9115 = vor.u32 %v9114, %v9110
      %v9116 = vrot.slane %v9115, 4
      %v9118 = vshll.u32 %v8737, 16
      %v9120 = vrot.slane %v9118, 5
      %v9121 = vsel %vm7194, %v9116, %v9120
      %v9122 = vld [vmem:[%s8689] sm:$0xc]
      %v9123 = vld [vmem:[%s8689 + $0x8] sm:$0x3]
      %v9124 = vld [vmem:[%s8689 + $0xc] sm:$0xc]
      %v9125 = vld [vmem:[%s8689 + $0x14] sm:$0x3]
      %v9126 = vld [vmem:[%s8689 + $0x18] sm:$0xc]
      %v9127 = vld [vmem:[%s8689 + $0x20] sm:$0x3]
      %v9128 = vld [vmem:[%s8689 + $0x24] sm:$0xc]
      %v9129 = vld [vmem:[%s8689 + $0x2c] sm:$0x3]
      %v9130 = vld [vmem:[%s8689 + $0x30] sm:$0xc]
      %v9131 = vld [vmem:[%s8689 + $0x38] sm:$0x3]
      %v9132 = vld [vmem:[%s8689 + $0x3c] sm:$0xc]
      %v9133 = vld [vmem:[%s8689 + $0x44] sm:$0x3]
      %v9134 = vld [vmem:[%s8689 + $0x48] sm:$0xc]
      %v9135 = vld [vmem:[%s8689 + $0x50] sm:$0x3]
      %v9136 = vld [vmem:[%s8689 + $0x54] sm:$0xc]
      %v9137 = vld [vmem:[%s8689 + $0x5c] sm:$0x3]
      %v9138 = vld [vmem:[%s8689 + $0x60] sm:$0xc]
      %v9139 = vld [vmem:[%s8689 + $0x68] sm:$0x3]
      %v9140 = vld [vmem:[%s8689 + $0x6c] sm:$0xc]
      %v9141 = vld [vmem:[%s8689 + $0x74] sm:$0x3]
      %v9142 = vld [vmem:[%s8689 + $0x78] sm:$0xc]
      %v9143 = vld [vmem:[%s8689 + $0x80] sm:$0x3]
      %v9144 = vld [vmem:[%s8689 + $0x84] sm:$0xc]
      %v9145 = vld [vmem:[%s8689 + $0x8c] sm:$0x3]
      %v9146 = vld [vmem:[%s8689 + $0x90] sm:$0xc]
      %v9147 = vld [vmem:[%s8689 + $0x98] sm:$0x3]
      %v9148 = vld [vmem:[%s8689 + $0x9c] sm:$0xc]
      %v9149 = vld [vmem:[%s8689 + $0xa4] sm:$0x3]
      %v9150 = vld [vmem:[%s8689 + $0xa8] sm:$0xc]
      %v9151 = vld [vmem:[%s8689 + $0xb0] sm:$0x3]
      %v9152 = vld [vmem:[%s8689 + $0xb4] sm:$0xc]
      %v9153 = vld [vmem:[%s8689 + $0xbc] sm:$0x3]
      %v9202 = vrot.slane %v9122, 6
      %v9203 = vrot.slane %v9202, 4
      %v9204 = vrot.slane %v8691, 6
      %v9205 = vsel %vm767, %v9203, %v9204
      %v9206 = vrot.slane %v9204, 4
      %v9207 = vrot.slane %v9123, 6
      %v9208 = vsel %vm767, %v9206, %v9207
      %v9209 = vrot.slane %v9124, 6
      %v9210 = vrot.slane %v9209, 4
      %v9211 = vrot.slane %v8694, 6
      %v9212 = vsel %vm767, %v9210, %v9211
      %v9213 = vrot.slane %v9211, 4
      %v9214 = vrot.slane %v9125, 6
      %v9215 = vsel %vm767, %v9213, %v9214
      %v9216 = vrot.slane %v9126, 6
      %v9217 = vrot.slane %v9216, 4
      %v9218 = vrot.slane %v8697, 6
      %v9219 = vsel %vm767, %v9217, %v9218
      %v9220 = vrot.slane %v9218, 4
      %v9221 = vrot.slane %v9127, 6
      %v9222 = vsel %vm767, %v9220, %v9221
      %v9223 = vrot.slane %v9128, 6
      %v9224 = vrot.slane %v9223, 4
      %v9225 = vrot.slane %v8700, 6
      %v9226 = vsel %vm767, %v9224, %v9225
      %v9227 = vrot.slane %v9225, 4
      %v9228 = vrot.slane %v9129, 6
      %v9229 = vsel %vm767, %v9227, %v9228
      %v9230 = vrot.slane %v9130, 6
      %v9231 = vrot.slane %v9230, 4
      %v9232 = vrot.slane %v8703, 6
      %v9233 = vsel %vm767, %v9231, %v9232
      %v9234 = vrot.slane %v9232, 4
      %v9235 = vrot.slane %v9131, 6
      %v9236 = vsel %vm767, %v9234, %v9235
      %v9237 = vrot.slane %v9132, 6
      %v9238 = vrot.slane %v9237, 4
      %v9239 = vrot.slane %v8706, 6
      %v9240 = vsel %vm767, %v9238, %v9239
      %v9241 = vrot.slane %v9239, 4
      %v9242 = vrot.slane %v9133, 6
      %v9243 = vsel %vm767, %v9241, %v9242
      %v9244 = vrot.slane %v9134, 6
      %v9245 = vrot.slane %v9244, 4
      %v9246 = vrot.slane %v8709, 6
      %v9247 = vsel %vm767, %v9245, %v9246
      %v9248 = vrot.slane %v9246, 4
      %v9249 = vrot.slane %v9135, 6
      %v9250 = vsel %vm767, %v9248, %v9249
      %v9251 = vrot.slane %v9136, 6
      %v9252 = vrot.slane %v9251, 4
      %v9253 = vrot.slane %v8712, 6
      %v9254 = vsel %vm767, %v9252, %v9253
      %v9255 = vrot.slane %v9253, 4
      %v9256 = vrot.slane %v9137, 6
      %v9257 = vsel %vm767, %v9255, %v9256
      %v9258 = vrot.slane %v9138, 6
      %v9259 = vrot.slane %v9258, 4
      %v9260 = vrot.slane %v8715, 6
      %v9261 = vsel %vm767, %v9259, %v9260
      %v9262 = vrot.slane %v9260, 4
      %v9263 = vrot.slane %v9139, 6
      %v9264 = vsel %vm767, %v9262, %v9263
      %v9265 = vrot.slane %v9140, 6
      %v9266 = vrot.slane %v9265, 4
      %v9267 = vrot.slane %v8718, 6
      %v9268 = vsel %vm767, %v9266, %v9267
      %v9269 = vrot.slane %v9267, 4
      %v9270 = vrot.slane %v9141, 6
      %v9271 = vsel %vm767, %v9269, %v9270
      %v9272 = vrot.slane %v9142, 6
      %v9273 = vrot.slane %v9272, 4
      %v9274 = vrot.slane %v8721, 6
      %v9275 = vsel %vm767, %v9273, %v9274
      %v9276 = vrot.slane %v9274, 4
      %v9277 = vrot.slane %v9143, 6
      %v9278 = vsel %vm767, %v9276, %v9277
      %v9279 = vrot.slane %v9144, 6
      %v9280 = vrot.slane %v9279, 4
      %v9281 = vrot.slane %v8724, 6
      %v9282 = vsel %vm767, %v9280, %v9281
      %v9283 = vrot.slane %v9281, 4
      %v9284 = vrot.slane %v9145, 6
      %v9285 = vsel %vm767, %v9283, %v9284
      %v9286 = vrot.slane %v9146, 6
      %v9287 = vrot.slane %v9286, 4
      %v9288 = vrot.slane %v8727, 6
      %v9289 = vsel %vm767, %v9287, %v9288
      %v9290 = vrot.slane %v9288, 4
      %v9291 = vrot.slane %v9147, 6
      %v9292 = vsel %vm767, %v9290, %v9291
      %v9293 = vrot.slane %v9148, 6
      %v9294 = vrot.slane %v9293, 4
      %v9295 = vrot.slane %v8730, 6
      %v9296 = vsel %vm767, %v9294, %v9295
      %v9297 = vrot.slane %v9295, 4
      %v9298 = vrot.slane %v9149, 6
      %v9299 = vsel %vm767, %v9297, %v9298
      %v9300 = vrot.slane %v9150, 6
      %v9301 = vrot.slane %v9300, 4
      %v9302 = vrot.slane %v8733, 6
      %v9303 = vsel %vm767, %v9301, %v9302
      %v9304 = vrot.slane %v9302, 4
      %v9305 = vrot.slane %v9151, 6
      %v9306 = vsel %vm767, %v9304, %v9305
      %v9307 = vrot.slane %v9152, 6
      %v9308 = vrot.slane %v9307, 4
      %v9309 = vrot.slane %v8736, 6
      %v9310 = vsel %vm767, %v9308, %v9309
      %v9311 = vrot.slane %v9309, 4
      %v9312 = vrot.slane %v9153, 6
      %v9313 = vsel %vm767, %v9311, %v9312
      %v9314 = vld [vmem:[%s8689] sm:$0x8]
      %v9315 = vld [vmem:[%s8689 + $0x8] sm:$0xf]
      %v9316 = vld [vmem:[%s8689 + $0xc] sm:$0x8]
      %v9317 = vld [vmem:[%s8689 + $0x14] sm:$0xf]
      %v9318 = vld [vmem:[%s8689 + $0x18] sm:$0x8]
      %v9319 = vld [vmem:[%s8689 + $0x20] sm:$0xf]
      %v9320 = vld [vmem:[%s8689 + $0x24] sm:$0x8]
      %v9321 = vld [vmem:[%s8689 + $0x2c] sm:$0xf]
      %v9322 = vld [vmem:[%s8689 + $0x30] sm:$0x8]
      %v9323 = vld [vmem:[%s8689 + $0x38] sm:$0xf]
      %v9324 = vld [vmem:[%s8689 + $0x3c] sm:$0x8]
      %v9325 = vld [vmem:[%s8689 + $0x44] sm:$0xf]
      %v9326 = vld [vmem:[%s8689 + $0x48] sm:$0x8]
      %v9327 = vld [vmem:[%s8689 + $0x50] sm:$0xf]
      %v9328 = vld [vmem:[%s8689 + $0x54] sm:$0x8]
      %v9329 = vld [vmem:[%s8689 + $0x5c] sm:$0xf]
      %v9330 = vld [vmem:[%s8689 + $0x60] sm:$0x8]
      %v9331 = vld [vmem:[%s8689 + $0x68] sm:$0xf]
      %v9332 = vld [vmem:[%s8689 + $0x6c] sm:$0x8]
      %v9333 = vld [vmem:[%s8689 + $0x74] sm:$0xf]
      %v9334 = vld [vmem:[%s8689 + $0x78] sm:$0x8]
      %v9335 = vld [vmem:[%s8689 + $0x80] sm:$0xf]
      %v9336 = vld [vmem:[%s8689 + $0x84] sm:$0x8]
      %v9337 = vld [vmem:[%s8689 + $0x8c] sm:$0xf]
      %v9338 = vld [vmem:[%s8689 + $0x90] sm:$0x8]
      %v9339 = vld [vmem:[%s8689 + $0x98] sm:$0xf]
      %v9340 = vld [vmem:[%s8689 + $0x9c] sm:$0x8]
      %v9341 = vld [vmem:[%s8689 + $0xa4] sm:$0xf]
      %v9342 = vld [vmem:[%s8689 + $0xa8] sm:$0x8]
      %v9343 = vld [vmem:[%s8689 + $0xb0] sm:$0xf]
      %v9344 = vld [vmem:[%s8689 + $0xb4] sm:$0x8]
      %v9345 = vld [vmem:[%s8689 + $0xbc] sm:$0xf]
      %v9347 = vshrl.u32 %v9314, 16
      %v9349 = vrot.slane %v9347, 7
      %v9350 = vrot.slane %v9349, 4
      %v9351 = vrot.slane %v8752, 7
      %v9352 = vor.u32 %v9351, %v8748
      %v9353 = vsel %vm7805, %v9350, %v9352
      %v9354 = vrot.slane %v9351, 4
      %v9356 = vshrl.u32 %v9315, 16
      %v9358 = vrot.slane %v9356, 7
      %v9359 = vshll.u32 %v9315, 16
      %v9361 = vor.u32 %v9358, %v9359
      %v9362 = vsel %vm7805, %v9354, %v9361
      %v9364 = vshrl.u32 %v9316, 16
      %v9366 = vrot.slane %v9364, 7
      %v9367 = vrot.slane %v9366, 4
      %v9368 = vrot.slane %v8776, 7
      %v9369 = vor.u32 %v9368, %v8772
      %v9370 = vsel %vm7805, %v9367, %v9369
      %v9371 = vrot.slane %v9368, 4
      %v9373 = vshrl.u32 %v9317, 16
      %v9375 = vrot.slane %v9373, 7
      %v9376 = vshll.u32 %v9317, 16
      %v9378 = vor.u32 %v9375, %v9376
      %v9379 = vsel %vm7805, %v9371, %v9378
      %v9381 = vshrl.u32 %v9318, 16
      %v9383 = vrot.slane %v9381, 7
      %v9384 = vrot.slane %v9383, 4
      %v9385 = vrot.slane %v8800, 7
      %v9386 = vor.u32 %v9385, %v8796
      %v9387 = vsel %vm7805, %v9384, %v9386
      %v9388 = vrot.slane %v9385, 4
      %v9390 = vshrl.u32 %v9319, 16
      %v9392 = vrot.slane %v9390, 7
      %v9393 = vshll.u32 %v9319, 16
      %v9395 = vor.u32 %v9392, %v9393
      %v9396 = vsel %vm7805, %v9388, %v9395
      %v9398 = vshrl.u32 %v9320, 16
      %v9400 = vrot.slane %v9398, 7
      %v9401 = vrot.slane %v9400, 4
      %v9402 = vrot.slane %v8824, 7
      %v9403 = vor.u32 %v9402, %v8820
      %v9404 = vsel %vm7805, %v9401, %v9403
      %v9405 = vrot.slane %v9402, 4
      %v9407 = vshrl.u32 %v9321, 16
      %v9409 = vrot.slane %v9407, 7
      %v9410 = vshll.u32 %v9321, 16
      %v9412 = vor.u32 %v9409, %v9410
      %v9413 = vsel %vm7805, %v9405, %v9412
      %v9415 = vshrl.u32 %v9322, 16
      %v9417 = vrot.slane %v9415, 7
      %v9418 = vrot.slane %v9417, 4
      %v9419 = vrot.slane %v8848, 7
      %v9420 = vor.u32 %v9419, %v8844
      %v9421 = vsel %vm7805, %v9418, %v9420
      %v9422 = vrot.slane %v9419, 4
      %v9424 = vshrl.u32 %v9323, 16
      %v9426 = vrot.slane %v9424, 7
      %v9427 = vshll.u32 %v9323, 16
      %v9429 = vor.u32 %v9426, %v9427
      %v9430 = vsel %vm7805, %v9422, %v9429
      %v9432 = vshrl.u32 %v9324, 16
      %v9434 = vrot.slane %v9432, 7
      %v9435 = vrot.slane %v9434, 4
      %v9436 = vrot.slane %v8872, 7
      %v9437 = vor.u32 %v9436, %v8868
      %v9438 = vsel %vm7805, %v9435, %v9437
      %v9439 = vrot.slane %v9436, 4
      %v9441 = vshrl.u32 %v9325, 16
      %v9443 = vrot.slane %v9441, 7
      %v9444 = vshll.u32 %v9325, 16
      %v9446 = vor.u32 %v9443, %v9444
      %v9447 = vsel %vm7805, %v9439, %v9446
      %v9449 = vshrl.u32 %v9326, 16
      %v9451 = vrot.slane %v9449, 7
      %v9452 = vrot.slane %v9451, 4
      %v9453 = vrot.slane %v8896, 7
      %v9454 = vor.u32 %v9453, %v8892
      %v9455 = vsel %vm7805, %v9452, %v9454
      %v9456 = vrot.slane %v9453, 4
      %v9458 = vshrl.u32 %v9327, 16
      %v9460 = vrot.slane %v9458, 7
      %v9461 = vshll.u32 %v9327, 16
      %v9463 = vor.u32 %v9460, %v9461
      %v9464 = vsel %vm7805, %v9456, %v9463
      %v9466 = vshrl.u32 %v9328, 16
      %v9468 = vrot.slane %v9466, 7
      %v9469 = vrot.slane %v9468, 4
      %v9470 = vrot.slane %v8920, 7
      %v9471 = vor.u32 %v9470, %v8916
      %v9472 = vsel %vm7805, %v9469, %v9471
      %v9473 = vrot.slane %v9470, 4
      %v9475 = vshrl.u32 %v9329, 16
      %v9477 = vrot.slane %v9475, 7
      %v9478 = vshll.u32 %v9329, 16
      %v9480 = vor.u32 %v9477, %v9478
      %v9481 = vsel %vm7805, %v9473, %v9480
      %v9483 = vshrl.u32 %v9330, 16
      %v9485 = vrot.slane %v9483, 7
      %v9486 = vrot.slane %v9485, 4
      %v9487 = vrot.slane %v8944, 7
      %v9488 = vor.u32 %v9487, %v8940
      %v9489 = vsel %vm7805, %v9486, %v9488
      %v9490 = vrot.slane %v9487, 4
      %v9492 = vshrl.u32 %v9331, 16
      %v9494 = vrot.slane %v9492, 7
      %v9495 = vshll.u32 %v9331, 16
      %v9497 = vor.u32 %v9494, %v9495
      %v9498 = vsel %vm7805, %v9490, %v9497
      %v9500 = vshrl.u32 %v9332, 16
      %v9502 = vrot.slane %v9500, 7
      %v9503 = vrot.slane %v9502, 4
      %v9504 = vrot.slane %v8968, 7
      %v9505 = vor.u32 %v9504, %v8964
      %v9506 = vsel %vm7805, %v9503, %v9505
      %v9507 = vrot.slane %v9504, 4
      %v9509 = vshrl.u32 %v9333, 16
      %v9511 = vrot.slane %v9509, 7
      %v9512 = vshll.u32 %v9333, 16
      %v9514 = vor.u32 %v9511, %v9512
      %v9515 = vsel %vm7805, %v9507, %v9514
      %v9517 = vshrl.u32 %v9334, 16
      %v9519 = vrot.slane %v9517, 7
      %v9520 = vrot.slane %v9519, 4
      %v9521 = vrot.slane %v8992, 7
      %v9522 = vor.u32 %v9521, %v8988
      %v9523 = vsel %vm7805, %v9520, %v9522
      %v9524 = vrot.slane %v9521, 4
      %v9526 = vshrl.u32 %v9335, 16
      %v9528 = vrot.slane %v9526, 7
      %v9529 = vshll.u32 %v9335, 16
      %v9531 = vor.u32 %v9528, %v9529
      %v9532 = vsel %vm7805, %v9524, %v9531
      %v9534 = vshrl.u32 %v9336, 16
      %v9536 = vrot.slane %v9534, 7
      %v9537 = vrot.slane %v9536, 4
      %v9538 = vrot.slane %v9016, 7
      %v9539 = vor.u32 %v9538, %v9012
      %v9540 = vsel %vm7805, %v9537, %v9539
      %v9541 = vrot.slane %v9538, 4
      %v9543 = vshrl.u32 %v9337, 16
      %v9545 = vrot.slane %v9543, 7
      %v9546 = vshll.u32 %v9337, 16
      %v9548 = vor.u32 %v9545, %v9546
      %v9549 = vsel %vm7805, %v9541, %v9548
      %v9551 = vshrl.u32 %v9338, 16
      %v9553 = vrot.slane %v9551, 7
      %v9554 = vrot.slane %v9553, 4
      %v9555 = vrot.slane %v9040, 7
      %v9556 = vor.u32 %v9555, %v9036
      %v9557 = vsel %vm7805, %v9554, %v9556
      %v9558 = vrot.slane %v9555, 4
      %v9560 = vshrl.u32 %v9339, 16
      %v9562 = vrot.slane %v9560, 7
      %v9563 = vshll.u32 %v9339, 16
      %v9565 = vor.u32 %v9562, %v9563
      %v9566 = vsel %vm7805, %v9558, %v9565
      %v9568 = vshrl.u32 %v9340, 16
      %v9570 = vrot.slane %v9568, 7
      %v9571 = vrot.slane %v9570, 4
      %v9572 = vrot.slane %v9064, 7
      %v9573 = vor.u32 %v9572, %v9060
      %v9574 = vsel %vm7805, %v9571, %v9573
      %v9575 = vrot.slane %v9572, 4
      %v9577 = vshrl.u32 %v9341, 16
      %v9579 = vrot.slane %v9577, 7
      %v9580 = vshll.u32 %v9341, 16
      %v9582 = vor.u32 %v9579, %v9580
      %v9583 = vsel %vm7805, %v9575, %v9582
      %v9585 = vshrl.u32 %v9342, 16
      %v9587 = vrot.slane %v9585, 7
      %v9588 = vrot.slane %v9587, 4
      %v9589 = vrot.slane %v9088, 7
      %v9590 = vor.u32 %v9589, %v9084
      %v9591 = vsel %vm7805, %v9588, %v9590
      %v9592 = vrot.slane %v9589, 4
      %v9594 = vshrl.u32 %v9343, 16
      %v9596 = vrot.slane %v9594, 7
      %v9597 = vshll.u32 %v9343, 16
      %v9599 = vor.u32 %v9596, %v9597
      %v9600 = vsel %vm7805, %v9592, %v9599
      %v9602 = vshrl.u32 %v9344, 16
      %v9604 = vrot.slane %v9602, 7
      %v9605 = vrot.slane %v9604, 4
      %v9606 = vrot.slane %v9112, 7
      %v9607 = vor.u32 %v9606, %v9108
      %v9608 = vsel %vm7805, %v9605, %v9607
      %v9609 = vrot.slane %v9606, 4
      %v9611 = vshrl.u32 %v9345, 16
      %v9613 = vrot.slane %v9611, 7
      %v9614 = vshll.u32 %v9345, 16
      %v9616 = vor.u32 %v9613, %v9614
      %v9617 = vsel %vm7805, %v9609, %v9616
      %v9618 = vunpack.c.l.b16 %v7208
      %v9619 = vunpack.c.l.b16 %v7218
      %v9620 = vunpack.c.l.b16 %v7232
      %v9621 = vunpack.c.l.b16 %v7242
      %v9622 = vunpack.c.l.b16 %v7256
      %v9623 = vunpack.c.l.b16 %v7266
      %v9624 = vunpack.c.l.b16 %v7280
      %v9625 = vunpack.c.l.b16 %v7290
      %v9626 = vunpack.c.l.b16 %v7304
      %v9627 = vunpack.c.l.b16 %v7314
      %v9628 = vunpack.c.l.b16 %v7328
      %v9629 = vunpack.c.l.b16 %v7338
      %v9630 = vunpack.c.l.b16 %v7352
      %v9631 = vunpack.c.l.b16 %v7362
      %v9632 = vunpack.c.l.b16 %v7376
      %v9633 = vunpack.c.l.b16 %v7386
      %v9634 = vunpack.c.l.b16 %v7400
      %v9635 = vunpack.c.l.b16 %v7410
      %v9636 = vunpack.c.l.b16 %v7424
      %v9637 = vunpack.c.l.b16 %v7434
      %v9638 = vunpack.c.l.b16 %v7448
      %v9639 = vunpack.c.l.b16 %v7458
      %v9640 = vunpack.c.l.b16 %v7472
      %v9641 = vunpack.c.l.b16 %v7482
      %v9642 = vunpack.c.l.b16 %v7496
      %v9643 = vunpack.c.l.b16 %v7506
      %v9644 = vunpack.c.l.b16 %v7520
      %v9645 = vunpack.c.l.b16 %v7530
      %v9646 = vunpack.c.l.b16 %v7544
      %v9647 = vunpack.c.l.b16 %v7554
      %v9648 = vunpack.c.l.b16 %v7568
      %v9649 = vunpack.c.l.b16 %v7578
      %v9650 = vpack.c.b16 %v9619, %v9618
      %v9651 = vpack.c.b16 %v9621, %v9620
      %v9652 = vpack.c.b16 %v9623, %v9622
      %v9653 = vpack.c.b16 %v9625, %v9624
      %v9654 = vpack.c.b16 %v9627, %v9626
      %v9655 = vpack.c.b16 %v9629, %v9628
      %v9656 = vpack.c.b16 %v9631, %v9630
      %v9657 = vpack.c.b16 %v9633, %v9632
      %v9658 = vpack.c.b16 %v9635, %v9634
      %v9659 = vpack.c.b16 %v9637, %v9636
      %v9660 = vpack.c.b16 %v9639, %v9638
      %v9661 = vpack.c.b16 %v9641, %v9640
      %v9662 = vpack.c.b16 %v9643, %v9642
      %v9663 = vpack.c.b16 %v9645, %v9644
      %v9664 = vpack.c.b16 %v9647, %v9646
      %v9665 = vpack.c.b16 %v9649, %v9648
      %v9666 = vunpack.c.l.b16 %v7662
      %v9667 = vunpack.c.l.b16 %v7665
      %v9668 = vunpack.c.l.b16 %v7669
      %v9669 = vunpack.c.l.b16 %v7672
      %v9670 = vunpack.c.l.b16 %v7676
      %v9671 = vunpack.c.l.b16 %v7679
      %v9672 = vunpack.c.l.b16 %v7683
      %v9673 = vunpack.c.l.b16 %v7686
      %v9674 = vunpack.c.l.b16 %v7690
      %v9675 = vunpack.c.l.b16 %v7693
      %v9676 = vunpack.c.l.b16 %v7697
      %v9677 = vunpack.c.l.b16 %v7700
      %v9678 = vunpack.c.l.b16 %v7704
      %v9679 = vunpack.c.l.b16 %v7707
      %v9680 = vunpack.c.l.b16 %v7711
      %v9681 = vunpack.c.l.b16 %v7714
      %v9682 = vunpack.c.l.b16 %v7718
      %v9683 = vunpack.c.l.b16 %v7721
      %v9684 = vunpack.c.l.b16 %v7725
      %v9685 = vunpack.c.l.b16 %v7728
      %v9686 = vunpack.c.l.b16 %v7732
      %v9687 = vunpack.c.l.b16 %v7735
      %v9688 = vunpack.c.l.b16 %v7739
      %v9689 = vunpack.c.l.b16 %v7742
      %v9690 = vunpack.c.l.b16 %v7746
      %v9691 = vunpack.c.l.b16 %v7749
      %v9692 = vunpack.c.l.b16 %v7753
      %v9693 = vunpack.c.l.b16 %v7756
      %v9694 = vunpack.c.l.b16 %v7760
      %v9695 = vunpack.c.l.b16 %v7763
      %v9696 = vunpack.c.l.b16 %v7767
      %v9697 = vunpack.c.l.b16 %v7770
      %v9698 = vpack.c.b16 %v9667, %v9666
      %v9699 = vpack.c.b16 %v9669, %v9668
      %v9700 = vpack.c.b16 %v9671, %v9670
      %v9701 = vpack.c.b16 %v9673, %v9672
      %v9702 = vpack.c.b16 %v9675, %v9674
      %v9703 = vpack.c.b16 %v9677, %v9676
      %v9704 = vpack.c.b16 %v9679, %v9678
      %v9705 = vpack.c.b16 %v9681, %v9680
      %v9706 = vpack.c.b16 %v9683, %v9682
      %v9707 = vpack.c.b16 %v9685, %v9684
      %v9708 = vpack.c.b16 %v9687, %v9686
      %v9709 = vpack.c.b16 %v9689, %v9688
      %v9710 = vpack.c.b16 %v9691, %v9690
      %v9711 = vpack.c.b16 %v9693, %v9692
      %v9712 = vpack.c.b16 %v9695, %v9694
      %v9713 = vpack.c.b16 %v9697, %v9696
      %9714 = vrot.lane.b32.xlu0 %v9698, 8
      %v9715 = vpop.permute.xlu0 %9714
      %9716 = vrot.lane.b32.xlu0 %v9699, 8
      %v9717 = vpop.permute.xlu0 %9716
      %9718 = vrot.lane.b32.xlu0 %v9700, 8
      %v9719 = vpop.permute.xlu0 %9718
      %9720 = vrot.lane.b32.xlu0 %v9701, 8
      %v9721 = vpop.permute.xlu0 %9720
      %9722 = vrot.lane.b32.xlu0 %v9702, 8
      %v9723 = vpop.permute.xlu0 %9722
      %9724 = vrot.lane.b32.xlu0 %v9703, 8
      %v9725 = vpop.permute.xlu0 %9724
      %9726 = vrot.lane.b32.xlu0 %v9704, 8
      %v9727 = vpop.permute.xlu0 %9726
      %9728 = vrot.lane.b32.xlu0 %v9705, 8
      %v9729 = vpop.permute.xlu0 %9728
      %9730 = vrot.lane.b32.xlu0 %v9706, 8
      %v9731 = vpop.permute.xlu0 %9730
      %9732 = vrot.lane.b32.xlu0 %v9707, 8
      %v9733 = vpop.permute.xlu0 %9732
      %9734 = vrot.lane.b32.xlu0 %v9708, 8
      %v9735 = vpop.permute.xlu0 %9734
      %9736 = vrot.lane.b32.xlu0 %v9709, 8
      %v9737 = vpop.permute.xlu0 %9736
      %9738 = vrot.lane.b32.xlu0 %v9710, 8
      %v9739 = vpop.permute.xlu0 %9738
      %9740 = vrot.lane.b32.xlu0 %v9711, 8
      %v9741 = vpop.permute.xlu0 %9740
      %9742 = vrot.lane.b32.xlu0 %v9712, 8
      %v9743 = vpop.permute.xlu0 %9742
      %9744 = vrot.lane.b32.xlu0 %v9713, 8
      %v9745 = vpop.permute.xlu0 %9744
      %v9746 = vunpack.c.l.b16 %v7813
      %v9747 = vunpack.c.l.b16 %v7822
      %v9748 = vunpack.c.l.b16 %v7830
      %v9749 = vunpack.c.l.b16 %v7839
      %v9750 = vunpack.c.l.b16 %v7847
      %v9751 = vunpack.c.l.b16 %v7856
      %v9752 = vunpack.c.l.b16 %v7864
      %v9753 = vunpack.c.l.b16 %v7873
      %v9754 = vunpack.c.l.b16 %v7881
      %v9755 = vunpack.c.l.b16 %v7890
      %v9756 = vunpack.c.l.b16 %v7898
      %v9757 = vunpack.c.l.b16 %v7907
      %v9758 = vunpack.c.l.b16 %v7915
      %v9759 = vunpack.c.l.b16 %v7924
      %v9760 = vunpack.c.l.b16 %v7932
      %v9761 = vunpack.c.l.b16 %v7941
      %v9762 = vunpack.c.l.b16 %v7949
      %v9763 = vunpack.c.l.b16 %v7958
      %v9764 = vunpack.c.l.b16 %v7966
      %v9765 = vunpack.c.l.b16 %v7975
      %v9766 = vunpack.c.l.b16 %v7983
      %v9767 = vunpack.c.l.b16 %v7992
      %v9768 = vunpack.c.l.b16 %v8000
      %v9769 = vunpack.c.l.b16 %v8009
      %v9770 = vunpack.c.l.b16 %v8017
      %v9771 = vunpack.c.l.b16 %v8026
      %v9772 = vunpack.c.l.b16 %v8034
      %v9773 = vunpack.c.l.b16 %v8043
      %v9774 = vunpack.c.l.b16 %v8051
      %v9775 = vunpack.c.l.b16 %v8060
      %v9776 = vunpack.c.l.b16 %v8068
      %v9777 = vunpack.c.l.b16 %v8077
      %v9778 = vpack.c.b16 %v9747, %v9746
      %v9779 = vpack.c.b16 %v9749, %v9748
      %v9780 = vpack.c.b16 %v9751, %v9750
      %v9781 = vpack.c.b16 %v9753, %v9752
      %v9782 = vpack.c.b16 %v9755, %v9754
      %v9783 = vpack.c.b16 %v9757, %v9756
      %v9784 = vpack.c.b16 %v9759, %v9758
      %v9785 = vpack.c.b16 %v9761, %v9760
      %v9786 = vpack.c.b16 %v9763, %v9762
      %v9787 = vpack.c.b16 %v9765, %v9764
      %v9788 = vpack.c.b16 %v9767, %v9766
      %v9789 = vpack.c.b16 %v9769, %v9768
      %v9790 = vpack.c.b16 %v9771, %v9770
      %v9791 = vpack.c.b16 %v9773, %v9772
      %v9792 = vpack.c.b16 %v9775, %v9774
      %v9793 = vpack.c.b16 %v9777, %v9776
      %9794 = vrot.lane.b32.xlu0 %v9778, 16
      %v9795 = vpop.permute.xlu0 %9794
      %9796 = vrot.lane.b32.xlu0 %v9779, 16
      %v9797 = vpop.permute.xlu0 %9796
      %9798 = vrot.lane.b32.xlu0 %v9780, 16
      %v9799 = vpop.permute.xlu0 %9798
      %9800 = vrot.lane.b32.xlu0 %v9781, 16
      %v9801 = vpop.permute.xlu0 %9800
      %9802 = vrot.lane.b32.xlu0 %v9782, 16
      %v9803 = vpop.permute.xlu0 %9802
      %9804 = vrot.lane.b32.xlu0 %v9783, 16
      %v9805 = vpop.permute.xlu0 %9804
      %9806 = vrot.lane.b32.xlu0 %v9784, 16
      %v9807 = vpop.permute.xlu0 %9806
      %9808 = vrot.lane.b32.xlu0 %v9785, 16
      %v9809 = vpop.permute.xlu0 %9808
      %9810 = vrot.lane.b32.xlu0 %v9786, 16
      %v9811 = vpop.permute.xlu0 %9810
      %9812 = vrot.lane.b32.xlu0 %v9787, 16
      %v9813 = vpop.permute.xlu0 %9812
      %9814 = vrot.lane.b32.xlu0 %v9788, 16
      %v9815 = vpop.permute.xlu0 %9814
      %9816 = vrot.lane.b32.xlu0 %v9789, 16
      %v9817 = vpop.permute.xlu0 %9816
      %9818 = vrot.lane.b32.xlu0 %v9790, 16
      %v9819 = vpop.permute.xlu0 %9818
      %9820 = vrot.lane.b32.xlu0 %v9791, 16
      %v9821 = vpop.permute.xlu0 %9820
      %9822 = vrot.lane.b32.xlu0 %v9792, 16
      %v9823 = vpop.permute.xlu0 %9822
      %9824 = vrot.lane.b32.xlu0 %v9793, 16
      %v9825 = vpop.permute.xlu0 %9824
      %v9826 = vunpack.c.l.b16 %v8104
      %v9827 = vunpack.c.l.b16 %v8112
      %v9828 = vunpack.c.l.b16 %v8123
      %v9829 = vunpack.c.l.b16 %v8131
      %v9830 = vunpack.c.l.b16 %v8142
      %v9831 = vunpack.c.l.b16 %v8150
      %v9832 = vunpack.c.l.b16 %v8161
      %v9833 = vunpack.c.l.b16 %v8169
      %v9834 = vunpack.c.l.b16 %v8180
      %v9835 = vunpack.c.l.b16 %v8188
      %v9836 = vunpack.c.l.b16 %v8199
      %v9837 = vunpack.c.l.b16 %v8207
      %v9838 = vunpack.c.l.b16 %v8218
      %v9839 = vunpack.c.l.b16 %v8226
      %v9840 = vunpack.c.l.b16 %v8237
      %v9841 = vunpack.c.l.b16 %v8245
      %v9842 = vunpack.c.l.b16 %v8256
      %v9843 = vunpack.c.l.b16 %v8264
      %v9844 = vunpack.c.l.b16 %v8275
      %v9845 = vunpack.c.l.b16 %v8283
      %v9846 = vunpack.c.l.b16 %v8294
      %v9847 = vunpack.c.l.b16 %v8302
      %v9848 = vunpack.c.l.b16 %v8313
      %v9849 = vunpack.c.l.b16 %v8321
      %v9850 = vunpack.c.l.b16 %v8332
      %v9851 = vunpack.c.l.b16 %v8340
      %v9852 = vunpack.c.l.b16 %v8351
      %v9853 = vunpack.c.l.b16 %v8359
      %v9854 = vunpack.c.l.b16 %v8370
      %v9855 = vunpack.c.l.b16 %v8378
      %v9856 = vunpack.c.l.b16 %v8389
      %v9857 = vunpack.c.l.b16 %v8397
      %v9858 = vpack.c.b16 %v9827, %v9826
      %v9859 = vpack.c.b16 %v9829, %v9828
      %v9860 = vpack.c.b16 %v9831, %v9830
      %v9861 = vpack.c.b16 %v9833, %v9832
      %v9862 = vpack.c.b16 %v9835, %v9834
      %v9863 = vpack.c.b16 %v9837, %v9836
      %v9864 = vpack.c.b16 %v9839, %v9838
      %v9865 = vpack.c.b16 %v9841, %v9840
      %v9866 = vpack.c.b16 %v9843, %v9842
      %v9867 = vpack.c.b16 %v9845, %v9844
      %v9868 = vpack.c.b16 %v9847, %v9846
      %v9869 = vpack.c.b16 %v9849, %v9848
      %v9870 = vpack.c.b16 %v9851, %v9850
      %v9871 = vpack.c.b16 %v9853, %v9852
      %v9872 = vpack.c.b16 %v9855, %v9854
      %v9873 = vpack.c.b16 %v9857, %v9856
      %9874 = vrot.lane.b32.xlu0 %v9858, 24
      %v9875 = vpop.permute.xlu0 %9874
      %9876 = vrot.lane.b32.xlu0 %v9859, 24
      %v9877 = vpop.permute.xlu0 %9876
      %9878 = vrot.lane.b32.xlu0 %v9860, 24
      %v9879 = vpop.permute.xlu0 %9878
      %9880 = vrot.lane.b32.xlu0 %v9861, 24
      %v9881 = vpop.permute.xlu0 %9880
      %9882 = vrot.lane.b32.xlu0 %v9862, 24
      %v9883 = vpop.permute.xlu0 %9882
      %9884 = vrot.lane.b32.xlu0 %v9863, 24
      %v9885 = vpop.permute.xlu0 %9884
      %9886 = vrot.lane.b32.xlu0 %v9864, 24
      %v9887 = vpop.permute.xlu0 %9886
      %9888 = vrot.lane.b32.xlu0 %v9865, 24
      %v9889 = vpop.permute.xlu0 %9888
      %9890 = vrot.lane.b32.xlu0 %v9866, 24
      %v9891 = vpop.permute.xlu0 %9890
      %9892 = vrot.lane.b32.xlu0 %v9867, 24
      %v9893 = vpop.permute.xlu0 %9892
      %9894 = vrot.lane.b32.xlu0 %v9868, 24
      %v9895 = vpop.permute.xlu0 %9894
      %9896 = vrot.lane.b32.xlu0 %v9869, 24
      %v9897 = vpop.permute.xlu0 %9896
      %9898 = vrot.lane.b32.xlu0 %v9870, 24
      %v9899 = vpop.permute.xlu0 %9898
      %9900 = vrot.lane.b32.xlu0 %v9871, 24
      %v9901 = vpop.permute.xlu0 %9900
      %9902 = vrot.lane.b32.xlu0 %v9872, 24
      %v9903 = vpop.permute.xlu0 %9902
      %9904 = vrot.lane.b32.xlu0 %v9873, 24
      %v9905 = vpop.permute.xlu0 %9904
      %v9906 = vunpack.c.l.b16 %v8421
      %v9907 = vunpack.c.l.b16 %v8430
      %v9908 = vunpack.c.l.b16 %v8438
      %v9909 = vunpack.c.l.b16 %v8447
      %v9910 = vunpack.c.l.b16 %v8455
      %v9911 = vunpack.c.l.b16 %v8464
      %v9912 = vunpack.c.l.b16 %v8472
      %v9913 = vunpack.c.l.b16 %v8481
      %v9914 = vunpack.c.l.b16 %v8489
      %v9915 = vunpack.c.l.b16 %v8498
      %v9916 = vunpack.c.l.b16 %v8506
      %v9917 = vunpack.c.l.b16 %v8515
      %v9918 = vunpack.c.l.b16 %v8523
      %v9919 = vunpack.c.l.b16 %v8532
      %v9920 = vunpack.c.l.b16 %v8540
      %v9921 = vunpack.c.l.b16 %v8549
      %v9922 = vunpack.c.l.b16 %v8557
      %v9923 = vunpack.c.l.b16 %v8566
      %v9924 = vunpack.c.l.b16 %v8574
      %v9925 = vunpack.c.l.b16 %v8583
      %v9926 = vunpack.c.l.b16 %v8591
      %v9927 = vunpack.c.l.b16 %v8600
      %v9928 = vunpack.c.l.b16 %v8608
      %v9929 = vunpack.c.l.b16 %v8617
      %v9930 = vunpack.c.l.b16 %v8625
      %v9931 = vunpack.c.l.b16 %v8634
      %v9932 = vunpack.c.l.b16 %v8642
      %v9933 = vunpack.c.l.b16 %v8651
      %v9934 = vunpack.c.l.b16 %v8659
      %v9935 = vunpack.c.l.b16 %v8668
      %v9936 = vunpack.c.l.b16 %v8676
      %v9937 = vunpack.c.l.b16 %v8685
      %v9938 = vpack.c.b16 %v9907, %v9906
      %v9939 = vpack.c.b16 %v9909, %v9908
      %v9940 = vpack.c.b16 %v9911, %v9910
      %v9941 = vpack.c.b16 %v9913, %v9912
      %v9942 = vpack.c.b16 %v9915, %v9914
      %v9943 = vpack.c.b16 %v9917, %v9916
      %v9944 = vpack.c.b16 %v9919, %v9918
      %v9945 = vpack.c.b16 %v9921, %v9920
      %v9946 = vpack.c.b16 %v9923, %v9922
      %v9947 = vpack.c.b16 %v9925, %v9924
      %v9948 = vpack.c.b16 %v9927, %v9926
      %v9949 = vpack.c.b16 %v9929, %v9928
      %v9950 = vpack.c.b16 %v9931, %v9930
      %v9951 = vpack.c.b16 %v9933, %v9932
      %v9952 = vpack.c.b16 %v9935, %v9934
      %v9953 = vpack.c.b16 %v9937, %v9936
      %9954 = vrot.lane.b32.xlu0 %v9938, 40
      %v9955 = vpop.permute.xlu0 %9954
      %9956 = vrot.lane.b32.xlu0 %v9939, 40
      %v9957 = vpop.permute.xlu0 %9956
      %9958 = vrot.lane.b32.xlu0 %v9940, 40
      %v9959 = vpop.permute.xlu0 %9958
      %9960 = vrot.lane.b32.xlu0 %v9941, 40
      %v9961 = vpop.permute.xlu0 %9960
      %9962 = vrot.lane.b32.xlu0 %v9942, 40
      %v9963 = vpop.permute.xlu0 %9962
      %9964 = vrot.lane.b32.xlu0 %v9943, 40
      %v9965 = vpop.permute.xlu0 %9964
      %9966 = vrot.lane.b32.xlu0 %v9944, 40
      %v9967 = vpop.permute.xlu0 %9966
      %9968 = vrot.lane.b32.xlu0 %v9945, 40
      %v9969 = vpop.permute.xlu0 %9968
      %9970 = vrot.lane.b32.xlu0 %v9946, 40
      %v9971 = vpop.permute.xlu0 %9970
      %9972 = vrot.lane.b32.xlu0 %v9947, 40
      %v9973 = vpop.permute.xlu0 %9972
      %9974 = vrot.lane.b32.xlu0 %v9948, 40
      %v9975 = vpop.permute.xlu0 %9974
      %9976 = vrot.lane.b32.xlu0 %v9949, 40
      %v9977 = vpop.permute.xlu0 %9976
      %9978 = vrot.lane.b32.xlu0 %v9950, 40
      %v9979 = vpop.permute.xlu0 %9978
      %9980 = vrot.lane.b32.xlu0 %v9951, 40
      %v9981 = vpop.permute.xlu0 %9980
      %9982 = vrot.lane.b32.xlu0 %v9952, 40
      %v9983 = vpop.permute.xlu0 %9982
      %9984 = vrot.lane.b32.xlu0 %v9953, 40
      %v9985 = vpop.permute.xlu0 %9984
      %v9986 = vunpack.c.l.b16 %v8751
      %v9987 = vunpack.c.l.b16 %v8761
      %v9988 = vunpack.c.l.b16 %v8775
      %v9989 = vunpack.c.l.b16 %v8785
      %v9990 = vunpack.c.l.b16 %v8799
      %v9991 = vunpack.c.l.b16 %v8809
      %v9992 = vunpack.c.l.b16 %v8823
      %v9993 = vunpack.c.l.b16 %v8833
      %v9994 = vunpack.c.l.b16 %v8847
      %v9995 = vunpack.c.l.b16 %v8857
      %v9996 = vunpack.c.l.b16 %v8871
      %v9997 = vunpack.c.l.b16 %v8881
      %v9998 = vunpack.c.l.b16 %v8895
      %v9999 = vunpack.c.l.b16 %v8905
      %v10000 = vunpack.c.l.b16 %v8919
      %v10001 = vunpack.c.l.b16 %v8929
      %v10002 = vunpack.c.l.b16 %v8943
      %v10003 = vunpack.c.l.b16 %v8953
      %v10004 = vunpack.c.l.b16 %v8967
      %v10005 = vunpack.c.l.b16 %v8977
      %v10006 = vunpack.c.l.b16 %v8991
      %v10007 = vunpack.c.l.b16 %v9001
      %v10008 = vunpack.c.l.b16 %v9015
      %v10009 = vunpack.c.l.b16 %v9025
      %v10010 = vunpack.c.l.b16 %v9039
      %v10011 = vunpack.c.l.b16 %v9049
      %v10012 = vunpack.c.l.b16 %v9063
      %v10013 = vunpack.c.l.b16 %v9073
      %v10014 = vunpack.c.l.b16 %v9087
      %v10015 = vunpack.c.l.b16 %v9097
      %v10016 = vunpack.c.l.b16 %v9111
      %v10017 = vunpack.c.l.b16 %v9121
      %v10018 = vpack.c.b16 %v9987, %v9986
      %v10019 = vpack.c.b16 %v9989, %v9988
      %v10020 = vpack.c.b16 %v9991, %v9990
      %v10021 = vpack.c.b16 %v9993, %v9992
      %v10022 = vpack.c.b16 %v9995, %v9994
      %v10023 = vpack.c.b16 %v9997, %v9996
      %v10024 = vpack.c.b16 %v9999, %v9998
      %v10025 = vpack.c.b16 %v10001, %v10000
      %v10026 = vpack.c.b16 %v10003, %v10002
      %v10027 = vpack.c.b16 %v10005, %v10004
      %v10028 = vpack.c.b16 %v10007, %v10006
      %v10029 = vpack.c.b16 %v10009, %v10008
      %v10030 = vpack.c.b16 %v10011, %v10010
      %v10031 = vpack.c.b16 %v10013, %v10012
      %v10032 = vpack.c.b16 %v10015, %v10014
      %v10033 = vpack.c.b16 %v10017, %v10016
      %10034 = vrot.lane.b32.xlu0 %v10018, 48
      %v10035 = vpop.permute.xlu0 %10034
      %10036 = vrot.lane.b32.xlu0 %v10019, 48
      %v10037 = vpop.permute.xlu0 %10036
      %10038 = vrot.lane.b32.xlu0 %v10020, 48
      %v10039 = vpop.permute.xlu0 %10038
      %10040 = vrot.lane.b32.xlu0 %v10021, 48
      %v10041 = vpop.permute.xlu0 %10040
      %10042 = vrot.lane.b32.xlu0 %v10022, 48
      %v10043 = vpop.permute.xlu0 %10042
      %10044 = vrot.lane.b32.xlu0 %v10023, 48
      %v10045 = vpop.permute.xlu0 %10044
      %10046 = vrot.lane.b32.xlu0 %v10024, 48
      %v10047 = vpop.permute.xlu0 %10046
      %10048 = vrot.lane.b32.xlu0 %v10025, 48
      %v10049 = vpop.permute.xlu0 %10048
      %10050 = vrot.lane.b32.xlu0 %v10026, 48
      %v10051 = vpop.permute.xlu0 %10050
      %10052 = vrot.lane.b32.xlu0 %v10027, 48
      %v10053 = vpop.permute.xlu0 %10052
      %10054 = vrot.lane.b32.xlu0 %v10028, 48
      %v10055 = vpop.permute.xlu0 %10054
      %10056 = vrot.lane.b32.xlu0 %v10029, 48
      %v10057 = vpop.permute.xlu0 %10056
      %10058 = vrot.lane.b32.xlu0 %v10030, 48
      %v10059 = vpop.permute.xlu0 %10058
      %10060 = vrot.lane.b32.xlu0 %v10031, 48
      %v10061 = vpop.permute.xlu0 %10060
      %10062 = vrot.lane.b32.xlu0 %v10032, 48
      %v10063 = vpop.permute.xlu0 %10062
      %10064 = vrot.lane.b32.xlu0 %v10033, 48
      %v10065 = vpop.permute.xlu0 %10064
      %v10066 = vunpack.c.l.b16 %v9205
      %v10067 = vunpack.c.l.b16 %v9208
      %v10068 = vunpack.c.l.b16 %v9212
      %v10069 = vunpack.c.l.b16 %v9215
      %v10070 = vunpack.c.l.b16 %v9219
      %v10071 = vunpack.c.l.b16 %v9222
      %v10072 = vunpack.c.l.b16 %v9226
      %v10073 = vunpack.c.l.b16 %v9229
      %v10074 = vunpack.c.l.b16 %v9233
      %v10075 = vunpack.c.l.b16 %v9236
      %v10076 = vunpack.c.l.b16 %v9240
      %v10077 = vunpack.c.l.b16 %v9243
      %v10078 = vunpack.c.l.b16 %v9247
      %v10079 = vunpack.c.l.b16 %v9250
      %v10080 = vunpack.c.l.b16 %v9254
      %v10081 = vunpack.c.l.b16 %v9257
      %v10082 = vunpack.c.l.b16 %v9261
      %v10083 = vunpack.c.l.b16 %v9264
      %v10084 = vunpack.c.l.b16 %v9268
      %v10085 = vunpack.c.l.b16 %v9271
      %v10086 = vunpack.c.l.b16 %v9275
      %v10087 = vunpack.c.l.b16 %v9278
      %v10088 = vunpack.c.l.b16 %v9282
      %v10089 = vunpack.c.l.b16 %v9285
      %v10090 = vunpack.c.l.b16 %v9289
      %v10091 = vunpack.c.l.b16 %v9292
      %v10092 = vunpack.c.l.b16 %v9296
      %v10093 = vunpack.c.l.b16 %v9299
      %v10094 = vunpack.c.l.b16 %v9303
      %v10095 = vunpack.c.l.b16 %v9306
      %v10096 = vunpack.c.l.b16 %v9310
      %v10097 = vunpack.c.l.b16 %v9313
      %v10098 = vpack.c.b16 %v10067, %v10066
      %v10099 = vpack.c.b16 %v10069, %v10068
      %v10100 = vpack.c.b16 %v10071, %v10070
      %v10101 = vpack.c.b16 %v10073, %v10072
      %v10102 = vpack.c.b16 %v10075, %v10074
      %v10103 = vpack.c.b16 %v10077, %v10076
      %v10104 = vpack.c.b16 %v10079, %v10078
      %v10105 = vpack.c.b16 %v10081, %v10080
      %v10106 = vpack.c.b16 %v10083, %v10082
      %v10107 = vpack.c.b16 %v10085, %v10084
      %v10108 = vpack.c.b16 %v10087, %v10086
      %v10109 = vpack.c.b16 %v10089, %v10088
      %v10110 = vpack.c.b16 %v10091, %v10090
      %v10111 = vpack.c.b16 %v10093, %v10092
      %v10112 = vpack.c.b16 %v10095, %v10094
      %v10113 = vpack.c.b16 %v10097, %v10096
      %10114 = vrot.lane.b32.xlu0 %v10098, 56
      %v10115 = vpop.permute.xlu0 %10114
      %10116 = vrot.lane.b32.xlu0 %v10099, 56
      %v10117 = vpop.permute.xlu0 %10116
      %10118 = vrot.lane.b32.xlu0 %v10100, 56
      %v10119 = vpop.permute.xlu0 %10118
      %10120 = vrot.lane.b32.xlu0 %v10101, 56
      %v10121 = vpop.permute.xlu0 %10120
      %10122 = vrot.lane.b32.xlu0 %v10102, 56
      %v10123 = vpop.permute.xlu0 %10122
      %10124 = vrot.lane.b32.xlu0 %v10103, 56
      %v10125 = vpop.permute.xlu0 %10124
      %10126 = vrot.lane.b32.xlu0 %v10104, 56
      %v10127 = vpop.permute.xlu0 %10126
      %10128 = vrot.lane.b32.xlu0 %v10105, 56
      %v10129 = vpop.permute.xlu0 %10128
      %10130 = vrot.lane.b32.xlu0 %v10106, 56
      %v10131 = vpop.permute.xlu0 %10130
      %10132 = vrot.lane.b32.xlu0 %v10107, 56
      %v10133 = vpop.permute.xlu0 %10132
      %10134 = vrot.lane.b32.xlu0 %v10108, 56
      %v10135 = vpop.permute.xlu0 %10134
      %10136 = vrot.lane.b32.xlu0 %v10109, 56
      %v10137 = vpop.permute.xlu0 %10136
      %10138 = vrot.lane.b32.xlu0 %v10110, 56
      %v10139 = vpop.permute.xlu0 %10138
      %10140 = vrot.lane.b32.xlu0 %v10111, 56
      %v10141 = vpop.permute.xlu0 %10140
      %10142 = vrot.lane.b32.xlu0 %v10112, 56
      %v10143 = vpop.permute.xlu0 %10142
      %10144 = vrot.lane.b32.xlu0 %v10113, 56
      %v10145 = vpop.permute.xlu0 %10144
      %v10146 = vunpack.c.l.b16 %v9353
      %v10147 = vunpack.c.l.b16 %v9362
      %v10148 = vunpack.c.l.b16 %v9370
      %v10149 = vunpack.c.l.b16 %v9379
      %v10150 = vunpack.c.l.b16 %v9387
      %v10151 = vunpack.c.l.b16 %v9396
      %v10152 = vunpack.c.l.b16 %v9404
      %v10153 = vunpack.c.l.b16 %v9413
      %v10154 = vunpack.c.l.b16 %v9421
      %v10155 = vunpack.c.l.b16 %v9430
      %v10156 = vunpack.c.l.b16 %v9438
      %v10157 = vunpack.c.l.b16 %v9447
      %v10158 = vunpack.c.l.b16 %v9455
      %v10159 = vunpack.c.l.b16 %v9464
      %v10160 = vunpack.c.l.b16 %v9472
      %v10161 = vunpack.c.l.b16 %v9481
      %v10162 = vunpack.c.l.b16 %v9489
      %v10163 = vunpack.c.l.b16 %v9498
      %v10164 = vunpack.c.l.b16 %v9506
      %v10165 = vunpack.c.l.b16 %v9515
      %v10166 = vunpack.c.l.b16 %v9523
      %v10167 = vunpack.c.l.b16 %v9532
      %v10168 = vunpack.c.l.b16 %v9540
      %v10169 = vunpack.c.l.b16 %v9549
      %v10170 = vunpack.c.l.b16 %v9557
      %v10171 = vunpack.c.l.b16 %v9566
      %v10172 = vunpack.c.l.b16 %v9574
      %v10173 = vunpack.c.l.b16 %v9583
      %v10174 = vunpack.c.l.b16 %v9591
      %v10175 = vunpack.c.l.b16 %v9600
      %v10176 = vunpack.c.l.b16 %v9608
      %v10177 = vunpack.c.l.b16 %v9617
      %v10178 = vpack.c.b16 %v10147, %v10146
      %v10179 = vpack.c.b16 %v10149, %v10148
      %v10180 = vpack.c.b16 %v10151, %v10150
      %v10181 = vpack.c.b16 %v10153, %v10152
      %v10182 = vpack.c.b16 %v10155, %v10154
      %v10183 = vpack.c.b16 %v10157, %v10156
      %v10184 = vpack.c.b16 %v10159, %v10158
      %v10185 = vpack.c.b16 %v10161, %v10160
      %v10186 = vpack.c.b16 %v10163, %v10162
      %v10187 = vpack.c.b16 %v10165, %v10164
      %v10188 = vpack.c.b16 %v10167, %v10166
      %v10189 = vpack.c.b16 %v10169, %v10168
      %v10190 = vpack.c.b16 %v10171, %v10170
      %v10191 = vpack.c.b16 %v10173, %v10172
      %v10192 = vpack.c.b16 %v10175, %v10174
      %v10193 = vpack.c.b16 %v10177, %v10176
      %10194 = vrot.lane.b32.xlu0 %v10178, 64
      %v10195 = vpop.permute.xlu0 %10194
      %10196 = vrot.lane.b32.xlu0 %v10179, 64
      %v10197 = vpop.permute.xlu0 %10196
      %10198 = vrot.lane.b32.xlu0 %v10180, 64
      %v10199 = vpop.permute.xlu0 %10198
      %10200 = vrot.lane.b32.xlu0 %v10181, 64
      %v10201 = vpop.permute.xlu0 %10200
      %10202 = vrot.lane.b32.xlu0 %v10182, 64
      %v10203 = vpop.permute.xlu0 %10202
      %10204 = vrot.lane.b32.xlu0 %v10183, 64
      %v10205 = vpop.permute.xlu0 %10204
      %10206 = vrot.lane.b32.xlu0 %v10184, 64
      %v10207 = vpop.permute.xlu0 %10206
      %10208 = vrot.lane.b32.xlu0 %v10185, 64
      %v10209 = vpop.permute.xlu0 %10208
      %10210 = vrot.lane.b32.xlu0 %v10186, 64
      %v10211 = vpop.permute.xlu0 %10210
      %10212 = vrot.lane.b32.xlu0 %v10187, 64
      %v10213 = vpop.permute.xlu0 %10212
      %10214 = vrot.lane.b32.xlu0 %v10188, 64
      %v10215 = vpop.permute.xlu0 %10214
      %10216 = vrot.lane.b32.xlu0 %v10189, 64
      %v10217 = vpop.permute.xlu0 %10216
      %10218 = vrot.lane.b32.xlu0 %v10190, 64
      %v10219 = vpop.permute.xlu0 %10218
      %10220 = vrot.lane.b32.xlu0 %v10191, 64
      %v10221 = vpop.permute.xlu0 %10220
      %10222 = vrot.lane.b32.xlu0 %v10192, 64
      %v10223 = vpop.permute.xlu0 %10222
      %10224 = vrot.lane.b32.xlu0 %v10193, 64
      %v10225 = vpop.permute.xlu0 %10224
      %v10228 = vsel %vm4075, %v9650, %v9715
      %v10231 = vsel %vm4075, %v9651, %v9717
      %v10234 = vsel %vm4075, %v9652, %v9719
      %v10237 = vsel %vm4075, %v9653, %v9721
      %v10240 = vsel %vm4075, %v9654, %v9723
      %v10243 = vsel %vm4075, %v9655, %v9725
      %v10246 = vsel %vm4075, %v9656, %v9727
      %v10249 = vsel %vm4075, %v9657, %v9729
      %v10252 = vsel %vm4075, %v9658, %v9731
      %v10255 = vsel %vm4075, %v9659, %v9733
      %v10258 = vsel %vm4075, %v9660, %v9735
      %v10261 = vsel %vm4075, %v9661, %v9737
      %v10264 = vsel %vm4075, %v9662, %v9739
      %v10267 = vsel %vm4075, %v9663, %v9741
      %v10270 = vsel %vm4075, %v9664, %v9743
      %v10273 = vsel %vm4075, %v9665, %v9745
      %v10275 = vsel %vm4124, %v10228, %v9795
      %v10277 = vsel %vm4124, %v10231, %v9797
      %v10279 = vsel %vm4124, %v10234, %v9799
      %v10281 = vsel %vm4124, %v10237, %v9801
      %v10283 = vsel %vm4124, %v10240, %v9803
      %v10285 = vsel %vm4124, %v10243, %v9805
      %v10287 = vsel %vm4124, %v10246, %v9807
      %v10289 = vsel %vm4124, %v10249, %v9809
      %v10291 = vsel %vm4124, %v10252, %v9811
      %v10293 = vsel %vm4124, %v10255, %v9813
      %v10295 = vsel %vm4124, %v10258, %v9815
      %v10297 = vsel %vm4124, %v10261, %v9817
      %v10299 = vsel %vm4124, %v10264, %v9819
      %v10301 = vsel %vm4124, %v10267, %v9821
      %v10303 = vsel %vm4124, %v10270, %v9823
      %v10305 = vsel %vm4124, %v10273, %v9825
      %v10307 = vsel %vm4157, %v10275, %v9875
      %v10309 = vsel %vm4157, %v10277, %v9877
      %v10311 = vsel %vm4157, %v10279, %v9879
      %v10313 = vsel %vm4157, %v10281, %v9881
      %v10315 = vsel %vm4157, %v10283, %v9883
      %v10317 = vsel %vm4157, %v10285, %v9885
      %v10319 = vsel %vm4157, %v10287, %v9887
      %v10321 = vsel %vm4157, %v10289, %v9889
      %v10323 = vsel %vm4157, %v10291, %v9891
      %v10325 = vsel %vm4157, %v10293, %v9893
      %v10327 = vsel %vm4157, %v10295, %v9895
      %v10329 = vsel %vm4157, %v10297, %v9897
      %v10331 = vsel %vm4157, %v10299, %v9899
      %v10333 = vsel %vm4157, %v10301, %v9901
      %v10335 = vsel %vm4157, %v10303, %v9903
      %v10337 = vsel %vm4157, %v10305, %v9905
      %v10338 = vsel %vm4190, %v10307, %v3724
      %v10339 = vsel %vm4190, %v10309, %v3726
      %v10340 = vsel %vm4190, %v10311, %v3728
      %v10341 = vsel %vm4190, %v10313, %v3730
      %v10342 = vsel %vm4190, %v10315, %v3732
      %v10343 = vsel %vm4190, %v10317, %v3734
      %v10344 = vsel %vm4190, %v10319, %v3736
      %v10345 = vsel %vm4190, %v10321, %v3738
      %v10346 = vsel %vm4190, %v10323, %v3740
      %v10347 = vsel %vm4190, %v10325, %v3742
      %v10348 = vsel %vm4190, %v10327, %v3744
      %v10349 = vsel %vm4190, %v10329, %v3746
      %v10350 = vsel %vm4190, %v10331, %v3748
      %v10351 = vsel %vm4190, %v10333, %v3750
      %v10352 = vsel %vm4190, %v10335, %v3752
      %v10353 = vsel %vm4190, %v10337, %v3754
      %v10355 = vsel %vm4223, %v10338, %v9955
      %v10357 = vsel %vm4223, %v10339, %v9957
      %v10359 = vsel %vm4223, %v10340, %v9959
      %v10361 = vsel %vm4223, %v10341, %v9961
      %v10363 = vsel %vm4223, %v10342, %v9963
      %v10365 = vsel %vm4223, %v10343, %v9965
      %v10367 = vsel %vm4223, %v10344, %v9967
      %v10369 = vsel %vm4223, %v10345, %v9969
      %v10371 = vsel %vm4223, %v10346, %v9971
      %v10373 = vsel %vm4223, %v10347, %v9973
      %v10375 = vsel %vm4223, %v10348, %v9975
      %v10377 = vsel %vm4223, %v10349, %v9977
      %v10379 = vsel %vm4223, %v10350, %v9979
      %v10381 = vsel %vm4223, %v10351, %v9981
      %v10383 = vsel %vm4223, %v10352, %v9983
      %v10385 = vsel %vm4223, %v10353, %v9985
      %v10387 = vsel %vm4256, %v10355, %v10035
      %v10389 = vsel %vm4256, %v10357, %v10037
      %v10391 = vsel %vm4256, %v10359, %v10039
      %v10393 = vsel %vm4256, %v10361, %v10041
      %v10395 = vsel %vm4256, %v10363, %v10043
      %v10397 = vsel %vm4256, %v10365, %v10045
      %v10399 = vsel %vm4256, %v10367, %v10047
      %v10401 = vsel %vm4256, %v10369, %v10049
      %v10403 = vsel %vm4256, %v10371, %v10051
      %v10405 = vsel %vm4256, %v10373, %v10053
      %v10407 = vsel %vm4256, %v10375, %v10055
      %v10409 = vsel %vm4256, %v10377, %v10057
      %v10411 = vsel %vm4256, %v10379, %v10059
      %v10413 = vsel %vm4256, %v10381, %v10061
      %v10415 = vsel %vm4256, %v10383, %v10063
      %v10417 = vsel %vm4256, %v10385, %v10065
      %v10419 = vsel %vm4289, %v10387, %v10115
      %v10421 = vsel %vm4289, %v10389, %v10117
      %v10423 = vsel %vm4289, %v10391, %v10119
      %v10425 = vsel %vm4289, %v10393, %v10121
      %v10427 = vsel %vm4289, %v10395, %v10123
      %v10429 = vsel %vm4289, %v10397, %v10125
      %v10431 = vsel %vm4289, %v10399, %v10127
      %v10433 = vsel %vm4289, %v10401, %v10129
      %v10435 = vsel %vm4289, %v10403, %v10131
      %v10437 = vsel %vm4289, %v10405, %v10133
      %v10439 = vsel %vm4289, %v10407, %v10135
      %v10441 = vsel %vm4289, %v10409, %v10137
      %v10443 = vsel %vm4289, %v10411, %v10139
      %v10445 = vsel %vm4289, %v10413, %v10141
      %v10447 = vsel %vm4289, %v10415, %v10143
      %v10449 = vsel %vm4289, %v10417, %v10145
      %v10451 = vsel %vm4322, %v10419, %v10195
      %v10453 = vsel %vm4322, %v10421, %v10197
      %v10455 = vsel %vm4322, %v10423, %v10199
      %v10457 = vsel %vm4322, %v10425, %v10201
      %v10459 = vsel %vm4322, %v10427, %v10203
      %v10461 = vsel %vm4322, %v10429, %v10205
      %v10463 = vsel %vm4322, %v10431, %v10207
      %v10465 = vsel %vm4322, %v10433, %v10209
      %v10467 = vsel %vm4322, %v10435, %v10211
      %v10469 = vsel %vm4322, %v10437, %v10213
      %v10471 = vsel %vm4322, %v10439, %v10215
      %v10473 = vsel %vm4322, %v10441, %v10217
      %v10475 = vsel %vm4322, %v10443, %v10219
      %v10477 = vsel %vm4322, %v10445, %v10221
      %v10479 = vsel %vm4322, %v10447, %v10223
      %v10481 = vsel %vm4322, %v10449, %v10225
      %s10482 = scalar_lea.vmem %s1, 72
      %v10483 = vld [vmem:[%s10482] sm:$0xf]
      %v10484 = vld [vmem:[%s10482 + $0x4] sm:$0xf]
      %v10485 = vld [vmem:[%s10482 + $0x8] sm:$0xf]
      %v10486 = vld [vmem:[%s10482 + $0xc] sm:$0xf]
      %v10487 = vld [vmem:[%s10482 + $0x10] sm:$0xf]
      %v10488 = vld [vmem:[%s10482 + $0x14] sm:$0xf]
      %v10489 = vld [vmem:[%s10482 + $0x18] sm:$0xf]
      %v10490 = vld [vmem:[%s10482 + $0x1c] sm:$0xf]
      %v10491 = vld [vmem:[%s10482 + $0x20] sm:$0xf]
      %v10501 = vunpack.c.l.b16 %v10483
      %v10502 = vunpack.c.l.b16 %v10484
      %v10503 = vunpack.c.l.b16 %v10485
      %v10504 = vunpack.c.l.b16 %v10486
      %v10505 = vunpack.c.l.b16 %v10487
      %v10506 = vunpack.c.l.b16 %v10488
      %v10507 = vunpack.c.l.b16 %v10489
      %v10508 = vunpack.c.l.b16 %v10490
      %v10509 = vunpack.c.l.b16 %v10491
      %v10510 = vpack.c.b16 %v10502, %v10501
      %v10511 = vpack.c.b16 %v10504, %v10503
      %v10512 = vpack.c.b16 %v10506, %v10505
      %v10513 = vpack.c.b16 %v10508, %v10507
      %v10514 = vpack.c.b16 %v10509, %v10509
      %v10519 = vsel %vm4391, %v10451, 0
      %v10521 = vsel %vm4391, %v10453, 0
      %v10523 = vsel %vm4391, %v10455, 0
      %v10525 = vsel %vm4391, %v10457, 0
      %v10527 = vsel %vm4391, %v10459, 0
      %v10529 = vsel %vm4391, %v10461, 0
      %v10531 = vsel %vm4391, %v10463, 0
      %v10533 = vsel %vm4391, %v10465, 0
      %v10535 = vsel %vm4391, %v10467, 0
      %v10537 = vsel %vm4391, %v10469, 0
      %v10539 = vsel %vm4391, %v10471, 0
      %v10541 = vsel %vm4391, %v10473, 0
      %v10543 = vsel %vm4391, %v10475, 0
      %v10545 = vsel %vm4391, %v10477, 0
      %v10547 = vsel %vm4391, %v10479, 0
      %v10549 = vsel %vm4391, %v10481, 0
      %v10552 = vsel %vm4424, %v10514, 0
      %10554 = vmatprep.subr.bf16.mxu0 0
      %10555 = vmatpush1.bf16.msra.mxu0 %v10510
      %10556 = vmatprep.subr.bf16.mxu0 0
      %10557 = vmatpush1.bf16.msra.mxu0 %v10511
      %10558 = vmatprep.subr.bf16.mxu0 0
      %10559 = vmatpush1.bf16.msra.mxu0 %v10512
      %10560 = vmatprep.subr.bf16.mxu0 0
      %10561 = vmatpush1.bf16.msra.mxu0 %v10513
      %10562 = vmatprep.subr.bf16.mxu0 0
      %10563 = vmatpush1.bf16.msra.mxu0 %v10552
      %10564 = vmatprep.subr.bf16.mxu0 0
      %10565 = vmatpush1.bf16.msra.mxu0 0
      %10566 = vmatprep.subr.bf16.mxu0 0
      %10567 = vmatpush1.bf16.msra.mxu0 0
      %10568 = vmatprep.subr.bf16.mxu0 0
      %10569 = vmatpush1.bf16.msra.mxu0 0
      %10570 = vmatprep.subr.bf16.mxu0 0
      %10571 = vmatpush1.bf16.msra.mxu0 0
      %10572 = vmatprep.subr.bf16.mxu0 0
      %10573 = vmatpush1.bf16.msra.mxu0 0
      %10574 = vmatprep.subr.bf16.mxu0 0
      %10575 = vmatpush1.bf16.msra.mxu0 0
      %10576 = vmatprep.subr.bf16.mxu0 0
      %10577 = vmatpush1.bf16.msra.mxu0 0
      %10578 = vmatprep.subr.bf16.mxu0 0
      %10579 = vmatpush1.bf16.msra.mxu0 0
      %10580 = vmatprep.subr.bf16.mxu0 0
      %10581 = vmatpush1.bf16.msra.mxu0 0
      %10582 = vmatprep.subr.bf16.mxu0 0
      %10583 = vmatpush1.bf16.msra.mxu0 0
      %10584 = vmatprep.subr.bf16.mxu0 0
      %10585 = vmatpush1.bf16.msra.mxu0 0
      %10586 = vmatprep.mubr.bf16.mxu0 0
      %10587 = vmatmul.mubr.bf16.gmra.mrb[0].mxu0 %v10519
      %v10588 = vpop.f32.mrb[0].mxu0
      %v10589 = vadd.f32 0.0, %v10588
      %v10590 = vpop.f32.mrb[0].mxu0
      %v10591 = vpop.f32.mrb[0].mxu0
      %v10592 = vadd.f32 0.0, %v10591
      %v10593 = vpop.f32.mrb[0].mxu0
      %10594 = vmatprep.mubr.bf16.mxu0 0
      %10595 = vmatmul.mubr.bf16.gmra.mrb[0].mxu0 %v10521
      %v10596 = vpop.f32.mrb[0].mxu0
      %v10597 = vadd.f32 0.0, %v10596
      %v10598 = vpop.f32.mrb[0].mxu0
      %v10599 = vpop.f32.mrb[0].mxu0
      %v10600 = vadd.f32 0.0, %v10599
      %v10601 = vpop.f32.mrb[0].mxu0
      %10602 = vmatprep.mubr.bf16.mxu0 0
      %10603 = vmatmul.mubr.bf16.gmra.mrb[0].mxu0 %v10523
      %v10604 = vpop.f32.mrb[0].mxu0
      %v10605 = vadd.f32 0.0, %v10604
      %v10606 = vpop.f32.mrb[0].mxu0
      %v10607 = vpop.f32.mrb[0].mxu0
      %v10608 = vadd.f32 0.0, %v10607
      %v10609 = vpop.f32.mrb[0].mxu0
      %10610 = vmatprep.mubr.bf16.mxu0 0
      %10611 = vmatmul.mubr.bf16.gmra.mrb[0].mxu0 %v10525
      %v10612 = vpop.f32.mrb[0].mxu0
      %v10613 = vadd.f32 0.0, %v10612
      %v10614 = vpop.f32.mrb[0].mxu0
      %v10615 = vpop.f32.mrb[0].mxu0
      %v10616 = vadd.f32 0.0, %v10615
      %v10617 = vpop.f32.mrb[0].mxu0
      %10618 = vmatprep.mubr.bf16.mxu0 0
      %10619 = vmatmul.mubr.bf16.gmra.mrb[0].mxu0 %v10527
      %v10620 = vpop.f32.mrb[0].mxu0
      %v10621 = vadd.f32 0.0, %v10620
      %v10622 = vpop.f32.mrb[0].mxu0
      %v10623 = vpop.f32.mrb[0].mxu0
      %v10624 = vadd.f32 0.0, %v10623
      %v10625 = vpop.f32.mrb[0].mxu0
      %10626 = vmatprep.mubr.bf16.mxu0 0
      %10627 = vmatmul.mubr.bf16.gmra.mrb[0].mxu0 %v10529
      %v10628 = vpop.f32.mrb[0].mxu0
      %v10629 = vadd.f32 0.0, %v10628
      %v10630 = vpop.f32.mrb[0].mxu0
      %v10631 = vpop.f32.mrb[0].mxu0
      %v10632 = vadd.f32 0.0, %v10631
      %v10633 = vpop.f32.mrb[0].mxu0
      %10634 = vmatprep.mubr.bf16.mxu0 0
      %10635 = vmatmul.mubr.bf16.gmra.mrb[0].mxu0 %v10531
      %v10636 = vpop.f32.mrb[0].mxu0
      %v10637 = vadd.f32 0.0, %v10636
      %v10638 = vpop.f32.mrb[0].mxu0
      %v10639 = vpop.f32.mrb[0].mxu0
      %v10640 = vadd.f32 0.0, %v10639
      %v10641 = vpop.f32.mrb[0].mxu0
      %10642 = vmatprep.mubr.bf16.mxu0 0
      %10643 = vmatmul.mubr.bf16.gmra.mrb[0].mxu0 %v10533
      %v10644 = vpop.f32.mrb[0].mxu0
      %v10645 = vadd.f32 0.0, %v10644
      %v10646 = vpop.f32.mrb[0].mxu0
      %v10647 = vpop.f32.mrb[0].mxu0
      %v10648 = vadd.f32 0.0, %v10647
      %v10649 = vpop.f32.mrb[0].mxu0
      %10650 = vmatprep.mubr.bf16.mxu0 0
      %10651 = vmatmul.mubr.bf16.gmra.mrb[0].mxu0 %v10535
      %v10652 = vpop.f32.mrb[0].mxu0
      %v10653 = vadd.f32 0.0, %v10652
      %v10654 = vpop.f32.mrb[0].mxu0
      %v10655 = vpop.f32.mrb[0].mxu0
      %v10656 = vadd.f32 0.0, %v10655
      %v10657 = vpop.f32.mrb[0].mxu0
      %10658 = vmatprep.mubr.bf16.mxu0 0
      %10659 = vmatmul.mubr.bf16.gmra.mrb[0].mxu0 %v10537
      %v10660 = vpop.f32.mrb[0].mxu0
      %v10661 = vadd.f32 0.0, %v10660
      %v10662 = vpop.f32.mrb[0].mxu0
      %v10663 = vpop.f32.mrb[0].mxu0
      %v10664 = vadd.f32 0.0, %v10663
      %v10665 = vpop.f32.mrb[0].mxu0
      %10666 = vmatprep.mubr.bf16.mxu0 0
      %10667 = vmatmul.mubr.bf16.gmra.mrb[0].mxu0 %v10539
      %v10668 = vpop.f32.mrb[0].mxu0
      %v10669 = vadd.f32 0.0, %v10668
      %v10670 = vpop.f32.mrb[0].mxu0
      %v10671 = vpop.f32.mrb[0].mxu0
      %v10672 = vadd.f32 0.0, %v10671
      %v10673 = vpop.f32.mrb[0].mxu0
      %10674 = vmatprep.mubr.bf16.mxu0 0
      %10675 = vmatmul.mubr.bf16.gmra.mrb[0].mxu0 %v10541
      %v10676 = vpop.f32.mrb[0].mxu0
      %v10677 = vadd.f32 0.0, %v10676
      %v10678 = vpop.f32.mrb[0].mxu0
      %v10679 = vpop.f32.mrb[0].mxu0
      %v10680 = vadd.f32 0.0, %v10679
      %v10681 = vpop.f32.mrb[0].mxu0
      %10682 = vmatprep.mubr.bf16.mxu0 0
      %10683 = vmatmul.mubr.bf16.gmra.mrb[0].mxu0 %v10543
      %v10684 = vpop.f32.mrb[0].mxu0
      %v10685 = vadd.f32 0.0, %v10684
      %v10686 = vpop.f32.mrb[0].mxu0
      %v10687 = vpop.f32.mrb[0].mxu0
      %v10688 = vadd.f32 0.0, %v10687
      %v10689 = vpop.f32.mrb[0].mxu0
      %10690 = vmatprep.mubr.bf16.mxu0 0
      %10691 = vmatmul.mubr.bf16.gmra.mrb[0].mxu0 %v10545
      %v10692 = vpop.f32.mrb[0].mxu0
      %v10693 = vadd.f32 0.0, %v10692
      %v10694 = vpop.f32.mrb[0].mxu0
      %v10695 = vpop.f32.mrb[0].mxu0
      %v10696 = vadd.f32 0.0, %v10695
      %v10697 = vpop.f32.mrb[0].mxu0
      %10698 = vmatprep.mubr.bf16.mxu0 0
      %10699 = vmatmul.mubr.bf16.gmra.mrb[0].mxu0 %v10547
      %v10700 = vpop.f32.mrb[0].mxu0
      %v10701 = vadd.f32 0.0, %v10700
      %v10702 = vpop.f32.mrb[0].mxu0
      %v10703 = vpop.f32.mrb[0].mxu0
      %v10704 = vadd.f32 0.0, %v10703
      %v10705 = vpop.f32.mrb[0].mxu0
      %10706 = vmatprep.mubr.bf16.mxu0 0
      %10707 = vmatmul.mubr.bf16.gmra.mrb[0].mxu0 %v10549
      %v10708 = vpop.f32.mrb[0].mxu0
      %v10709 = vadd.f32 0.0, %v10708
      %v10710 = vpop.f32.mrb[0].mxu0
      %v10711 = vpop.f32.mrb[0].mxu0
      %v10712 = vadd.f32 0.0, %v10711
      %v10713 = vpop.f32.mrb[0].mxu0
      %10714 = vdwg.mxu0
      %s10715 = smul.u32 %s197, 3
      %s10716 = smul.addr %s10715, 4
      %s10717 = scalar_lea.vmem %s184, %s10716
      %v10718 = vld [vmem:[%s10717] sm:$0xf]
      %v10719 = vld [vmem:[%s10717 + $0x4] sm:$0xf]
      %v10720 = vld [vmem:[%s10717 + $0xc] sm:$0xf]
      %v10721 = vld [vmem:[%s10717 + $0x10] sm:$0xf]
      %v10722 = vld [vmem:[%s10717 + $0x18] sm:$0xf]
      %v10723 = vld [vmem:[%s10717 + $0x1c] sm:$0xf]
      %v10724 = vld [vmem:[%s10717 + $0x24] sm:$0xf]
      %v10725 = vld [vmem:[%s10717 + $0x28] sm:$0xf]
      %v10726 = vld [vmem:[%s10717 + $0x30] sm:$0xf]
      %v10727 = vld [vmem:[%s10717 + $0x34] sm:$0xf]
      %v10728 = vld [vmem:[%s10717 + $0x3c] sm:$0xf]
      %v10729 = vld [vmem:[%s10717 + $0x40] sm:$0xf]
      %v10730 = vld [vmem:[%s10717 + $0x48] sm:$0xf]
      %v10731 = vld [vmem:[%s10717 + $0x4c] sm:$0xf]
      %v10732 = vld [vmem:[%s10717 + $0x54] sm:$0xf]
      %v10733 = vld [vmem:[%s10717 + $0x58] sm:$0xf]
      %v10734 = vld [vmem:[%s10717 + $0x60] sm:$0xf]
      %v10735 = vld [vmem:[%s10717 + $0x64] sm:$0xf]
      %v10736 = vld [vmem:[%s10717 + $0x6c] sm:$0xf]
      %v10737 = vld [vmem:[%s10717 + $0x70] sm:$0xf]
      %v10738 = vld [vmem:[%s10717 + $0x78] sm:$0xf]
      %v10739 = vld [vmem:[%s10717 + $0x7c] sm:$0xf]
      %v10740 = vld [vmem:[%s10717 + $0x84] sm:$0xf]
      %v10741 = vld [vmem:[%s10717 + $0x88] sm:$0xf]
      %v10742 = vld [vmem:[%s10717 + $0x90] sm:$0xf]
      %v10743 = vld [vmem:[%s10717 + $0x94] sm:$0xf]
      %v10744 = vld [vmem:[%s10717 + $0x9c] sm:$0xf]
      %v10745 = vld [vmem:[%s10717 + $0xa0] sm:$0xf]
      %v10746 = vld [vmem:[%s10717 + $0xa8] sm:$0xf]
      %v10747 = vld [vmem:[%s10717 + $0xac] sm:$0xf]
      %v10748 = vld [vmem:[%s10717 + $0xb4] sm:$0xf]
      %v10749 = vld [vmem:[%s10717 + $0xb8] sm:$0xf]
      %v10750 = vld [vmem:[%s10717] sm:$0xc]
      %v10751 = vld [vmem:[%s10717 + $0x8] sm:$0x3]
      %v10752 = vld [vmem:[%s10717 + $0xc] sm:$0xc]
      %v10753 = vld [vmem:[%s10717 + $0x14] sm:$0x3]
      %v10754 = vld [vmem:[%s10717 + $0x18] sm:$0xc]
      %v10755 = vld [vmem:[%s10717 + $0x20] sm:$0x3]
      %v10756 = vld [vmem:[%s10717 + $0x24] sm:$0xc]
      %v10757 = vld [vmem:[%s10717 + $0x2c] sm:$0x3]
      %v10758 = vld [vmem:[%s10717 + $0x30] sm:$0xc]
      %v10759 = vld [vmem:[%s10717 + $0x38] sm:$0x3]
      %v10760 = vld [vmem:[%s10717 + $0x3c] sm:$0xc]
      %v10761 = vld [vmem:[%s10717 + $0x44] sm:$0x3]
      %v10762 = vld [vmem:[%s10717 + $0x48] sm:$0xc]
      %v10763 = vld [vmem:[%s10717 + $0x50] sm:$0x3]
      %v10764 = vld [vmem:[%s10717 + $0x54] sm:$0xc]
      %v10765 = vld [vmem:[%s10717 + $0x5c] sm:$0x3]
      %v10766 = vld [vmem:[%s10717 + $0x60] sm:$0xc]
      %v10767 = vld [vmem:[%s10717 + $0x68] sm:$0x3]
      %v10768 = vld [vmem:[%s10717 + $0x6c] sm:$0xc]
      %v10769 = vld [vmem:[%s10717 + $0x74] sm:$0x3]
      %v10770 = vld [vmem:[%s10717 + $0x78] sm:$0xc]
      %v10771 = vld [vmem:[%s10717 + $0x80] sm:$0x3]
      %v10772 = vld [vmem:[%s10717 + $0x84] sm:$0xc]
      %v10773 = vld [vmem:[%s10717 + $0x8c] sm:$0x3]
      %v10774 = vld [vmem:[%s10717 + $0x90] sm:$0xc]
      %v10775 = vld [vmem:[%s10717 + $0x98] sm:$0x3]
      %v10776 = vld [vmem:[%s10717 + $0x9c] sm:$0xc]
      %v10777 = vld [vmem:[%s10717 + $0xa4] sm:$0x3]
      %v10778 = vld [vmem:[%s10717 + $0xa8] sm:$0xc]
      %v10779 = vld [vmem:[%s10717 + $0xb0] sm:$0x3]
      %v10780 = vld [vmem:[%s10717 + $0xb4] sm:$0xc]
      %v10781 = vld [vmem:[%s10717 + $0xbc] sm:$0x3]
      %v10830 = vrot.slane %v10750, 6
      %v10831 = vrot.slane %v10830, 4
      %v10832 = vrot.slane %v10719, 6
      %v10833 = vsel %vm767, %v10831, %v10832
      %v10834 = vrot.slane %v10832, 4
      %v10835 = vrot.slane %v10751, 6
      %v10836 = vsel %vm767, %v10834, %v10835
      %v10837 = vrot.slane %v10752, 6
      %v10838 = vrot.slane %v10837, 4
      %v10839 = vrot.slane %v10721, 6
      %v10840 = vsel %vm767, %v10838, %v10839
      %v10841 = vrot.slane %v10839, 4
      %v10842 = vrot.slane %v10753, 6
      %v10843 = vsel %vm767, %v10841, %v10842
      %v10844 = vrot.slane %v10754, 6
      %v10845 = vrot.slane %v10844, 4
      %v10846 = vrot.slane %v10723, 6
      %v10847 = vsel %vm767, %v10845, %v10846
      %v10848 = vrot.slane %v10846, 4
      %v10849 = vrot.slane %v10755, 6
      %v10850 = vsel %vm767, %v10848, %v10849
      %v10851 = vrot.slane %v10756, 6
      %v10852 = vrot.slane %v10851, 4
      %v10853 = vrot.slane %v10725, 6
      %v10854 = vsel %vm767, %v10852, %v10853
      %v10855 = vrot.slane %v10853, 4
      %v10856 = vrot.slane %v10757, 6
      %v10857 = vsel %vm767, %v10855, %v10856
      %v10858 = vrot.slane %v10758, 6
      %v10859 = vrot.slane %v10858, 4
      %v10860 = vrot.slane %v10727, 6
      %v10861 = vsel %vm767, %v10859, %v10860
      %v10862 = vrot.slane %v10860, 4
      %v10863 = vrot.slane %v10759, 6
      %v10864 = vsel %vm767, %v10862, %v10863
      %v10865 = vrot.slane %v10760, 6
      %v10866 = vrot.slane %v10865, 4
      %v10867 = vrot.slane %v10729, 6
      %v10868 = vsel %vm767, %v10866, %v10867
      %v10869 = vrot.slane %v10867, 4
      %v10870 = vrot.slane %v10761, 6
      %v10871 = vsel %vm767, %v10869, %v10870
      %v10872 = vrot.slane %v10762, 6
      %v10873 = vrot.slane %v10872, 4
      %v10874 = vrot.slane %v10731, 6
      %v10875 = vsel %vm767, %v10873, %v10874
      %v10876 = vrot.slane %v10874, 4
      %v10877 = vrot.slane %v10763, 6
      %v10878 = vsel %vm767, %v10876, %v10877
      %v10879 = vrot.slane %v10764, 6
      %v10880 = vrot.slane %v10879, 4
      %v10881 = vrot.slane %v10733, 6
      %v10882 = vsel %vm767, %v10880, %v10881
      %v10883 = vrot.slane %v10881, 4
      %v10884 = vrot.slane %v10765, 6
      %v10885 = vsel %vm767, %v10883, %v10884
      %v10886 = vrot.slane %v10766, 6
      %v10887 = vrot.slane %v10886, 4
      %v10888 = vrot.slane %v10735, 6
      %v10889 = vsel %vm767, %v10887, %v10888
      %v10890 = vrot.slane %v10888, 4
      %v10891 = vrot.slane %v10767, 6
      %v10892 = vsel %vm767, %v10890, %v10891
      %v10893 = vrot.slane %v10768, 6
      %v10894 = vrot.slane %v10893, 4
      %v10895 = vrot.slane %v10737, 6
      %v10896 = vsel %vm767, %v10894, %v10895
      %v10897 = vrot.slane %v10895, 4
      %v10898 = vrot.slane %v10769, 6
      %v10899 = vsel %vm767, %v10897, %v10898
      %v10900 = vrot.slane %v10770, 6
      %v10901 = vrot.slane %v10900, 4
      %v10902 = vrot.slane %v10739, 6
      %v10903 = vsel %vm767, %v10901, %v10902
      %v10904 = vrot.slane %v10902, 4
      %v10905 = vrot.slane %v10771, 6
      %v10906 = vsel %vm767, %v10904, %v10905
      %v10907 = vrot.slane %v10772, 6
      %v10908 = vrot.slane %v10907, 4
      %v10909 = vrot.slane %v10741, 6
      %v10910 = vsel %vm767, %v10908, %v10909
      %v10911 = vrot.slane %v10909, 4
      %v10912 = vrot.slane %v10773, 6
      %v10913 = vsel %vm767, %v10911, %v10912
      %v10914 = vrot.slane %v10774, 6
      %v10915 = vrot.slane %v10914, 4
      %v10916 = vrot.slane %v10743, 6
      %v10917 = vsel %vm767, %v10915, %v10916
      %v10918 = vrot.slane %v10916, 4
      %v10919 = vrot.slane %v10775, 6
      %v10920 = vsel %vm767, %v10918, %v10919
      %v10921 = vrot.slane %v10776, 6
      %v10922 = vrot.slane %v10921, 4
      %v10923 = vrot.slane %v10745, 6
      %v10924 = vsel %vm767, %v10922, %v10923
      %v10925 = vrot.slane %v10923, 4
      %v10926 = vrot.slane %v10777, 6
      %v10927 = vsel %vm767, %v10925, %v10926
      %v10928 = vrot.slane %v10778, 6
      %v10929 = vrot.slane %v10928, 4
      %v10930 = vrot.slane %v10747, 6
      %v10931 = vsel %vm767, %v10929, %v10930
      %v10932 = vrot.slane %v10930, 4
      %v10933 = vrot.slane %v10779, 6
      %v10934 = vsel %vm767, %v10932, %v10933
      %v10935 = vrot.slane %v10780, 6
      %v10936 = vrot.slane %v10935, 4
      %v10937 = vrot.slane %v10749, 6
      %v10938 = vsel %vm767, %v10936, %v10937
      %v10939 = vrot.slane %v10937, 4
      %v10940 = vrot.slane %v10781, 6
      %v10941 = vsel %vm767, %v10939, %v10940
      %v10942 = vld [vmem:[%s10717 + $0x8] sm:$0xf]
      %v10943 = vld [vmem:[%s10717 + $0x14] sm:$0xf]
      %v10944 = vld [vmem:[%s10717 + $0x20] sm:$0xf]
      %v10945 = vld [vmem:[%s10717 + $0x2c] sm:$0xf]
      %v10946 = vld [vmem:[%s10717 + $0x38] sm:$0xf]
      %v10947 = vld [vmem:[%s10717 + $0x44] sm:$0xf]
      %v10948 = vld [vmem:[%s10717 + $0x50] sm:$0xf]
      %v10949 = vld [vmem:[%s10717 + $0x5c] sm:$0xf]
      %v10950 = vld [vmem:[%s10717 + $0x68] sm:$0xf]
      %v10951 = vld [vmem:[%s10717 + $0x74] sm:$0xf]
      %v10952 = vld [vmem:[%s10717 + $0x80] sm:$0xf]
      %v10953 = vld [vmem:[%s10717 + $0x8c] sm:$0xf]
      %v10954 = vld [vmem:[%s10717 + $0x98] sm:$0xf]
      %v10955 = vld [vmem:[%s10717 + $0xa4] sm:$0xf]
      %v10956 = vld [vmem:[%s10717 + $0xb0] sm:$0xf]
      %v10957 = vld [vmem:[%s10717 + $0xbc] sm:$0xf]
      %v10958 = vld [vmem:[%s1270] sm:$0xf]
      %v10959 = vld [vmem:[%s1270 + $0x4] sm:$0xf]
      %v10960 = vld [vmem:[%s1270 + $0xc] sm:$0xf]
      %v10961 = vld [vmem:[%s1270 + $0x10] sm:$0xf]
      %v10962 = vld [vmem:[%s1270 + $0x18] sm:$0xf]
      %v10963 = vld [vmem:[%s1270 + $0x1c] sm:$0xf]
      %v10964 = vld [vmem:[%s1270 + $0x24] sm:$0xf]
      %v10965 = vld [vmem:[%s1270 + $0x28] sm:$0xf]
      %v10966 = vld [vmem:[%s1270 + $0x30] sm:$0xf]
      %v10967 = vld [vmem:[%s1270 + $0x34] sm:$0xf]
      %v10968 = vld [vmem:[%s1270 + $0x3c] sm:$0xf]
      %v10969 = vld [vmem:[%s1270 + $0x40] sm:$0xf]
      %v10970 = vld [vmem:[%s1270 + $0x48] sm:$0xf]
      %v10971 = vld [vmem:[%s1270 + $0x4c] sm:$0xf]
      %v10972 = vld [vmem:[%s1270 + $0x54] sm:$0xf]
      %v10973 = vld [vmem:[%s1270 + $0x58] sm:$0xf]
      %v10974 = vld [vmem:[%s1270 + $0x60] sm:$0xf]
      %v10975 = vld [vmem:[%s1270 + $0x64] sm:$0xf]
      %v10976 = vld [vmem:[%s1270 + $0x6c] sm:$0xf]
      %v10977 = vld [vmem:[%s1270 + $0x70] sm:$0xf]
      %v10978 = vld [vmem:[%s1270 + $0x78] sm:$0xf]
      %v10979 = vld [vmem:[%s1270 + $0x7c] sm:$0xf]
      %v10980 = vld [vmem:[%s1270 + $0x84] sm:$0xf]
      %v10981 = vld [vmem:[%s1270 + $0x88] sm:$0xf]
      %v10982 = vld [vmem:[%s1270 + $0x90] sm:$0xf]
      %v10983 = vld [vmem:[%s1270 + $0x94] sm:$0xf]
      %v10984 = vld [vmem:[%s1270 + $0x9c] sm:$0xf]
      %v10985 = vld [vmem:[%s1270 + $0xa0] sm:$0xf]
      %v10986 = vld [vmem:[%s1270 + $0xa8] sm:$0xf]
      %v10987 = vld [vmem:[%s1270 + $0xac] sm:$0xf]
      %v10988 = vld [vmem:[%s1270 + $0xb4] sm:$0xf]
      %v10989 = vld [vmem:[%s1270 + $0xb8] sm:$0xf]
      %s10990 = sadd.s32 %s197, 8
      %s10991 = smul.u32 %s10990, 3
      %s10992 = smul.addr %s10991, 4
      %s10993 = scalar_lea.vmem %s184, %s10992
      %v10994 = vld [vmem:[%s10993] sm:$0xf]
      %v10995 = vld [vmem:[%s10993 + $0x4] sm:$0xf]
      %v10996 = vld [vmem:[%s10993 + $0xc] sm:$0xf]
      %v10997 = vld [vmem:[%s10993 + $0x10] sm:$0xf]
      %v10998 = vld [vmem:[%s10993 + $0x18] sm:$0xf]
      %v10999 = vld [vmem:[%s10993 + $0x1c] sm:$0xf]
      %v11000 = vld [vmem:[%s10993 + $0x24] sm:$0xf]
      %v11001 = vld [vmem:[%s10993 + $0x28] sm:$0xf]
      %v11002 = vld [vmem:[%s10993 + $0x30] sm:$0xf]
      %v11003 = vld [vmem:[%s10993 + $0x34] sm:$0xf]
      %v11004 = vld [vmem:[%s10993 + $0x3c] sm:$0xf]
      %v11005 = vld [vmem:[%s10993 + $0x40] sm:$0xf]
      %v11006 = vld [vmem:[%s10993 + $0x48] sm:$0xf]
      %v11007 = vld [vmem:[%s10993 + $0x4c] sm:$0xf]
      %v11008 = vld [vmem:[%s10993 + $0x54] sm:$0xf]
      %v11009 = vld [vmem:[%s10993 + $0x58] sm:$0xf]
      %v11010 = vld [vmem:[%s10993 + $0x60] sm:$0xf]
      %v11011 = vld [vmem:[%s10993 + $0x64] sm:$0xf]
      %v11012 = vld [vmem:[%s10993 + $0x6c] sm:$0xf]
      %v11013 = vld [vmem:[%s10993 + $0x70] sm:$0xf]
      %v11014 = vld [vmem:[%s10993 + $0x78] sm:$0xf]
      %v11015 = vld [vmem:[%s10993 + $0x7c] sm:$0xf]
      %v11016 = vld [vmem:[%s10993 + $0x84] sm:$0xf]
      %v11017 = vld [vmem:[%s10993 + $0x88] sm:$0xf]
      %v11018 = vld [vmem:[%s10993 + $0x90] sm:$0xf]
      %v11019 = vld [vmem:[%s10993 + $0x94] sm:$0xf]
      %v11020 = vld [vmem:[%s10993 + $0x9c] sm:$0xf]
      %v11021 = vld [vmem:[%s10993 + $0xa0] sm:$0xf]
      %v11022 = vld [vmem:[%s10993 + $0xa8] sm:$0xf]
      %v11023 = vld [vmem:[%s10993 + $0xac] sm:$0xf]
      %v11024 = vld [vmem:[%s10993 + $0xb4] sm:$0xf]
      %v11025 = vld [vmem:[%s10993 + $0xb8] sm:$0xf]
      %v11026 = vld [vmem:[%s10993] sm:$0xc]
      %v11027 = vld [vmem:[%s10993 + $0x8] sm:$0x3]
      %v11028 = vld [vmem:[%s10993 + $0xc] sm:$0xc]
      %v11029 = vld [vmem:[%s10993 + $0x14] sm:$0x3]
      %v11030 = vld [vmem:[%s10993 + $0x18] sm:$0xc]
      %v11031 = vld [vmem:[%s10993 + $0x20] sm:$0x3]
      %v11032 = vld [vmem:[%s10993 + $0x24] sm:$0xc]
      %v11033 = vld [vmem:[%s10993 + $0x2c] sm:$0x3]
      %v11034 = vld [vmem:[%s10993 + $0x30] sm:$0xc]
      %v11035 = vld [vmem:[%s10993 + $0x38] sm:$0x3]
      %v11036 = vld [vmem:[%s10993 + $0x3c] sm:$0xc]
      %v11037 = vld [vmem:[%s10993 + $0x44] sm:$0x3]
      %v11038 = vld [vmem:[%s10993 + $0x48] sm:$0xc]
      %v11039 = vld [vmem:[%s10993 + $0x50] sm:$0x3]
      %v11040 = vld [vmem:[%s10993 + $0x54] sm:$0xc]
      %v11041 = vld [vmem:[%s10993 + $0x5c] sm:$0x3]
      %v11042 = vld [vmem:[%s10993 + $0x60] sm:$0xc]
      %v11043 = vld [vmem:[%s10993 + $0x68] sm:$0x3]
      %v11044 = vld [vmem:[%s10993 + $0x6c] sm:$0xc]
      %v11045 = vld [vmem:[%s10993 + $0x74] sm:$0x3]
      %v11046 = vld [vmem:[%s10993 + $0x78] sm:$0xc]
      %v11047 = vld [vmem:[%s10993 + $0x80] sm:$0x3]
      %v11048 = vld [vmem:[%s10993 + $0x84] sm:$0xc]
      %v11049 = vld [vmem:[%s10993 + $0x8c] sm:$0x3]
      %v11050 = vld [vmem:[%s10993 + $0x90] sm:$0xc]
      %v11051 = vld [vmem:[%s10993 + $0x98] sm:$0x3]
      %v11052 = vld [vmem:[%s10993 + $0x9c] sm:$0xc]
      %v11053 = vld [vmem:[%s10993 + $0xa4] sm:$0x3]
      %v11054 = vld [vmem:[%s10993 + $0xa8] sm:$0xc]
      %v11055 = vld [vmem:[%s10993 + $0xb0] sm:$0x3]
      %v11056 = vld [vmem:[%s10993 + $0xb4] sm:$0xc]
      %v11057 = vld [vmem:[%s10993 + $0xbc] sm:$0x3]
      %v11106 = vrot.slane %v11026, 6
      %v11107 = vrot.slane %v11106, 4
      %v11108 = vrot.slane %v10995, 6
      %v11109 = vsel %vm767, %v11107, %v11108
      %v11110 = vrot.slane %v11108, 4
      %v11111 = vrot.slane %v11027, 6
      %v11112 = vsel %vm767, %v11110, %v11111
      %v11113 = vrot.slane %v11028, 6
      %v11114 = vrot.slane %v11113, 4
      %v11115 = vrot.slane %v10997, 6
      %v11116 = vsel %vm767, %v11114, %v11115
      %v11117 = vrot.slane %v11115, 4
      %v11118 = vrot.slane %v11029, 6
      %v11119 = vsel %vm767, %v11117, %v11118
      %v11120 = vrot.slane %v11030, 6
      %v11121 = vrot.slane %v11120, 4
      %v11122 = vrot.slane %v10999, 6
      %v11123 = vsel %vm767, %v11121, %v11122
      %v11124 = vrot.slane %v11122, 4
      %v11125 = vrot.slane %v11031, 6
      %v11126 = vsel %vm767, %v11124, %v11125
      %v11127 = vrot.slane %v11032, 6
      %v11128 = vrot.slane %v11127, 4
      %v11129 = vrot.slane %v11001, 6
      %v11130 = vsel %vm767, %v11128, %v11129
      %v11131 = vrot.slane %v11129, 4
      %v11132 = vrot.slane %v11033, 6
      %v11133 = vsel %vm767, %v11131, %v11132
      %v11134 = vrot.slane %v11034, 6
      %v11135 = vrot.slane %v11134, 4
      %v11136 = vrot.slane %v11003, 6
      %v11137 = vsel %vm767, %v11135, %v11136
      %v11138 = vrot.slane %v11136, 4
      %v11139 = vrot.slane %v11035, 6
      %v11140 = vsel %vm767, %v11138, %v11139
      %v11141 = vrot.slane %v11036, 6
      %v11142 = vrot.slane %v11141, 4
      %v11143 = vrot.slane %v11005, 6
      %v11144 = vsel %vm767, %v11142, %v11143
      %v11145 = vrot.slane %v11143, 4
      %v11146 = vrot.slane %v11037, 6
      %v11147 = vsel %vm767, %v11145, %v11146
      %v11148 = vrot.slane %v11038, 6
      %v11149 = vrot.slane %v11148, 4
      %v11150 = vrot.slane %v11007, 6
      %v11151 = vsel %vm767, %v11149, %v11150
      %v11152 = vrot.slane %v11150, 4
      %v11153 = vrot.slane %v11039, 6
      %v11154 = vsel %vm767, %v11152, %v11153
      %v11155 = vrot.slane %v11040, 6
      %v11156 = vrot.slane %v11155, 4
      %v11157 = vrot.slane %v11009, 6
      %v11158 = vsel %vm767, %v11156, %v11157
      %v11159 = vrot.slane %v11157, 4
      %v11160 = vrot.slane %v11041, 6
      %v11161 = vsel %vm767, %v11159, %v11160
      %v11162 = vrot.slane %v11042, 6
      %v11163 = vrot.slane %v11162, 4
      %v11164 = vrot.slane %v11011, 6
      %v11165 = vsel %vm767, %v11163, %v11164
      %v11166 = vrot.slane %v11164, 4
      %v11167 = vrot.slane %v11043, 6
      %v11168 = vsel %vm767, %v11166, %v11167
      %v11169 = vrot.slane %v11044, 6
      %v11170 = vrot.slane %v11169, 4
      %v11171 = vrot.slane %v11013, 6
      %v11172 = vsel %vm767, %v11170, %v11171
      %v11173 = vrot.slane %v11171, 4
      %v11174 = vrot.slane %v11045, 6
      %v11175 = vsel %vm767, %v11173, %v11174
      %v11176 = vrot.slane %v11046, 6
      %v11177 = vrot.slane %v11176, 4
      %v11178 = vrot.slane %v11015, 6
      %v11179 = vsel %vm767, %v11177, %v11178
      %v11180 = vrot.slane %v11178, 4
      %v11181 = vrot.slane %v11047, 6
      %v11182 = vsel %vm767, %v11180, %v11181
      %v11183 = vrot.slane %v11048, 6
      %v11184 = vrot.slane %v11183, 4
      %v11185 = vrot.slane %v11017, 6
      %v11186 = vsel %vm767, %v11184, %v11185
      %v11187 = vrot.slane %v11185, 4
      %v11188 = vrot.slane %v11049, 6
      %v11189 = vsel %vm767, %v11187, %v11188
      %v11190 = vrot.slane %v11050, 6
      %v11191 = vrot.slane %v11190, 4
      %v11192 = vrot.slane %v11019, 6
      %v11193 = vsel %vm767, %v11191, %v11192
      %v11194 = vrot.slane %v11192, 4
      %v11195 = vrot.slane %v11051, 6
      %v11196 = vsel %vm767, %v11194, %v11195
      %v11197 = vrot.slane %v11052, 6
      %v11198 = vrot.slane %v11197, 4
      %v11199 = vrot.slane %v11021, 6
      %v11200 = vsel %vm767, %v11198, %v11199
      %v11201 = vrot.slane %v11199, 4
      %v11202 = vrot.slane %v11053, 6
      %v11203 = vsel %vm767, %v11201, %v11202
      %v11204 = vrot.slane %v11054, 6
      %v11205 = vrot.slane %v11204, 4
      %v11206 = vrot.slane %v11023, 6
      %v11207 = vsel %vm767, %v11205, %v11206
      %v11208 = vrot.slane %v11206, 4
      %v11209 = vrot.slane %v11055, 6
      %v11210 = vsel %vm767, %v11208, %v11209
      %v11211 = vrot.slane %v11056, 6
      %v11212 = vrot.slane %v11211, 4
      %v11213 = vrot.slane %v11025, 6
      %v11214 = vsel %vm767, %v11212, %v11213
      %v11215 = vrot.slane %v11213, 4
      %v11216 = vrot.slane %v11057, 6
      %v11217 = vsel %vm767, %v11215, %v11216
      %v11218 = vld [vmem:[%s10993 + $0x8] sm:$0xf]
      %v11219 = vld [vmem:[%s10993 + $0x14] sm:$0xf]
      %v11220 = vld [vmem:[%s10993 + $0x20] sm:$0xf]
      %v11221 = vld [vmem:[%s10993 + $0x2c] sm:$0xf]
      %v11222 = vld [vmem:[%s10993 + $0x38] sm:$0xf]
      %v11223 = vld [vmem:[%s10993 + $0x44] sm:$0xf]
      %v11224 = vld [vmem:[%s10993 + $0x50] sm:$0xf]
      %v11225 = vld [vmem:[%s10993 + $0x5c] sm:$0xf]
      %v11226 = vld [vmem:[%s10993 + $0x68] sm:$0xf]
      %v11227 = vld [vmem:[%s10993 + $0x74] sm:$0xf]
      %v11228 = vld [vmem:[%s10993 + $0x80] sm:$0xf]
      %v11229 = vld [vmem:[%s10993 + $0x8c] sm:$0xf]
      %v11230 = vld [vmem:[%s10993 + $0x98] sm:$0xf]
      %v11231 = vld [vmem:[%s10993 + $0xa4] sm:$0xf]
      %v11232 = vld [vmem:[%s10993 + $0xb0] sm:$0xf]
      %v11233 = vld [vmem:[%s10993 + $0xbc] sm:$0xf]
      %v11250 = vunpack.c.l.b16 %v10718
      %v11251 = vunpack.c.l.b16 %v10719
      %v11252 = vunpack.c.l.b16 %v10720
      %v11253 = vunpack.c.l.b16 %v10721
      %v11254 = vunpack.c.l.b16 %v10722
      %v11255 = vunpack.c.l.b16 %v10723
      %v11256 = vunpack.c.l.b16 %v10724
      %v11257 = vunpack.c.l.b16 %v10725
      %v11258 = vunpack.c.l.b16 %v10726
      %v11259 = vunpack.c.l.b16 %v10727
      %v11260 = vunpack.c.l.b16 %v10728
      %v11261 = vunpack.c.l.b16 %v10729
      %v11262 = vunpack.c.l.b16 %v10730
      %v11263 = vunpack.c.l.b16 %v10731
      %v11264 = vunpack.c.l.b16 %v10732
      %v11265 = vunpack.c.l.b16 %v10733
      %v11266 = vunpack.c.l.b16 %v10734
      %v11267 = vunpack.c.l.b16 %v10735
      %v11268 = vunpack.c.l.b16 %v10736
      %v11269 = vunpack.c.l.b16 %v10737
      %v11270 = vunpack.c.l.b16 %v10738
      %v11271 = vunpack.c.l.b16 %v10739
      %v11272 = vunpack.c.l.b16 %v10740
      %v11273 = vunpack.c.l.b16 %v10741
      %v11274 = vunpack.c.l.b16 %v10742
      %v11275 = vunpack.c.l.b16 %v10743
      %v11276 = vunpack.c.l.b16 %v10744
      %v11277 = vunpack.c.l.b16 %v10745
      %v11278 = vunpack.c.l.b16 %v10746
      %v11279 = vunpack.c.l.b16 %v10747
      %v11280 = vunpack.c.l.b16 %v10748
      %v11281 = vunpack.c.l.b16 %v10749
      %v11282 = vpack.c.b16 %v11251, %v11250
      %v11283 = vpack.c.b16 %v11253, %v11252
      %v11284 = vpack.c.b16 %v11255, %v11254
      %v11285 = vpack.c.b16 %v11257, %v11256
      %v11286 = vpack.c.b16 %v11259, %v11258
      %v11287 = vpack.c.b16 %v11261, %v11260
      %v11288 = vpack.c.b16 %v11263, %v11262
      %v11289 = vpack.c.b16 %v11265, %v11264
      %v11290 = vpack.c.b16 %v11267, %v11266
      %v11291 = vpack.c.b16 %v11269, %v11268
      %v11292 = vpack.c.b16 %v11271, %v11270
      %v11293 = vpack.c.b16 %v11273, %v11272
      %v11294 = vpack.c.b16 %v11275, %v11274
      %v11295 = vpack.c.b16 %v11277, %v11276
      %v11296 = vpack.c.b16 %v11279, %v11278
      %v11297 = vpack.c.b16 %v11281, %v11280
      %v11298 = vunpack.c.l.b16 %v10833
      %v11299 = vunpack.c.l.b16 %v10836
      %v11300 = vunpack.c.l.b16 %v10840
      %v11301 = vunpack.c.l.b16 %v10843
      %v11302 = vunpack.c.l.b16 %v10847
      %v11303 = vunpack.c.l.b16 %v10850
      %v11304 = vunpack.c.l.b16 %v10854
      %v11305 = vunpack.c.l.b16 %v10857
      %v11306 = vunpack.c.l.b16 %v10861
      %v11307 = vunpack.c.l.b16 %v10864
      %v11308 = vunpack.c.l.b16 %v10868
      %v11309 = vunpack.c.l.b16 %v10871
      %v11310 = vunpack.c.l.b16 %v10875
      %v11311 = vunpack.c.l.b16 %v10878
      %v11312 = vunpack.c.l.b16 %v10882
      %v11313 = vunpack.c.l.b16 %v10885
      %v11314 = vunpack.c.l.b16 %v10889
      %v11315 = vunpack.c.l.b16 %v10892
      %v11316 = vunpack.c.l.b16 %v10896
      %v11317 = vunpack.c.l.b16 %v10899
      %v11318 = vunpack.c.l.b16 %v10903
      %v11319 = vunpack.c.l.b16 %v10906
      %v11320 = vunpack.c.l.b16 %v10910
      %v11321 = vunpack.c.l.b16 %v10913
      %v11322 = vunpack.c.l.b16 %v10917
      %v11323 = vunpack.c.l.b16 %v10920
      %v11324 = vunpack.c.l.b16 %v10924
      %v11325 = vunpack.c.l.b16 %v10927
      %v11326 = vunpack.c.l.b16 %v10931
      %v11327 = vunpack.c.l.b16 %v10934
      %v11328 = vunpack.c.l.b16 %v10938
      %v11329 = vunpack.c.l.b16 %v10941
      %v11330 = vpack.c.b16 %v11299, %v11298
      %v11331 = vpack.c.b16 %v11301, %v11300
      %v11332 = vpack.c.b16 %v11303, %v11302
      %v11333 = vpack.c.b16 %v11305, %v11304
      %v11334 = vpack.c.b16 %v11307, %v11306
      %v11335 = vpack.c.b16 %v11309, %v11308
      %v11336 = vpack.c.b16 %v11311, %v11310
      %v11337 = vpack.c.b16 %v11313, %v11312
      %v11338 = vpack.c.b16 %v11315, %v11314
      %v11339 = vpack.c.b16 %v11317, %v11316
      %v11340 = vpack.c.b16 %v11319, %v11318
      %v11341 = vpack.c.b16 %v11321, %v11320
      %v11342 = vpack.c.b16 %v11323, %v11322
      %v11343 = vpack.c.b16 %v11325, %v11324
      %v11344 = vpack.c.b16 %v11327, %v11326
      %v11345 = vpack.c.b16 %v11329, %v11328
      %11346 = vrot.lane.b32.xlu0 %v11330, 8
      %v11347 = vpop.permute.xlu0 %11346
      %11348 = vrot.lane.b32.xlu0 %v11331, 8
      %v11349 = vpop.permute.xlu0 %11348
      %11350 = vrot.lane.b32.xlu0 %v11332, 8
      %v11351 = vpop.permute.xlu0 %11350
      %11352 = vrot.lane.b32.xlu0 %v11333, 8
      %v11353 = vpop.permute.xlu0 %11352
      %11354 = vrot.lane.b32.xlu0 %v11334, 8
      %v11355 = vpop.permute.xlu0 %11354
      %11356 = vrot.lane.b32.xlu0 %v11335, 8
      %v11357 = vpop.permute.xlu0 %11356
      %11358 = vrot.lane.b32.xlu0 %v11336, 8
      %v11359 = vpop.permute.xlu0 %11358
      %11360 = vrot.lane.b32.xlu0 %v11337, 8
      %v11361 = vpop.permute.xlu0 %11360
      %11362 = vrot.lane.b32.xlu0 %v11338, 8
      %v11363 = vpop.permute.xlu0 %11362
      %11364 = vrot.lane.b32.xlu0 %v11339, 8
      %v11365 = vpop.permute.xlu0 %11364
      %11366 = vrot.lane.b32.xlu0 %v11340, 8
      %v11367 = vpop.permute.xlu0 %11366
      %11368 = vrot.lane.b32.xlu0 %v11341, 8
      %v11369 = vpop.permute.xlu0 %11368
      %11370 = vrot.lane.b32.xlu0 %v11342, 8
      %v11371 = vpop.permute.xlu0 %11370
      %11372 = vrot.lane.b32.xlu0 %v11343, 8
      %v11373 = vpop.permute.xlu0 %11372
      %11374 = vrot.lane.b32.xlu0 %v11344, 8
      %v11375 = vpop.permute.xlu0 %11374
      %11376 = vrot.lane.b32.xlu0 %v11345, 8
      %v11377 = vpop.permute.xlu0 %11376
      %v11394 = vunpack.c.l.b16 %v10942
      %v11395 = vunpack.c.l.b16 %v10943
      %v11396 = vunpack.c.l.b16 %v10944
      %v11397 = vunpack.c.l.b16 %v10945
      %v11398 = vunpack.c.l.b16 %v10946
      %v11399 = vunpack.c.l.b16 %v10947
      %v11400 = vunpack.c.l.b16 %v10948
      %v11401 = vunpack.c.l.b16 %v10949
      %v11402 = vunpack.c.l.b16 %v10950
      %v11403 = vunpack.c.l.b16 %v10951
      %v11404 = vunpack.c.l.b16 %v10952
      %v11405 = vunpack.c.l.b16 %v10953
      %v11406 = vunpack.c.l.b16 %v10954
      %v11407 = vunpack.c.l.b16 %v10955
      %v11408 = vunpack.c.l.b16 %v10956
      %v11409 = vunpack.c.l.b16 %v10957
      %v11410 = vpack.c.b16 %v11394, %v11251
      %v11411 = vpack.c.b16 %v11395, %v11253
      %v11412 = vpack.c.b16 %v11396, %v11255
      %v11413 = vpack.c.b16 %v11397, %v11257
      %v11414 = vpack.c.b16 %v11398, %v11259
      %v11415 = vpack.c.b16 %v11399, %v11261
      %v11416 = vpack.c.b16 %v11400, %v11263
      %v11417 = vpack.c.b16 %v11401, %v11265
      %v11418 = vpack.c.b16 %v11402, %v11267
      %v11419 = vpack.c.b16 %v11403, %v11269
      %v11420 = vpack.c.b16 %v11404, %v11271
      %v11421 = vpack.c.b16 %v11405, %v11273
      %v11422 = vpack.c.b16 %v11406, %v11275
      %v11423 = vpack.c.b16 %v11407, %v11277
      %v11424 = vpack.c.b16 %v11408, %v11279
      %v11425 = vpack.c.b16 %v11409, %v11281
      %11426 = vrot.lane.b32.xlu0 %v11410, 16
      %v11427 = vpop.permute.xlu0 %11426
      %11428 = vrot.lane.b32.xlu0 %v11411, 16
      %v11429 = vpop.permute.xlu0 %11428
      %11430 = vrot.lane.b32.xlu0 %v11412, 16
      %v11431 = vpop.permute.xlu0 %11430
      %11432 = vrot.lane.b32.xlu0 %v11413, 16
      %v11433 = vpop.permute.xlu0 %11432
      %11434 = vrot.lane.b32.xlu0 %v11414, 16
      %v11435 = vpop.permute.xlu0 %11434
      %11436 = vrot.lane.b32.xlu0 %v11415, 16
      %v11437 = vpop.permute.xlu0 %11436
      %11438 = vrot.lane.b32.xlu0 %v11416, 16
      %v11439 = vpop.permute.xlu0 %11438
      %11440 = vrot.lane.b32.xlu0 %v11417, 16
      %v11441 = vpop.permute.xlu0 %11440
      %11442 = vrot.lane.b32.xlu0 %v11418, 16
      %v11443 = vpop.permute.xlu0 %11442
      %11444 = vrot.lane.b32.xlu0 %v11419, 16
      %v11445 = vpop.permute.xlu0 %11444
      %11446 = vrot.lane.b32.xlu0 %v11420, 16
      %v11447 = vpop.permute.xlu0 %11446
      %11448 = vrot.lane.b32.xlu0 %v11421, 16
      %v11449 = vpop.permute.xlu0 %11448
      %11450 = vrot.lane.b32.xlu0 %v11422, 16
      %v11451 = vpop.permute.xlu0 %11450
      %11452 = vrot.lane.b32.xlu0 %v11423, 16
      %v11453 = vpop.permute.xlu0 %11452
      %11454 = vrot.lane.b32.xlu0 %v11424, 16
      %v11455 = vpop.permute.xlu0 %11454
      %11456 = vrot.lane.b32.xlu0 %v11425, 16
      %v11457 = vpop.permute.xlu0 %11456
      %v11490 = vunpack.c.l.b16 %v10958
      %v11491 = vunpack.c.l.b16 %v10959
      %v11492 = vunpack.c.l.b16 %v10960
      %v11493 = vunpack.c.l.b16 %v10961
      %v11494 = vunpack.c.l.b16 %v10962
      %v11495 = vunpack.c.l.b16 %v10963
      %v11496 = vunpack.c.l.b16 %v10964
      %v11497 = vunpack.c.l.b16 %v10965
      %v11498 = vunpack.c.l.b16 %v10966
      %v11499 = vunpack.c.l.b16 %v10967
      %v11500 = vunpack.c.l.b16 %v10968
      %v11501 = vunpack.c.l.b16 %v10969
      %v11502 = vunpack.c.l.b16 %v10970
      %v11503 = vunpack.c.l.b16 %v10971
      %v11504 = vunpack.c.l.b16 %v10972
      %v11505 = vunpack.c.l.b16 %v10973
      %v11506 = vunpack.c.l.b16 %v10974
      %v11507 = vunpack.c.l.b16 %v10975
      %v11508 = vunpack.c.l.b16 %v10976
      %v11509 = vunpack.c.l.b16 %v10977
      %v11510 = vunpack.c.l.b16 %v10978
      %v11511 = vunpack.c.l.b16 %v10979
      %v11512 = vunpack.c.l.b16 %v10980
      %v11513 = vunpack.c.l.b16 %v10981
      %v11514 = vunpack.c.l.b16 %v10982
      %v11515 = vunpack.c.l.b16 %v10983
      %v11516 = vunpack.c.l.b16 %v10984
      %v11517 = vunpack.c.l.b16 %v10985
      %v11518 = vunpack.c.l.b16 %v10986
      %v11519 = vunpack.c.l.b16 %v10987
      %v11520 = vunpack.c.l.b16 %v10988
      %v11521 = vunpack.c.l.b16 %v10989
      %v11522 = vpack.c.b16 %v11491, %v11490
      %v11523 = vpack.c.b16 %v11493, %v11492
      %v11524 = vpack.c.b16 %v11495, %v11494
      %v11525 = vpack.c.b16 %v11497, %v11496
      %v11526 = vpack.c.b16 %v11499, %v11498
      %v11527 = vpack.c.b16 %v11501, %v11500
      %v11528 = vpack.c.b16 %v11503, %v11502
      %v11529 = vpack.c.b16 %v11505, %v11504
      %v11530 = vpack.c.b16 %v11507, %v11506
      %v11531 = vpack.c.b16 %v11509, %v11508
      %v11532 = vpack.c.b16 %v11511, %v11510
      %v11533 = vpack.c.b16 %v11513, %v11512
      %v11534 = vpack.c.b16 %v11515, %v11514
      %v11535 = vpack.c.b16 %v11517, %v11516
      %v11536 = vpack.c.b16 %v11519, %v11518
      %v11537 = vpack.c.b16 %v11521, %v11520
      %11538 = vrot.lane.b32.xlu0 %v11522, 24
      %v11539 = vpop.permute.xlu0 %11538
      %11540 = vrot.lane.b32.xlu0 %v11523, 24
      %v11541 = vpop.permute.xlu0 %11540
      %11542 = vrot.lane.b32.xlu0 %v11524, 24
      %v11543 = vpop.permute.xlu0 %11542
      %11544 = vrot.lane.b32.xlu0 %v11525, 24
      %v11545 = vpop.permute.xlu0 %11544
      %11546 = vrot.lane.b32.xlu0 %v11526, 24
      %v11547 = vpop.permute.xlu0 %11546
      %11548 = vrot.lane.b32.xlu0 %v11527, 24
      %v11549 = vpop.permute.xlu0 %11548
      %11550 = vrot.lane.b32.xlu0 %v11528, 24
      %v11551 = vpop.permute.xlu0 %11550
      %11552 = vrot.lane.b32.xlu0 %v11529, 24
      %v11553 = vpop.permute.xlu0 %11552
      %11554 = vrot.lane.b32.xlu0 %v11530, 24
      %v11555 = vpop.permute.xlu0 %11554
      %11556 = vrot.lane.b32.xlu0 %v11531, 24
      %v11557 = vpop.permute.xlu0 %11556
      %11558 = vrot.lane.b32.xlu0 %v11532, 24
      %v11559 = vpop.permute.xlu0 %11558
      %11560 = vrot.lane.b32.xlu0 %v11533, 24
      %v11561 = vpop.permute.xlu0 %11560
      %11562 = vrot.lane.b32.xlu0 %v11534, 24
      %v11563 = vpop.permute.xlu0 %11562
      %11564 = vrot.lane.b32.xlu0 %v11535, 24
      %v11565 = vpop.permute.xlu0 %11564
      %11566 = vrot.lane.b32.xlu0 %v11536, 24
      %v11567 = vpop.permute.xlu0 %11566
      %11568 = vrot.lane.b32.xlu0 %v11537, 24
      %v11569 = vpop.permute.xlu0 %11568
      %v11586 = vunpack.c.l.b16 %v1272
      %v11587 = vunpack.c.l.b16 %v8398
      %v11588 = vunpack.c.l.b16 %v1275
      %v11589 = vunpack.c.l.b16 %v8399
      %v11590 = vunpack.c.l.b16 %v1278
      %v11591 = vunpack.c.l.b16 %v8400
      %v11592 = vunpack.c.l.b16 %v1281
      %v11593 = vunpack.c.l.b16 %v8401
      %v11594 = vunpack.c.l.b16 %v1284
      %v11595 = vunpack.c.l.b16 %v8402
      %v11596 = vunpack.c.l.b16 %v1287
      %v11597 = vunpack.c.l.b16 %v8403
      %v11598 = vunpack.c.l.b16 %v1290
      %v11599 = vunpack.c.l.b16 %v8404
      %v11600 = vunpack.c.l.b16 %v1293
      %v11601 = vunpack.c.l.b16 %v8405
      %v11602 = vunpack.c.l.b16 %v1296
      %v11603 = vunpack.c.l.b16 %v8406
      %v11604 = vunpack.c.l.b16 %v1299
      %v11605 = vunpack.c.l.b16 %v8407
      %v11606 = vunpack.c.l.b16 %v1302
      %v11607 = vunpack.c.l.b16 %v8408
      %v11608 = vunpack.c.l.b16 %v1305
      %v11609 = vunpack.c.l.b16 %v8409
      %v11610 = vunpack.c.l.b16 %v1308
      %v11611 = vunpack.c.l.b16 %v8410
      %v11612 = vunpack.c.l.b16 %v1311
      %v11613 = vunpack.c.l.b16 %v8411
      %v11614 = vunpack.c.l.b16 %v1314
      %v11615 = vunpack.c.l.b16 %v8412
      %v11616 = vunpack.c.l.b16 %v1317
      %v11617 = vunpack.c.l.b16 %v8413
      %v11618 = vpack.c.b16 %v11587, %v11586
      %v11619 = vpack.c.b16 %v11589, %v11588
      %v11620 = vpack.c.b16 %v11591, %v11590
      %v11621 = vpack.c.b16 %v11593, %v11592
      %v11622 = vpack.c.b16 %v11595, %v11594
      %v11623 = vpack.c.b16 %v11597, %v11596
      %v11624 = vpack.c.b16 %v11599, %v11598
      %v11625 = vpack.c.b16 %v11601, %v11600
      %v11626 = vpack.c.b16 %v11603, %v11602
      %v11627 = vpack.c.b16 %v11605, %v11604
      %v11628 = vpack.c.b16 %v11607, %v11606
      %v11629 = vpack.c.b16 %v11609, %v11608
      %v11630 = vpack.c.b16 %v11611, %v11610
      %v11631 = vpack.c.b16 %v11613, %v11612
      %v11632 = vpack.c.b16 %v11615, %v11614
      %v11633 = vpack.c.b16 %v11617, %v11616
      %11634 = vrot.lane.b32.xlu0 %v11618, 40
      %v11635 = vpop.permute.xlu0 %11634
      %11636 = vrot.lane.b32.xlu0 %v11619, 40
      %v11637 = vpop.permute.xlu0 %11636
      %11638 = vrot.lane.b32.xlu0 %v11620, 40
      %v11639 = vpop.permute.xlu0 %11638
      %11640 = vrot.lane.b32.xlu0 %v11621, 40
      %v11641 = vpop.permute.xlu0 %11640
      %11642 = vrot.lane.b32.xlu0 %v11622, 40
      %v11643 = vpop.permute.xlu0 %11642
      %11644 = vrot.lane.b32.xlu0 %v11623, 40
      %v11645 = vpop.permute.xlu0 %11644
      %11646 = vrot.lane.b32.xlu0 %v11624, 40
      %v11647 = vpop.permute.xlu0 %11646
      %11648 = vrot.lane.b32.xlu0 %v11625, 40
      %v11649 = vpop.permute.xlu0 %11648
      %11650 = vrot.lane.b32.xlu0 %v11626, 40
      %v11651 = vpop.permute.xlu0 %11650
      %11652 = vrot.lane.b32.xlu0 %v11627, 40
      %v11653 = vpop.permute.xlu0 %11652
      %11654 = vrot.lane.b32.xlu0 %v11628, 40
      %v11655 = vpop.permute.xlu0 %11654
      %11656 = vrot.lane.b32.xlu0 %v11629, 40
      %v11657 = vpop.permute.xlu0 %11656
      %11658 = vrot.lane.b32.xlu0 %v11630, 40
      %v11659 = vpop.permute.xlu0 %11658
      %11660 = vrot.lane.b32.xlu0 %v11631, 40
      %v11661 = vpop.permute.xlu0 %11660
      %11662 = vrot.lane.b32.xlu0 %v11632, 40
      %v11663 = vpop.permute.xlu0 %11662
      %11664 = vrot.lane.b32.xlu0 %v11633, 40
      %v11665 = vpop.permute.xlu0 %11664
      %v11682 = vunpack.c.l.b16 %v10994
      %v11683 = vunpack.c.l.b16 %v10995
      %v11684 = vunpack.c.l.b16 %v10996
      %v11685 = vunpack.c.l.b16 %v10997
      %v11686 = vunpack.c.l.b16 %v10998
      %v11687 = vunpack.c.l.b16 %v10999
      %v11688 = vunpack.c.l.b16 %v11000
      %v11689 = vunpack.c.l.b16 %v11001
      %v11690 = vunpack.c.l.b16 %v11002
      %v11691 = vunpack.c.l.b16 %v11003
      %v11692 = vunpack.c.l.b16 %v11004
      %v11693 = vunpack.c.l.b16 %v11005
      %v11694 = vunpack.c.l.b16 %v11006
      %v11695 = vunpack.c.l.b16 %v11007
      %v11696 = vunpack.c.l.b16 %v11008
      %v11697 = vunpack.c.l.b16 %v11009
      %v11698 = vunpack.c.l.b16 %v11010
      %v11699 = vunpack.c.l.b16 %v11011
      %v11700 = vunpack.c.l.b16 %v11012
      %v11701 = vunpack.c.l.b16 %v11013
      %v11702 = vunpack.c.l.b16 %v11014
      %v11703 = vunpack.c.l.b16 %v11015
      %v11704 = vunpack.c.l.b16 %v11016
      %v11705 = vunpack.c.l.b16 %v11017
      %v11706 = vunpack.c.l.b16 %v11018
      %v11707 = vunpack.c.l.b16 %v11019
      %v11708 = vunpack.c.l.b16 %v11020
      %v11709 = vunpack.c.l.b16 %v11021
      %v11710 = vunpack.c.l.b16 %v11022
      %v11711 = vunpack.c.l.b16 %v11023
      %v11712 = vunpack.c.l.b16 %v11024
      %v11713 = vunpack.c.l.b16 %v11025
      %v11714 = vpack.c.b16 %v11683, %v11682
      %v11715 = vpack.c.b16 %v11685, %v11684
      %v11716 = vpack.c.b16 %v11687, %v11686
      %v11717 = vpack.c.b16 %v11689, %v11688
      %v11718 = vpack.c.b16 %v11691, %v11690
      %v11719 = vpack.c.b16 %v11693, %v11692
      %v11720 = vpack.c.b16 %v11695, %v11694
      %v11721 = vpack.c.b16 %v11697, %v11696
      %v11722 = vpack.c.b16 %v11699, %v11698
      %v11723 = vpack.c.b16 %v11701, %v11700
      %v11724 = vpack.c.b16 %v11703, %v11702
      %v11725 = vpack.c.b16 %v11705, %v11704
      %v11726 = vpack.c.b16 %v11707, %v11706
      %v11727 = vpack.c.b16 %v11709, %v11708
      %v11728 = vpack.c.b16 %v11711, %v11710
      %v11729 = vpack.c.b16 %v11713, %v11712
      %11730 = vrot.lane.b32.xlu0 %v11714, 48
      %v11731 = vpop.permute.xlu0 %11730
      %11732 = vrot.lane.b32.xlu0 %v11715, 48
      %v11733 = vpop.permute.xlu0 %11732
      %11734 = vrot.lane.b32.xlu0 %v11716, 48
      %v11735 = vpop.permute.xlu0 %11734
      %11736 = vrot.lane.b32.xlu0 %v11717, 48
      %v11737 = vpop.permute.xlu0 %11736
      %11738 = vrot.lane.b32.xlu0 %v11718, 48
      %v11739 = vpop.permute.xlu0 %11738
      %11740 = vrot.lane.b32.xlu0 %v11719, 48
      %v11741 = vpop.permute.xlu0 %11740
      %11742 = vrot.lane.b32.xlu0 %v11720, 48
      %v11743 = vpop.permute.xlu0 %11742
      %11744 = vrot.lane.b32.xlu0 %v11721, 48
      %v11745 = vpop.permute.xlu0 %11744
      %11746 = vrot.lane.b32.xlu0 %v11722, 48
      %v11747 = vpop.permute.xlu0 %11746
      %11748 = vrot.lane.b32.xlu0 %v11723, 48
      %v11749 = vpop.permute.xlu0 %11748
      %11750 = vrot.lane.b32.xlu0 %v11724, 48
      %v11751 = vpop.permute.xlu0 %11750
      %11752 = vrot.lane.b32.xlu0 %v11725, 48
      %v11753 = vpop.permute.xlu0 %11752
      %11754 = vrot.lane.b32.xlu0 %v11726, 48
      %v11755 = vpop.permute.xlu0 %11754
      %11756 = vrot.lane.b32.xlu0 %v11727, 48
      %v11757 = vpop.permute.xlu0 %11756
      %11758 = vrot.lane.b32.xlu0 %v11728, 48
      %v11759 = vpop.permute.xlu0 %11758
      %11760 = vrot.lane.b32.xlu0 %v11729, 48
      %v11761 = vpop.permute.xlu0 %11760
      %v11762 = vunpack.c.l.b16 %v11109
      %v11763 = vunpack.c.l.b16 %v11112
      %v11764 = vunpack.c.l.b16 %v11116
      %v11765 = vunpack.c.l.b16 %v11119
      %v11766 = vunpack.c.l.b16 %v11123
      %v11767 = vunpack.c.l.b16 %v11126
      %v11768 = vunpack.c.l.b16 %v11130
      %v11769 = vunpack.c.l.b16 %v11133
      %v11770 = vunpack.c.l.b16 %v11137
      %v11771 = vunpack.c.l.b16 %v11140
      %v11772 = vunpack.c.l.b16 %v11144
      %v11773 = vunpack.c.l.b16 %v11147
      %v11774 = vunpack.c.l.b16 %v11151
      %v11775 = vunpack.c.l.b16 %v11154
      %v11776 = vunpack.c.l.b16 %v11158
      %v11777 = vunpack.c.l.b16 %v11161
      %v11778 = vunpack.c.l.b16 %v11165
      %v11779 = vunpack.c.l.b16 %v11168
      %v11780 = vunpack.c.l.b16 %v11172
      %v11781 = vunpack.c.l.b16 %v11175
      %v11782 = vunpack.c.l.b16 %v11179
      %v11783 = vunpack.c.l.b16 %v11182
      %v11784 = vunpack.c.l.b16 %v11186
      %v11785 = vunpack.c.l.b16 %v11189
      %v11786 = vunpack.c.l.b16 %v11193
      %v11787 = vunpack.c.l.b16 %v11196
      %v11788 = vunpack.c.l.b16 %v11200
      %v11789 = vunpack.c.l.b16 %v11203
      %v11790 = vunpack.c.l.b16 %v11207
      %v11791 = vunpack.c.l.b16 %v11210
      %v11792 = vunpack.c.l.b16 %v11214
      %v11793 = vunpack.c.l.b16 %v11217
      %v11794 = vpack.c.b16 %v11763, %v11762
      %v11795 = vpack.c.b16 %v11765, %v11764
      %v11796 = vpack.c.b16 %v11767, %v11766
      %v11797 = vpack.c.b16 %v11769, %v11768
      %v11798 = vpack.c.b16 %v11771, %v11770
      %v11799 = vpack.c.b16 %v11773, %v11772
      %v11800 = vpack.c.b16 %v11775, %v11774
      %v11801 = vpack.c.b16 %v11777, %v11776
      %v11802 = vpack.c.b16 %v11779, %v11778
      %v11803 = vpack.c.b16 %v11781, %v11780
      %v11804 = vpack.c.b16 %v11783, %v11782
      %v11805 = vpack.c.b16 %v11785, %v11784
      %v11806 = vpack.c.b16 %v11787, %v11786
      %v11807 = vpack.c.b16 %v11789, %v11788
      %v11808 = vpack.c.b16 %v11791, %v11790
      %v11809 = vpack.c.b16 %v11793, %v11792
      %11810 = vrot.lane.b32.xlu0 %v11794, 56
      %v11811 = vpop.permute.xlu0 %11810
      %11812 = vrot.lane.b32.xlu0 %v11795, 56
      %v11813 = vpop.permute.xlu0 %11812
      %11814 = vrot.lane.b32.xlu0 %v11796, 56
      %v11815 = vpop.permute.xlu0 %11814
      %11816 = vrot.lane.b32.xlu0 %v11797, 56
      %v11817 = vpop.permute.xlu0 %11816
      %11818 = vrot.lane.b32.xlu0 %v11798, 56
      %v11819 = vpop.permute.xlu0 %11818
      %11820 = vrot.lane.b32.xlu0 %v11799, 56
      %v11821 = vpop.permute.xlu0 %11820
      %11822 = vrot.lane.b32.xlu0 %v11800, 56
      %v11823 = vpop.permute.xlu0 %11822
      %11824 = vrot.lane.b32.xlu0 %v11801, 56
      %v11825 = vpop.permute.xlu0 %11824
      %11826 = vrot.lane.b32.xlu0 %v11802, 56
      %v11827 = vpop.permute.xlu0 %11826
      %11828 = vrot.lane.b32.xlu0 %v11803, 56
      %v11829 = vpop.permute.xlu0 %11828
      %11830 = vrot.lane.b32.xlu0 %v11804, 56
      %v11831 = vpop.permute.xlu0 %11830
      %11832 = vrot.lane.b32.xlu0 %v11805, 56
      %v11833 = vpop.permute.xlu0 %11832
      %11834 = vrot.lane.b32.xlu0 %v11806, 56
      %v11835 = vpop.permute.xlu0 %11834
      %11836 = vrot.lane.b32.xlu0 %v11807, 56
      %v11837 = vpop.permute.xlu0 %11836
      %11838 = vrot.lane.b32.xlu0 %v11808, 56
      %v11839 = vpop.permute.xlu0 %11838
      %11840 = vrot.lane.b32.xlu0 %v11809, 56
      %v11841 = vpop.permute.xlu0 %11840
      %v11858 = vunpack.c.l.b16 %v11218
      %v11859 = vunpack.c.l.b16 %v11219
      %v11860 = vunpack.c.l.b16 %v11220
      %v11861 = vunpack.c.l.b16 %v11221
      %v11862 = vunpack.c.l.b16 %v11222
      %v11863 = vunpack.c.l.b16 %v11223
      %v11864 = vunpack.c.l.b16 %v11224
      %v11865 = vunpack.c.l.b16 %v11225
      %v11866 = vunpack.c.l.b16 %v11226
      %v11867 = vunpack.c.l.b16 %v11227
      %v11868 = vunpack.c.l.b16 %v11228
      %v11869 = vunpack.c.l.b16 %v11229
      %v11870 = vunpack.c.l.b16 %v11230
      %v11871 = vunpack.c.l.b16 %v11231
      %v11872 = vunpack.c.l.b16 %v11232
      %v11873 = vunpack.c.l.b16 %v11233
      %v11874 = vpack.c.b16 %v11858, %v11683
      %v11875 = vpack.c.b16 %v11859, %v11685
      %v11876 = vpack.c.b16 %v11860, %v11687
      %v11877 = vpack.c.b16 %v11861, %v11689
      %v11878 = vpack.c.b16 %v11862, %v11691
      %v11879 = vpack.c.b16 %v11863, %v11693
      %v11880 = vpack.c.b16 %v11864, %v11695
      %v11881 = vpack.c.b16 %v11865, %v11697
      %v11882 = vpack.c.b16 %v11866, %v11699
      %v11883 = vpack.c.b16 %v11867, %v11701
      %v11884 = vpack.c.b16 %v11868, %v11703
      %v11885 = vpack.c.b16 %v11869, %v11705
      %v11886 = vpack.c.b16 %v11870, %v11707
      %v11887 = vpack.c.b16 %v11871, %v11709
      %v11888 = vpack.c.b16 %v11872, %v11711
      %v11889 = vpack.c.b16 %v11873, %v11713
      %11890 = vrot.lane.b32.xlu0 %v11874, 64
      %v11891 = vpop.permute.xlu0 %11890
      %11892 = vrot.lane.b32.xlu0 %v11875, 64
      %v11893 = vpop.permute.xlu0 %11892
      %11894 = vrot.lane.b32.xlu0 %v11876, 64
      %v11895 = vpop.permute.xlu0 %11894
      %11896 = vrot.lane.b32.xlu0 %v11877, 64
      %v11897 = vpop.permute.xlu0 %11896
      %11898 = vrot.lane.b32.xlu0 %v11878, 64
      %v11899 = vpop.permute.xlu0 %11898
      %11900 = vrot.lane.b32.xlu0 %v11879, 64
      %v11901 = vpop.permute.xlu0 %11900
      %11902 = vrot.lane.b32.xlu0 %v11880, 64
      %v11903 = vpop.permute.xlu0 %11902
      %11904 = vrot.lane.b32.xlu0 %v11881, 64
      %v11905 = vpop.permute.xlu0 %11904
      %11906 = vrot.lane.b32.xlu0 %v11882, 64
      %v11907 = vpop.permute.xlu0 %11906
      %11908 = vrot.lane.b32.xlu0 %v11883, 64
      %v11909 = vpop.permute.xlu0 %11908
      %11910 = vrot.lane.b32.xlu0 %v11884, 64
      %v11911 = vpop.permute.xlu0 %11910
      %11912 = vrot.lane.b32.xlu0 %v11885, 64
      %v11913 = vpop.permute.xlu0 %11912
      %11914 = vrot.lane.b32.xlu0 %v11886, 64
      %v11915 = vpop.permute.xlu0 %11914
      %11916 = vrot.lane.b32.xlu0 %v11887, 64
      %v11917 = vpop.permute.xlu0 %11916
      %11918 = vrot.lane.b32.xlu0 %v11888, 64
      %v11919 = vpop.permute.xlu0 %11918
      %11920 = vrot.lane.b32.xlu0 %v11889, 64
      %v11921 = vpop.permute.xlu0 %11920
      %v11924 = vsel %vm4075, %v11282, %v11347
      %v11927 = vsel %vm4075, %v11283, %v11349
      %v11930 = vsel %vm4075, %v11284, %v11351
      %v11933 = vsel %vm4075, %v11285, %v11353
      %v11936 = vsel %vm4075, %v11286, %v11355
      %v11939 = vsel %vm4075, %v11287, %v11357
      %v11942 = vsel %vm4075, %v11288, %v11359
      %v11945 = vsel %vm4075, %v11289, %v11361
      %v11948 = vsel %vm4075, %v11290, %v11363
      %v11951 = vsel %vm4075, %v11291, %v11365
      %v11954 = vsel %vm4075, %v11292, %v11367
      %v11957 = vsel %vm4075, %v11293, %v11369
      %v11960 = vsel %vm4075, %v11294, %v11371
      %v11963 = vsel %vm4075, %v11295, %v11373
      %v11966 = vsel %vm4075, %v11296, %v11375
      %v11969 = vsel %vm4075, %v11297, %v11377
      %v11971 = vsel %vm4124, %v11924, %v11427
      %v11973 = vsel %vm4124, %v11927, %v11429
      %v11975 = vsel %vm4124, %v11930, %v11431
      %v11977 = vsel %vm4124, %v11933, %v11433
      %v11979 = vsel %vm4124, %v11936, %v11435
      %v11981 = vsel %vm4124, %v11939, %v11437
      %v11983 = vsel %vm4124, %v11942, %v11439
      %v11985 = vsel %vm4124, %v11945, %v11441
      %v11987 = vsel %vm4124, %v11948, %v11443
      %v11989 = vsel %vm4124, %v11951, %v11445
      %v11991 = vsel %vm4124, %v11954, %v11447
      %v11993 = vsel %vm4124, %v11957, %v11449
      %v11995 = vsel %vm4124, %v11960, %v11451
      %v11997 = vsel %vm4124, %v11963, %v11453
      %v11999 = vsel %vm4124, %v11966, %v11455
      %v12001 = vsel %vm4124, %v11969, %v11457
      %v12003 = vsel %vm4157, %v11971, %v11539
      %v12005 = vsel %vm4157, %v11973, %v11541
      %v12007 = vsel %vm4157, %v11975, %v11543
      %v12009 = vsel %vm4157, %v11977, %v11545
      %v12011 = vsel %vm4157, %v11979, %v11547
      %v12013 = vsel %vm4157, %v11981, %v11549
      %v12015 = vsel %vm4157, %v11983, %v11551
      %v12017 = vsel %vm4157, %v11985, %v11553
      %v12019 = vsel %vm4157, %v11987, %v11555
      %v12021 = vsel %vm4157, %v11989, %v11557
      %v12023 = vsel %vm4157, %v11991, %v11559
      %v12025 = vsel %vm4157, %v11993, %v11561
      %v12027 = vsel %vm4157, %v11995, %v11563
      %v12029 = vsel %vm4157, %v11997, %v11565
      %v12031 = vsel %vm4157, %v11999, %v11567
      %v12033 = vsel %vm4157, %v12001, %v11569
      %v12034 = vsel %vm4190, %v12003, %v3724
      %v12035 = vsel %vm4190, %v12005, %v3726
      %v12036 = vsel %vm4190, %v12007, %v3728
      %v12037 = vsel %vm4190, %v12009, %v3730
      %v12038 = vsel %vm4190, %v12011, %v3732
      %v12039 = vsel %vm4190, %v12013, %v3734
      %v12040 = vsel %vm4190, %v12015, %v3736
      %v12041 = vsel %vm4190, %v12017, %v3738
      %v12042 = vsel %vm4190, %v12019, %v3740
      %v12043 = vsel %vm4190, %v12021, %v3742
      %v12044 = vsel %vm4190, %v12023, %v3744
      %v12045 = vsel %vm4190, %v12025, %v3746
      %v12046 = vsel %vm4190, %v12027, %v3748
      %v12047 = vsel %vm4190, %v12029, %v3750
      %v12048 = vsel %vm4190, %v12031, %v3752
      %v12049 = vsel %vm4190, %v12033, %v3754
      %v12051 = vsel %vm4223, %v12034, %v11635
      %v12053 = vsel %vm4223, %v12035, %v11637
      %v12055 = vsel %vm4223, %v12036, %v11639
      %v12057 = vsel %vm4223, %v12037, %v11641
      %v12059 = vsel %vm4223, %v12038, %v11643
      %v12061 = vsel %vm4223, %v12039, %v11645
      %v12063 = vsel %vm4223, %v12040, %v11647
      %v12065 = vsel %vm4223, %v12041, %v11649
      %v12067 = vsel %vm4223, %v12042, %v11651
      %v12069 = vsel %vm4223, %v12043, %v11653
      %v12071 = vsel %vm4223, %v12044, %v11655
      %v12073 = vsel %vm4223, %v12045, %v11657
      %v12075 = vsel %vm4223, %v12046, %v11659
      %v12077 = vsel %vm4223, %v12047, %v11661
      %v12079 = vsel %vm4223, %v12048, %v11663
      %v12081 = vsel %vm4223, %v12049, %v11665
      %v12083 = vsel %vm4256, %v12051, %v11731
      %v12085 = vsel %vm4256, %v12053, %v11733
      %v12087 = vsel %vm4256, %v12055, %v11735
      %v12089 = vsel %vm4256, %v12057, %v11737
      %v12091 = vsel %vm4256, %v12059, %v11739
      %v12093 = vsel %vm4256, %v12061, %v11741
      %v12095 = vsel %vm4256, %v12063, %v11743
      %v12097 = vsel %vm4256, %v12065, %v11745
      %v12099 = vsel %vm4256, %v12067, %v11747
      %v12101 = vsel %vm4256, %v12069, %v11749
      %v12103 = vsel %vm4256, %v12071, %v11751
      %v12105 = vsel %vm4256, %v12073, %v11753
      %v12107 = vsel %vm4256, %v12075, %v11755
      %v12109 = vsel %vm4256, %v12077, %v11757
      %v12111 = vsel %vm4256, %v12079, %v11759
      %v12113 = vsel %vm4256, %v12081, %v11761
      %v12115 = vsel %vm4289, %v12083, %v11811
      %v12117 = vsel %vm4289, %v12085, %v11813
      %v12119 = vsel %vm4289, %v12087, %v11815
      %v12121 = vsel %vm4289, %v12089, %v11817
      %v12123 = vsel %vm4289, %v12091, %v11819
      %v12125 = vsel %vm4289, %v12093, %v11821
      %v12127 = vsel %vm4289, %v12095, %v11823
      %v12129 = vsel %vm4289, %v12097, %v11825
      %v12131 = vsel %vm4289, %v12099, %v11827
      %v12133 = vsel %vm4289, %v12101, %v11829
      %v12135 = vsel %vm4289, %v12103, %v11831
      %v12137 = vsel %vm4289, %v12105, %v11833
      %v12139 = vsel %vm4289, %v12107, %v11835
      %v12141 = vsel %vm4289, %v12109, %v11837
      %v12143 = vsel %vm4289, %v12111, %v11839
      %v12145 = vsel %vm4289, %v12113, %v11841
      %v12147 = vsel %vm4322, %v12115, %v11891
      %v12149 = vsel %vm4322, %v12117, %v11893
      %v12151 = vsel %vm4322, %v12119, %v11895
      %v12153 = vsel %vm4322, %v12121, %v11897
      %v12155 = vsel %vm4322, %v12123, %v11899
      %v12157 = vsel %vm4322, %v12125, %v11901
      %v12159 = vsel %vm4322, %v12127, %v11903
      %v12161 = vsel %vm4322, %v12129, %v11905
      %v12163 = vsel %vm4322, %v12131, %v11907
      %v12165 = vsel %vm4322, %v12133, %v11909
      %v12167 = vsel %vm4322, %v12135, %v11911
      %v12169 = vsel %vm4322, %v12137, %v11913
      %v12171 = vsel %vm4322, %v12139, %v11915
      %v12173 = vsel %vm4322, %v12141, %v11917
      %v12175 = vsel %vm4322, %v12143, %v11919
      %v12177 = vsel %vm4322, %v12145, %v11921
      %s12178 = scalar_lea.vmem %s1, 108
      %v12179 = vld [vmem:[%s12178] sm:$0xf]
      %v12180 = vld [vmem:[%s12178 + $0x4] sm:$0xf]
      %v12181 = vld [vmem:[%s12178 + $0x8] sm:$0xf]
      %v12182 = vld [vmem:[%s12178 + $0xc] sm:$0xf]
      %v12183 = vld [vmem:[%s12178 + $0x10] sm:$0xf]
      %v12184 = vld [vmem:[%s12178 + $0x14] sm:$0xf]
      %v12185 = vld [vmem:[%s12178 + $0x18] sm:$0xf]
      %v12186 = vld [vmem:[%s12178 + $0x1c] sm:$0xf]
      %v12187 = vld [vmem:[%s12178 + $0x20] sm:$0xf]
      %v12197 = vunpack.c.l.b16 %v12179
      %v12198 = vunpack.c.l.b16 %v12180
      %v12199 = vunpack.c.l.b16 %v12181
      %v12200 = vunpack.c.l.b16 %v12182
      %v12201 = vunpack.c.l.b16 %v12183
      %v12202 = vunpack.c.l.b16 %v12184
      %v12203 = vunpack.c.l.b16 %v12185
      %v12204 = vunpack.c.l.b16 %v12186
      %v12205 = vunpack.c.l.b16 %v12187
      %v12206 = vpack.c.b16 %v12198, %v12197
      %v12207 = vpack.c.b16 %v12200, %v12199
      %v12208 = vpack.c.b16 %v12202, %v12201
      %v12209 = vpack.c.b16 %v12204, %v12203
      %v12210 = vpack.c.b16 %v12205, %v12205
      %v12215 = vsel %vm4391, %v12147, 0
      %v12217 = vsel %vm4391, %v12149, 0
      %v12219 = vsel %vm4391, %v12151, 0
      %v12221 = vsel %vm4391, %v12153, 0
      %v12223 = vsel %vm4391, %v12155, 0
      %v12225 = vsel %vm4391, %v12157, 0
      %v12227 = vsel %vm4391, %v12159, 0
      %v12229 = vsel %vm4391, %v12161, 0
      %v12231 = vsel %vm4391, %v12163, 0
      %v12233 = vsel %vm4391, %v12165, 0
      %v12235 = vsel %vm4391, %v12167, 0
      %v12237 = vsel %vm4391, %v12169, 0
      %v12239 = vsel %vm4391, %v12171, 0
      %v12241 = vsel %vm4391, %v12173, 0
      %v12243 = vsel %vm4391, %v12175, 0
      %v12245 = vsel %vm4391, %v12177, 0
      %v12248 = vsel %vm4424, %v12210, 0
      %12250 = vmatprep.subr.bf16.mxu0 0
      %12251 = vmatpush1.bf16.msra.mxu0 %v12206
      %12252 = vmatprep.subr.bf16.mxu0 0
      %12253 = vmatpush1.bf16.msra.mxu0 %v12207
      %12254 = vmatprep.subr.bf16.mxu0 0
      %12255 = vmatpush1.bf16.msra.mxu0 %v12208
      %12256 = vmatprep.subr.bf16.mxu0 0
      %12257 = vmatpush1.bf16.msra.mxu0 %v12209
      %12258 = vmatprep.subr.bf16.mxu0 0
      %12259 = vmatpush1.bf16.msra.mxu0 %v12248
      %12260 = vmatprep.subr.bf16.mxu0 0
      %12261 = vmatpush1.bf16.msra.mxu0 0
      %12262 = vmatprep.subr.bf16.mxu0 0
      %12263 = vmatpush1.bf16.msra.mxu0 0
      %12264 = vmatprep.subr.bf16.mxu0 0
      %12265 = vmatpush1.bf16.msra.mxu0 0
      %12266 = vmatprep.subr.bf16.mxu0 0
      %12267 = vmatpush1.bf16.msra.mxu0 0
      %12268 = vmatprep.subr.bf16.mxu0 0
      %12269 = vmatpush1.bf16.msra.mxu0 0
      %12270 = vmatprep.subr.bf16.mxu0 0
      %12271 = vmatpush1.bf16.msra.mxu0 0
      %12272 = vmatprep.subr.bf16.mxu0 0
      %12273 = vmatpush1.bf16.msra.mxu0 0
      %12274 = vmatprep.subr.bf16.mxu0 0
      %12275 = vmatpush1.bf16.msra.mxu0 0
      %12276 = vmatprep.subr.bf16.mxu0 0
      %12277 = vmatpush1.bf16.msra.mxu0 0
      %12278 = vmatprep.subr.bf16.mxu0 0
      %12279 = vmatpush1.bf16.msra.mxu0 0
      %12280 = vmatprep.subr.bf16.mxu0 0
      %12281 = vmatpush1.bf16.msra.mxu0 0
      %12282 = vmatprep.mubr.bf16.mxu0 0
      %12283 = vmatmul.mubr.bf16.gmra.mrb[0].mxu0 %v12215
      %v12284 = vpop.f32.mrb[0].mxu0
      %v12285 = vadd.f32 0.0, %v12284
      %v12286 = vpop.f32.mrb[0].mxu0
      %v12287 = vpop.f32.mrb[0].mxu0
      %v12288 = vadd.f32 0.0, %v12287
      %v12289 = vpop.f32.mrb[0].mxu0
      %12290 = vmatprep.mubr.bf16.mxu0 0
      %12291 = vmatmul.mubr.bf16.gmra.mrb[0].mxu0 %v12217
      %v12292 = vpop.f32.mrb[0].mxu0
      %v12293 = vadd.f32 0.0, %v12292
      %v12294 = vpop.f32.mrb[0].mxu0
      %v12295 = vpop.f32.mrb[0].mxu0
      %v12296 = vadd.f32 0.0, %v12295
      %v12297 = vpop.f32.mrb[0].mxu0
      %12298 = vmatprep.mubr.bf16.mxu0 0
      %12299 = vmatmul.mubr.bf16.gmra.mrb[0].mxu0 %v12219
      %v12300 = vpop.f32.mrb[0].mxu0
      %v12301 = vadd.f32 0.0, %v12300
      %v12302 = vpop.f32.mrb[0].mxu0
      %v12303 = vpop.f32.mrb[0].mxu0
      %v12304 = vadd.f32 0.0, %v12303
      %v12305 = vpop.f32.mrb[0].mxu0
      %12306 = vmatprep.mubr.bf16.mxu0 0
      %12307 = vmatmul.mubr.bf16.gmra.mrb[0].mxu0 %v12221
      %v12308 = vpop.f32.mrb[0].mxu0
      %v12309 = vadd.f32 0.0, %v12308
      %v12310 = vpop.f32.mrb[0].mxu0
      %v12311 = vpop.f32.mrb[0].mxu0
      %v12312 = vadd.f32 0.0, %v12311
      %v12313 = vpop.f32.mrb[0].mxu0
      %12314 = vmatprep.mubr.bf16.mxu0 0
      %12315 = vmatmul.mubr.bf16.gmra.mrb[0].mxu0 %v12223
      %v12316 = vpop.f32.mrb[0].mxu0
      %v12317 = vadd.f32 0.0, %v12316
      %v12318 = vpop.f32.mrb[0].mxu0
      %v12319 = vpop.f32.mrb[0].mxu0
      %v12320 = vadd.f32 0.0, %v12319
      %v12321 = vpop.f32.mrb[0].mxu0
      %12322 = vmatprep.mubr.bf16.mxu0 0
      %12323 = vmatmul.mubr.bf16.gmra.mrb[0].mxu0 %v12225
      %v12324 = vpop.f32.mrb[0].mxu0
      %v12325 = vadd.f32 0.0, %v12324
      %v12326 = vpop.f32.mrb[0].mxu0
      %v12327 = vpop.f32.mrb[0].mxu0
      %v12328 = vadd.f32 0.0, %v12327
      %v12329 = vpop.f32.mrb[0].mxu0
      %12330 = vmatprep.mubr.bf16.mxu0 0
      %12331 = vmatmul.mubr.bf16.gmra.mrb[0].mxu0 %v12227
      %v12332 = vpop.f32.mrb[0].mxu0
      %v12333 = vadd.f32 0.0, %v12332
      %v12334 = vpop.f32.mrb[0].mxu0
      %v12335 = vpop.f32.mrb[0].mxu0
      %v12336 = vadd.f32 0.0, %v12335
      %v12337 = vpop.f32.mrb[0].mxu0
      %12338 = vmatprep.mubr.bf16.mxu0 0
      %12339 = vmatmul.mubr.bf16.gmra.mrb[0].mxu0 %v12229
      %v12340 = vpop.f32.mrb[0].mxu0
      %v12341 = vadd.f32 0.0, %v12340
      %v12342 = vpop.f32.mrb[0].mxu0
      %v12343 = vpop.f32.mrb[0].mxu0
      %v12344 = vadd.f32 0.0, %v12343
      %v12345 = vpop.f32.mrb[0].mxu0
      %12346 = vmatprep.mubr.bf16.mxu0 0
      %12347 = vmatmul.mubr.bf16.gmra.mrb[0].mxu0 %v12231
      %v12348 = vpop.f32.mrb[0].mxu0
      %v12349 = vadd.f32 0.0, %v12348
      %v12350 = vpop.f32.mrb[0].mxu0
      %v12351 = vpop.f32.mrb[0].mxu0
      %v12352 = vadd.f32 0.0, %v12351
      %v12353 = vpop.f32.mrb[0].mxu0
      %12354 = vmatprep.mubr.bf16.mxu0 0
      %12355 = vmatmul.mubr.bf16.gmra.mrb[0].mxu0 %v12233
      %v12356 = vpop.f32.mrb[0].mxu0
      %v12357 = vadd.f32 0.0, %v12356
      %v12358 = vpop.f32.mrb[0].mxu0
      %v12359 = vpop.f32.mrb[0].mxu0
      %v12360 = vadd.f32 0.0, %v12359
      %v12361 = vpop.f32.mrb[0].mxu0
      %12362 = vmatprep.mubr.bf16.mxu0 0
      %12363 = vmatmul.mubr.bf16.gmra.mrb[0].mxu0 %v12235
      %v12364 = vpop.f32.mrb[0].mxu0
      %v12365 = vadd.f32 0.0, %v12364
      %v12366 = vpop.f32.mrb[0].mxu0
      %v12367 = vpop.f32.mrb[0].mxu0
      %v12368 = vadd.f32 0.0, %v12367
      %v12369 = vpop.f32.mrb[0].mxu0
      %12370 = vmatprep.mubr.bf16.mxu0 0
      %12371 = vmatmul.mubr.bf16.gmra.mrb[0].mxu0 %v12237
      %v12372 = vpop.f32.mrb[0].mxu0
      %v12373 = vadd.f32 0.0, %v12372
      %v12374 = vpop.f32.mrb[0].mxu0
      %v12375 = vpop.f32.mrb[0].mxu0
      %v12376 = vadd.f32 0.0, %v12375
      %v12377 = vpop.f32.mrb[0].mxu0
      %12378 = vmatprep.mubr.bf16.mxu0 0
      %12379 = vmatmul.mubr.bf16.gmra.mrb[0].mxu0 %v12239
      %v12380 = vpop.f32.mrb[0].mxu0
      %v12381 = vadd.f32 0.0, %v12380
      %v12382 = vpop.f32.mrb[0].mxu0
      %v12383 = vpop.f32.mrb[0].mxu0
      %v12384 = vadd.f32 0.0, %v12383
      %v12385 = vpop.f32.mrb[0].mxu0
      %12386 = vmatprep.mubr.bf16.mxu0 0
      %12387 = vmatmul.mubr.bf16.gmra.mrb[0].mxu0 %v12241
      %v12388 = vpop.f32.mrb[0].mxu0
      %v12389 = vadd.f32 0.0, %v12388
      %v12390 = vpop.f32.mrb[0].mxu0
      %v12391 = vpop.f32.mrb[0].mxu0
      %v12392 = vadd.f32 0.0, %v12391
      %v12393 = vpop.f32.mrb[0].mxu0
      %12394 = vmatprep.mubr.bf16.mxu0 0
      %12395 = vmatmul.mubr.bf16.gmra.mrb[0].mxu0 %v12243
      %v12396 = vpop.f32.mrb[0].mxu0
      %v12397 = vadd.f32 0.0, %v12396
      %v12398 = vpop.f32.mrb[0].mxu0
      %v12399 = vpop.f32.mrb[0].mxu0
      %v12400 = vadd.f32 0.0, %v12399
      %v12401 = vpop.f32.mrb[0].mxu0
      %12402 = vmatprep.mubr.bf16.mxu0 0
      %12403 = vmatmul.mubr.bf16.gmra.mrb[0].mxu0 %v12245
      %v12404 = vpop.f32.mrb[0].mxu0
      %v12405 = vadd.f32 0.0, %v12404
      %v12406 = vpop.f32.mrb[0].mxu0
      %v12407 = vpop.f32.mrb[0].mxu0
      %v12408 = vadd.f32 0.0, %v12407
      %v12409 = vpop.f32.mrb[0].mxu0
      %12410 = vdwg.mxu0
      %12443 = vrot.lane.b32.xlu0 %v7014, 2
      %v12444 = vpop.permute.xlu0 %12443
      %12445 = vrot.lane.b32.xlu0 %v7017, 2
      %v12446 = vpop.permute.xlu0 %12445
      %12447 = vrot.lane.b32.xlu0 %v7022, 2
      %v12448 = vpop.permute.xlu0 %12447
      %12449 = vrot.lane.b32.xlu0 %v7025, 2
      %v12450 = vpop.permute.xlu0 %12449
      %12451 = vrot.lane.b32.xlu0 %v7030, 2
      %v12452 = vpop.permute.xlu0 %12451
      %12453 = vrot.lane.b32.xlu0 %v7033, 2
      %v12454 = vpop.permute.xlu0 %12453
      %12455 = vrot.lane.b32.xlu0 %v7038, 2
      %v12456 = vpop.permute.xlu0 %12455
      %12457 = vrot.lane.b32.xlu0 %v7041, 2
      %v12458 = vpop.permute.xlu0 %12457
      %12459 = vrot.lane.b32.xlu0 %v7046, 2
      %v12460 = vpop.permute.xlu0 %12459
      %12461 = vrot.lane.b32.xlu0 %v7049, 2
      %v12462 = vpop.permute.xlu0 %12461
      %12463 = vrot.lane.b32.xlu0 %v7054, 2
      %v12464 = vpop.permute.xlu0 %12463
      %12465 = vrot.lane.b32.xlu0 %v7057, 2
      %v12466 = vpop.permute.xlu0 %12465
      %12467 = vrot.lane.b32.xlu0 %v7062, 2
      %v12468 = vpop.permute.xlu0 %12467
      %12469 = vrot.lane.b32.xlu0 %v7065, 2
      %v12470 = vpop.permute.xlu0 %12469
      %12471 = vrot.lane.b32.xlu0 %v7070, 2
      %v12472 = vpop.permute.xlu0 %12471
      %12473 = vrot.lane.b32.xlu0 %v7073, 2
      %v12474 = vpop.permute.xlu0 %12473
      %12475 = vrot.lane.b32.xlu0 %v7078, 2
      %v12476 = vpop.permute.xlu0 %12475
      %12477 = vrot.lane.b32.xlu0 %v7081, 2
      %v12478 = vpop.permute.xlu0 %12477
      %12479 = vrot.lane.b32.xlu0 %v7086, 2
      %v12480 = vpop.permute.xlu0 %12479
      %12481 = vrot.lane.b32.xlu0 %v7089, 2
      %v12482 = vpop.permute.xlu0 %12481
      %12483 = vrot.lane.b32.xlu0 %v7094, 2
      %v12484 = vpop.permute.xlu0 %12483
      %12485 = vrot.lane.b32.xlu0 %v7097, 2
      %v12486 = vpop.permute.xlu0 %12485
      %12487 = vrot.lane.b32.xlu0 %v7102, 2
      %v12488 = vpop.permute.xlu0 %12487
      %12489 = vrot.lane.b32.xlu0 %v7105, 2
      %v12490 = vpop.permute.xlu0 %12489
      %12491 = vrot.lane.b32.xlu0 %v7110, 2
      %v12492 = vpop.permute.xlu0 %12491
      %12493 = vrot.lane.b32.xlu0 %v7113, 2
      %v12494 = vpop.permute.xlu0 %12493
      %12495 = vrot.lane.b32.xlu0 %v7118, 2
      %v12496 = vpop.permute.xlu0 %12495
      %12497 = vrot.lane.b32.xlu0 %v7121, 2
      %v12498 = vpop.permute.xlu0 %12497
      %12499 = vrot.lane.b32.xlu0 %v7126, 2
      %v12500 = vpop.permute.xlu0 %12499
      %12501 = vrot.lane.b32.xlu0 %v7129, 2
      %v12502 = vpop.permute.xlu0 %12501
      %12503 = vrot.lane.b32.xlu0 %v7134, 2
      %v12504 = vpop.permute.xlu0 %12503
      %12505 = vrot.lane.b32.xlu0 %v7137, 2
      %v12506 = vpop.permute.xlu0 %12505
      %12571 = vrot.lane.b32.xlu0 %v10589, 4
      %v12572 = vpop.permute.xlu0 %12571
      %12573 = vrot.lane.b32.xlu0 %v10592, 4
      %v12574 = vpop.permute.xlu0 %12573
      %12575 = vrot.lane.b32.xlu0 %v10597, 4
      %v12576 = vpop.permute.xlu0 %12575
      %12577 = vrot.lane.b32.xlu0 %v10600, 4
      %v12578 = vpop.permute.xlu0 %12577
      %12579 = vrot.lane.b32.xlu0 %v10605, 4
      %v12580 = vpop.permute.xlu0 %12579
      %12581 = vrot.lane.b32.xlu0 %v10608, 4
      %v12582 = vpop.permute.xlu0 %12581
      %12583 = vrot.lane.b32.xlu0 %v10613, 4
      %v12584 = vpop.permute.xlu0 %12583
      %12585 = vrot.lane.b32.xlu0 %v10616, 4
      %v12586 = vpop.permute.xlu0 %12585
      %12587 = vrot.lane.b32.xlu0 %v10621, 4
      %v12588 = vpop.permute.xlu0 %12587
      %12589 = vrot.lane.b32.xlu0 %v10624, 4
      %v12590 = vpop.permute.xlu0 %12589
      %12591 = vrot.lane.b32.xlu0 %v10629, 4
      %v12592 = vpop.permute.xlu0 %12591
      %12593 = vrot.lane.b32.xlu0 %v10632, 4
      %v12594 = vpop.permute.xlu0 %12593
      %12595 = vrot.lane.b32.xlu0 %v10637, 4
      %v12596 = vpop.permute.xlu0 %12595
      %12597 = vrot.lane.b32.xlu0 %v10640, 4
      %v12598 = vpop.permute.xlu0 %12597
      %12599 = vrot.lane.b32.xlu0 %v10645, 4
      %v12600 = vpop.permute.xlu0 %12599
      %12601 = vrot.lane.b32.xlu0 %v10648, 4
      %v12602 = vpop.permute.xlu0 %12601
      %12603 = vrot.lane.b32.xlu0 %v10653, 4
      %v12604 = vpop.permute.xlu0 %12603
      %12605 = vrot.lane.b32.xlu0 %v10656, 4
      %v12606 = vpop.permute.xlu0 %12605
      %12607 = vrot.lane.b32.xlu0 %v10661, 4
      %v12608 = vpop.permute.xlu0 %12607
      %12609 = vrot.lane.b32.xlu0 %v10664, 4
      %v12610 = vpop.permute.xlu0 %12609
      %12611 = vrot.lane.b32.xlu0 %v10669, 4
      %v12612 = vpop.permute.xlu0 %12611
      %12613 = vrot.lane.b32.xlu0 %v10672, 4
      %v12614 = vpop.permute.xlu0 %12613
      %12615 = vrot.lane.b32.xlu0 %v10677, 4
      %v12616 = vpop.permute.xlu0 %12615
      %12617 = vrot.lane.b32.xlu0 %v10680, 4
      %v12618 = vpop.permute.xlu0 %12617
      %12619 = vrot.lane.b32.xlu0 %v10685, 4
      %v12620 = vpop.permute.xlu0 %12619
      %12621 = vrot.lane.b32.xlu0 %v10688, 4
      %v12622 = vpop.permute.xlu0 %12621
      %12623 = vrot.lane.b32.xlu0 %v10693, 4
      %v12624 = vpop.permute.xlu0 %12623
      %12625 = vrot.lane.b32.xlu0 %v10696, 4
      %v12626 = vpop.permute.xlu0 %12625
      %12627 = vrot.lane.b32.xlu0 %v10701, 4
      %v12628 = vpop.permute.xlu0 %12627
      %12629 = vrot.lane.b32.xlu0 %v10704, 4
      %v12630 = vpop.permute.xlu0 %12629
      %12631 = vrot.lane.b32.xlu0 %v10709, 4
      %v12632 = vpop.permute.xlu0 %12631
      %12633 = vrot.lane.b32.xlu0 %v10712, 4
      %v12634 = vpop.permute.xlu0 %12633
      %12699 = vrot.lane.b32.xlu0 %v12285, 6
      %v12700 = vpop.permute.xlu0 %12699
      %12701 = vrot.lane.b32.xlu0 %v12288, 6
      %v12702 = vpop.permute.xlu0 %12701
      %12703 = vrot.lane.b32.xlu0 %v12293, 6
      %v12704 = vpop.permute.xlu0 %12703
      %12705 = vrot.lane.b32.xlu0 %v12296, 6
      %v12706 = vpop.permute.xlu0 %12705
      %12707 = vrot.lane.b32.xlu0 %v12301, 6
      %v12708 = vpop.permute.xlu0 %12707
      %12709 = vrot.lane.b32.xlu0 %v12304, 6
      %v12710 = vpop.permute.xlu0 %12709
      %12711 = vrot.lane.b32.xlu0 %v12309, 6
      %v12712 = vpop.permute.xlu0 %12711
      %12713 = vrot.lane.b32.xlu0 %v12312, 6
      %v12714 = vpop.permute.xlu0 %12713
      %12715 = vrot.lane.b32.xlu0 %v12317, 6
      %v12716 = vpop.permute.xlu0 %12715
      %12717 = vrot.lane.b32.xlu0 %v12320, 6
      %v12718 = vpop.permute.xlu0 %12717
      %12719 = vrot.lane.b32.xlu0 %v12325, 6
      %v12720 = vpop.permute.xlu0 %12719
      %12721 = vrot.lane.b32.xlu0 %v12328, 6
      %v12722 = vpop.permute.xlu0 %12721
      %12723 = vrot.lane.b32.xlu0 %v12333, 6
      %v12724 = vpop.permute.xlu0 %12723
      %12725 = vrot.lane.b32.xlu0 %v12336, 6
      %v12726 = vpop.permute.xlu0 %12725
      %12727 = vrot.lane.b32.xlu0 %v12341, 6
      %v12728 = vpop.permute.xlu0 %12727
      %12729 = vrot.lane.b32.xlu0 %v12344, 6
      %v12730 = vpop.permute.xlu0 %12729
      %12731 = vrot.lane.b32.xlu0 %v12349, 6
      %v12732 = vpop.permute.xlu0 %12731
      %12733 = vrot.lane.b32.xlu0 %v12352, 6
      %v12734 = vpop.permute.xlu0 %12733
      %12735 = vrot.lane.b32.xlu0 %v12357, 6
      %v12736 = vpop.permute.xlu0 %12735
      %12737 = vrot.lane.b32.xlu0 %v12360, 6
      %v12738 = vpop.permute.xlu0 %12737
      %12739 = vrot.lane.b32.xlu0 %v12365, 6
      %v12740 = vpop.permute.xlu0 %12739
      %12741 = vrot.lane.b32.xlu0 %v12368, 6
      %v12742 = vpop.permute.xlu0 %12741
      %12743 = vrot.lane.b32.xlu0 %v12373, 6
      %v12744 = vpop.permute.xlu0 %12743
      %12745 = vrot.lane.b32.xlu0 %v12376, 6
      %v12746 = vpop.permute.xlu0 %12745
      %12747 = vrot.lane.b32.xlu0 %v12381, 6
      %v12748 = vpop.permute.xlu0 %12747
      %12749 = vrot.lane.b32.xlu0 %v12384, 6
      %v12750 = vpop.permute.xlu0 %12749
      %12751 = vrot.lane.b32.xlu0 %v12389, 6
      %v12752 = vpop.permute.xlu0 %12751
      %12753 = vrot.lane.b32.xlu0 %v12392, 6
      %v12754 = vpop.permute.xlu0 %12753
      %12755 = vrot.lane.b32.xlu0 %v12397, 6
      %v12756 = vpop.permute.xlu0 %12755
      %12757 = vrot.lane.b32.xlu0 %v12400, 6
      %v12758 = vpop.permute.xlu0 %12757
      %12759 = vrot.lane.b32.xlu0 %v12405, 6
      %v12760 = vpop.permute.xlu0 %12759
      %12761 = vrot.lane.b32.xlu0 %v12408, 6
      %v12762 = vpop.permute.xlu0 %12761
      %vm12795 = vcmask 15360
      %v12796 = vsel %vm12795, %v4463, %v12444
      %v12797 = vsel %vm12795, %v4466, %v12446
      %v12798 = vsel %vm12795, %v4471, %v12448
      %v12799 = vsel %vm12795, %v4474, %v12450
      %v12800 = vsel %vm12795, %v4479, %v12452
      %v12801 = vsel %vm12795, %v4482, %v12454
      %v12802 = vsel %vm12795, %v4487, %v12456
      %v12803 = vsel %vm12795, %v4490, %v12458
      %v12804 = vsel %vm12795, %v4495, %v12460
      %v12805 = vsel %vm12795, %v4498, %v12462
      %v12806 = vsel %vm12795, %v4503, %v12464
      %v12807 = vsel %vm12795, %v4506, %v12466
      %v12808 = vsel %vm12795, %v4511, %v12468
      %v12809 = vsel %vm12795, %v4514, %v12470
      %v12810 = vsel %vm12795, %v4519, %v12472
      %v12811 = vsel %vm12795, %v4522, %v12474
      %v12812 = vsel %vm12795, %v4527, %v12476
      %v12813 = vsel %vm12795, %v4530, %v12478
      %v12814 = vsel %vm12795, %v4535, %v12480
      %v12815 = vsel %vm12795, %v4538, %v12482
      %v12816 = vsel %vm12795, %v4543, %v12484
      %v12817 = vsel %vm12795, %v4546, %v12486
      %v12818 = vsel %vm12795, %v4551, %v12488
      %v12819 = vsel %vm12795, %v4554, %v12490
      %v12820 = vsel %vm12795, %v4559, %v12492
      %v12821 = vsel %vm12795, %v4562, %v12494
      %v12822 = vsel %vm12795, %v4567, %v12496
      %v12823 = vsel %vm12795, %v4570, %v12498
      %v12824 = vsel %vm12795, %v4575, %v12500
      %v12825 = vsel %vm12795, %v4578, %v12502
      %v12826 = vsel %vm12795, %v4583, %v12504
      %v12827 = vsel %vm12795, %v4586, %v12506
      %vm12828 = vcmask 31744
      %v12829 = vsel %vm12828, %v12796, %v12572
      %v12830 = vsel %vm12828, %v12797, %v12574
      %v12831 = vsel %vm12828, %v12798, %v12576
      %v12832 = vsel %vm12828, %v12799, %v12578
      %v12833 = vsel %vm12828, %v12800, %v12580
      %v12834 = vsel %vm12828, %v12801, %v12582
      %v12835 = vsel %vm12828, %v12802, %v12584
      %v12836 = vsel %vm12828, %v12803, %v12586
      %v12837 = vsel %vm12828, %v12804, %v12588
      %v12838 = vsel %vm12828, %v12805, %v12590
      %v12839 = vsel %vm12828, %v12806, %v12592
      %v12840 = vsel %vm12828, %v12807, %v12594
      %v12841 = vsel %vm12828, %v12808, %v12596
      %v12842 = vsel %vm12828, %v12809, %v12598
      %v12843 = vsel %vm12828, %v12810, %v12600
      %v12844 = vsel %vm12828, %v12811, %v12602
      %v12845 = vsel %vm12828, %v12812, %v12604
      %v12846 = vsel %vm12828, %v12813, %v12606
      %v12847 = vsel %vm12828, %v12814, %v12608
      %v12848 = vsel %vm12828, %v12815, %v12610
      %v12849 = vsel %vm12828, %v12816, %v12612
      %v12850 = vsel %vm12828, %v12817, %v12614
      %v12851 = vsel %vm12828, %v12818, %v12616
      %v12852 = vsel %vm12828, %v12819, %v12618
      %v12853 = vsel %vm12828, %v12820, %v12620
      %v12854 = vsel %vm12828, %v12821, %v12622
      %v12855 = vsel %vm12828, %v12822, %v12624
      %v12856 = vsel %vm12828, %v12823, %v12626
      %v12857 = vsel %vm12828, %v12824, %v12628
      %v12858 = vsel %vm12828, %v12825, %v12630
      %v12859 = vsel %vm12828, %v12826, %v12632
      %v12860 = vsel %vm12828, %v12827, %v12634
      %vm12861 = vcmask 48128
      %v12862 = vsel %vm12861, %v12829, %v12700
      %v12863 = vsel %vm12861, %v12830, %v12702
      %v12864 = vsel %vm12861, %v12831, %v12704
      %v12865 = vsel %vm12861, %v12832, %v12706
      %v12866 = vsel %vm12861, %v12833, %v12708
      %v12867 = vsel %vm12861, %v12834, %v12710
      %v12868 = vsel %vm12861, %v12835, %v12712
      %v12869 = vsel %vm12861, %v12836, %v12714
      %v12870 = vsel %vm12861, %v12837, %v12716
      %v12871 = vsel %vm12861, %v12838, %v12718
      %v12872 = vsel %vm12861, %v12839, %v12720
      %v12873 = vsel %vm12861, %v12840, %v12722
      %v12874 = vsel %vm12861, %v12841, %v12724
      %v12875 = vsel %vm12861, %v12842, %v12726
      %v12876 = vsel %vm12861, %v12843, %v12728
      %v12877 = vsel %vm12861, %v12844, %v12730
      %v12878 = vsel %vm12861, %v12845, %v12732
      %v12879 = vsel %vm12861, %v12846, %v12734
      %v12880 = vsel %vm12861, %v12847, %v12736
      %v12881 = vsel %vm12861, %v12848, %v12738
      %v12882 = vsel %vm12861, %v12849, %v12740
      %v12883 = vsel %vm12861, %v12850, %v12742
      %v12884 = vsel %vm12861, %v12851, %v12744
      %v12885 = vsel %vm12861, %v12852, %v12746
      %v12886 = vsel %vm12861, %v12853, %v12748
      %v12887 = vsel %vm12861, %v12854, %v12750
      %v12888 = vsel %vm12861, %v12855, %v12752
      %v12889 = vsel %vm12861, %v12856, %v12754
      %v12890 = vsel %vm12861, %v12857, %v12756
      %v12891 = vsel %vm12861, %v12858, %v12758
      %v12892 = vsel %vm12861, %v12859, %v12760
      %v12893 = vsel %vm12861, %v12860, %v12762
      %v12894 = vld [vmem:[%s2] sm:$0x1]
      %v12896 = vlaneseq
      %v12897 = vshrl.u32 %v12896, 7
      %v12898 = vsub.s32 0, %v12897
      %v12899 = vrot.slane %v12894, %v12898
      %v12901 = vadd.f32 %v12862, %v12899
      %v12902 = vadd.f32 %v12863, %v12899
      %v12903 = vadd.f32 %v12864, %v12899
      %v12904 = vadd.f32 %v12865, %v12899
      %v12905 = vadd.f32 %v12866, %v12899
      %v12906 = vadd.f32 %v12867, %v12899
      %v12907 = vadd.f32 %v12868, %v12899
      %v12908 = vadd.f32 %v12869, %v12899
      %v12909 = vadd.f32 %v12870, %v12899
      %v12910 = vadd.f32 %v12871, %v12899
      %v12911 = vadd.f32 %v12872, %v12899
      %v12912 = vadd.f32 %v12873, %v12899
      %v12913 = vadd.f32 %v12874, %v12899
      %v12914 = vadd.f32 %v12875, %v12899
      %v12915 = vadd.f32 %v12876, %v12899
      %v12916 = vadd.f32 %v12877, %v12899
      %v12917 = vadd.f32 %v12878, %v12899
      %v12918 = vadd.f32 %v12879, %v12899
      %v12919 = vadd.f32 %v12880, %v12899
      %v12920 = vadd.f32 %v12881, %v12899
      %v12921 = vadd.f32 %v12882, %v12899
      %v12922 = vadd.f32 %v12883, %v12899
      %v12923 = vadd.f32 %v12884, %v12899
      %v12924 = vadd.f32 %v12885, %v12899
      %v12925 = vadd.f32 %v12886, %v12899
      %v12926 = vadd.f32 %v12887, %v12899
      %v12927 = vadd.f32 %v12888, %v12899
      %v12928 = vadd.f32 %v12889, %v12899
      %v12929 = vadd.f32 %v12890, %v12899
      %v12930 = vadd.f32 %v12891, %v12899
      %v12931 = vadd.f32 %v12892, %v12899
      %v12932 = vadd.f32 %v12893, %v12899
      %v12933 = vmax.f32 %v12901, 0.0
      %v12934 = vmax.f32 %v12902, 0.0
      %v12935 = vmax.f32 %v12903, 0.0
      %v12936 = vmax.f32 %v12904, 0.0
      %v12937 = vmax.f32 %v12905, 0.0
      %v12938 = vmax.f32 %v12906, 0.0
      %v12939 = vmax.f32 %v12907, 0.0
      %v12940 = vmax.f32 %v12908, 0.0
      %v12941 = vmax.f32 %v12909, 0.0
      %v12942 = vmax.f32 %v12910, 0.0
      %v12943 = vmax.f32 %v12911, 0.0
      %v12944 = vmax.f32 %v12912, 0.0
      %v12945 = vmax.f32 %v12913, 0.0
      %v12946 = vmax.f32 %v12914, 0.0
      %v12947 = vmax.f32 %v12915, 0.0
      %v12948 = vmax.f32 %v12916, 0.0
      %v12949 = vmax.f32 %v12917, 0.0
      %v12950 = vmax.f32 %v12918, 0.0
      %v12951 = vmax.f32 %v12919, 0.0
      %v12952 = vmax.f32 %v12920, 0.0
      %v12953 = vmax.f32 %v12921, 0.0
      %v12954 = vmax.f32 %v12922, 0.0
      %v12955 = vmax.f32 %v12923, 0.0
      %v12956 = vmax.f32 %v12924, 0.0
      %v12957 = vmax.f32 %v12925, 0.0
      %v12958 = vmax.f32 %v12926, 0.0
      %v12959 = vmax.f32 %v12927, 0.0
      %v12960 = vmax.f32 %v12928, 0.0
      %v12961 = vmax.f32 %v12929, 0.0
      %v12962 = vmax.f32 %v12930, 0.0
      %v12963 = vmax.f32 %v12931, 0.0
      %v12964 = vmax.f32 %v12932, 0.0
      %12965 = vst.msk [vmem:[%s194] sm:$0xff] %vm4075, %v12933
      %12966 = vst.msk [vmem:[%s194 + $0x8] sm:$0xff] %vm4075, %v12934
      %12967 = vst.msk [vmem:[%s194 + $0x10] sm:$0xff] %vm4075, %v12935
      %12968 = vst.msk [vmem:[%s194 + $0x18] sm:$0xff] %vm4075, %v12936
      %12969 = vst.msk [vmem:[%s194 + $0x20] sm:$0xff] %vm4075, %v12937
      %12970 = vst.msk [vmem:[%s194 + $0x28] sm:$0xff] %vm4075, %v12938
      %12971 = vst.msk [vmem:[%s194 + $0x30] sm:$0xff] %vm4075, %v12939
      %12972 = vst.msk [vmem:[%s194 + $0x38] sm:$0xff] %vm4075, %v12940
      %12973 = vst.msk [vmem:[%s194 + $0x40] sm:$0xff] %vm4075, %v12941
      %12974 = vst.msk [vmem:[%s194 + $0x48] sm:$0xff] %vm4075, %v12942
      %12975 = vst.msk [vmem:[%s194 + $0x50] sm:$0xff] %vm4075, %v12943
      %12976 = vst.msk [vmem:[%s194 + $0x58] sm:$0xff] %vm4075, %v12944
      %12977 = vst.msk [vmem:[%s194 + $0x60] sm:$0xff] %vm4075, %v12945
      %12978 = vst.msk [vmem:[%s194 + $0x68] sm:$0xff] %vm4075, %v12946
      %12979 = vst.msk [vmem:[%s194 + $0x70] sm:$0xff] %vm4075, %v12947
      %12980 = vst.msk [vmem:[%s194 + $0x78] sm:$0xff] %vm4075, %v12948
      %12981 = vst.msk [vmem:[%s194 + $0x80] sm:$0xff] %vm4075, %v12949
      %12982 = vst.msk [vmem:[%s194 + $0x88] sm:$0xff] %vm4075, %v12950
      %12983 = vst.msk [vmem:[%s194 + $0x90] sm:$0xff] %vm4075, %v12951
      %12984 = vst.msk [vmem:[%s194 + $0x98] sm:$0xff] %vm4075, %v12952
      %12985 = vst.msk [vmem:[%s194 + $0xa0] sm:$0xff] %vm4075, %v12953
      %12986 = vst.msk [vmem:[%s194 + $0xa8] sm:$0xff] %vm4075, %v12954
      %12987 = vst.msk [vmem:[%s194 + $0xb0] sm:$0xff] %vm4075, %v12955
      %12988 = vst.msk [vmem:[%s194 + $0xb8] sm:$0xff] %vm4075, %v12956
      %12989 = vst.msk [vmem:[%s194 + $0xc0] sm:$0xff] %vm4075, %v12957
      %12990 = vst.msk [vmem:[%s194 + $0xc8] sm:$0xff] %vm4075, %v12958
      %12991 = vst.msk [vmem:[%s194 + $0xd0] sm:$0xff] %vm4075, %v12959
      %12992 = vst.msk [vmem:[%s194 + $0xd8] sm:$0xff] %vm4075, %v12960
      %12993 = vst.msk [vmem:[%s194 + $0xe0] sm:$0xff] %vm4075, %v12961
      %12994 = vst.msk [vmem:[%s194 + $0xe8] sm:$0xff] %vm4075, %v12962
      %12995 = vst.msk [vmem:[%s194 + $0xf0] sm:$0xff] %vm4075, %v12963
      %12996 = vst.msk [vmem:[%s194 + $0xf8] sm:$0xff] %vm4075, %v12964
      %s12997 = smul.u32 16, %s19
      %p12998 = scmp.lt.s32.totalorder %s18, 1
      %s12999 = scalar_select %p12998, %s18, 1
      %p13000 = scmp.lt.s32.totalorder %s12997, 15
      %s13001 = scalar_select %p13000, %s12997, 15
      %s13002 = smul.addr %s13001, 2
      %s13003 = smul.addr %s12999, 32
      %s13004 = sadd.s32 %s13002, %s13003
      %s13005 = smul.addr %s13004, 8
      %s13006 = scalar_lea.vmem %s3, %s13005
      // Predicated region
      $region33: #{tpu_custom_call.1} parent=31 // pred_check
        %p13007 = pneg %p114
      $region34: #{tpu_custom_call.1} parent=31 // pred_check_branch
        %13009 = sbr.rel (%p13007) target = $region36
      $region35: #{tpu_custom_call.1} parent=31 // pred_region
        %s13010 = smul.u32 16, %s19
      $region36: #{tpu_custom_call.1} parent=31 // pred_fallthru
        _
    $region32: #{tpu_custom_call.1} parent=5 // pred_fallthru
      _
    %p13011 = scmp.le.s32.totalorder 2, %s9
    // Predicated region
    $region37: #{tpu_custom_call.1} parent=5 // pred_check
      %p13012 = pneg %p13011
    $region38: #{tpu_custom_call.1} parent=5 // pred_check_branch
      %13014 = sbr.rel (%p13012) target = $region40
    $region39: #{tpu_custom_call.1} parent=5 // pred_region
      %s13015 = ssub.s32 %s9, 2
      // Predicated region
      $region41: #{tpu_custom_call.1} parent=39 // pred_check
        %p13016 = pneg %p120
      $region42: #{tpu_custom_call.1} parent=39 // pred_check_branch
        %13018 = sbr.rel (%p13016) target = $region44
      $region43: #{tpu_custom_call.1} parent=39 // pred_region
        %s13019 = smul.u32 16, %s21
        %p13020 = scmp.lt.s32.totalorder %s20, 1
        %s13021 = scalar_select %p13020, %s20, 1
        %p13022 = scmp.lt.s32.totalorder %s13019, 15
        %s13023 = scalar_select %p13022, %s13019, 15
        %s13024 = smul.addr %s13023, 2
        %s13025 = smul.addr %s13021, 32
        %s13026 = sadd.s32 %s13024, %s13025
        %s13027 = smul.addr %s13026, 8
        %s13028 = scalar_lea.vmem %s3, %s13027
      $region44: #{tpu_custom_call.1} parent=39 // pred_fallthru
        _
    $region40: #{tpu_custom_call.1} parent=5 // pred_fallthru
      _
  $region6: #{tpu_custom_call.1} parent=0 // loop_footer
    %s13 = sadd.s32 1, %s9
  $region7: #{tpu_custom_call.1} parent=0 // loop_footer_branch
    %8 = sbr.rel target = $region3
  $region8: #{tpu_custom_call.1} parent=0 // loop_exit
    _

</llo_original>
